<compile_context>
chip_gen: v5e
topology: v5e:2x2
jax: 0.10.0
libtpu: 0.0.40
codegen_flags: <defaults>
</compile_context>

<pallas_src>
import functools

import jax
import jax.numpy as jnp
from jax import lax
from jax.experimental import pallas as pl
from jax.experimental.pallas import tpu as pltpu

EPS = 1e-5   # nn.InstanceNorm2d default eps
LANE = 128


def _round_up(n, m):
    return (n + m - 1) // m * m


# ------------------------------ Pallas kernel ------------------------------- #
def _residual_block_kernel(xp_ref, w1_ref, w2_ref, g1_ref, b1_ref, g2_ref, b2_ref,
                           o_ref, hp_ref, *, H, W, K):
    """Fused: conv1 + InstanceNorm + ReLU + conv2 + InstanceNorm + residual.

    xp_ref : (H+2P, W+2P, Cp)   f32   reflect-padded input tile (one instance)
    w*_ref : (NP, 2*Cp, Cp)     bf16  tap-PAIR weight matrices (HWIO flattened,
                                      odd tap count padded with a zero tap)
    g*/b*  : (1, Cp)            f32   InstanceNorm affine params
    o_ref  : (H*W, Cp)          f32   output tile
    hp_ref : (H+2P, W+2P, Cp)   f32   VMEM scratch: reflect-padded intermediate h
    """
    P = K // 2
    KK = K * K
    NP = (KK + 1) // 2
    HW = H * W
    Cp = o_ref.shape[-1]

    def conv(src_ref, w_ref):
        # KxK conv as NP accumulated matmuls; two taps share one 2*Cp-deep
        # contraction so the MXU sees full-width (256) contractions on v6e/v7x.
        def tap(t):
            ky, kx = t // K, t % K
            v = src_ref[ky:ky + H, kx:kx + W, :].astype(jnp.bfloat16)
            return v.reshape(HW, Cp)

        acc = jnp.zeros((HW, Cp), jnp.float32)
        for p in range(NP):
            t0 = 2 * p
            t1 = min(2 * p + 1, KK - 1)        # odd KK: dummy tap, zero weights
            v = jnp.concatenate([tap(t0), tap(t1)], axis=-1)    # (HW, 2*Cp) bf16
            acc = acc + jnp.dot(v, w_ref[p], preferred_element_type=jnp.float32)
        return acc

    def instance_norm(y, g, b):
        # Single-pass sum / sum-of-squares; biased variance (PyTorch InstanceNorm2d).
        inv_n = 1.0 / HW
        mean = jnp.sum(y, axis=0, keepdims=True) * inv_n
        var = jnp.sum(y * y, axis=0, keepdims=True) * inv_n - mean * mean
        var = jnp.maximum(var, 0.0)          # guard tiny negative from cancellation
        inv = lax.rsqrt(var + EPS)           # EUP
        return (y - mean) * (inv * g) + b

    # ---- conv1 -> InstanceNorm -> ReLU (conv bias is a no-op under IN) ----
    y1 = conv(xp_ref, w1_ref)
    h = jnp.maximum(instance_norm(y1, g1_ref[...], b1_ref[...]), 0.0)

    # ---- rebuild reflect-padded h as a value; single dense store to scratch ----
    h3 = h.reshape(H, W, Cp)
    top = [h3[P - r:P - r + 1] for r in range(P)]          # padded row r <- row P-r
    bot = [h3[H - 2 - i:H - 1 - i] for i in range(P)]      # padded row H+P+i <- H-2-i
    rows = jnp.concatenate(top + [h3] + bot, axis=0) if P else h3
    left = [rows[:, P - r:P - r + 1] for r in range(P)]
    right = [rows[:, W - 2 - i:W - 1 - i] for i in range(P)]
    hp = jnp.concatenate(left + [rows] + right, axis=1) if P else rows
    hp_ref[...] = hp                                        # (Hp, Wp, Cp) dense store

    # ---- conv2 -> InstanceNorm -> + residual (residual stays f32) ----
    y2 = instance_norm(conv(hp_ref, w2_ref), g2_ref[...], b2_ref[...])
    x_res = xp_ref[P:H + P, P:W + P, :].reshape(HW, Cp)     # original x, f32
    o_ref[...] = y2 + x_res


# --------------------------------- wrapper ---------------------------------- #
def residual_block(x_nchw, params):
    """Forward of ResidualBlock: out = IN(conv2(relu(IN(conv1(x))))) + x (NCHW)."""
    x = jnp.transpose(x_nchw, (0, 2, 3, 1)).astype(jnp.float32)   # NCHW -> NHWC
    B, H, W, C = x.shape
    K = params["w1"].shape[0]
    P = K // 2
    KK = K * K
    NP = (KK + 1) // 2
    Cp = _round_up(max(C, LANE), LANE)        # lane-dense channel dim
    HW = H * W
    Hp, Wp = H + 2 * P, W + 2 * P

    def pad_c(a, axes):
        pads = [(0, 0)] * a.ndim
        for ax in axes:
            pads[ax] = (0, Cp - a.shape[ax])
        return jnp.pad(a, pads)

    # Glue (cheap, 1-pixel halo only): channel zero-pad + spatial reflect pad.
    xp = jnp.pad(pad_c(x, (3,)), ((0, 0), (P, P), (P, P), (0, 0)), mode="reflect")

    # Weights as tap-PAIR (2*Cp, Cp) matrices in bf16 (odd tap count -> zero tap).
    def prep_w(w):
        wf = pad_c(w, (2, 3)).reshape(KK, Cp, Cp)
        if KK % 2:
            wf = jnp.concatenate([wf, jnp.zeros((1, Cp, Cp), wf.dtype)], axis=0)
        return wf.reshape(NP, 2 * Cp, Cp).astype(jnp.bfloat16)

    w1 = prep_w(params["w1"])
    w2 = prep_w(params["w2"])
    g1 = pad_c(params["g1"].reshape(1, C), (1,))
    b1 = pad_c(params["be1"].reshape(1, C), (1,))
    g2 = pad_c(params["g2"].reshape(1, C), (1,))
    b2 = pad_c(params["be2"].reshape(1, C), (1,))
    # NOTE: conv biases params["b1"]/params["b2"] are intentionally NOT used in the
    # kernel: InstanceNorm removes any per-channel constant, so they are a no-op.

    kernel = functools.partial(_residual_block_kernel, H=H, W=W, K=K)

    # Rough VMEM budget (double-buffered input/output, resident weights, scratch).
    est = (2 * Hp * Wp * Cp * 4            # xp blocks
           + 2 * NP * 2 * Cp * Cp * 2      # weights (both convs, bf16)
           + 2 * HW * Cp * 4               # output blocks
           + Hp * Wp * Cp * 4              # hp scratch
           + 8 * HW * Cp * 4)              # working values (acc, h, v, ...)
    vmem_limit = int(min(max(est + (8 << 20), 32 << 20), 56 << 20))

    out = pl.pallas_call(
        kernel,
        out_shape=jax.ShapeDtypeStruct((B, HW, Cp), jnp.float32),
        grid=(B,),
        in_specs=[
            pl.BlockSpec((pl.Squeezed(), Hp, Wp, Cp), lambda b: (b, 0, 0, 0)),
            pl.BlockSpec((NP, 2 * Cp, Cp), lambda b: (0, 0, 0)),   # resident
            pl.BlockSpec((NP, 2 * Cp, Cp), lambda b: (0, 0, 0)),   # resident
            pl.BlockSpec((1, Cp), lambda b: (0, 0)),
            pl.BlockSpec((1, Cp), lambda b: (0, 0)),
            pl.BlockSpec((1, Cp), lambda b: (0, 0)),
            pl.BlockSpec((1, Cp), lambda b: (0, 0)),
        ],
        out_specs=pl.BlockSpec((pl.Squeezed(), HW, Cp), lambda b: (b, 0, 0)),
        scratch_shapes=[pltpu.VMEM((Hp, Wp, Cp), jnp.float32)],
        compiler_params=pltpu.CompilerParams(
            dimension_semantics=("parallel",),
            vmem_limit_bytes=vmem_limit,
        ),
    )(xp, w1, w2, g1, b1, g2, b2)

    out = out.reshape(B, H, W, Cp)[..., :C]
    return jnp.transpose(out, (0, 3, 1, 2))                       # NHWC -> NCHW


# ----------------------------- pure-JAX references --------------------------- #
def _ref_conv_in(x, w, b, gamma, beta, operand_dtype):
    K = w.shape[0]
    P = K // 2
    xp = jnp.pad(x, ((0, 0), (P, P), (P, P), (0, 0)), mode="reflect")
    y = lax.conv_general_dilated(
        xp.astype(operand_dtype), w.astype(operand_dtype),
        window_strides=(1, 1), padding="VALID",
        dimension_numbers=("NHWC", "HWIO", "NHWC"),
        preferred_element_type=jnp.float32)
    y = y + b
    mean = jnp.mean(y, axis=(1, 2), keepdims=True)
    var = jnp.mean(jnp.square(y - mean), axis=(1, 2), keepdims=True)
    return gamma * (y - mean) * lax.rsqrt(var + EPS) + beta


def residual_block_ref(x_nchw, params, operand_dtype=jnp.float32):
    x = jnp.transpose(x_nchw, (0, 2, 3, 1)).astype(jnp.float32)
    h = jnp.maximum(
        _ref_conv_in(x, params["w1"], params["b1"], params["g1"], params["be1"],
                     operand_dtype), 0.0)
    if operand_dtype != jnp.float32:
        h = h.astype(operand_dtype).astype(jnp.float32)   # mirror kernel rounding
    o = _ref_conv_in(h, params["w2"], params["b2"], params["g2"], params["be2"],
                     operand_dtype) + x
    return jnp.transpose(o, (0, 3, 1, 2))


# ----------------------------------- main ------------------------------------ #
if __name__ == "__main__":
    B, C, H, W, K = 2, 4, 16, 16, 3   # small synthetic shapes (module default C=128)

    key = jax.random.PRNGKey(0)
    ks = jax.random.split(key, 9)
    params = {
        # conv weights generated directly in HWIO layout (K, K, Cin, Cout)
        "w1": 0.1 * jax.random.normal(ks[0], (K, K, C, C), jnp.float32),
        "b1": 0.1 * jax.random.normal(ks[1], (C,), jnp.float32),
        "g1": 1.0 + 0.1 * jax.random.normal(ks[2], (C,), jnp.float32),
        "be1": 0.1 * jax.random.normal(ks[3], (C,), jnp.float32),
        "w2": 0.1 * jax.random.normal(ks[4], (K, K, C, C), jnp.float32),
        "b2": 0.1 * jax.random.normal(ks[5], (C,), jnp.float32),
        "g2": 1.0 + 0.1 * jax.random.normal(ks[6], (C,), jnp.float32),
        "be2": 0.1 * jax.random.normal(ks[7], (C,), jnp.float32),
    }
    x = jax.random.normal(ks[8], (B, C, H, W), jnp.float32)   # NCHW input

    out = jax.block_until_ready(residual_block(x, params))
    assert out.shape == (B, C, H, W), out.shape

    # Numerics-matched reference (bf16 conv operands, f32 accumulation/statistics).
    ref_bf16 = jax.block_until_ready(
        residual_block_ref(x, params, operand_dtype=jnp.bfloat16))
    err_b = float(jnp.max(jnp.abs(out - ref_bf16)))
    assert err_b < 1e-2, f"bf16-matched reference mismatch: {err_b}"

    # Full-f32 PyTorch-semantics reference (looser: kernel uses bf16 MXU operands).
    ref_f32 = jax.block_until_ready(residual_block_ref(x, params))
    err_f = float(jnp.max(jnp.abs(out - ref_f32)))
    assert err_f < 8e-2, f"f32 reference mismatch: {err_f}"

    print("KERNEL_OK")
</pallas_src>

<mosaic_0001>
module attributes {stable_mosaic.version = 11 : i64} {
  func.func @_residual_block_kernel(%arg0: i32, %arg1: memref<1x18x18x128xf32, #tpu.memory_space<vmem>>, %arg2: memref<5x256x128xbf16, #tpu.memory_space<vmem>>, %arg3: memref<5x256x128xbf16, #tpu.memory_space<vmem>>, %arg4: memref<1x128xf32, #tpu.memory_space<vmem>>, %arg5: memref<1x128xf32, #tpu.memory_space<vmem>>, %arg6: memref<1x128xf32, #tpu.memory_space<vmem>>, %arg7: memref<1x128xf32, #tpu.memory_space<vmem>>, %arg8: memref<1x256x128xf32, #tpu.memory_space<vmem>>, %arg9: memref<18x18x128xf32, #tpu.memory_space<vmem>>) attributes {dimension_semantics = [#tpu.dimension_semantics<parallel>], iteration_bounds = array<i64: 2>, scalar_prefetch = 0 : i64, scratch_operands = 1 : i64, tpu.core_type = #tpu.core_type<tc>, window_params = [{transform_indices = @transform_0, window_bounds = array<i64: 1, 18, 18, 128>}, {pipeline_mode = #tpu.pipeline_mode<synchronous>, transform_indices = @transform_1, window_bounds = array<i64: 5, 256, 128>}, {pipeline_mode = #tpu.pipeline_mode<synchronous>, transform_indices = @transform_2, window_bounds = array<i64: 5, 256, 128>}, {pipeline_mode = #tpu.pipeline_mode<synchronous>, transform_indices = @transform_3, window_bounds = array<i64: 1, 128>}, {pipeline_mode = #tpu.pipeline_mode<synchronous>, transform_indices = @transform_4, window_bounds = array<i64: 1, 128>}, {pipeline_mode = #tpu.pipeline_mode<synchronous>, transform_indices = @transform_5, window_bounds = array<i64: 1, 128>}, {pipeline_mode = #tpu.pipeline_mode<synchronous>, transform_indices = @transform_6, window_bounds = array<i64: 1, 128>}, {transform_indices = @transform_7, window_bounds = array<i64: 1, 256, 128>}]} {
    %cst = arith.constant 0.000000e+00 : f32
    %0 = vector.broadcast %cst : f32 to vector<256x128xf32>
    %c0 = arith.constant 0 : index
    %c0_0 = arith.constant 0 : index
    %c0_1 = arith.constant 0 : index
    %c0_2 = arith.constant 0 : index
    %1 = vector.load %arg1[%c0, %c0_0, %c0_1, %c0_2] : memref<1x18x18x128xf32, #tpu.memory_space<vmem>>, vector<1x16x16x128xf32>
    %2 = vector.shape_cast %1 : vector<1x16x16x128xf32> to vector<16x16x128xf32>
    %3 = arith.truncf %2 : vector<16x16x128xf32> to vector<16x16x128xbf16>
    %4 = vector.shape_cast %3 : vector<16x16x128xbf16> to vector<256x128xbf16>
    %c0_3 = arith.constant 0 : index
    %c0_4 = arith.constant 0 : index
    %c1 = arith.constant 1 : index
    %c0_5 = arith.constant 0 : index
    %5 = vector.load %arg1[%c0_3, %c0_4, %c1, %c0_5] : memref<1x18x18x128xf32, #tpu.memory_space<vmem>>, vector<1x16x16x128xf32>
    %6 = vector.shape_cast %5 : vector<1x16x16x128xf32> to vector<16x16x128xf32>
    %7 = arith.truncf %6 : vector<16x16x128xf32> to vector<16x16x128xbf16>
    %8 = vector.shape_cast %7 : vector<16x16x128xbf16> to vector<256x128xbf16>
    %9 = tpu.concatenate %4, %8 in 1 : vector<256x128xbf16>, vector<256x128xbf16> -> vector<256x256xbf16>
    %c0_6 = arith.constant 0 : index
    %c0_7 = arith.constant 0 : index
    %c0_8 = arith.constant 0 : index
    %10 = vector.load %arg2[%c0_6, %c0_7, %c0_8] : memref<5x256x128xbf16, #tpu.memory_space<vmem>>, vector<1x256x128xbf16>
    %11 = vector.shape_cast %10 : vector<1x256x128xbf16> to vector<256x128xbf16>
    %cst_9 = arith.constant dense<0.000000e+00> : vector<256x128xf32>
    %12 = tpu.matmul %9, %11, %cst_9 {dimension_numbers = #tpu.dot_dimension_numbers<[1], [0], [0], [1], [0, 0, 1, 1], [], []>} : vector<256x256xbf16>, vector<256x128xbf16>, vector<256x128xf32> -> vector<256x128xf32>
    %13 = arith.addf %0, %12 : vector<256x128xf32>
    %c0_10 = arith.constant 0 : index
    %c0_11 = arith.constant 0 : index
    %c2 = arith.constant 2 : index
    %c0_12 = arith.constant 0 : index
    %14 = vector.load %arg1[%c0_10, %c0_11, %c2, %c0_12] : memref<1x18x18x128xf32, #tpu.memory_space<vmem>>, vector<1x16x16x128xf32>
    %15 = vector.shape_cast %14 : vector<1x16x16x128xf32> to vector<16x16x128xf32>
    %16 = arith.truncf %15 : vector<16x16x128xf32> to vector<16x16x128xbf16>
    %17 = vector.shape_cast %16 : vector<16x16x128xbf16> to vector<256x128xbf16>
    %c0_13 = arith.constant 0 : index
    %c1_14 = arith.constant 1 : index
    %c0_15 = arith.constant 0 : index
    %c0_16 = arith.constant 0 : index
    %18 = vector.load %arg1[%c0_13, %c1_14, %c0_15, %c0_16] : memref<1x18x18x128xf32, #tpu.memory_space<vmem>>, vector<1x16x16x128xf32>
    %19 = vector.shape_cast %18 : vector<1x16x16x128xf32> to vector<16x16x128xf32>
    %20 = arith.truncf %19 : vector<16x16x128xf32> to vector<16x16x128xbf16>
    %21 = vector.shape_cast %20 : vector<16x16x128xbf16> to vector<256x128xbf16>
    %22 = tpu.concatenate %17, %21 in 1 : vector<256x128xbf16>, vector<256x128xbf16> -> vector<256x256xbf16>
    %c1_17 = arith.constant 1 : index
    %c0_18 = arith.constant 0 : index
    %c0_19 = arith.constant 0 : index
    %23 = vector.load %arg2[%c1_17, %c0_18, %c0_19] : memref<5x256x128xbf16, #tpu.memory_space<vmem>>, vector<1x256x128xbf16>
    %24 = vector.shape_cast %23 : vector<1x256x128xbf16> to vector<256x128xbf16>
    %cst_20 = arith.constant dense<0.000000e+00> : vector<256x128xf32>
    %25 = tpu.matmul %22, %24, %cst_20 {dimension_numbers = #tpu.dot_dimension_numbers<[1], [0], [0], [1], [0, 0, 1, 1], [], []>} : vector<256x256xbf16>, vector<256x128xbf16>, vector<256x128xf32> -> vector<256x128xf32>
    %26 = arith.addf %13, %25 : vector<256x128xf32>
    %c0_21 = arith.constant 0 : index
    %c1_22 = arith.constant 1 : index
    %c1_23 = arith.constant 1 : index
    %c0_24 = arith.constant 0 : index
    %27 = vector.load %arg1[%c0_21, %c1_22, %c1_23, %c0_24] : memref<1x18x18x128xf32, #tpu.memory_space<vmem>>, vector<1x16x16x128xf32>
    %28 = vector.shape_cast %27 : vector<1x16x16x128xf32> to vector<16x16x128xf32>
    %29 = arith.truncf %28 : vector<16x16x128xf32> to vector<16x16x128xbf16>
    %30 = vector.shape_cast %29 : vector<16x16x128xbf16> to vector<256x128xbf16>
    %c0_25 = arith.constant 0 : index
    %c1_26 = arith.constant 1 : index
    %c2_27 = arith.constant 2 : index
    %c0_28 = arith.constant 0 : index
    %31 = vector.load %arg1[%c0_25, %c1_26, %c2_27, %c0_28] : memref<1x18x18x128xf32, #tpu.memory_space<vmem>>, vector<1x16x16x128xf32>
    %32 = vector.shape_cast %31 : vector<1x16x16x128xf32> to vector<16x16x128xf32>
    %33 = arith.truncf %32 : vector<16x16x128xf32> to vector<16x16x128xbf16>
    %34 = vector.shape_cast %33 : vector<16x16x128xbf16> to vector<256x128xbf16>
    %35 = tpu.concatenate %30, %34 in 1 : vector<256x128xbf16>, vector<256x128xbf16> -> vector<256x256xbf16>
    %c2_29 = arith.constant 2 : index
    %c0_30 = arith.constant 0 : index
    %c0_31 = arith.constant 0 : index
    %36 = vector.load %arg2[%c2_29, %c0_30, %c0_31] : memref<5x256x128xbf16, #tpu.memory_space<vmem>>, vector<1x256x128xbf16>
    %37 = vector.shape_cast %36 : vector<1x256x128xbf16> to vector<256x128xbf16>
    %cst_32 = arith.constant dense<0.000000e+00> : vector<256x128xf32>
    %38 = tpu.matmul %35, %37, %cst_32 {dimension_numbers = #tpu.dot_dimension_numbers<[1], [0], [0], [1], [0, 0, 1, 1], [], []>} : vector<256x256xbf16>, vector<256x128xbf16>, vector<256x128xf32> -> vector<256x128xf32>
    %39 = arith.addf %26, %38 : vector<256x128xf32>
    %c0_33 = arith.constant 0 : index
    %c2_34 = arith.constant 2 : index
    %c0_35 = arith.constant 0 : index
    %c0_36 = arith.constant 0 : index
    %40 = vector.load %arg1[%c0_33, %c2_34, %c0_35, %c0_36] : memref<1x18x18x128xf32, #tpu.memory_space<vmem>>, vector<1x16x16x128xf32>
    %41 = vector.shape_cast %40 : vector<1x16x16x128xf32> to vector<16x16x128xf32>
    %42 = arith.truncf %41 : vector<16x16x128xf32> to vector<16x16x128xbf16>
    %43 = vector.shape_cast %42 : vector<16x16x128xbf16> to vector<256x128xbf16>
    %c0_37 = arith.constant 0 : index
    %c2_38 = arith.constant 2 : index
    %c1_39 = arith.constant 1 : index
    %c0_40 = arith.constant 0 : index
    %44 = vector.load %arg1[%c0_37, %c2_38, %c1_39, %c0_40] : memref<1x18x18x128xf32, #tpu.memory_space<vmem>>, vector<1x16x16x128xf32>
    %45 = vector.shape_cast %44 : vector<1x16x16x128xf32> to vector<16x16x128xf32>
    %46 = arith.truncf %45 : vector<16x16x128xf32> to vector<16x16x128xbf16>
    %47 = vector.shape_cast %46 : vector<16x16x128xbf16> to vector<256x128xbf16>
    %48 = tpu.concatenate %43, %47 in 1 : vector<256x128xbf16>, vector<256x128xbf16> -> vector<256x256xbf16>
    %c3 = arith.constant 3 : index
    %c0_41 = arith.constant 0 : index
    %c0_42 = arith.constant 0 : index
    %49 = vector.load %arg2[%c3, %c0_41, %c0_42] : memref<5x256x128xbf16, #tpu.memory_space<vmem>>, vector<1x256x128xbf16>
    %50 = vector.shape_cast %49 : vector<1x256x128xbf16> to vector<256x128xbf16>
    %cst_43 = arith.constant dense<0.000000e+00> : vector<256x128xf32>
    %51 = tpu.matmul %48, %50, %cst_43 {dimension_numbers = #tpu.dot_dimension_numbers<[1], [0], [0], [1], [0, 0, 1, 1], [], []>} : vector<256x256xbf16>, vector<256x128xbf16>, vector<256x128xf32> -> vector<256x128xf32>
    %52 = arith.addf %39, %51 : vector<256x128xf32>
    %c0_44 = arith.constant 0 : index
    %c2_45 = arith.constant 2 : index
    %c2_46 = arith.constant 2 : index
    %c0_47 = arith.constant 0 : index
    %53 = vector.load %arg1[%c0_44, %c2_45, %c2_46, %c0_47] : memref<1x18x18x128xf32, #tpu.memory_space<vmem>>, vector<1x16x16x128xf32>
    %54 = vector.shape_cast %53 : vector<1x16x16x128xf32> to vector<16x16x128xf32>
    %55 = arith.truncf %54 : vector<16x16x128xf32> to vector<16x16x128xbf16>
    %56 = vector.shape_cast %55 : vector<16x16x128xbf16> to vector<256x128xbf16>
    %c0_48 = arith.constant 0 : index
    %c2_49 = arith.constant 2 : index
    %c2_50 = arith.constant 2 : index
    %c0_51 = arith.constant 0 : index
    %57 = vector.load %arg1[%c0_48, %c2_49, %c2_50, %c0_51] : memref<1x18x18x128xf32, #tpu.memory_space<vmem>>, vector<1x16x16x128xf32>
    %58 = vector.shape_cast %57 : vector<1x16x16x128xf32> to vector<16x16x128xf32>
    %59 = arith.truncf %58 : vector<16x16x128xf32> to vector<16x16x128xbf16>
    %60 = vector.shape_cast %59 : vector<16x16x128xbf16> to vector<256x128xbf16>
    %61 = tpu.concatenate %56, %60 in 1 : vector<256x128xbf16>, vector<256x128xbf16> -> vector<256x256xbf16>
    %c4 = arith.constant 4 : index
    %c0_52 = arith.constant 0 : index
    %c0_53 = arith.constant 0 : index
    %62 = vector.load %arg2[%c4, %c0_52, %c0_53] : memref<5x256x128xbf16, #tpu.memory_space<vmem>>, vector<1x256x128xbf16>
    %63 = vector.shape_cast %62 : vector<1x256x128xbf16> to vector<256x128xbf16>
    %cst_54 = arith.constant dense<0.000000e+00> : vector<256x128xf32>
    %64 = tpu.matmul %61, %63, %cst_54 {dimension_numbers = #tpu.dot_dimension_numbers<[1], [0], [0], [1], [0, 0, 1, 1], [], []>} : vector<256x256xbf16>, vector<256x128xbf16>, vector<256x128xf32> -> vector<256x128xf32>
    %65 = arith.addf %52, %64 : vector<256x128xf32>
    %c0_55 = arith.constant 0 : index
    %c0_56 = arith.constant 0 : index
    %66 = vector.load %arg4[%c0_55, %c0_56] : memref<1x128xf32, #tpu.memory_space<vmem>>, vector<1x128xf32>
    %c0_57 = arith.constant 0 : index
    %c0_58 = arith.constant 0 : index
    %67 = vector.load %arg5[%c0_57, %c0_58] : memref<1x128xf32, #tpu.memory_space<vmem>>, vector<1x128xf32>
    %cst_59 = arith.constant dense<0.000000e+00> : vector<128xf32>
    %68 = vector.multi_reduction <add>, %65, %cst_59 [0] : vector<256x128xf32> to vector<128xf32>
    %69 = vector.shape_cast %68 : vector<128xf32> to vector<1x128xf32>
    %cst_60 = arith.constant 3.906250e-03 : f32
    %70 = vector.broadcast %cst_60 : f32 to vector<1x128xf32>
    %71 = arith.mulf %69, %70 : vector<1x128xf32>
    %72 = arith.mulf %65, %65 : vector<256x128xf32>
    %cst_61 = arith.constant dense<0.000000e+00> : vector<128xf32>
    %73 = vector.multi_reduction <add>, %72, %cst_61 [0] : vector<256x128xf32> to vector<128xf32>
    %74 = vector.shape_cast %73 : vector<128xf32> to vector<1x128xf32>
    %cst_62 = arith.constant 3.906250e-03 : f32
    %75 = vector.broadcast %cst_62 : f32 to vector<1x128xf32>
    %76 = arith.mulf %74, %75 : vector<1x128xf32>
    %77 = arith.mulf %71, %71 : vector<1x128xf32>
    %78 = arith.subf %76, %77 : vector<1x128xf32>
    %cst_63 = arith.constant 0.000000e+00 : f32
    %79 = vector.broadcast %cst_63 : f32 to vector<1x128xf32>
    %80 = arith.maximumf %78, %79 : vector<1x128xf32>
    %cst_64 = arith.constant 9.99999974E-6 : f32
    %81 = vector.broadcast %cst_64 : f32 to vector<1x128xf32>
    %82 = arith.addf %80, %81 : vector<1x128xf32>
    %83 = math.rsqrt %82 : vector<1x128xf32>
    %84 = vector.broadcast %71 : vector<1x128xf32> to vector<256x128xf32>
    %85 = arith.subf %65, %84 : vector<256x128xf32>
    %86 = arith.mulf %83, %66 : vector<1x128xf32>
    %87 = vector.broadcast %86 : vector<1x128xf32> to vector<256x128xf32>
    %88 = arith.mulf %85, %87 : vector<256x128xf32>
    %89 = vector.broadcast %67 : vector<1x128xf32> to vector<256x128xf32>
    %90 = arith.addf %88, %89 : vector<256x128xf32>
    %cst_65 = arith.constant 0.000000e+00 : f32
    %91 = vector.broadcast %cst_65 : f32 to vector<256x128xf32>
    %92 = arith.maximumf %90, %91 : vector<256x128xf32>
    %93 = vector.shape_cast %92 : vector<256x128xf32> to vector<16x16x128xf32>
    %94 = vector.extract_strided_slice %93 {offsets = [1, 0, 0], sizes = [1, 16, 128], strides = [1, 1, 1]} : vector<16x16x128xf32> to vector<1x16x128xf32>
    %95 = vector.extract_strided_slice %93 {offsets = [14, 0, 0], sizes = [1, 16, 128], strides = [1, 1, 1]} : vector<16x16x128xf32> to vector<1x16x128xf32>
    %96 = tpu.concatenate %94, %93, %95 in 0 : vector<1x16x128xf32>, vector<16x16x128xf32>, vector<1x16x128xf32> -> vector<18x16x128xf32>
    %97 = vector.extract_strided_slice %96 {offsets = [0, 1, 0], sizes = [18, 1, 128], strides = [1, 1, 1]} : vector<18x16x128xf32> to vector<18x1x128xf32>
    %98 = vector.extract_strided_slice %96 {offsets = [0, 14, 0], sizes = [18, 1, 128], strides = [1, 1, 1]} : vector<18x16x128xf32> to vector<18x1x128xf32>
    %99 = tpu.concatenate %97, %96, %98 in 1 : vector<18x1x128xf32>, vector<18x16x128xf32>, vector<18x1x128xf32> -> vector<18x18x128xf32>
    %c0_66 = arith.constant 0 : index
    %c0_67 = arith.constant 0 : index
    %c0_68 = arith.constant 0 : index
    %100 = vector.load %arg9[%c0_66, %c0_67, %c0_68] : memref<18x18x128xf32, #tpu.memory_space<vmem>>, vector<18x18x128xf32>
    tpu.vector_store %arg9[%c0_66, %c0_67, %c0_68], %99 {strides = array<i32>} : memref<18x18x128xf32, #tpu.memory_space<vmem>>, vector<18x18x128xf32>,
    %cst_69 = arith.constant 0.000000e+00 : f32
    %101 = vector.broadcast %cst_69 : f32 to vector<256x128xf32>
    %c0_70 = arith.constant 0 : index
    %c0_71 = arith.constant 0 : index
    %c0_72 = arith.constant 0 : index
    %102 = vector.load %arg9[%c0_70, %c0_71, %c0_72] : memref<18x18x128xf32, #tpu.memory_space<vmem>>, vector<16x16x128xf32>
    %103 = arith.truncf %102 : vector<16x16x128xf32> to vector<16x16x128xbf16>
    %104 = vector.shape_cast %103 : vector<16x16x128xbf16> to vector<256x128xbf16>
    %c0_73 = arith.constant 0 : index
    %c1_74 = arith.constant 1 : index
    %c0_75 = arith.constant 0 : index
    %105 = vector.load %arg9[%c0_73, %c1_74, %c0_75] : memref<18x18x128xf32, #tpu.memory_space<vmem>>, vector<16x16x128xf32>
    %106 = arith.truncf %105 : vector<16x16x128xf32> to vector<16x16x128xbf16>
    %107 = vector.shape_cast %106 : vector<16x16x128xbf16> to vector<256x128xbf16>
    %108 = tpu.concatenate %104, %107 in 1 : vector<256x128xbf16>, vector<256x128xbf16> -> vector<256x256xbf16>
    %c0_76 = arith.constant 0 : index
    %c0_77 = arith.constant 0 : index
    %c0_78 = arith.constant 0 : index
    %109 = vector.load %arg3[%c0_76, %c0_77, %c0_78] : memref<5x256x128xbf16, #tpu.memory_space<vmem>>, vector<1x256x128xbf16>
    %110 = vector.shape_cast %109 : vector<1x256x128xbf16> to vector<256x128xbf16>
    %cst_79 = arith.constant dense<0.000000e+00> : vector<256x128xf32>
    %111 = tpu.matmul %108, %110, %cst_79 {dimension_numbers = #tpu.dot_dimension_numbers<[1], [0], [0], [1], [0, 0, 1, 1], [], []>} : vector<256x256xbf16>, vector<256x128xbf16>, vector<256x128xf32> -> vector<256x128xf32>
    %112 = arith.addf %101, %111 : vector<256x128xf32>
    %c0_80 = arith.constant 0 : index
    %c2_81 = arith.constant 2 : index
    %c0_82 = arith.constant 0 : index
    %113 = vector.load %arg9[%c0_80, %c2_81, %c0_82] : memref<18x18x128xf32, #tpu.memory_space<vmem>>, vector<16x16x128xf32>
    %114 = arith.truncf %113 : vector<16x16x128xf32> to vector<16x16x128xbf16>
    %115 = vector.shape_cast %114 : vector<16x16x128xbf16> to vector<256x128xbf16>
    %c1_83 = arith.constant 1 : index
    %c0_84 = arith.constant 0 : index
    %c0_85 = arith.constant 0 : index
    %116 = vector.load %arg9[%c1_83, %c0_84, %c0_85] : memref<18x18x128xf32, #tpu.memory_space<vmem>>, vector<16x16x128xf32>
    %117 = arith.truncf %116 : vector<16x16x128xf32> to vector<16x16x128xbf16>
    %118 = vector.shape_cast %117 : vector<16x16x128xbf16> to vector<256x128xbf16>
    %119 = tpu.concatenate %115, %118 in 1 : vector<256x128xbf16>, vector<256x128xbf16> -> vector<256x256xbf16>
    %c1_86 = arith.constant 1 : index
    %c0_87 = arith.constant 0 : index
    %c0_88 = arith.constant 0 : index
    %120 = vector.load %arg3[%c1_86, %c0_87, %c0_88] : memref<5x256x128xbf16, #tpu.memory_space<vmem>>, vector<1x256x128xbf16>
    %121 = vector.shape_cast %120 : vector<1x256x128xbf16> to vector<256x128xbf16>
    %cst_89 = arith.constant dense<0.000000e+00> : vector<256x128xf32>
    %122 = tpu.matmul %119, %121, %cst_89 {dimension_numbers = #tpu.dot_dimension_numbers<[1], [0], [0], [1], [0, 0, 1, 1], [], []>} : vector<256x256xbf16>, vector<256x128xbf16>, vector<256x128xf32> -> vector<256x128xf32>
    %123 = arith.addf %112, %122 : vector<256x128xf32>
    %c1_90 = arith.constant 1 : index
    %c1_91 = arith.constant 1 : index
    %c0_92 = arith.constant 0 : index
    %124 = vector.load %arg9[%c1_90, %c1_91, %c0_92] : memref<18x18x128xf32, #tpu.memory_space<vmem>>, vector<16x16x128xf32>
    %125 = arith.truncf %124 : vector<16x16x128xf32> to vector<16x16x128xbf16>
    %126 = vector.shape_cast %125 : vector<16x16x128xbf16> to vector<256x128xbf16>
    %c1_93 = arith.constant 1 : index
    %c2_94 = arith.constant 2 : index
    %c0_95 = arith.constant 0 : index
    %127 = vector.load %arg9[%c1_93, %c2_94, %c0_95] : memref<18x18x128xf32, #tpu.memory_space<vmem>>, vector<16x16x128xf32>
    %128 = arith.truncf %127 : vector<16x16x128xf32> to vector<16x16x128xbf16>
    %129 = vector.shape_cast %128 : vector<16x16x128xbf16> to vector<256x128xbf16>
    %130 = tpu.concatenate %126, %129 in 1 : vector<256x128xbf16>, vector<256x128xbf16> -> vector<256x256xbf16>
    %c2_96 = arith.constant 2 : index
    %c0_97 = arith.constant 0 : index
    %c0_98 = arith.constant 0 : index
    %131 = vector.load %arg3[%c2_96, %c0_97, %c0_98] : memref<5x256x128xbf16, #tpu.memory_space<vmem>>, vector<1x256x128xbf16>
    %132 = vector.shape_cast %131 : vector<1x256x128xbf16> to vector<256x128xbf16>
    %cst_99 = arith.constant dense<0.000000e+00> : vector<256x128xf32>
    %133 = tpu.matmul %130, %132, %cst_99 {dimension_numbers = #tpu.dot_dimension_numbers<[1], [0], [0], [1], [0, 0, 1, 1], [], []>} : vector<256x256xbf16>, vector<256x128xbf16>, vector<256x128xf32> -> vector<256x128xf32>
    %134 = arith.addf %123, %133 : vector<256x128xf32>
    %c2_100 = arith.constant 2 : index
    %c0_101 = arith.constant 0 : index
    %c0_102 = arith.constant 0 : index
    %135 = vector.load %arg9[%c2_100, %c0_101, %c0_102] : memref<18x18x128xf32, #tpu.memory_space<vmem>>, vector<16x16x128xf32>
    %136 = arith.truncf %135 : vector<16x16x128xf32> to vector<16x16x128xbf16>
    %137 = vector.shape_cast %136 : vector<16x16x128xbf16> to vector<256x128xbf16>
    %c2_103 = arith.constant 2 : index
    %c1_104 = arith.constant 1 : index
    %c0_105 = arith.constant 0 : index
    %138 = vector.load %arg9[%c2_103, %c1_104, %c0_105] : memref<18x18x128xf32, #tpu.memory_space<vmem>>, vector<16x16x128xf32>
    %139 = arith.truncf %138 : vector<16x16x128xf32> to vector<16x16x128xbf16>
    %140 = vector.shape_cast %139 : vector<16x16x128xbf16> to vector<256x128xbf16>
    %141 = tpu.concatenate %137, %140 in 1 : vector<256x128xbf16>, vector<256x128xbf16> -> vector<256x256xbf16>
    %c3_106 = arith.constant 3 : index
    %c0_107 = arith.constant 0 : index
    %c0_108 = arith.constant 0 : index
    %142 = vector.load %arg3[%c3_106, %c0_107, %c0_108] : memref<5x256x128xbf16, #tpu.memory_space<vmem>>, vector<1x256x128xbf16>
    %143 = vector.shape_cast %142 : vector<1x256x128xbf16> to vector<256x128xbf16>
    %cst_109 = arith.constant dense<0.000000e+00> : vector<256x128xf32>
    %144 = tpu.matmul %141, %143, %cst_109 {dimension_numbers = #tpu.dot_dimension_numbers<[1], [0], [0], [1], [0, 0, 1, 1], [], []>} : vector<256x256xbf16>, vector<256x128xbf16>, vector<256x128xf32> -> vector<256x128xf32>
    %145 = arith.addf %134, %144 : vector<256x128xf32>
    %c2_110 = arith.constant 2 : index
    %c2_111 = arith.constant 2 : index
    %c0_112 = arith.constant 0 : index
    %146 = vector.load %arg9[%c2_110, %c2_111, %c0_112] : memref<18x18x128xf32, #tpu.memory_space<vmem>>, vector<16x16x128xf32>
    %147 = arith.truncf %146 : vector<16x16x128xf32> to vector<16x16x128xbf16>
    %148 = vector.shape_cast %147 : vector<16x16x128xbf16> to vector<256x128xbf16>
    %c2_113 = arith.constant 2 : index
    %c2_114 = arith.constant 2 : index
    %c0_115 = arith.constant 0 : index
    %149 = vector.load %arg9[%c2_113, %c2_114, %c0_115] : memref<18x18x128xf32, #tpu.memory_space<vmem>>, vector<16x16x128xf32>
    %150 = arith.truncf %149 : vector<16x16x128xf32> to vector<16x16x128xbf16>
    %151 = vector.shape_cast %150 : vector<16x16x128xbf16> to vector<256x128xbf16>
    %152 = tpu.concatenate %148, %151 in 1 : vector<256x128xbf16>, vector<256x128xbf16> -> vector<256x256xbf16>
    %c4_116 = arith.constant 4 : index
    %c0_117 = arith.constant 0 : index
    %c0_118 = arith.constant 0 : index
    %153 = vector.load %arg3[%c4_116, %c0_117, %c0_118] : memref<5x256x128xbf16, #tpu.memory_space<vmem>>, vector<1x256x128xbf16>
    %154 = vector.shape_cast %153 : vector<1x256x128xbf16> to vector<256x128xbf16>
    %cst_119 = arith.constant dense<0.000000e+00> : vector<256x128xf32>
    %155 = tpu.matmul %152, %154, %cst_119 {dimension_numbers = #tpu.dot_dimension_numbers<[1], [0], [0], [1], [0, 0, 1, 1], [], []>} : vector<256x256xbf16>, vector<256x128xbf16>, vector<256x128xf32> -> vector<256x128xf32>
    %156 = arith.addf %145, %155 : vector<256x128xf32>
    %c0_120 = arith.constant 0 : index
    %c0_121 = arith.constant 0 : index
    %157 = vector.load %arg6[%c0_120, %c0_121] : memref<1x128xf32, #tpu.memory_space<vmem>>, vector<1x128xf32>
    %c0_122 = arith.constant 0 : index
    %c0_123 = arith.constant 0 : index
    %158 = vector.load %arg7[%c0_122, %c0_123] : memref<1x128xf32, #tpu.memory_space<vmem>>, vector<1x128xf32>
    %cst_124 = arith.constant dense<0.000000e+00> : vector<128xf32>
    %159 = vector.multi_reduction <add>, %156, %cst_124 [0] : vector<256x128xf32> to vector<128xf32>
    %160 = vector.shape_cast %159 : vector<128xf32> to vector<1x128xf32>
    %cst_125 = arith.constant 3.906250e-03 : f32
    %161 = vector.broadcast %cst_125 : f32 to vector<1x128xf32>
    %162 = arith.mulf %160, %161 : vector<1x128xf32>
    %163 = arith.mulf %156, %156 : vector<256x128xf32>
    %cst_126 = arith.constant dense<0.000000e+00> : vector<128xf32>
    %164 = vector.multi_reduction <add>, %163, %cst_126 [0] : vector<256x128xf32> to vector<128xf32>
    %165 = vector.shape_cast %164 : vector<128xf32> to vector<1x128xf32>
    %cst_127 = arith.constant 3.906250e-03 : f32
    %166 = vector.broadcast %cst_127 : f32 to vector<1x128xf32>
    %167 = arith.mulf %165, %166 : vector<1x128xf32>
    %168 = arith.mulf %162, %162 : vector<1x128xf32>
    %169 = arith.subf %167, %168 : vector<1x128xf32>
    %cst_128 = arith.constant 0.000000e+00 : f32
    %170 = vector.broadcast %cst_128 : f32 to vector<1x128xf32>
    %171 = arith.maximumf %169, %170 : vector<1x128xf32>
    %cst_129 = arith.constant 9.99999974E-6 : f32
    %172 = vector.broadcast %cst_129 : f32 to vector<1x128xf32>
    %173 = arith.addf %171, %172 : vector<1x128xf32>
    %174 = math.rsqrt %173 : vector<1x128xf32>
    %175 = vector.broadcast %162 : vector<1x128xf32> to vector<256x128xf32>
    %176 = arith.subf %156, %175 : vector<256x128xf32>
    %177 = arith.mulf %174, %157 : vector<1x128xf32>
    %178 = vector.broadcast %177 : vector<1x128xf32> to vector<256x128xf32>
    %179 = arith.mulf %176, %178 : vector<256x128xf32>
    %180 = vector.broadcast %158 : vector<1x128xf32> to vector<256x128xf32>
    %181 = arith.addf %179, %180 : vector<256x128xf32>
    %c0_130 = arith.constant 0 : index
    %c1_131 = arith.constant 1 : index
    %c1_132 = arith.constant 1 : index
    %c0_133 = arith.constant 0 : index
    %182 = vector.load %arg1[%c0_130, %c1_131, %c1_132, %c0_133] : memref<1x18x18x128xf32, #tpu.memory_space<vmem>>, vector<1x16x16x128xf32>
    %183 = vector.shape_cast %182 : vector<1x16x16x128xf32> to vector<16x16x128xf32>
    %184 = vector.shape_cast %183 : vector<16x16x128xf32> to vector<256x128xf32>
    %185 = arith.addf %181, %184 : vector<256x128xf32>
    %c0_134 = arith.constant 0 : index
    %c0_135 = arith.constant 0 : index
    %c0_136 = arith.constant 0 : index
    %186 = vector.load %arg8[%c0_134, %c0_135, %c0_136] : memref<1x256x128xf32, #tpu.memory_space<vmem>>, vector<1x256x128xf32>
    %187 = vector.shape_cast %186 : vector<1x256x128xf32> to vector<256x128xf32>
    %188 = vector.shape_cast %185 : vector<256x128xf32> to vector<1x256x128xf32>
    tpu.vector_store %arg8[%c0_134, %c0_135, %c0_136], %188 {strides = array<i32>} : memref<1x256x128xf32, #tpu.memory_space<vmem>>, vector<1x256x128xf32>,
    return
  }
  func.func @transform_0(%arg0: i32) -> (i32, i32, i32, i32) {
    %c0_i32 = arith.constant 0 : i32
    %c0_i32_0 = arith.constant 0 : i32
    %c0_i32_1 = arith.constant 0 : i32
    %c0_i32_2 = arith.constant 0 : i32
    return %arg0, %c0_i32, %c0_i32_0, %c0_i32_1 : i32, i32, i32, i32
  }
  func.func @transform_1(%arg0: i32) -> (i32, i32, i32) {
    %c0_i32 = arith.constant 0 : i32
    %c0_i32_0 = arith.constant 0 : i32
    %c0_i32_1 = arith.constant 0 : i32
    %c0_i32_2 = arith.constant 0 : i32
    return %c0_i32, %c0_i32_0, %c0_i32_1 : i32, i32, i32
  }
  func.func @transform_2(%arg0: i32) -> (i32, i32, i32) {
    %c0_i32 = arith.constant 0 : i32
    %c0_i32_0 = arith.constant 0 : i32
    %c0_i32_1 = arith.constant 0 : i32
    %c0_i32_2 = arith.constant 0 : i32
    return %c0_i32, %c0_i32_0, %c0_i32_1 : i32, i32, i32
  }
  func.func @transform_3(%arg0: i32) -> (i32, i32) {
    %c0_i32 = arith.constant 0 : i32
    %c0_i32_0 = arith.constant 0 : i32
    %c0_i32_1 = arith.constant 0 : i32
    return %c0_i32, %c0_i32_0 : i32, i32
  }
  func.func @transform_4(%arg0: i32) -> (i32, i32) {
    %c0_i32 = arith.constant 0 : i32
    %c0_i32_0 = arith.constant 0 : i32
    %c0_i32_1 = arith.constant 0 : i32
    return %c0_i32, %c0_i32_0 : i32, i32
  }
  func.func @transform_5(%arg0: i32) -> (i32, i32) {
    %c0_i32 = arith.constant 0 : i32
    %c0_i32_0 = arith.constant 0 : i32
    %c0_i32_1 = arith.constant 0 : i32
    return %c0_i32, %c0_i32_0 : i32, i32
  }
  func.func @transform_6(%arg0: i32) -> (i32, i32) {
    %c0_i32 = arith.constant 0 : i32
    %c0_i32_0 = arith.constant 0 : i32
    %c0_i32_1 = arith.constant 0 : i32
    return %c0_i32, %c0_i32_0 : i32, i32
  }
  func.func @transform_7(%arg0: i32) -> (i32, i32, i32) {
    %c0_i32 = arith.constant 0 : i32
    %c0_i32_0 = arith.constant 0 : i32
    %c0_i32_1 = arith.constant 0 : i32
    return %arg0, %c0_i32, %c0_i32_0 : i32, i32, i32
  }
}

</mosaic_0001>

<llo_original>
// kernel: tpu_custom_call.1
$region0: #{tpu_custom_call.1}
  #allocation0 [shape = 'u32[]', space=smem, size = 0x4, offset = 0x4, fixed_abs, tag = 'smem constant byte address 0x4 - core index']
  #allocation1 [shape = 'u32[72,128]{1,0:T(1,128)}', space=vmem, size = 0x9000, scoped, tag = 'internal scratch']
  #allocation2 [shape = 'f32[18,18,128]{2,1,0:T(8,128)}', space=vmem, size = 0x36000, scoped, tag = 'scratch operand']
  %s0 = inlined_call_operand.vmem [shape: f32[2,18,18,128], index: 0, kind: input, shape index: {}]
  %s1 = inlined_call_operand.vmem [shape: bf16[5,256,128], index: 1, kind: input, shape index: {}]
  %s2 = inlined_call_operand.vmem [shape: bf16[5,256,128], index: 2, kind: input, shape index: {}]
  %s3 = inlined_call_operand.vmem [shape: f32[1,128], index: 3, kind: input, shape index: {}]
  %s4 = inlined_call_operand.vmem [shape: f32[1,128], index: 4, kind: input, shape index: {}]
  %s5 = inlined_call_operand.vmem [shape: f32[1,128], index: 5, kind: input, shape index: {}]
  %s6 = inlined_call_operand.vmem [shape: f32[1,128], index: 6, kind: input, shape index: {}]
  %s7 = inlined_call_operand.hbm [shape: f32[2,256,128], index: 7, kind: output, shape index: {}]
  %s8 = sld [smem:[#allocation0]]
  $region61: #{tpu_custom_call.1} parent=0
    _
  %s10 = ssub.s32 1, %s8
  %s11 = scalar_select 0, %s10, %s8
  $region1: #{tpu_custom_call.1} parent=0
    #allocation3 [shape = 'u8[262144]{0}', space=vmem, size = 0x40000, scoped, tag = 'output window, operand 0']
    #allocation4 [shape = 's32[2]{0}', space=sflag, size = 0x8, scoped, tag = 'scoped memory for tpu_custom_call.1']
    %12 = vsyncpa [#allocation4], 0
    %s13 = scalar_lea.sflag [#allocation4], 1
    %14 = vsyncpa %s13, 0
    loop: start=0, step=1, limit=4
    $region2: #{tpu_custom_call.1} parent=1 // loop_pre_header
      _
    $region3: #{tpu_custom_call.1} parent=1 // loop_header
      %s16 = sphi 0, %s20
      %p17 = scmp.ge.s32.totalorder %s16, 4
      %s26 = sphi 0, %s28
      %s29 = sphi 0, %s26
      %s30 = sphi 0, %s29
      %s46 = sphi 0, %s30
      %s50 = sphi 0, %s50
      %s52 = sphi 0, %s50
      %s53 = sphi 0, %s52
      %s67 = sphi 0, %s53
      %s71 = sphi 0, %s71
      %s73 = sphi 0, %s71
      %s74 = sphi 0, %s73
      %s88 = sphi 0, %s74
      %s92 = sphi 0, %s92
      %s94 = sphi 0, %s92
      %s95 = sphi 0, %s94
      %s109 = sphi 0, %s95
      %s113 = sphi 0, %s113
      %s115 = sphi 0, %s113
      %s116 = sphi 0, %s115
      %s130 = sphi 0, %s116
      %s134 = sphi 0, %s134
      %s136 = sphi 0, %s134
      %s137 = sphi 0, %s136
      %s151 = sphi 0, %s137
      %s155 = sphi 0, %s155
      %s157 = sphi 0, %s155
      %s158 = sphi 0, %s157
      %s172 = sphi 0, %s158
      %s178 = sphi 0, %s180
      %s181 = sphi 0, %s178
      %s182 = sphi 0, %s181
      %s198 = sphi 0, %s182
    $region4: #{tpu_custom_call.1} parent=1 // loop_header_branch
      %19 = sbr.rel (%p17) target = $region8
    $region5: #{tpu_custom_call.1} parent=1 // loop_body
      %s21 = ssub.s32 %s16, 1
      %s22 = ssub.s32 %s16, 2
      %s23 = sadd.s32 %s16, 1
      %s24 = ssub.s32 %s16, %s23
      %p25 = scmp.eq.s32.totalorder %s24, 0
      %s27 = sadd.s32 %s26, 1
      %s28 = scalar_select %p25, %s26, %s27
      %p31 = pneg %p25
      %p32 = scmp.eq.s32.totalorder %s16, 1
      %p33 = por %p31, %p32
      %p34 = scmp.ne.s32.totalorder %s26, %s29
      %p35 = scmp.eq.s32.totalorder %s16, 0
      %p36 = por %p34, %p35
      %p37 = scmp.ne.s32.totalorder %s26, %s29
      %p38 = scmp.eq.s32.totalorder %s21, 1
      %p39 = por %p37, %p38
      %p40 = scmp.ne.s32.totalorder %s29, %s30
      %p41 = scmp.eq.s32.totalorder %s21, 0
      %p42 = por %p40, %p41
      %p43 = scmp.ne.s32.totalorder %s29, %s30
      %p44 = scmp.eq.s32.totalorder %s22, 1
      %p45 = por %p43, %p44
      %p47 = scmp.ne.s32.totalorder %s30, %s46
      %p48 = scmp.eq.s32.totalorder %s22, 0
      %p49 = por %p47, %p48
      %s51 = sadd.s32 %s50, 1
      %p54 = scmp.eq.s32.totalorder %s16, 1
      %p55 = scmp.ne.s32.totalorder %s50, %s52
      %p56 = scmp.eq.s32.totalorder %s16, 0
      %p57 = por %p55, %p56
      %p58 = scmp.ne.s32.totalorder %s50, %s52
      %p59 = scmp.eq.s32.totalorder %s21, 1
      %p60 = por %p58, %p59
      %p61 = scmp.ne.s32.totalorder %s52, %s53
      %p62 = scmp.eq.s32.totalorder %s21, 0
      %p63 = por %p61, %p62
      %p64 = scmp.ne.s32.totalorder %s52, %s53
      %p65 = scmp.eq.s32.totalorder %s22, 1
      %p66 = por %p64, %p65
      %p68 = scmp.ne.s32.totalorder %s53, %s67
      %p69 = scmp.eq.s32.totalorder %s22, 0
      %p70 = por %p68, %p69
      %s72 = sadd.s32 %s71, 1
      %p75 = scmp.eq.s32.totalorder %s16, 1
      %p76 = scmp.ne.s32.totalorder %s71, %s73
      %p77 = scmp.eq.s32.totalorder %s16, 0
      %p78 = por %p76, %p77
      %p79 = scmp.ne.s32.totalorder %s71, %s73
      %p80 = scmp.eq.s32.totalorder %s21, 1
      %p81 = por %p79, %p80
      %p82 = scmp.ne.s32.totalorder %s73, %s74
      %p83 = scmp.eq.s32.totalorder %s21, 0
      %p84 = por %p82, %p83
      %p85 = scmp.ne.s32.totalorder %s73, %s74
      %p86 = scmp.eq.s32.totalorder %s22, 1
      %p87 = por %p85, %p86
      %p89 = scmp.ne.s32.totalorder %s74, %s88
      %p90 = scmp.eq.s32.totalorder %s22, 0
      %p91 = por %p89, %p90
      %s93 = sadd.s32 %s92, 1
      %p96 = scmp.eq.s32.totalorder %s16, 1
      %p97 = scmp.ne.s32.totalorder %s92, %s94
      %p98 = scmp.eq.s32.totalorder %s16, 0
      %p99 = por %p97, %p98
      %p100 = scmp.ne.s32.totalorder %s92, %s94
      %p101 = scmp.eq.s32.totalorder %s21, 1
      %p102 = por %p100, %p101
      %p103 = scmp.ne.s32.totalorder %s94, %s95
      %p104 = scmp.eq.s32.totalorder %s21, 0
      %p105 = por %p103, %p104
      %p106 = scmp.ne.s32.totalorder %s94, %s95
      %p107 = scmp.eq.s32.totalorder %s22, 1
      %p108 = por %p106, %p107
      %p110 = scmp.ne.s32.totalorder %s95, %s109
      %p111 = scmp.eq.s32.totalorder %s22, 0
      %p112 = por %p110, %p111
      %s114 = sadd.s32 %s113, 1
      %p117 = scmp.eq.s32.totalorder %s16, 1
      %p118 = scmp.ne.s32.totalorder %s113, %s115
      %p119 = scmp.eq.s32.totalorder %s16, 0
      %p120 = por %p118, %p119
      %p121 = scmp.ne.s32.totalorder %s113, %s115
      %p122 = scmp.eq.s32.totalorder %s21, 1
      %p123 = por %p121, %p122
      %p124 = scmp.ne.s32.totalorder %s115, %s116
      %p125 = scmp.eq.s32.totalorder %s21, 0
      %p126 = por %p124, %p125
      %p127 = scmp.ne.s32.totalorder %s115, %s116
      %p128 = scmp.eq.s32.totalorder %s22, 1
      %p129 = por %p127, %p128
      %p131 = scmp.ne.s32.totalorder %s116, %s130
      %p132 = scmp.eq.s32.totalorder %s22, 0
      %p133 = por %p131, %p132
      %s135 = sadd.s32 %s134, 1
      %p138 = scmp.eq.s32.totalorder %s16, 1
      %p139 = scmp.ne.s32.totalorder %s134, %s136
      %p140 = scmp.eq.s32.totalorder %s16, 0
      %p141 = por %p139, %p140
      %p142 = scmp.ne.s32.totalorder %s134, %s136
      %p143 = scmp.eq.s32.totalorder %s21, 1
      %p144 = por %p142, %p143
      %p145 = scmp.ne.s32.totalorder %s136, %s137
      %p146 = scmp.eq.s32.totalorder %s21, 0
      %p147 = por %p145, %p146
      %p148 = scmp.ne.s32.totalorder %s136, %s137
      %p149 = scmp.eq.s32.totalorder %s22, 1
      %p150 = por %p148, %p149
      %p152 = scmp.ne.s32.totalorder %s137, %s151
      %p153 = scmp.eq.s32.totalorder %s22, 0
      %p154 = por %p152, %p153
      %s156 = sadd.s32 %s155, 1
      %p159 = scmp.eq.s32.totalorder %s16, 1
      %p160 = scmp.ne.s32.totalorder %s155, %s157
      %p161 = scmp.eq.s32.totalorder %s16, 0
      %p162 = por %p160, %p161
      %p163 = scmp.ne.s32.totalorder %s155, %s157
      %p164 = scmp.eq.s32.totalorder %s21, 1
      %p165 = por %p163, %p164
      %p166 = scmp.ne.s32.totalorder %s157, %s158
      %p167 = scmp.eq.s32.totalorder %s21, 0
      %p168 = por %p166, %p167
      %p169 = scmp.ne.s32.totalorder %s157, %s158
      %p170 = scmp.eq.s32.totalorder %s22, 1
      %p171 = por %p169, %p170
      %p173 = scmp.ne.s32.totalorder %s158, %s172
      %p174 = scmp.eq.s32.totalorder %s22, 0
      %p175 = por %p173, %p174
      %s176 = ssub.s32 %s16, %s23
      %p177 = scmp.eq.s32.totalorder %s176, 0
      %s179 = sadd.s32 %s178, 1
      %s180 = scalar_select %p177, %s178, %s179
      %p183 = pneg %p177
      %p184 = scmp.eq.s32.totalorder %s16, 1
      %p185 = por %p183, %p184
      %p186 = scmp.ne.s32.totalorder %s178, %s181
      %p187 = scmp.eq.s32.totalorder %s16, 0
      %p188 = por %p186, %p187
      %p189 = scmp.ne.s32.totalorder %s178, %s181
      %p190 = scmp.eq.s32.totalorder %s21, 1
      %p191 = por %p189, %p190
      %p192 = scmp.ne.s32.totalorder %s181, %s182
      %p193 = scmp.eq.s32.totalorder %s21, 0
      %p194 = por %p192, %p193
      %p195 = scmp.ne.s32.totalorder %s181, %s182
      %p196 = scmp.eq.s32.totalorder %s22, 1
      %p197 = por %p195, %p196
      %p199 = scmp.ne.s32.totalorder %s182, %s198
      %p200 = scmp.eq.s32.totalorder %s22, 0
      %p201 = por %p199, %p200
      %p202 = scmp.le.s32.totalorder 1, %s16
      %p203 = scmp.lt.s32.totalorder %s16, 3
      %p204 = pnand %p202, %p203
      %p205 = pneg %p204
      // Predicated region
      $region9: #{tpu_custom_call.1} parent=5 // pred_check
        _
      $region10: #{tpu_custom_call.1} parent=5 // pred_check_branch
        %207 = sbr.rel (%p204) target = $region12
      $region11: #{tpu_custom_call.1} parent=5 // pred_region
        %s208 = ssub.s32 %s16, 1
        // Predicated region
        $region13: #{tpu_custom_call.1} parent=11 // pred_check
          %p209 = pneg %p63
        $region14: #{tpu_custom_call.1} parent=11 // pred_check_branch
          %211 = sbr.rel (%p209) target = $region16
        $region15: #{tpu_custom_call.1} parent=11 // pred_region
          _
        $region16: #{tpu_custom_call.1} parent=11 // pred_fallthru
          _
        // Predicated region
        $region17: #{tpu_custom_call.1} parent=11 // pred_check
          %p212 = pneg %p84
        $region18: #{tpu_custom_call.1} parent=11 // pred_check_branch
          %214 = sbr.rel (%p212) target = $region20
        $region19: #{tpu_custom_call.1} parent=11 // pred_region
          _
        $region20: #{tpu_custom_call.1} parent=11 // pred_fallthru
          _
        // Predicated region
        $region21: #{tpu_custom_call.1} parent=11 // pred_check
          %p215 = pneg %p105
        $region22: #{tpu_custom_call.1} parent=11 // pred_check_branch
          %217 = sbr.rel (%p215) target = $region24
        $region23: #{tpu_custom_call.1} parent=11 // pred_region
          _
        $region24: #{tpu_custom_call.1} parent=11 // pred_fallthru
          _
        // Predicated region
        $region25: #{tpu_custom_call.1} parent=11 // pred_check
          %p218 = pneg %p126
        $region26: #{tpu_custom_call.1} parent=11 // pred_check_branch
          %220 = sbr.rel (%p218) target = $region28
        $region27: #{tpu_custom_call.1} parent=11 // pred_region
          _
        $region28: #{tpu_custom_call.1} parent=11 // pred_fallthru
          _
        // Predicated region
        $region29: #{tpu_custom_call.1} parent=11 // pred_check
          %p221 = pneg %p147
        $region30: #{tpu_custom_call.1} parent=11 // pred_check_branch
          %223 = sbr.rel (%p221) target = $region32
        $region31: #{tpu_custom_call.1} parent=11 // pred_region
          _
        $region32: #{tpu_custom_call.1} parent=11 // pred_fallthru
          _
        // Predicated region
        $region33: #{tpu_custom_call.1} parent=11 // pred_check
          %p224 = pneg %p168
        $region34: #{tpu_custom_call.1} parent=11 // pred_check_branch
          %226 = sbr.rel (%p224) target = $region36
        $region35: #{tpu_custom_call.1} parent=11 // pred_region
          _
        $region36: #{tpu_custom_call.1} parent=11 // pred_fallthru
          _
      $region12: #{tpu_custom_call.1} parent=5 // pred_fallthru
        _
      %p227 = scmp.lt.s32.totalorder %s16, 2
      // Predicated region
      $region37: #{tpu_custom_call.1} parent=5 // pred_check
        %p228 = pneg %p227
      $region38: #{tpu_custom_call.1} parent=5 // pred_check_branch
        %230 = sbr.rel (%p228) target = $region40
      $region39: #{tpu_custom_call.1} parent=5 // pred_region
        // Predicated region
        $region41: #{tpu_custom_call.1} parent=39 // pred_check
          %p231 = pneg %p36
        $region42: #{tpu_custom_call.1} parent=39 // pred_check_branch
          %233 = sbr.rel (%p231) target = $region44
        $region43: #{tpu_custom_call.1} parent=39 // pred_region
          %p234 = scmp.lt.s32.totalorder %s16, 1
          %s235 = scalar_select %p234, %s16, 1
          %s236 = smul.addr %s235, 54
          %s237 = smul.addr %s236, 8
          %s238 = scalar_lea.vmem %s0, %s237
        $region44: #{tpu_custom_call.1} parent=39 // pred_fallthru
          _
      $region40: #{tpu_custom_call.1} parent=5 // pred_fallthru
        _
      %p239 = scmp.le.s32.totalorder 1, %s16
      %p240 = scmp.lt.s32.totalorder %s16, 3
      %p241 = pnand %p239, %p240
      %p242 = pneg %p241
      // Predicated region
      $region45: #{tpu_custom_call.1} parent=5 // pred_check
        _
      $region46: #{tpu_custom_call.1} parent=5 // pred_check_branch
        %244 = sbr.rel (%p241) target = $region48
      $region47: #{tpu_custom_call.1} parent=5 // pred_region
        %s245 = ssub.s32 %s16, 1
        %p246 = scmp.lt.s32.totalorder %s21, 1
        %s247 = scalar_select %p246, %s21, 1
        %s248 = smul.addr %s247, 54
        %s249 = smul.addr %s248, 8
        %s250 = scalar_lea.vmem %s0, %s249
        %p251 = pneg %p42
        %p252 = pneg %p39
        %p253 = pneg %p63
        %p254 = pneg %p60
        %p255 = pneg %p84
        %p256 = pneg %p81
        %p257 = pneg %p105
        %p258 = pneg %p102
        %p259 = pneg %p126
        %p260 = pneg %p123
        %p261 = pneg %p147
        %p262 = pneg %p144
        %p263 = pneg %p168
        %p264 = pneg %p165
        %p265 = pneg %p194
        %p266 = pneg %p191
        %s267 = sand.u32 %s181, 1
        %s268 = scalar_lea.sflag [#allocation4], %s267
        %s269 = sand.u32 %s181, 1
        %s270 = smul.addr %s269, 256
        %s271 = scalar_lea.vmem [#allocation3], %s270
        %p272 = scmp.lt.s32.totalorder %s21, 1
        %s273 = scalar_select %p272, %s21, 1
        %s274 = smul.addr %s273, 54
        %s275 = smul.addr %s274, 8
        %s276 = scalar_lea.vmem %s0, %s275
        %v277 = vld [vmem:[%s276] sm:$0xff]
        %v278 = vld [vmem:[%s276 + $0x8] sm:$0xff]
        %v279 = vld [vmem:[%s276 + $0x18] sm:$0xff]
        %v280 = vld [vmem:[%s276 + $0x20] sm:$0xff]
        %v281 = vld [vmem:[%s276 + $0x30] sm:$0xff]
        %v282 = vld [vmem:[%s276 + $0x38] sm:$0xff]
        %v283 = vld [vmem:[%s276 + $0x48] sm:$0xff]
        %v284 = vld [vmem:[%s276 + $0x50] sm:$0xff]
        %v285 = vld [vmem:[%s276 + $0x60] sm:$0xff]
        %v286 = vld [vmem:[%s276 + $0x68] sm:$0xff]
        %v287 = vld [vmem:[%s276 + $0x78] sm:$0xff]
        %v288 = vld [vmem:[%s276 + $0x80] sm:$0xff]
        %v289 = vld [vmem:[%s276 + $0x90] sm:$0xff]
        %v290 = vld [vmem:[%s276 + $0x98] sm:$0xff]
        %v291 = vld [vmem:[%s276 + $0xa8] sm:$0xff]
        %v292 = vld [vmem:[%s276 + $0xb0] sm:$0xff]
        %v293 = vld [vmem:[%s276 + $0xc0] sm:$0xff]
        %v294 = vld [vmem:[%s276 + $0xc8] sm:$0xff]
        %v295 = vld [vmem:[%s276 + $0xd8] sm:$0xff]
        %v296 = vld [vmem:[%s276 + $0xe0] sm:$0xff]
        %v297 = vld [vmem:[%s276 + $0xf0] sm:$0xff]
        %v298 = vld [vmem:[%s276 + $0xf8] sm:$0xff]
        %v299 = vld [vmem:[%s276 + $0x108] sm:$0xff]
        %v300 = vld [vmem:[%s276 + $0x110] sm:$0xff]
        %v301 = vld [vmem:[%s276 + $0x120] sm:$0xff]
        %v302 = vld [vmem:[%s276 + $0x128] sm:$0xff]
        %v303 = vld [vmem:[%s276 + $0x138] sm:$0xff]
        %v304 = vld [vmem:[%s276 + $0x140] sm:$0xff]
        %v305 = vld [vmem:[%s276 + $0x150] sm:$0xff]
        %v306 = vld [vmem:[%s276 + $0x158] sm:$0xff]
        %v307 = vld [vmem:[%s276 + $0x168] sm:$0xff]
        %v308 = vld [vmem:[%s276 + $0x170] sm:$0xff]
        %v309 = vpack.c.bf16 %v277, %v277
        %v310 = vpack.c.bf16 %v278, %v278
        %v311 = vpack.c.bf16 %v279, %v279
        %v312 = vpack.c.bf16 %v280, %v280
        %v313 = vpack.c.bf16 %v281, %v281
        %v314 = vpack.c.bf16 %v282, %v282
        %v315 = vpack.c.bf16 %v283, %v283
        %v316 = vpack.c.bf16 %v284, %v284
        %v317 = vpack.c.bf16 %v285, %v285
        %v318 = vpack.c.bf16 %v286, %v286
        %v319 = vpack.c.bf16 %v287, %v287
        %v320 = vpack.c.bf16 %v288, %v288
        %v321 = vpack.c.bf16 %v289, %v289
        %v322 = vpack.c.bf16 %v290, %v290
        %v323 = vpack.c.bf16 %v291, %v291
        %v324 = vpack.c.bf16 %v292, %v292
        %v325 = vpack.c.bf16 %v293, %v293
        %v326 = vpack.c.bf16 %v294, %v294
        %v327 = vpack.c.bf16 %v295, %v295
        %v328 = vpack.c.bf16 %v296, %v296
        %v329 = vpack.c.bf16 %v297, %v297
        %v330 = vpack.c.bf16 %v298, %v298
        %v331 = vpack.c.bf16 %v299, %v299
        %v332 = vpack.c.bf16 %v300, %v300
        %v333 = vpack.c.bf16 %v301, %v301
        %v334 = vpack.c.bf16 %v302, %v302
        %v335 = vpack.c.bf16 %v303, %v303
        %v336 = vpack.c.bf16 %v304, %v304
        %v337 = vpack.c.bf16 %v305, %v305
        %v338 = vpack.c.bf16 %v306, %v306
        %v339 = vpack.c.bf16 %v307, %v307
        %v340 = vpack.c.bf16 %v308, %v308
        %v341 = vld [vmem:[%s276 + $0x1] sm:$0xff]
        %v342 = vld [vmem:[%s276 + $0x9] sm:$0xff]
        %v343 = vld [vmem:[%s276 + $0x19] sm:$0xff]
        %v344 = vld [vmem:[%s276 + $0x21] sm:$0xff]
        %v345 = vld [vmem:[%s276 + $0x31] sm:$0xff]
        %v346 = vld [vmem:[%s276 + $0x39] sm:$0xff]
        %v347 = vld [vmem:[%s276 + $0x49] sm:$0xff]
        %v348 = vld [vmem:[%s276 + $0x51] sm:$0xff]
        %v349 = vld [vmem:[%s276 + $0x61] sm:$0xff]
        %v350 = vld [vmem:[%s276 + $0x69] sm:$0xff]
        %v351 = vld [vmem:[%s276 + $0x79] sm:$0xff]
        %v352 = vld [vmem:[%s276 + $0x81] sm:$0xff]
        %v353 = vld [vmem:[%s276 + $0x91] sm:$0xff]
        %v354 = vld [vmem:[%s276 + $0x99] sm:$0xff]
        %v355 = vld [vmem:[%s276 + $0xa9] sm:$0xff]
        %v356 = vld [vmem:[%s276 + $0xb1] sm:$0xff]
        %v357 = vld [vmem:[%s276 + $0xc1] sm:$0xff]
        %v358 = vld [vmem:[%s276 + $0xc9] sm:$0xff]
        %v359 = vld [vmem:[%s276 + $0xd9] sm:$0xff]
        %v360 = vld [vmem:[%s276 + $0xe1] sm:$0xff]
        %v361 = vld [vmem:[%s276 + $0xf1] sm:$0xff]
        %v362 = vld [vmem:[%s276 + $0xf9] sm:$0xff]
        %v363 = vld [vmem:[%s276 + $0x109] sm:$0xff]
        %v364 = vld [vmem:[%s276 + $0x111] sm:$0xff]
        %v365 = vld [vmem:[%s276 + $0x121] sm:$0xff]
        %v366 = vld [vmem:[%s276 + $0x129] sm:$0xff]
        %v367 = vld [vmem:[%s276 + $0x139] sm:$0xff]
        %v368 = vld [vmem:[%s276 + $0x141] sm:$0xff]
        %v369 = vld [vmem:[%s276 + $0x151] sm:$0xff]
        %v370 = vld [vmem:[%s276 + $0x159] sm:$0xff]
        %v371 = vld [vmem:[%s276 + $0x169] sm:$0xff]
        %v372 = vld [vmem:[%s276 + $0x171] sm:$0xff]
        %v373 = vpack.c.bf16 %v341, %v341
        %v374 = vpack.c.bf16 %v342, %v342
        %v375 = vpack.c.bf16 %v343, %v343
        %v376 = vpack.c.bf16 %v344, %v344
        %v377 = vpack.c.bf16 %v345, %v345
        %v378 = vpack.c.bf16 %v346, %v346
        %v379 = vpack.c.bf16 %v347, %v347
        %v380 = vpack.c.bf16 %v348, %v348
        %v381 = vpack.c.bf16 %v349, %v349
        %v382 = vpack.c.bf16 %v350, %v350
        %v383 = vpack.c.bf16 %v351, %v351
        %v384 = vpack.c.bf16 %v352, %v352
        %v385 = vpack.c.bf16 %v353, %v353
        %v386 = vpack.c.bf16 %v354, %v354
        %v387 = vpack.c.bf16 %v355, %v355
        %v388 = vpack.c.bf16 %v356, %v356
        %v389 = vpack.c.bf16 %v357, %v357
        %v390 = vpack.c.bf16 %v358, %v358
        %v391 = vpack.c.bf16 %v359, %v359
        %v392 = vpack.c.bf16 %v360, %v360
        %v393 = vpack.c.bf16 %v361, %v361
        %v394 = vpack.c.bf16 %v362, %v362
        %v395 = vpack.c.bf16 %v363, %v363
        %v396 = vpack.c.bf16 %v364, %v364
        %v397 = vpack.c.bf16 %v365, %v365
        %v398 = vpack.c.bf16 %v366, %v366
        %v399 = vpack.c.bf16 %v367, %v367
        %v400 = vpack.c.bf16 %v368, %v368
        %v401 = vpack.c.bf16 %v369, %v369
        %v402 = vpack.c.bf16 %v370, %v370
        %v403 = vpack.c.bf16 %v371, %v371
        %v404 = vpack.c.bf16 %v372, %v372
        %v437 = vunpack.c.l.b16 %v309
        %v438 = vunpack.c.l.b16 %v310
        %v439 = vunpack.c.l.b16 %v311
        %v440 = vunpack.c.l.b16 %v312
        %v441 = vunpack.c.l.b16 %v313
        %v442 = vunpack.c.l.b16 %v314
        %v443 = vunpack.c.l.b16 %v315
        %v444 = vunpack.c.l.b16 %v316
        %v445 = vunpack.c.l.b16 %v317
        %v446 = vunpack.c.l.b16 %v318
        %v447 = vunpack.c.l.b16 %v319
        %v448 = vunpack.c.l.b16 %v320
        %v449 = vunpack.c.l.b16 %v321
        %v450 = vunpack.c.l.b16 %v322
        %v451 = vunpack.c.l.b16 %v323
        %v452 = vunpack.c.l.b16 %v324
        %v453 = vunpack.c.l.b16 %v325
        %v454 = vunpack.c.l.b16 %v326
        %v455 = vunpack.c.l.b16 %v327
        %v456 = vunpack.c.l.b16 %v328
        %v457 = vunpack.c.l.b16 %v329
        %v458 = vunpack.c.l.b16 %v330
        %v459 = vunpack.c.l.b16 %v331
        %v460 = vunpack.c.l.b16 %v332
        %v461 = vunpack.c.l.b16 %v333
        %v462 = vunpack.c.l.b16 %v334
        %v463 = vunpack.c.l.b16 %v335
        %v464 = vunpack.c.l.b16 %v336
        %v465 = vunpack.c.l.b16 %v337
        %v466 = vunpack.c.l.b16 %v338
        %v467 = vunpack.c.l.b16 %v339
        %v468 = vunpack.c.l.b16 %v340
        %v469 = vpack.c.b16 %v438, %v437
        %v470 = vpack.c.b16 %v440, %v439
        %v471 = vpack.c.b16 %v442, %v441
        %v472 = vpack.c.b16 %v444, %v443
        %v473 = vpack.c.b16 %v446, %v445
        %v474 = vpack.c.b16 %v448, %v447
        %v475 = vpack.c.b16 %v450, %v449
        %v476 = vpack.c.b16 %v452, %v451
        %v477 = vpack.c.b16 %v454, %v453
        %v478 = vpack.c.b16 %v456, %v455
        %v479 = vpack.c.b16 %v458, %v457
        %v480 = vpack.c.b16 %v460, %v459
        %v481 = vpack.c.b16 %v462, %v461
        %v482 = vpack.c.b16 %v464, %v463
        %v483 = vpack.c.b16 %v466, %v465
        %v484 = vpack.c.b16 %v468, %v467
        %v533 = vunpack.c.l.b16 %v373
        %v534 = vunpack.c.l.b16 %v374
        %v535 = vunpack.c.l.b16 %v375
        %v536 = vunpack.c.l.b16 %v376
        %v537 = vunpack.c.l.b16 %v377
        %v538 = vunpack.c.l.b16 %v378
        %v539 = vunpack.c.l.b16 %v379
        %v540 = vunpack.c.l.b16 %v380
        %v541 = vunpack.c.l.b16 %v381
        %v542 = vunpack.c.l.b16 %v382
        %v543 = vunpack.c.l.b16 %v383
        %v544 = vunpack.c.l.b16 %v384
        %v545 = vunpack.c.l.b16 %v385
        %v546 = vunpack.c.l.b16 %v386
        %v547 = vunpack.c.l.b16 %v387
        %v548 = vunpack.c.l.b16 %v388
        %v549 = vunpack.c.l.b16 %v389
        %v550 = vunpack.c.l.b16 %v390
        %v551 = vunpack.c.l.b16 %v391
        %v552 = vunpack.c.l.b16 %v392
        %v553 = vunpack.c.l.b16 %v393
        %v554 = vunpack.c.l.b16 %v394
        %v555 = vunpack.c.l.b16 %v395
        %v556 = vunpack.c.l.b16 %v396
        %v557 = vunpack.c.l.b16 %v397
        %v558 = vunpack.c.l.b16 %v398
        %v559 = vunpack.c.l.b16 %v399
        %v560 = vunpack.c.l.b16 %v400
        %v561 = vunpack.c.l.b16 %v401
        %v562 = vunpack.c.l.b16 %v402
        %v563 = vunpack.c.l.b16 %v403
        %v564 = vunpack.c.l.b16 %v404
        %v565 = vpack.c.b16 %v534, %v533
        %v566 = vpack.c.b16 %v536, %v535
        %v567 = vpack.c.b16 %v538, %v537
        %v568 = vpack.c.b16 %v540, %v539
        %v569 = vpack.c.b16 %v542, %v541
        %v570 = vpack.c.b16 %v544, %v543
        %v571 = vpack.c.b16 %v546, %v545
        %v572 = vpack.c.b16 %v548, %v547
        %v573 = vpack.c.b16 %v550, %v549
        %v574 = vpack.c.b16 %v552, %v551
        %v575 = vpack.c.b16 %v554, %v553
        %v576 = vpack.c.b16 %v556, %v555
        %v577 = vpack.c.b16 %v558, %v557
        %v578 = vpack.c.b16 %v560, %v559
        %v579 = vpack.c.b16 %v562, %v561
        %v580 = vpack.c.b16 %v564, %v563
        %v597 = vld [vmem:[%s1] sm:$0xf]
        %v598 = vld [vmem:[%s1 + $0x4] sm:$0xf]
        %v599 = vld [vmem:[%s1 + $0x8] sm:$0xf]
        %v600 = vld [vmem:[%s1 + $0xc] sm:$0xf]
        %v601 = vld [vmem:[%s1 + $0x10] sm:$0xf]
        %v602 = vld [vmem:[%s1 + $0x14] sm:$0xf]
        %v603 = vld [vmem:[%s1 + $0x18] sm:$0xf]
        %v604 = vld [vmem:[%s1 + $0x1c] sm:$0xf]
        %v605 = vld [vmem:[%s1 + $0x20] sm:$0xf]
        %v606 = vld [vmem:[%s1 + $0x24] sm:$0xf]
        %v607 = vld [vmem:[%s1 + $0x28] sm:$0xf]
        %v608 = vld [vmem:[%s1 + $0x2c] sm:$0xf]
        %v609 = vld [vmem:[%s1 + $0x30] sm:$0xf]
        %v610 = vld [vmem:[%s1 + $0x34] sm:$0xf]
        %v611 = vld [vmem:[%s1 + $0x38] sm:$0xf]
        %v612 = vld [vmem:[%s1 + $0x3c] sm:$0xf]
        %v613 = vld [vmem:[%s1 + $0x40] sm:$0xf]
        %v614 = vld [vmem:[%s1 + $0x44] sm:$0xf]
        %v615 = vld [vmem:[%s1 + $0x48] sm:$0xf]
        %v616 = vld [vmem:[%s1 + $0x4c] sm:$0xf]
        %v617 = vld [vmem:[%s1 + $0x50] sm:$0xf]
        %v618 = vld [vmem:[%s1 + $0x54] sm:$0xf]
        %v619 = vld [vmem:[%s1 + $0x58] sm:$0xf]
        %v620 = vld [vmem:[%s1 + $0x5c] sm:$0xf]
        %v621 = vld [vmem:[%s1 + $0x60] sm:$0xf]
        %v622 = vld [vmem:[%s1 + $0x64] sm:$0xf]
        %v623 = vld [vmem:[%s1 + $0x68] sm:$0xf]
        %v624 = vld [vmem:[%s1 + $0x6c] sm:$0xf]
        %v625 = vld [vmem:[%s1 + $0x70] sm:$0xf]
        %v626 = vld [vmem:[%s1 + $0x74] sm:$0xf]
        %v627 = vld [vmem:[%s1 + $0x78] sm:$0xf]
        %v628 = vld [vmem:[%s1 + $0x7c] sm:$0xf]
        %v629 = vld [vmem:[%s276 + $0x2] sm:$0xff]
        %v630 = vld [vmem:[%s276 + $0xa] sm:$0xff]
        %v631 = vld [vmem:[%s276 + $0x1a] sm:$0xff]
        %v632 = vld [vmem:[%s276 + $0x22] sm:$0xff]
        %v633 = vld [vmem:[%s276 + $0x32] sm:$0xff]
        %v634 = vld [vmem:[%s276 + $0x3a] sm:$0xff]
        %v635 = vld [vmem:[%s276 + $0x4a] sm:$0xff]
        %v636 = vld [vmem:[%s276 + $0x52] sm:$0xff]
        %v637 = vld [vmem:[%s276 + $0x62] sm:$0xff]
        %v638 = vld [vmem:[%s276 + $0x6a] sm:$0xff]
        %v639 = vld [vmem:[%s276 + $0x7a] sm:$0xff]
        %v640 = vld [vmem:[%s276 + $0x82] sm:$0xff]
        %v641 = vld [vmem:[%s276 + $0x92] sm:$0xff]
        %v642 = vld [vmem:[%s276 + $0x9a] sm:$0xff]
        %v643 = vld [vmem:[%s276 + $0xaa] sm:$0xff]
        %v644 = vld [vmem:[%s276 + $0xb2] sm:$0xff]
        %v645 = vld [vmem:[%s276 + $0xc2] sm:$0xff]
        %v646 = vld [vmem:[%s276 + $0xca] sm:$0xff]
        %v647 = vld [vmem:[%s276 + $0xda] sm:$0xff]
        %v648 = vld [vmem:[%s276 + $0xe2] sm:$0xff]
        %v649 = vld [vmem:[%s276 + $0xf2] sm:$0xff]
        %v650 = vld [vmem:[%s276 + $0xfa] sm:$0xff]
        %v651 = vld [vmem:[%s276 + $0x10a] sm:$0xff]
        %v652 = vld [vmem:[%s276 + $0x112] sm:$0xff]
        %v653 = vld [vmem:[%s276 + $0x122] sm:$0xff]
        %v654 = vld [vmem:[%s276 + $0x12a] sm:$0xff]
        %v655 = vld [vmem:[%s276 + $0x13a] sm:$0xff]
        %v656 = vld [vmem:[%s276 + $0x142] sm:$0xff]
        %v657 = vld [vmem:[%s276 + $0x152] sm:$0xff]
        %v658 = vld [vmem:[%s276 + $0x15a] sm:$0xff]
        %v659 = vld [vmem:[%s276 + $0x16a] sm:$0xff]
        %v660 = vld [vmem:[%s276 + $0x172] sm:$0xff]
        %v661 = vpack.c.bf16 %v629, %v629
        %v662 = vpack.c.bf16 %v630, %v630
        %v663 = vpack.c.bf16 %v631, %v631
        %v664 = vpack.c.bf16 %v632, %v632
        %v665 = vpack.c.bf16 %v633, %v633
        %v666 = vpack.c.bf16 %v634, %v634
        %v667 = vpack.c.bf16 %v635, %v635
        %v668 = vpack.c.bf16 %v636, %v636
        %v669 = vpack.c.bf16 %v637, %v637
        %v670 = vpack.c.bf16 %v638, %v638
        %v671 = vpack.c.bf16 %v639, %v639
        %v672 = vpack.c.bf16 %v640, %v640
        %v673 = vpack.c.bf16 %v641, %v641
        %v674 = vpack.c.bf16 %v642, %v642
        %v675 = vpack.c.bf16 %v643, %v643
        %v676 = vpack.c.bf16 %v644, %v644
        %v677 = vpack.c.bf16 %v645, %v645
        %v678 = vpack.c.bf16 %v646, %v646
        %v679 = vpack.c.bf16 %v647, %v647
        %v680 = vpack.c.bf16 %v648, %v648
        %v681 = vpack.c.bf16 %v649, %v649
        %v682 = vpack.c.bf16 %v650, %v650
        %v683 = vpack.c.bf16 %v651, %v651
        %v684 = vpack.c.bf16 %v652, %v652
        %v685 = vpack.c.bf16 %v653, %v653
        %v686 = vpack.c.bf16 %v654, %v654
        %v687 = vpack.c.bf16 %v655, %v655
        %v688 = vpack.c.bf16 %v656, %v656
        %v689 = vpack.c.bf16 %v657, %v657
        %v690 = vpack.c.bf16 %v658, %v658
        %v691 = vpack.c.bf16 %v659, %v659
        %v692 = vpack.c.bf16 %v660, %v660
        %s693 = scalar_lea.vmem %s276, 24
        %v694 = vld [vmem:[%s693] sm:$0xff]
        %v695 = vld [vmem:[%s693 + $0x8] sm:$0xff]
        %v696 = vld [vmem:[%s693 + $0x18] sm:$0xff]
        %v697 = vld [vmem:[%s693 + $0x20] sm:$0xff]
        %v698 = vld [vmem:[%s693 + $0x30] sm:$0xff]
        %v699 = vld [vmem:[%s693 + $0x38] sm:$0xff]
        %v700 = vld [vmem:[%s693 + $0x48] sm:$0xff]
        %v701 = vld [vmem:[%s693 + $0x50] sm:$0xff]
        %v702 = vld [vmem:[%s693 + $0x60] sm:$0xff]
        %v703 = vld [vmem:[%s693 + $0x68] sm:$0xff]
        %v704 = vld [vmem:[%s693 + $0x78] sm:$0xff]
        %v705 = vld [vmem:[%s693 + $0x80] sm:$0xff]
        %v706 = vld [vmem:[%s693 + $0x90] sm:$0xff]
        %v707 = vld [vmem:[%s693 + $0x98] sm:$0xff]
        %v708 = vld [vmem:[%s693 + $0xa8] sm:$0xff]
        %v709 = vld [vmem:[%s693 + $0xb0] sm:$0xff]
        %v710 = vld [vmem:[%s693 + $0xc0] sm:$0xff]
        %v711 = vld [vmem:[%s693 + $0xc8] sm:$0xff]
        %v712 = vld [vmem:[%s693 + $0xd8] sm:$0xff]
        %v713 = vld [vmem:[%s693 + $0xe0] sm:$0xff]
        %v714 = vld [vmem:[%s693 + $0xf0] sm:$0xff]
        %v715 = vld [vmem:[%s693 + $0xf8] sm:$0xff]
        %v716 = vld [vmem:[%s693 + $0x108] sm:$0xff]
        %v717 = vld [vmem:[%s693 + $0x110] sm:$0xff]
        %v718 = vld [vmem:[%s693 + $0x120] sm:$0xff]
        %v719 = vld [vmem:[%s693 + $0x128] sm:$0xff]
        %v720 = vld [vmem:[%s693 + $0x138] sm:$0xff]
        %v721 = vld [vmem:[%s693 + $0x140] sm:$0xff]
        %v722 = vld [vmem:[%s693 + $0x150] sm:$0xff]
        %v723 = vld [vmem:[%s693 + $0x158] sm:$0xff]
        %v724 = vld [vmem:[%s693 + $0x168] sm:$0xff]
        %v725 = vld [vmem:[%s693 + $0x170] sm:$0xff]
        %v726 = vpack.c.bf16 %v694, %v694
        %v727 = vpack.c.bf16 %v695, %v695
        %v728 = vpack.c.bf16 %v696, %v696
        %v729 = vpack.c.bf16 %v697, %v697
        %v730 = vpack.c.bf16 %v698, %v698
        %v731 = vpack.c.bf16 %v699, %v699
        %v732 = vpack.c.bf16 %v700, %v700
        %v733 = vpack.c.bf16 %v701, %v701
        %v734 = vpack.c.bf16 %v702, %v702
        %v735 = vpack.c.bf16 %v703, %v703
        %v736 = vpack.c.bf16 %v704, %v704
        %v737 = vpack.c.bf16 %v705, %v705
        %v738 = vpack.c.bf16 %v706, %v706
        %v739 = vpack.c.bf16 %v707, %v707
        %v740 = vpack.c.bf16 %v708, %v708
        %v741 = vpack.c.bf16 %v709, %v709
        %v742 = vpack.c.bf16 %v710, %v710
        %v743 = vpack.c.bf16 %v711, %v711
        %v744 = vpack.c.bf16 %v712, %v712
        %v745 = vpack.c.bf16 %v713, %v713
        %v746 = vpack.c.bf16 %v714, %v714
        %v747 = vpack.c.bf16 %v715, %v715
        %v748 = vpack.c.bf16 %v716, %v716
        %v749 = vpack.c.bf16 %v717, %v717
        %v750 = vpack.c.bf16 %v718, %v718
        %v751 = vpack.c.bf16 %v719, %v719
        %v752 = vpack.c.bf16 %v720, %v720
        %v753 = vpack.c.bf16 %v721, %v721
        %v754 = vpack.c.bf16 %v722, %v722
        %v755 = vpack.c.bf16 %v723, %v723
        %v756 = vpack.c.bf16 %v724, %v724
        %v757 = vpack.c.bf16 %v725, %v725
        %v790 = vunpack.c.l.b16 %v661
        %v791 = vunpack.c.l.b16 %v662
        %v792 = vunpack.c.l.b16 %v663
        %v793 = vunpack.c.l.b16 %v664
        %v794 = vunpack.c.l.b16 %v665
        %v795 = vunpack.c.l.b16 %v666
        %v796 = vunpack.c.l.b16 %v667
        %v797 = vunpack.c.l.b16 %v668
        %v798 = vunpack.c.l.b16 %v669
        %v799 = vunpack.c.l.b16 %v670
        %v800 = vunpack.c.l.b16 %v671
        %v801 = vunpack.c.l.b16 %v672
        %v802 = vunpack.c.l.b16 %v673
        %v803 = vunpack.c.l.b16 %v674
        %v804 = vunpack.c.l.b16 %v675
        %v805 = vunpack.c.l.b16 %v676
        %v806 = vunpack.c.l.b16 %v677
        %v807 = vunpack.c.l.b16 %v678
        %v808 = vunpack.c.l.b16 %v679
        %v809 = vunpack.c.l.b16 %v680
        %v810 = vunpack.c.l.b16 %v681
        %v811 = vunpack.c.l.b16 %v682
        %v812 = vunpack.c.l.b16 %v683
        %v813 = vunpack.c.l.b16 %v684
        %v814 = vunpack.c.l.b16 %v685
        %v815 = vunpack.c.l.b16 %v686
        %v816 = vunpack.c.l.b16 %v687
        %v817 = vunpack.c.l.b16 %v688
        %v818 = vunpack.c.l.b16 %v689
        %v819 = vunpack.c.l.b16 %v690
        %v820 = vunpack.c.l.b16 %v691
        %v821 = vunpack.c.l.b16 %v692
        %v822 = vpack.c.b16 %v791, %v790
        %v823 = vpack.c.b16 %v793, %v792
        %v824 = vpack.c.b16 %v795, %v794
        %v825 = vpack.c.b16 %v797, %v796
        %v826 = vpack.c.b16 %v799, %v798
        %v827 = vpack.c.b16 %v801, %v800
        %v828 = vpack.c.b16 %v803, %v802
        %v829 = vpack.c.b16 %v805, %v804
        %v830 = vpack.c.b16 %v807, %v806
        %v831 = vpack.c.b16 %v809, %v808
        %v832 = vpack.c.b16 %v811, %v810
        %v833 = vpack.c.b16 %v813, %v812
        %v834 = vpack.c.b16 %v815, %v814
        %v835 = vpack.c.b16 %v817, %v816
        %v836 = vpack.c.b16 %v819, %v818
        %v837 = vpack.c.b16 %v821, %v820
        %v886 = vunpack.c.l.b16 %v726
        %v887 = vunpack.c.l.b16 %v727
        %v888 = vunpack.c.l.b16 %v728
        %v889 = vunpack.c.l.b16 %v729
        %v890 = vunpack.c.l.b16 %v730
        %v891 = vunpack.c.l.b16 %v731
        %v892 = vunpack.c.l.b16 %v732
        %v893 = vunpack.c.l.b16 %v733
        %v894 = vunpack.c.l.b16 %v734
        %v895 = vunpack.c.l.b16 %v735
        %v896 = vunpack.c.l.b16 %v736
        %v897 = vunpack.c.l.b16 %v737
        %v898 = vunpack.c.l.b16 %v738
        %v899 = vunpack.c.l.b16 %v739
        %v900 = vunpack.c.l.b16 %v740
        %v901 = vunpack.c.l.b16 %v741
        %v902 = vunpack.c.l.b16 %v742
        %v903 = vunpack.c.l.b16 %v743
        %v904 = vunpack.c.l.b16 %v744
        %v905 = vunpack.c.l.b16 %v745
        %v906 = vunpack.c.l.b16 %v746
        %v907 = vunpack.c.l.b16 %v747
        %v908 = vunpack.c.l.b16 %v748
        %v909 = vunpack.c.l.b16 %v749
        %v910 = vunpack.c.l.b16 %v750
        %v911 = vunpack.c.l.b16 %v751
        %v912 = vunpack.c.l.b16 %v752
        %v913 = vunpack.c.l.b16 %v753
        %v914 = vunpack.c.l.b16 %v754
        %v915 = vunpack.c.l.b16 %v755
        %v916 = vunpack.c.l.b16 %v756
        %v917 = vunpack.c.l.b16 %v757
        %v918 = vpack.c.b16 %v887, %v886
        %v919 = vpack.c.b16 %v889, %v888
        %v920 = vpack.c.b16 %v891, %v890
        %v921 = vpack.c.b16 %v893, %v892
        %v922 = vpack.c.b16 %v895, %v894
        %v923 = vpack.c.b16 %v897, %v896
        %v924 = vpack.c.b16 %v899, %v898
        %v925 = vpack.c.b16 %v901, %v900
        %v926 = vpack.c.b16 %v903, %v902
        %v927 = vpack.c.b16 %v905, %v904
        %v928 = vpack.c.b16 %v907, %v906
        %v929 = vpack.c.b16 %v909, %v908
        %v930 = vpack.c.b16 %v911, %v910
        %v931 = vpack.c.b16 %v913, %v912
        %v932 = vpack.c.b16 %v915, %v914
        %v933 = vpack.c.b16 %v917, %v916
        %s950 = scalar_lea.vmem %s1, 128
        %v951 = vld [vmem:[%s950] sm:$0xf]
        %v952 = vld [vmem:[%s950 + $0x4] sm:$0xf]
        %v953 = vld [vmem:[%s950 + $0x8] sm:$0xf]
        %v954 = vld [vmem:[%s950 + $0xc] sm:$0xf]
        %v955 = vld [vmem:[%s950 + $0x10] sm:$0xf]
        %v956 = vld [vmem:[%s950 + $0x14] sm:$0xf]
        %v957 = vld [vmem:[%s950 + $0x18] sm:$0xf]
        %v958 = vld [vmem:[%s950 + $0x1c] sm:$0xf]
        %v959 = vld [vmem:[%s950 + $0x20] sm:$0xf]
        %v960 = vld [vmem:[%s950 + $0x24] sm:$0xf]
        %v961 = vld [vmem:[%s950 + $0x28] sm:$0xf]
        %v962 = vld [vmem:[%s950 + $0x2c] sm:$0xf]
        %v963 = vld [vmem:[%s950 + $0x30] sm:$0xf]
        %v964 = vld [vmem:[%s950 + $0x34] sm:$0xf]
        %v965 = vld [vmem:[%s950 + $0x38] sm:$0xf]
        %v966 = vld [vmem:[%s950 + $0x3c] sm:$0xf]
        %v967 = vld [vmem:[%s950 + $0x40] sm:$0xf]
        %v968 = vld [vmem:[%s950 + $0x44] sm:$0xf]
        %v969 = vld [vmem:[%s950 + $0x48] sm:$0xf]
        %v970 = vld [vmem:[%s950 + $0x4c] sm:$0xf]
        %v971 = vld [vmem:[%s950 + $0x50] sm:$0xf]
        %v972 = vld [vmem:[%s950 + $0x54] sm:$0xf]
        %v973 = vld [vmem:[%s950 + $0x58] sm:$0xf]
        %v974 = vld [vmem:[%s950 + $0x5c] sm:$0xf]
        %v975 = vld [vmem:[%s950 + $0x60] sm:$0xf]
        %v976 = vld [vmem:[%s950 + $0x64] sm:$0xf]
        %v977 = vld [vmem:[%s950 + $0x68] sm:$0xf]
        %v978 = vld [vmem:[%s950 + $0x6c] sm:$0xf]
        %v979 = vld [vmem:[%s950 + $0x70] sm:$0xf]
        %v980 = vld [vmem:[%s950 + $0x74] sm:$0xf]
        %v981 = vld [vmem:[%s950 + $0x78] sm:$0xf]
        %v982 = vld [vmem:[%s950 + $0x7c] sm:$0xf]
        %v1015 = vunpack.c.l.b16 %v951
        %v1016 = vunpack.c.l.b16 %v952
        %v1017 = vunpack.c.l.b16 %v953
        %v1018 = vunpack.c.l.b16 %v954
        %v1019 = vunpack.c.l.b16 %v955
        %v1020 = vunpack.c.l.b16 %v956
        %v1021 = vunpack.c.l.b16 %v957
        %v1022 = vunpack.c.l.b16 %v958
        %v1023 = vunpack.c.l.b16 %v959
        %v1024 = vunpack.c.l.b16 %v960
        %v1025 = vunpack.c.l.b16 %v961
        %v1026 = vunpack.c.l.b16 %v962
        %v1027 = vunpack.c.l.b16 %v963
        %v1028 = vunpack.c.l.b16 %v964
        %v1029 = vunpack.c.l.b16 %v965
        %v1030 = vunpack.c.l.b16 %v966
        %v1031 = vunpack.c.l.b16 %v967
        %v1032 = vunpack.c.l.b16 %v968
        %v1033 = vunpack.c.l.b16 %v969
        %v1034 = vunpack.c.l.b16 %v970
        %v1035 = vunpack.c.l.b16 %v971
        %v1036 = vunpack.c.l.b16 %v972
        %v1037 = vunpack.c.l.b16 %v973
        %v1038 = vunpack.c.l.b16 %v974
        %v1039 = vunpack.c.l.b16 %v975
        %v1040 = vunpack.c.l.b16 %v976
        %v1041 = vunpack.c.l.b16 %v977
        %v1042 = vunpack.c.l.b16 %v978
        %v1043 = vunpack.c.l.b16 %v979
        %v1044 = vunpack.c.l.b16 %v980
        %v1045 = vunpack.c.l.b16 %v981
        %v1046 = vunpack.c.l.b16 %v982
        %v1047 = vpack.c.b16 %v1016, %v1015
        %v1048 = vpack.c.b16 %v1018, %v1017
        %v1049 = vpack.c.b16 %v1020, %v1019
        %v1050 = vpack.c.b16 %v1022, %v1021
        %v1051 = vpack.c.b16 %v1024, %v1023
        %v1052 = vpack.c.b16 %v1026, %v1025
        %v1053 = vpack.c.b16 %v1028, %v1027
        %v1054 = vpack.c.b16 %v1030, %v1029
        %v1055 = vpack.c.b16 %v1032, %v1031
        %v1056 = vpack.c.b16 %v1034, %v1033
        %v1057 = vpack.c.b16 %v1036, %v1035
        %v1058 = vpack.c.b16 %v1038, %v1037
        %v1059 = vpack.c.b16 %v1040, %v1039
        %v1060 = vpack.c.b16 %v1042, %v1041
        %v1061 = vpack.c.b16 %v1044, %v1043
        %v1062 = vpack.c.b16 %v1046, %v1045
        %1079 = vmatpush.bf16.msra.mxu0 %v1054
        %1080 = vmatpush.bf16.msra.mxu0 %v1053
        %1081 = vmatpush.bf16.msra.mxu0 %v1052
        %1082 = vmatpush.bf16.msra.mxu0 %v1051
        %1083 = vmatpush.bf16.msra.mxu0 %v1050
        %1084 = vmatpush.bf16.msra.mxu0 %v1049
        %1085 = vmatpush.bf16.msra.mxu0 %v1048
        %1086 = vmatpush.bf16.msra.mxu0 %v1047
        %1087 = vmatmul.bf16.gmra.mxu0 %v822
        %v1088 = vpop.f32.mrf.mxu0
        %v1089 = vadd.f32 0.0, %v1088
        %v1090 = vpop.f32.mrf.mxu0
        %v1091 = vadd.f32 0.0, %v1090
        %1092 = vmatmul.bf16.gmra.mxu0 %v823
        %v1093 = vpop.f32.mrf.mxu0
        %v1094 = vadd.f32 0.0, %v1093
        %v1095 = vpop.f32.mrf.mxu0
        %v1096 = vadd.f32 0.0, %v1095
        %1097 = vmatmul.bf16.gmra.mxu0 %v824
        %v1098 = vpop.f32.mrf.mxu0
        %v1099 = vadd.f32 0.0, %v1098
        %v1100 = vpop.f32.mrf.mxu0
        %v1101 = vadd.f32 0.0, %v1100
        %1102 = vmatmul.bf16.gmra.mxu0 %v825
        %v1103 = vpop.f32.mrf.mxu0
        %v1104 = vadd.f32 0.0, %v1103
        %v1105 = vpop.f32.mrf.mxu0
        %v1106 = vadd.f32 0.0, %v1105
        %1107 = vmatmul.bf16.gmra.mxu0 %v826
        %v1108 = vpop.f32.mrf.mxu0
        %v1109 = vadd.f32 0.0, %v1108
        %v1110 = vpop.f32.mrf.mxu0
        %v1111 = vadd.f32 0.0, %v1110
        %1112 = vmatmul.bf16.gmra.mxu0 %v827
        %v1113 = vpop.f32.mrf.mxu0
        %v1114 = vadd.f32 0.0, %v1113
        %v1115 = vpop.f32.mrf.mxu0
        %v1116 = vadd.f32 0.0, %v1115
        %1117 = vmatmul.bf16.gmra.mxu0 %v828
        %v1118 = vpop.f32.mrf.mxu0
        %v1119 = vadd.f32 0.0, %v1118
        %v1120 = vpop.f32.mrf.mxu0
        %v1121 = vadd.f32 0.0, %v1120
        %1122 = vmatmul.bf16.gmra.mxu0 %v829
        %v1123 = vpop.f32.mrf.mxu0
        %v1124 = vadd.f32 0.0, %v1123
        %v1125 = vpop.f32.mrf.mxu0
        %v1126 = vadd.f32 0.0, %v1125
        %1127 = vmatmul.bf16.gmra.mxu0 %v830
        %v1128 = vpop.f32.mrf.mxu0
        %v1129 = vadd.f32 0.0, %v1128
        %v1130 = vpop.f32.mrf.mxu0
        %v1131 = vadd.f32 0.0, %v1130
        %1132 = vmatmul.bf16.gmra.mxu0 %v831
        %v1133 = vpop.f32.mrf.mxu0
        %v1134 = vadd.f32 0.0, %v1133
        %v1135 = vpop.f32.mrf.mxu0
        %v1136 = vadd.f32 0.0, %v1135
        %1137 = vmatmul.bf16.gmra.mxu0 %v832
        %v1138 = vpop.f32.mrf.mxu0
        %v1139 = vadd.f32 0.0, %v1138
        %v1140 = vpop.f32.mrf.mxu0
        %v1141 = vadd.f32 0.0, %v1140
        %1142 = vmatmul.bf16.gmra.mxu0 %v833
        %v1143 = vpop.f32.mrf.mxu0
        %v1144 = vadd.f32 0.0, %v1143
        %v1145 = vpop.f32.mrf.mxu0
        %v1146 = vadd.f32 0.0, %v1145
        %1147 = vmatmul.bf16.gmra.mxu0 %v834
        %v1148 = vpop.f32.mrf.mxu0
        %v1149 = vadd.f32 0.0, %v1148
        %v1150 = vpop.f32.mrf.mxu0
        %v1151 = vadd.f32 0.0, %v1150
        %1152 = vmatmul.bf16.gmra.mxu0 %v835
        %v1153 = vpop.f32.mrf.mxu0
        %v1154 = vadd.f32 0.0, %v1153
        %v1155 = vpop.f32.mrf.mxu0
        %v1156 = vadd.f32 0.0, %v1155
        %1157 = vmatmul.bf16.gmra.mxu0 %v836
        %v1158 = vpop.f32.mrf.mxu0
        %v1159 = vadd.f32 0.0, %v1158
        %v1160 = vpop.f32.mrf.mxu0
        %v1161 = vadd.f32 0.0, %v1160
        %1162 = vmatmul.bf16.gmra.mxu0 %v837
        %v1163 = vpop.f32.mrf.mxu0
        %v1164 = vadd.f32 0.0, %v1163
        %v1165 = vpop.f32.mrf.mxu0
        %v1166 = vadd.f32 0.0, %v1165
        %1167 = vdwg.mxu0
        %1168 = vmatpush.bf16.msra.mxu0 %v1062
        %1169 = vmatpush.bf16.msra.mxu0 %v1061
        %1170 = vmatpush.bf16.msra.mxu0 %v1060
        %1171 = vmatpush.bf16.msra.mxu0 %v1059
        %1172 = vmatpush.bf16.msra.mxu0 %v1058
        %1173 = vmatpush.bf16.msra.mxu0 %v1057
        %1174 = vmatpush.bf16.msra.mxu0 %v1056
        %1175 = vmatpush.bf16.msra.mxu0 %v1055
        %1176 = vmatmul.bf16.gmra.mxu0 %v918
        %v1177 = vpop.f32.mrf.mxu0
        %v1178 = vadd.f32 %v1089, %v1177
        %v1179 = vpop.f32.mrf.mxu0
        %v1180 = vadd.f32 %v1091, %v1179
        %1181 = vmatmul.bf16.gmra.mxu0 %v919
        %v1182 = vpop.f32.mrf.mxu0
        %v1183 = vadd.f32 %v1094, %v1182
        %v1184 = vpop.f32.mrf.mxu0
        %v1185 = vadd.f32 %v1096, %v1184
        %1186 = vmatmul.bf16.gmra.mxu0 %v920
        %v1187 = vpop.f32.mrf.mxu0
        %v1188 = vadd.f32 %v1099, %v1187
        %v1189 = vpop.f32.mrf.mxu0
        %v1190 = vadd.f32 %v1101, %v1189
        %1191 = vmatmul.bf16.gmra.mxu0 %v921
        %v1192 = vpop.f32.mrf.mxu0
        %v1193 = vadd.f32 %v1104, %v1192
        %v1194 = vpop.f32.mrf.mxu0
        %v1195 = vadd.f32 %v1106, %v1194
        %1196 = vmatmul.bf16.gmra.mxu0 %v922
        %v1197 = vpop.f32.mrf.mxu0
        %v1198 = vadd.f32 %v1109, %v1197
        %v1199 = vpop.f32.mrf.mxu0
        %v1200 = vadd.f32 %v1111, %v1199
        %1201 = vmatmul.bf16.gmra.mxu0 %v923
        %v1202 = vpop.f32.mrf.mxu0
        %v1203 = vadd.f32 %v1114, %v1202
        %v1204 = vpop.f32.mrf.mxu0
        %v1205 = vadd.f32 %v1116, %v1204
        %1206 = vmatmul.bf16.gmra.mxu0 %v924
        %v1207 = vpop.f32.mrf.mxu0
        %v1208 = vadd.f32 %v1119, %v1207
        %v1209 = vpop.f32.mrf.mxu0
        %v1210 = vadd.f32 %v1121, %v1209
        %1211 = vmatmul.bf16.gmra.mxu0 %v925
        %v1212 = vpop.f32.mrf.mxu0
        %v1213 = vadd.f32 %v1124, %v1212
        %v1214 = vpop.f32.mrf.mxu0
        %v1215 = vadd.f32 %v1126, %v1214
        %1216 = vmatmul.bf16.gmra.mxu0 %v926
        %v1217 = vpop.f32.mrf.mxu0
        %v1218 = vadd.f32 %v1129, %v1217
        %v1219 = vpop.f32.mrf.mxu0
        %v1220 = vadd.f32 %v1131, %v1219
        %1221 = vmatmul.bf16.gmra.mxu0 %v927
        %v1222 = vpop.f32.mrf.mxu0
        %v1223 = vadd.f32 %v1134, %v1222
        %v1224 = vpop.f32.mrf.mxu0
        %v1225 = vadd.f32 %v1136, %v1224
        %1226 = vmatmul.bf16.gmra.mxu0 %v928
        %v1227 = vpop.f32.mrf.mxu0
        %v1228 = vadd.f32 %v1139, %v1227
        %v1229 = vpop.f32.mrf.mxu0
        %v1230 = vadd.f32 %v1141, %v1229
        %1231 = vmatmul.bf16.gmra.mxu0 %v929
        %v1232 = vpop.f32.mrf.mxu0
        %v1233 = vadd.f32 %v1144, %v1232
        %v1234 = vpop.f32.mrf.mxu0
        %v1235 = vadd.f32 %v1146, %v1234
        %1236 = vmatmul.bf16.gmra.mxu0 %v930
        %v1237 = vpop.f32.mrf.mxu0
        %v1238 = vadd.f32 %v1149, %v1237
        %v1239 = vpop.f32.mrf.mxu0
        %v1240 = vadd.f32 %v1151, %v1239
        %1241 = vmatmul.bf16.gmra.mxu0 %v931
        %v1242 = vpop.f32.mrf.mxu0
        %v1243 = vadd.f32 %v1154, %v1242
        %v1244 = vpop.f32.mrf.mxu0
        %v1245 = vadd.f32 %v1156, %v1244
        %1246 = vmatmul.bf16.gmra.mxu0 %v932
        %v1247 = vpop.f32.mrf.mxu0
        %v1248 = vadd.f32 %v1159, %v1247
        %v1249 = vpop.f32.mrf.mxu0
        %v1250 = vadd.f32 %v1161, %v1249
        %1251 = vmatmul.bf16.gmra.mxu0 %v933
        %v1252 = vpop.f32.mrf.mxu0
        %v1253 = vadd.f32 %v1164, %v1252
        %v1254 = vpop.f32.mrf.mxu0
        %v1255 = vadd.f32 %v1166, %v1254
        %1256 = vdwg.mxu0
        %v1289 = vunpack.c.l.b16 %v597
        %v1290 = vunpack.c.l.b16 %v598
        %v1291 = vunpack.c.l.b16 %v599
        %v1292 = vunpack.c.l.b16 %v600
        %v1293 = vunpack.c.l.b16 %v601
        %v1294 = vunpack.c.l.b16 %v602
        %v1295 = vunpack.c.l.b16 %v603
        %v1296 = vunpack.c.l.b16 %v604
        %v1297 = vunpack.c.l.b16 %v605
        %v1298 = vunpack.c.l.b16 %v606
        %v1299 = vunpack.c.l.b16 %v607
        %v1300 = vunpack.c.l.b16 %v608
        %v1301 = vunpack.c.l.b16 %v609
        %v1302 = vunpack.c.l.b16 %v610
        %v1303 = vunpack.c.l.b16 %v611
        %v1304 = vunpack.c.l.b16 %v612
        %v1305 = vunpack.c.l.b16 %v613
        %v1306 = vunpack.c.l.b16 %v614
        %v1307 = vunpack.c.l.b16 %v615
        %v1308 = vunpack.c.l.b16 %v616
        %v1309 = vunpack.c.l.b16 %v617
        %v1310 = vunpack.c.l.b16 %v618
        %v1311 = vunpack.c.l.b16 %v619
        %v1312 = vunpack.c.l.b16 %v620
        %v1313 = vunpack.c.l.b16 %v621
        %v1314 = vunpack.c.l.b16 %v622
        %v1315 = vunpack.c.l.b16 %v623
        %v1316 = vunpack.c.l.b16 %v624
        %v1317 = vunpack.c.l.b16 %v625
        %v1318 = vunpack.c.l.b16 %v626
        %v1319 = vunpack.c.l.b16 %v627
        %v1320 = vunpack.c.l.b16 %v628
        %v1321 = vpack.c.b16 %v1290, %v1289
        %v1322 = vpack.c.b16 %v1292, %v1291
        %v1323 = vpack.c.b16 %v1294, %v1293
        %v1324 = vpack.c.b16 %v1296, %v1295
        %v1325 = vpack.c.b16 %v1298, %v1297
        %v1326 = vpack.c.b16 %v1300, %v1299
        %v1327 = vpack.c.b16 %v1302, %v1301
        %v1328 = vpack.c.b16 %v1304, %v1303
        %v1329 = vpack.c.b16 %v1306, %v1305
        %v1330 = vpack.c.b16 %v1308, %v1307
        %v1331 = vpack.c.b16 %v1310, %v1309
        %v1332 = vpack.c.b16 %v1312, %v1311
        %v1333 = vpack.c.b16 %v1314, %v1313
        %v1334 = vpack.c.b16 %v1316, %v1315
        %v1335 = vpack.c.b16 %v1318, %v1317
        %v1336 = vpack.c.b16 %v1320, %v1319
        %1353 = vmatpush.bf16.msra.mxu0 %v1328
        %1354 = vmatpush.bf16.msra.mxu0 %v1327
        %1355 = vmatpush.bf16.msra.mxu0 %v1326
        %1356 = vmatpush.bf16.msra.mxu0 %v1325
        %1357 = vmatpush.bf16.msra.mxu0 %v1324
        %1358 = vmatpush.bf16.msra.mxu0 %v1323
        %1359 = vmatpush.bf16.msra.mxu0 %v1322
        %1360 = vmatpush.bf16.msra.mxu0 %v1321
        %1361 = vmatmul.bf16.gmra.mxu0 %v469
        %v1362 = vpop.f32.mrf.mxu0
        %v1363 = vadd.f32 %v1178, %v1362
        %v1364 = vpop.f32.mrf.mxu0
        %v1365 = vadd.f32 %v1180, %v1364
        %1366 = vmatmul.bf16.gmra.mxu0 %v470
        %v1367 = vpop.f32.mrf.mxu0
        %v1368 = vadd.f32 %v1183, %v1367
        %v1369 = vpop.f32.mrf.mxu0
        %v1370 = vadd.f32 %v1185, %v1369
        %1371 = vmatmul.bf16.gmra.mxu0 %v471
        %v1372 = vpop.f32.mrf.mxu0
        %v1373 = vadd.f32 %v1188, %v1372
        %v1374 = vpop.f32.mrf.mxu0
        %v1375 = vadd.f32 %v1190, %v1374
        %1376 = vmatmul.bf16.gmra.mxu0 %v472
        %v1377 = vpop.f32.mrf.mxu0
        %v1378 = vadd.f32 %v1193, %v1377
        %v1379 = vpop.f32.mrf.mxu0
        %v1380 = vadd.f32 %v1195, %v1379
        %1381 = vmatmul.bf16.gmra.mxu0 %v473
        %v1382 = vpop.f32.mrf.mxu0
        %v1383 = vadd.f32 %v1198, %v1382
        %v1384 = vpop.f32.mrf.mxu0
        %v1385 = vadd.f32 %v1200, %v1384
        %1386 = vmatmul.bf16.gmra.mxu0 %v474
        %v1387 = vpop.f32.mrf.mxu0
        %v1388 = vadd.f32 %v1203, %v1387
        %v1389 = vpop.f32.mrf.mxu0
        %v1390 = vadd.f32 %v1205, %v1389
        %1391 = vmatmul.bf16.gmra.mxu0 %v475
        %v1392 = vpop.f32.mrf.mxu0
        %v1393 = vadd.f32 %v1208, %v1392
        %v1394 = vpop.f32.mrf.mxu0
        %v1395 = vadd.f32 %v1210, %v1394
        %1396 = vmatmul.bf16.gmra.mxu0 %v476
        %v1397 = vpop.f32.mrf.mxu0
        %v1398 = vadd.f32 %v1213, %v1397
        %v1399 = vpop.f32.mrf.mxu0
        %v1400 = vadd.f32 %v1215, %v1399
        %1401 = vmatmul.bf16.gmra.mxu0 %v477
        %v1402 = vpop.f32.mrf.mxu0
        %v1403 = vadd.f32 %v1218, %v1402
        %v1404 = vpop.f32.mrf.mxu0
        %v1405 = vadd.f32 %v1220, %v1404
        %1406 = vmatmul.bf16.gmra.mxu0 %v478
        %v1407 = vpop.f32.mrf.mxu0
        %v1408 = vadd.f32 %v1223, %v1407
        %v1409 = vpop.f32.mrf.mxu0
        %v1410 = vadd.f32 %v1225, %v1409
        %1411 = vmatmul.bf16.gmra.mxu0 %v479
        %v1412 = vpop.f32.mrf.mxu0
        %v1413 = vadd.f32 %v1228, %v1412
        %v1414 = vpop.f32.mrf.mxu0
        %v1415 = vadd.f32 %v1230, %v1414
        %1416 = vmatmul.bf16.gmra.mxu0 %v480
        %v1417 = vpop.f32.mrf.mxu0
        %v1418 = vadd.f32 %v1233, %v1417
        %v1419 = vpop.f32.mrf.mxu0
        %v1420 = vadd.f32 %v1235, %v1419
        %1421 = vmatmul.bf16.gmra.mxu0 %v481
        %v1422 = vpop.f32.mrf.mxu0
        %v1423 = vadd.f32 %v1238, %v1422
        %v1424 = vpop.f32.mrf.mxu0
        %v1425 = vadd.f32 %v1240, %v1424
        %1426 = vmatmul.bf16.gmra.mxu0 %v482
        %v1427 = vpop.f32.mrf.mxu0
        %v1428 = vadd.f32 %v1243, %v1427
        %v1429 = vpop.f32.mrf.mxu0
        %v1430 = vadd.f32 %v1245, %v1429
        %1431 = vmatmul.bf16.gmra.mxu0 %v483
        %v1432 = vpop.f32.mrf.mxu0
        %v1433 = vadd.f32 %v1248, %v1432
        %v1434 = vpop.f32.mrf.mxu0
        %v1435 = vadd.f32 %v1250, %v1434
        %1436 = vmatmul.bf16.gmra.mxu0 %v484
        %v1437 = vpop.f32.mrf.mxu0
        %v1438 = vadd.f32 %v1253, %v1437
        %v1439 = vpop.f32.mrf.mxu0
        %v1440 = vadd.f32 %v1255, %v1439
        %1441 = vdwg.mxu0
        %1442 = vmatpush.bf16.msra.mxu0 %v1336
        %1443 = vmatpush.bf16.msra.mxu0 %v1335
        %1444 = vmatpush.bf16.msra.mxu0 %v1334
        %1445 = vmatpush.bf16.msra.mxu0 %v1333
        %1446 = vmatpush.bf16.msra.mxu0 %v1332
        %1447 = vmatpush.bf16.msra.mxu0 %v1331
        %1448 = vmatpush.bf16.msra.mxu0 %v1330
        %1449 = vmatpush.bf16.msra.mxu0 %v1329
        %1450 = vmatmul.bf16.gmra.mxu0 %v565
        %v1451 = vpop.f32.mrf.mxu0
        %v1452 = vadd.f32 %v1363, %v1451
        %v1453 = vpop.f32.mrf.mxu0
        %v1454 = vadd.f32 %v1365, %v1453
        %1455 = vmatmul.bf16.gmra.mxu0 %v566
        %v1456 = vpop.f32.mrf.mxu0
        %v1457 = vadd.f32 %v1368, %v1456
        %v1458 = vpop.f32.mrf.mxu0
        %v1459 = vadd.f32 %v1370, %v1458
        %1460 = vmatmul.bf16.gmra.mxu0 %v567
        %v1461 = vpop.f32.mrf.mxu0
        %v1462 = vadd.f32 %v1373, %v1461
        %v1463 = vpop.f32.mrf.mxu0
        %v1464 = vadd.f32 %v1375, %v1463
        %1465 = vmatmul.bf16.gmra.mxu0 %v568
        %v1466 = vpop.f32.mrf.mxu0
        %v1467 = vadd.f32 %v1378, %v1466
        %v1468 = vpop.f32.mrf.mxu0
        %v1469 = vadd.f32 %v1380, %v1468
        %1470 = vmatmul.bf16.gmra.mxu0 %v569
        %v1471 = vpop.f32.mrf.mxu0
        %v1472 = vadd.f32 %v1383, %v1471
        %v1473 = vpop.f32.mrf.mxu0
        %v1474 = vadd.f32 %v1385, %v1473
        %1475 = vmatmul.bf16.gmra.mxu0 %v570
        %v1476 = vpop.f32.mrf.mxu0
        %v1477 = vadd.f32 %v1388, %v1476
        %v1478 = vpop.f32.mrf.mxu0
        %v1479 = vadd.f32 %v1390, %v1478
        %1480 = vmatmul.bf16.gmra.mxu0 %v571
        %v1481 = vpop.f32.mrf.mxu0
        %v1482 = vadd.f32 %v1393, %v1481
        %v1483 = vpop.f32.mrf.mxu0
        %v1484 = vadd.f32 %v1395, %v1483
        %1485 = vmatmul.bf16.gmra.mxu0 %v572
        %v1486 = vpop.f32.mrf.mxu0
        %v1487 = vadd.f32 %v1398, %v1486
        %v1488 = vpop.f32.mrf.mxu0
        %v1489 = vadd.f32 %v1400, %v1488
        %1490 = vmatmul.bf16.gmra.mxu0 %v573
        %v1491 = vpop.f32.mrf.mxu0
        %v1492 = vadd.f32 %v1403, %v1491
        %v1493 = vpop.f32.mrf.mxu0
        %v1494 = vadd.f32 %v1405, %v1493
        %1495 = vmatmul.bf16.gmra.mxu0 %v574
        %v1496 = vpop.f32.mrf.mxu0
        %v1497 = vadd.f32 %v1408, %v1496
        %v1498 = vpop.f32.mrf.mxu0
        %v1499 = vadd.f32 %v1410, %v1498
        %1500 = vmatmul.bf16.gmra.mxu0 %v575
        %v1501 = vpop.f32.mrf.mxu0
        %v1502 = vadd.f32 %v1413, %v1501
        %v1503 = vpop.f32.mrf.mxu0
        %v1504 = vadd.f32 %v1415, %v1503
        %1505 = vmatmul.bf16.gmra.mxu0 %v576
        %v1506 = vpop.f32.mrf.mxu0
        %v1507 = vadd.f32 %v1418, %v1506
        %v1508 = vpop.f32.mrf.mxu0
        %v1509 = vadd.f32 %v1420, %v1508
        %1510 = vmatmul.bf16.gmra.mxu0 %v577
        %v1511 = vpop.f32.mrf.mxu0
        %v1512 = vadd.f32 %v1423, %v1511
        %v1513 = vpop.f32.mrf.mxu0
        %v1514 = vadd.f32 %v1425, %v1513
        %1515 = vmatmul.bf16.gmra.mxu0 %v578
        %v1516 = vpop.f32.mrf.mxu0
        %v1517 = vadd.f32 %v1428, %v1516
        %v1518 = vpop.f32.mrf.mxu0
        %v1519 = vadd.f32 %v1430, %v1518
        %1520 = vmatmul.bf16.gmra.mxu0 %v579
        %v1521 = vpop.f32.mrf.mxu0
        %v1522 = vadd.f32 %v1433, %v1521
        %v1523 = vpop.f32.mrf.mxu0
        %v1524 = vadd.f32 %v1435, %v1523
        %1525 = vmatmul.bf16.gmra.mxu0 %v580
        %v1526 = vpop.f32.mrf.mxu0
        %v1527 = vadd.f32 %v1438, %v1526
        %v1528 = vpop.f32.mrf.mxu0
        %v1529 = vadd.f32 %v1440, %v1528
        %1530 = vdwg.mxu0
        %v1531 = vld [vmem:[%s693 + $0x1] sm:$0xff]
        %v1532 = vld [vmem:[%s693 + $0x9] sm:$0xff]
        %v1533 = vld [vmem:[%s693 + $0x19] sm:$0xff]
        %v1534 = vld [vmem:[%s693 + $0x21] sm:$0xff]
        %v1535 = vld [vmem:[%s693 + $0x31] sm:$0xff]
        %v1536 = vld [vmem:[%s693 + $0x39] sm:$0xff]
        %v1537 = vld [vmem:[%s693 + $0x49] sm:$0xff]
        %v1538 = vld [vmem:[%s693 + $0x51] sm:$0xff]
        %v1539 = vld [vmem:[%s693 + $0x61] sm:$0xff]
        %v1540 = vld [vmem:[%s693 + $0x69] sm:$0xff]
        %v1541 = vld [vmem:[%s693 + $0x79] sm:$0xff]
        %v1542 = vld [vmem:[%s693 + $0x81] sm:$0xff]
        %v1543 = vld [vmem:[%s693 + $0x91] sm:$0xff]
        %v1544 = vld [vmem:[%s693 + $0x99] sm:$0xff]
        %v1545 = vld [vmem:[%s693 + $0xa9] sm:$0xff]
        %v1546 = vld [vmem:[%s693 + $0xb1] sm:$0xff]
        %v1547 = vld [vmem:[%s693 + $0xc1] sm:$0xff]
        %v1548 = vld [vmem:[%s693 + $0xc9] sm:$0xff]
        %v1549 = vld [vmem:[%s693 + $0xd9] sm:$0xff]
        %v1550 = vld [vmem:[%s693 + $0xe1] sm:$0xff]
        %v1551 = vld [vmem:[%s693 + $0xf1] sm:$0xff]
        %v1552 = vld [vmem:[%s693 + $0xf9] sm:$0xff]
        %v1553 = vld [vmem:[%s693 + $0x109] sm:$0xff]
        %v1554 = vld [vmem:[%s693 + $0x111] sm:$0xff]
        %v1555 = vld [vmem:[%s693 + $0x121] sm:$0xff]
        %v1556 = vld [vmem:[%s693 + $0x129] sm:$0xff]
        %v1557 = vld [vmem:[%s693 + $0x139] sm:$0xff]
        %v1558 = vld [vmem:[%s693 + $0x141] sm:$0xff]
        %v1559 = vld [vmem:[%s693 + $0x151] sm:$0xff]
        %v1560 = vld [vmem:[%s693 + $0x159] sm:$0xff]
        %v1561 = vld [vmem:[%s693 + $0x169] sm:$0xff]
        %v1562 = vld [vmem:[%s693 + $0x171] sm:$0xff]
        %v1563 = vpack.c.bf16 %v1531, %v1531
        %v1564 = vpack.c.bf16 %v1532, %v1532
        %v1565 = vpack.c.bf16 %v1533, %v1533
        %v1566 = vpack.c.bf16 %v1534, %v1534
        %v1567 = vpack.c.bf16 %v1535, %v1535
        %v1568 = vpack.c.bf16 %v1536, %v1536
        %v1569 = vpack.c.bf16 %v1537, %v1537
        %v1570 = vpack.c.bf16 %v1538, %v1538
        %v1571 = vpack.c.bf16 %v1539, %v1539
        %v1572 = vpack.c.bf16 %v1540, %v1540
        %v1573 = vpack.c.bf16 %v1541, %v1541
        %v1574 = vpack.c.bf16 %v1542, %v1542
        %v1575 = vpack.c.bf16 %v1543, %v1543
        %v1576 = vpack.c.bf16 %v1544, %v1544
        %v1577 = vpack.c.bf16 %v1545, %v1545
        %v1578 = vpack.c.bf16 %v1546, %v1546
        %v1579 = vpack.c.bf16 %v1547, %v1547
        %v1580 = vpack.c.bf16 %v1548, %v1548
        %v1581 = vpack.c.bf16 %v1549, %v1549
        %v1582 = vpack.c.bf16 %v1550, %v1550
        %v1583 = vpack.c.bf16 %v1551, %v1551
        %v1584 = vpack.c.bf16 %v1552, %v1552
        %v1585 = vpack.c.bf16 %v1553, %v1553
        %v1586 = vpack.c.bf16 %v1554, %v1554
        %v1587 = vpack.c.bf16 %v1555, %v1555
        %v1588 = vpack.c.bf16 %v1556, %v1556
        %v1589 = vpack.c.bf16 %v1557, %v1557
        %v1590 = vpack.c.bf16 %v1558, %v1558
        %v1591 = vpack.c.bf16 %v1559, %v1559
        %v1592 = vpack.c.bf16 %v1560, %v1560
        %v1593 = vpack.c.bf16 %v1561, %v1561
        %v1594 = vpack.c.bf16 %v1562, %v1562
        %v1595 = vld [vmem:[%s693 + $0x2] sm:$0xff]
        %v1596 = vld [vmem:[%s693 + $0xa] sm:$0xff]
        %v1597 = vld [vmem:[%s693 + $0x1a] sm:$0xff]
        %v1598 = vld [vmem:[%s693 + $0x22] sm:$0xff]
        %v1599 = vld [vmem:[%s693 + $0x32] sm:$0xff]
        %v1600 = vld [vmem:[%s693 + $0x3a] sm:$0xff]
        %v1601 = vld [vmem:[%s693 + $0x4a] sm:$0xff]
        %v1602 = vld [vmem:[%s693 + $0x52] sm:$0xff]
        %v1603 = vld [vmem:[%s693 + $0x62] sm:$0xff]
        %v1604 = vld [vmem:[%s693 + $0x6a] sm:$0xff]
        %v1605 = vld [vmem:[%s693 + $0x7a] sm:$0xff]
        %v1606 = vld [vmem:[%s693 + $0x82] sm:$0xff]
        %v1607 = vld [vmem:[%s693 + $0x92] sm:$0xff]
        %v1608 = vld [vmem:[%s693 + $0x9a] sm:$0xff]
        %v1609 = vld [vmem:[%s693 + $0xaa] sm:$0xff]
        %v1610 = vld [vmem:[%s693 + $0xb2] sm:$0xff]
        %v1611 = vld [vmem:[%s693 + $0xc2] sm:$0xff]
        %v1612 = vld [vmem:[%s693 + $0xca] sm:$0xff]
        %v1613 = vld [vmem:[%s693 + $0xda] sm:$0xff]
        %v1614 = vld [vmem:[%s693 + $0xe2] sm:$0xff]
        %v1615 = vld [vmem:[%s693 + $0xf2] sm:$0xff]
        %v1616 = vld [vmem:[%s693 + $0xfa] sm:$0xff]
        %v1617 = vld [vmem:[%s693 + $0x10a] sm:$0xff]
        %v1618 = vld [vmem:[%s693 + $0x112] sm:$0xff]
        %v1619 = vld [vmem:[%s693 + $0x122] sm:$0xff]
        %v1620 = vld [vmem:[%s693 + $0x12a] sm:$0xff]
        %v1621 = vld [vmem:[%s693 + $0x13a] sm:$0xff]
        %v1622 = vld [vmem:[%s693 + $0x142] sm:$0xff]
        %v1623 = vld [vmem:[%s693 + $0x152] sm:$0xff]
        %v1624 = vld [vmem:[%s693 + $0x15a] sm:$0xff]
        %v1625 = vld [vmem:[%s693 + $0x16a] sm:$0xff]
        %v1626 = vld [vmem:[%s693 + $0x172] sm:$0xff]
        %v1627 = vpack.c.bf16 %v1595, %v1595
        %v1628 = vpack.c.bf16 %v1596, %v1596
        %v1629 = vpack.c.bf16 %v1597, %v1597
        %v1630 = vpack.c.bf16 %v1598, %v1598
        %v1631 = vpack.c.bf16 %v1599, %v1599
        %v1632 = vpack.c.bf16 %v1600, %v1600
        %v1633 = vpack.c.bf16 %v1601, %v1601
        %v1634 = vpack.c.bf16 %v1602, %v1602
        %v1635 = vpack.c.bf16 %v1603, %v1603
        %v1636 = vpack.c.bf16 %v1604, %v1604
        %v1637 = vpack.c.bf16 %v1605, %v1605
        %v1638 = vpack.c.bf16 %v1606, %v1606
        %v1639 = vpack.c.bf16 %v1607, %v1607
        %v1640 = vpack.c.bf16 %v1608, %v1608
        %v1641 = vpack.c.bf16 %v1609, %v1609
        %v1642 = vpack.c.bf16 %v1610, %v1610
        %v1643 = vpack.c.bf16 %v1611, %v1611
        %v1644 = vpack.c.bf16 %v1612, %v1612
        %v1645 = vpack.c.bf16 %v1613, %v1613
        %v1646 = vpack.c.bf16 %v1614, %v1614
        %v1647 = vpack.c.bf16 %v1615, %v1615
        %v1648 = vpack.c.bf16 %v1616, %v1616
        %v1649 = vpack.c.bf16 %v1617, %v1617
        %v1650 = vpack.c.bf16 %v1618, %v1618
        %v1651 = vpack.c.bf16 %v1619, %v1619
        %v1652 = vpack.c.bf16 %v1620, %v1620
        %v1653 = vpack.c.bf16 %v1621, %v1621
        %v1654 = vpack.c.bf16 %v1622, %v1622
        %v1655 = vpack.c.bf16 %v1623, %v1623
        %v1656 = vpack.c.bf16 %v1624, %v1624
        %v1657 = vpack.c.bf16 %v1625, %v1625
        %v1658 = vpack.c.bf16 %v1626, %v1626
        %v1691 = vunpack.c.l.b16 %v1563
        %v1692 = vunpack.c.l.b16 %v1564
        %v1693 = vunpack.c.l.b16 %v1565
        %v1694 = vunpack.c.l.b16 %v1566
        %v1695 = vunpack.c.l.b16 %v1567
        %v1696 = vunpack.c.l.b16 %v1568
        %v1697 = vunpack.c.l.b16 %v1569
        %v1698 = vunpack.c.l.b16 %v1570
        %v1699 = vunpack.c.l.b16 %v1571
        %v1700 = vunpack.c.l.b16 %v1572
        %v1701 = vunpack.c.l.b16 %v1573
        %v1702 = vunpack.c.l.b16 %v1574
        %v1703 = vunpack.c.l.b16 %v1575
        %v1704 = vunpack.c.l.b16 %v1576
        %v1705 = vunpack.c.l.b16 %v1577
        %v1706 = vunpack.c.l.b16 %v1578
        %v1707 = vunpack.c.l.b16 %v1579
        %v1708 = vunpack.c.l.b16 %v1580
        %v1709 = vunpack.c.l.b16 %v1581
        %v1710 = vunpack.c.l.b16 %v1582
        %v1711 = vunpack.c.l.b16 %v1583
        %v1712 = vunpack.c.l.b16 %v1584
        %v1713 = vunpack.c.l.b16 %v1585
        %v1714 = vunpack.c.l.b16 %v1586
        %v1715 = vunpack.c.l.b16 %v1587
        %v1716 = vunpack.c.l.b16 %v1588
        %v1717 = vunpack.c.l.b16 %v1589
        %v1718 = vunpack.c.l.b16 %v1590
        %v1719 = vunpack.c.l.b16 %v1591
        %v1720 = vunpack.c.l.b16 %v1592
        %v1721 = vunpack.c.l.b16 %v1593
        %v1722 = vunpack.c.l.b16 %v1594
        %v1723 = vpack.c.b16 %v1692, %v1691
        %v1724 = vpack.c.b16 %v1694, %v1693
        %v1725 = vpack.c.b16 %v1696, %v1695
        %v1726 = vpack.c.b16 %v1698, %v1697
        %v1727 = vpack.c.b16 %v1700, %v1699
        %v1728 = vpack.c.b16 %v1702, %v1701
        %v1729 = vpack.c.b16 %v1704, %v1703
        %v1730 = vpack.c.b16 %v1706, %v1705
        %v1731 = vpack.c.b16 %v1708, %v1707
        %v1732 = vpack.c.b16 %v1710, %v1709
        %v1733 = vpack.c.b16 %v1712, %v1711
        %v1734 = vpack.c.b16 %v1714, %v1713
        %v1735 = vpack.c.b16 %v1716, %v1715
        %v1736 = vpack.c.b16 %v1718, %v1717
        %v1737 = vpack.c.b16 %v1720, %v1719
        %v1738 = vpack.c.b16 %v1722, %v1721
        %v1787 = vunpack.c.l.b16 %v1627
        %v1788 = vunpack.c.l.b16 %v1628
        %v1789 = vunpack.c.l.b16 %v1629
        %v1790 = vunpack.c.l.b16 %v1630
        %v1791 = vunpack.c.l.b16 %v1631
        %v1792 = vunpack.c.l.b16 %v1632
        %v1793 = vunpack.c.l.b16 %v1633
        %v1794 = vunpack.c.l.b16 %v1634
        %v1795 = vunpack.c.l.b16 %v1635
        %v1796 = vunpack.c.l.b16 %v1636
        %v1797 = vunpack.c.l.b16 %v1637
        %v1798 = vunpack.c.l.b16 %v1638
        %v1799 = vunpack.c.l.b16 %v1639
        %v1800 = vunpack.c.l.b16 %v1640
        %v1801 = vunpack.c.l.b16 %v1641
        %v1802 = vunpack.c.l.b16 %v1642
        %v1803 = vunpack.c.l.b16 %v1643
        %v1804 = vunpack.c.l.b16 %v1644
        %v1805 = vunpack.c.l.b16 %v1645
        %v1806 = vunpack.c.l.b16 %v1646
        %v1807 = vunpack.c.l.b16 %v1647
        %v1808 = vunpack.c.l.b16 %v1648
        %v1809 = vunpack.c.l.b16 %v1649
        %v1810 = vunpack.c.l.b16 %v1650
        %v1811 = vunpack.c.l.b16 %v1651
        %v1812 = vunpack.c.l.b16 %v1652
        %v1813 = vunpack.c.l.b16 %v1653
        %v1814 = vunpack.c.l.b16 %v1654
        %v1815 = vunpack.c.l.b16 %v1655
        %v1816 = vunpack.c.l.b16 %v1656
        %v1817 = vunpack.c.l.b16 %v1657
        %v1818 = vunpack.c.l.b16 %v1658
        %v1819 = vpack.c.b16 %v1788, %v1787
        %v1820 = vpack.c.b16 %v1790, %v1789
        %v1821 = vpack.c.b16 %v1792, %v1791
        %v1822 = vpack.c.b16 %v1794, %v1793
        %v1823 = vpack.c.b16 %v1796, %v1795
        %v1824 = vpack.c.b16 %v1798, %v1797
        %v1825 = vpack.c.b16 %v1800, %v1799
        %v1826 = vpack.c.b16 %v1802, %v1801
        %v1827 = vpack.c.b16 %v1804, %v1803
        %v1828 = vpack.c.b16 %v1806, %v1805
        %v1829 = vpack.c.b16 %v1808, %v1807
        %v1830 = vpack.c.b16 %v1810, %v1809
        %v1831 = vpack.c.b16 %v1812, %v1811
        %v1832 = vpack.c.b16 %v1814, %v1813
        %v1833 = vpack.c.b16 %v1816, %v1815
        %v1834 = vpack.c.b16 %v1818, %v1817
        %s1851 = scalar_lea.vmem %s1, 256
        %v1852 = vld [vmem:[%s1851] sm:$0xf]
        %v1853 = vld [vmem:[%s1851 + $0x4] sm:$0xf]
        %v1854 = vld [vmem:[%s1851 + $0x8] sm:$0xf]
        %v1855 = vld [vmem:[%s1851 + $0xc] sm:$0xf]
        %v1856 = vld [vmem:[%s1851 + $0x10] sm:$0xf]
        %v1857 = vld [vmem:[%s1851 + $0x14] sm:$0xf]
        %v1858 = vld [vmem:[%s1851 + $0x18] sm:$0xf]
        %v1859 = vld [vmem:[%s1851 + $0x1c] sm:$0xf]
        %v1860 = vld [vmem:[%s1851 + $0x20] sm:$0xf]
        %v1861 = vld [vmem:[%s1851 + $0x24] sm:$0xf]
        %v1862 = vld [vmem:[%s1851 + $0x28] sm:$0xf]
        %v1863 = vld [vmem:[%s1851 + $0x2c] sm:$0xf]
        %v1864 = vld [vmem:[%s1851 + $0x30] sm:$0xf]
        %v1865 = vld [vmem:[%s1851 + $0x34] sm:$0xf]
        %v1866 = vld [vmem:[%s1851 + $0x38] sm:$0xf]
        %v1867 = vld [vmem:[%s1851 + $0x3c] sm:$0xf]
        %v1868 = vld [vmem:[%s1851 + $0x40] sm:$0xf]
        %v1869 = vld [vmem:[%s1851 + $0x44] sm:$0xf]
        %v1870 = vld [vmem:[%s1851 + $0x48] sm:$0xf]
        %v1871 = vld [vmem:[%s1851 + $0x4c] sm:$0xf]
        %v1872 = vld [vmem:[%s1851 + $0x50] sm:$0xf]
        %v1873 = vld [vmem:[%s1851 + $0x54] sm:$0xf]
        %v1874 = vld [vmem:[%s1851 + $0x58] sm:$0xf]
        %v1875 = vld [vmem:[%s1851 + $0x5c] sm:$0xf]
        %v1876 = vld [vmem:[%s1851 + $0x60] sm:$0xf]
        %v1877 = vld [vmem:[%s1851 + $0x64] sm:$0xf]
        %v1878 = vld [vmem:[%s1851 + $0x68] sm:$0xf]
        %v1879 = vld [vmem:[%s1851 + $0x6c] sm:$0xf]
        %v1880 = vld [vmem:[%s1851 + $0x70] sm:$0xf]
        %v1881 = vld [vmem:[%s1851 + $0x74] sm:$0xf]
        %v1882 = vld [vmem:[%s1851 + $0x78] sm:$0xf]
        %v1883 = vld [vmem:[%s1851 + $0x7c] sm:$0xf]
        %v1916 = vunpack.c.l.b16 %v1852
        %v1917 = vunpack.c.l.b16 %v1853
        %v1918 = vunpack.c.l.b16 %v1854
        %v1919 = vunpack.c.l.b16 %v1855
        %v1920 = vunpack.c.l.b16 %v1856
        %v1921 = vunpack.c.l.b16 %v1857
        %v1922 = vunpack.c.l.b16 %v1858
        %v1923 = vunpack.c.l.b16 %v1859
        %v1924 = vunpack.c.l.b16 %v1860
        %v1925 = vunpack.c.l.b16 %v1861
        %v1926 = vunpack.c.l.b16 %v1862
        %v1927 = vunpack.c.l.b16 %v1863
        %v1928 = vunpack.c.l.b16 %v1864
        %v1929 = vunpack.c.l.b16 %v1865
        %v1930 = vunpack.c.l.b16 %v1866
        %v1931 = vunpack.c.l.b16 %v1867
        %v1932 = vunpack.c.l.b16 %v1868
        %v1933 = vunpack.c.l.b16 %v1869
        %v1934 = vunpack.c.l.b16 %v1870
        %v1935 = vunpack.c.l.b16 %v1871
        %v1936 = vunpack.c.l.b16 %v1872
        %v1937 = vunpack.c.l.b16 %v1873
        %v1938 = vunpack.c.l.b16 %v1874
        %v1939 = vunpack.c.l.b16 %v1875
        %v1940 = vunpack.c.l.b16 %v1876
        %v1941 = vunpack.c.l.b16 %v1877
        %v1942 = vunpack.c.l.b16 %v1878
        %v1943 = vunpack.c.l.b16 %v1879
        %v1944 = vunpack.c.l.b16 %v1880
        %v1945 = vunpack.c.l.b16 %v1881
        %v1946 = vunpack.c.l.b16 %v1882
        %v1947 = vunpack.c.l.b16 %v1883
        %v1948 = vpack.c.b16 %v1917, %v1916
        %v1949 = vpack.c.b16 %v1919, %v1918
        %v1950 = vpack.c.b16 %v1921, %v1920
        %v1951 = vpack.c.b16 %v1923, %v1922
        %v1952 = vpack.c.b16 %v1925, %v1924
        %v1953 = vpack.c.b16 %v1927, %v1926
        %v1954 = vpack.c.b16 %v1929, %v1928
        %v1955 = vpack.c.b16 %v1931, %v1930
        %v1956 = vpack.c.b16 %v1933, %v1932
        %v1957 = vpack.c.b16 %v1935, %v1934
        %v1958 = vpack.c.b16 %v1937, %v1936
        %v1959 = vpack.c.b16 %v1939, %v1938
        %v1960 = vpack.c.b16 %v1941, %v1940
        %v1961 = vpack.c.b16 %v1943, %v1942
        %v1962 = vpack.c.b16 %v1945, %v1944
        %v1963 = vpack.c.b16 %v1947, %v1946
        %1980 = vmatpush.bf16.msra.mxu0 %v1955
        %1981 = vmatpush.bf16.msra.mxu0 %v1954
        %1982 = vmatpush.bf16.msra.mxu0 %v1953
        %1983 = vmatpush.bf16.msra.mxu0 %v1952
        %1984 = vmatpush.bf16.msra.mxu0 %v1951
        %1985 = vmatpush.bf16.msra.mxu0 %v1950
        %1986 = vmatpush.bf16.msra.mxu0 %v1949
        %1987 = vmatpush.bf16.msra.mxu0 %v1948
        %1988 = vmatmul.bf16.gmra.mxu0 %v1723
        %v1989 = vpop.f32.mrf.mxu0
        %v1990 = vadd.f32 0.0, %v1989
        %v1991 = vpop.f32.mrf.mxu0
        %v1992 = vadd.f32 0.0, %v1991
        %1993 = vmatmul.bf16.gmra.mxu0 %v1724
        %v1994 = vpop.f32.mrf.mxu0
        %v1995 = vadd.f32 0.0, %v1994
        %v1996 = vpop.f32.mrf.mxu0
        %v1997 = vadd.f32 0.0, %v1996
        %1998 = vmatmul.bf16.gmra.mxu0 %v1725
        %v1999 = vpop.f32.mrf.mxu0
        %v2000 = vadd.f32 0.0, %v1999
        %v2001 = vpop.f32.mrf.mxu0
        %v2002 = vadd.f32 0.0, %v2001
        %2003 = vmatmul.bf16.gmra.mxu0 %v1726
        %v2004 = vpop.f32.mrf.mxu0
        %v2005 = vadd.f32 0.0, %v2004
        %v2006 = vpop.f32.mrf.mxu0
        %v2007 = vadd.f32 0.0, %v2006
        %2008 = vmatmul.bf16.gmra.mxu0 %v1727
        %v2009 = vpop.f32.mrf.mxu0
        %v2010 = vadd.f32 0.0, %v2009
        %v2011 = vpop.f32.mrf.mxu0
        %v2012 = vadd.f32 0.0, %v2011
        %2013 = vmatmul.bf16.gmra.mxu0 %v1728
        %v2014 = vpop.f32.mrf.mxu0
        %v2015 = vadd.f32 0.0, %v2014
        %v2016 = vpop.f32.mrf.mxu0
        %v2017 = vadd.f32 0.0, %v2016
        %2018 = vmatmul.bf16.gmra.mxu0 %v1729
        %v2019 = vpop.f32.mrf.mxu0
        %v2020 = vadd.f32 0.0, %v2019
        %v2021 = vpop.f32.mrf.mxu0
        %v2022 = vadd.f32 0.0, %v2021
        %2023 = vmatmul.bf16.gmra.mxu0 %v1730
        %v2024 = vpop.f32.mrf.mxu0
        %v2025 = vadd.f32 0.0, %v2024
        %v2026 = vpop.f32.mrf.mxu0
        %v2027 = vadd.f32 0.0, %v2026
        %2028 = vmatmul.bf16.gmra.mxu0 %v1731
        %v2029 = vpop.f32.mrf.mxu0
        %v2030 = vadd.f32 0.0, %v2029
        %v2031 = vpop.f32.mrf.mxu0
        %v2032 = vadd.f32 0.0, %v2031
        %2033 = vmatmul.bf16.gmra.mxu0 %v1732
        %v2034 = vpop.f32.mrf.mxu0
        %v2035 = vadd.f32 0.0, %v2034
        %v2036 = vpop.f32.mrf.mxu0
        %v2037 = vadd.f32 0.0, %v2036
        %2038 = vmatmul.bf16.gmra.mxu0 %v1733
        %v2039 = vpop.f32.mrf.mxu0
        %v2040 = vadd.f32 0.0, %v2039
        %v2041 = vpop.f32.mrf.mxu0
        %v2042 = vadd.f32 0.0, %v2041
        %2043 = vmatmul.bf16.gmra.mxu0 %v1734
        %v2044 = vpop.f32.mrf.mxu0
        %v2045 = vadd.f32 0.0, %v2044
        %v2046 = vpop.f32.mrf.mxu0
        %v2047 = vadd.f32 0.0, %v2046
        %2048 = vmatmul.bf16.gmra.mxu0 %v1735
        %v2049 = vpop.f32.mrf.mxu0
        %v2050 = vadd.f32 0.0, %v2049
        %v2051 = vpop.f32.mrf.mxu0
        %v2052 = vadd.f32 0.0, %v2051
        %2053 = vmatmul.bf16.gmra.mxu0 %v1736
        %v2054 = vpop.f32.mrf.mxu0
        %v2055 = vadd.f32 0.0, %v2054
        %v2056 = vpop.f32.mrf.mxu0
        %v2057 = vadd.f32 0.0, %v2056
        %2058 = vmatmul.bf16.gmra.mxu0 %v1737
        %v2059 = vpop.f32.mrf.mxu0
        %v2060 = vadd.f32 0.0, %v2059
        %v2061 = vpop.f32.mrf.mxu0
        %v2062 = vadd.f32 0.0, %v2061
        %2063 = vmatmul.bf16.gmra.mxu0 %v1738
        %v2064 = vpop.f32.mrf.mxu0
        %v2065 = vadd.f32 0.0, %v2064
        %v2066 = vpop.f32.mrf.mxu0
        %v2067 = vadd.f32 0.0, %v2066
        %2068 = vdwg.mxu0
        %2069 = vmatpush.bf16.msra.mxu0 %v1963
        %2070 = vmatpush.bf16.msra.mxu0 %v1962
        %2071 = vmatpush.bf16.msra.mxu0 %v1961
        %2072 = vmatpush.bf16.msra.mxu0 %v1960
        %2073 = vmatpush.bf16.msra.mxu0 %v1959
        %2074 = vmatpush.bf16.msra.mxu0 %v1958
        %2075 = vmatpush.bf16.msra.mxu0 %v1957
        %2076 = vmatpush.bf16.msra.mxu0 %v1956
        %2077 = vmatmul.bf16.gmra.mxu0 %v1819
        %v2078 = vpop.f32.mrf.mxu0
        %v2079 = vadd.f32 %v1990, %v2078
        %v2080 = vpop.f32.mrf.mxu0
        %v2081 = vadd.f32 %v1992, %v2080
        %2082 = vmatmul.bf16.gmra.mxu0 %v1820
        %v2083 = vpop.f32.mrf.mxu0
        %v2084 = vadd.f32 %v1995, %v2083
        %v2085 = vpop.f32.mrf.mxu0
        %v2086 = vadd.f32 %v1997, %v2085
        %2087 = vmatmul.bf16.gmra.mxu0 %v1821
        %v2088 = vpop.f32.mrf.mxu0
        %v2089 = vadd.f32 %v2000, %v2088
        %v2090 = vpop.f32.mrf.mxu0
        %v2091 = vadd.f32 %v2002, %v2090
        %2092 = vmatmul.bf16.gmra.mxu0 %v1822
        %v2093 = vpop.f32.mrf.mxu0
        %v2094 = vadd.f32 %v2005, %v2093
        %v2095 = vpop.f32.mrf.mxu0
        %v2096 = vadd.f32 %v2007, %v2095
        %2097 = vmatmul.bf16.gmra.mxu0 %v1823
        %v2098 = vpop.f32.mrf.mxu0
        %v2099 = vadd.f32 %v2010, %v2098
        %v2100 = vpop.f32.mrf.mxu0
        %v2101 = vadd.f32 %v2012, %v2100
        %2102 = vmatmul.bf16.gmra.mxu0 %v1824
        %v2103 = vpop.f32.mrf.mxu0
        %v2104 = vadd.f32 %v2015, %v2103
        %v2105 = vpop.f32.mrf.mxu0
        %v2106 = vadd.f32 %v2017, %v2105
        %2107 = vmatmul.bf16.gmra.mxu0 %v1825
        %v2108 = vpop.f32.mrf.mxu0
        %v2109 = vadd.f32 %v2020, %v2108
        %v2110 = vpop.f32.mrf.mxu0
        %v2111 = vadd.f32 %v2022, %v2110
        %2112 = vmatmul.bf16.gmra.mxu0 %v1826
        %v2113 = vpop.f32.mrf.mxu0
        %v2114 = vadd.f32 %v2025, %v2113
        %v2115 = vpop.f32.mrf.mxu0
        %v2116 = vadd.f32 %v2027, %v2115
        %2117 = vmatmul.bf16.gmra.mxu0 %v1827
        %v2118 = vpop.f32.mrf.mxu0
        %v2119 = vadd.f32 %v2030, %v2118
        %v2120 = vpop.f32.mrf.mxu0
        %v2121 = vadd.f32 %v2032, %v2120
        %2122 = vmatmul.bf16.gmra.mxu0 %v1828
        %v2123 = vpop.f32.mrf.mxu0
        %v2124 = vadd.f32 %v2035, %v2123
        %v2125 = vpop.f32.mrf.mxu0
        %v2126 = vadd.f32 %v2037, %v2125
        %2127 = vmatmul.bf16.gmra.mxu0 %v1829
        %v2128 = vpop.f32.mrf.mxu0
        %v2129 = vadd.f32 %v2040, %v2128
        %v2130 = vpop.f32.mrf.mxu0
        %v2131 = vadd.f32 %v2042, %v2130
        %2132 = vmatmul.bf16.gmra.mxu0 %v1830
        %v2133 = vpop.f32.mrf.mxu0
        %v2134 = vadd.f32 %v2045, %v2133
        %v2135 = vpop.f32.mrf.mxu0
        %v2136 = vadd.f32 %v2047, %v2135
        %2137 = vmatmul.bf16.gmra.mxu0 %v1831
        %v2138 = vpop.f32.mrf.mxu0
        %v2139 = vadd.f32 %v2050, %v2138
        %v2140 = vpop.f32.mrf.mxu0
        %v2141 = vadd.f32 %v2052, %v2140
        %2142 = vmatmul.bf16.gmra.mxu0 %v1832
        %v2143 = vpop.f32.mrf.mxu0
        %v2144 = vadd.f32 %v2055, %v2143
        %v2145 = vpop.f32.mrf.mxu0
        %v2146 = vadd.f32 %v2057, %v2145
        %2147 = vmatmul.bf16.gmra.mxu0 %v1833
        %v2148 = vpop.f32.mrf.mxu0
        %v2149 = vadd.f32 %v2060, %v2148
        %v2150 = vpop.f32.mrf.mxu0
        %v2151 = vadd.f32 %v2062, %v2150
        %2152 = vmatmul.bf16.gmra.mxu0 %v1834
        %v2153 = vpop.f32.mrf.mxu0
        %v2154 = vadd.f32 %v2065, %v2153
        %v2155 = vpop.f32.mrf.mxu0
        %v2156 = vadd.f32 %v2067, %v2155
        %2157 = vdwg.mxu0
        %v2158 = vadd.f32 %v1452, %v2079
        %v2159 = vadd.f32 %v1454, %v2081
        %v2160 = vadd.f32 %v1457, %v2084
        %v2161 = vadd.f32 %v1459, %v2086
        %v2162 = vadd.f32 %v1462, %v2089
        %v2163 = vadd.f32 %v1464, %v2091
        %v2164 = vadd.f32 %v1467, %v2094
        %v2165 = vadd.f32 %v1469, %v2096
        %v2166 = vadd.f32 %v1472, %v2099
        %v2167 = vadd.f32 %v1474, %v2101
        %v2168 = vadd.f32 %v1477, %v2104
        %v2169 = vadd.f32 %v1479, %v2106
        %v2170 = vadd.f32 %v1482, %v2109
        %v2171 = vadd.f32 %v1484, %v2111
        %v2172 = vadd.f32 %v1487, %v2114
        %v2173 = vadd.f32 %v1489, %v2116
        %v2174 = vadd.f32 %v1492, %v2119
        %v2175 = vadd.f32 %v1494, %v2121
        %v2176 = vadd.f32 %v1497, %v2124
        %v2177 = vadd.f32 %v1499, %v2126
        %v2178 = vadd.f32 %v1502, %v2129
        %v2179 = vadd.f32 %v1504, %v2131
        %v2180 = vadd.f32 %v1507, %v2134
        %v2181 = vadd.f32 %v1509, %v2136
        %v2182 = vadd.f32 %v1512, %v2139
        %v2183 = vadd.f32 %v1514, %v2141
        %v2184 = vadd.f32 %v1517, %v2144
        %v2185 = vadd.f32 %v1519, %v2146
        %v2186 = vadd.f32 %v1522, %v2149
        %v2187 = vadd.f32 %v1524, %v2151
        %v2188 = vadd.f32 %v1527, %v2154
        %v2189 = vadd.f32 %v1529, %v2156
        %s2190 = scalar_lea.vmem %s276, 48
        %v2191 = vld [vmem:[%s2190] sm:$0xff]
        %v2192 = vld [vmem:[%s2190 + $0x8] sm:$0xff]
        %v2193 = vld [vmem:[%s2190 + $0x18] sm:$0xff]
        %v2194 = vld [vmem:[%s2190 + $0x20] sm:$0xff]
        %v2195 = vld [vmem:[%s2190 + $0x30] sm:$0xff]
        %v2196 = vld [vmem:[%s2190 + $0x38] sm:$0xff]
        %v2197 = vld [vmem:[%s2190 + $0x48] sm:$0xff]
        %v2198 = vld [vmem:[%s2190 + $0x50] sm:$0xff]
        %v2199 = vld [vmem:[%s2190 + $0x60] sm:$0xff]
        %v2200 = vld [vmem:[%s2190 + $0x68] sm:$0xff]
        %v2201 = vld [vmem:[%s2190 + $0x78] sm:$0xff]
        %v2202 = vld [vmem:[%s2190 + $0x80] sm:$0xff]
        %v2203 = vld [vmem:[%s2190 + $0x90] sm:$0xff]
        %v2204 = vld [vmem:[%s2190 + $0x98] sm:$0xff]
        %v2205 = vld [vmem:[%s2190 + $0xa8] sm:$0xff]
        %v2206 = vld [vmem:[%s2190 + $0xb0] sm:$0xff]
        %v2207 = vld [vmem:[%s2190 + $0xc0] sm:$0xff]
        %v2208 = vld [vmem:[%s2190 + $0xc8] sm:$0xff]
        %v2209 = vld [vmem:[%s2190 + $0xd8] sm:$0xff]
        %v2210 = vld [vmem:[%s2190 + $0xe0] sm:$0xff]
        %v2211 = vld [vmem:[%s2190 + $0xf0] sm:$0xff]
        %v2212 = vld [vmem:[%s2190 + $0xf8] sm:$0xff]
        %v2213 = vld [vmem:[%s2190 + $0x108] sm:$0xff]
        %v2214 = vld [vmem:[%s2190 + $0x110] sm:$0xff]
        %v2215 = vld [vmem:[%s2190 + $0x120] sm:$0xff]
        %v2216 = vld [vmem:[%s2190 + $0x128] sm:$0xff]
        %v2217 = vld [vmem:[%s2190 + $0x138] sm:$0xff]
        %v2218 = vld [vmem:[%s2190 + $0x140] sm:$0xff]
        %v2219 = vld [vmem:[%s2190 + $0x150] sm:$0xff]
        %v2220 = vld [vmem:[%s2190 + $0x158] sm:$0xff]
        %v2221 = vld [vmem:[%s2190 + $0x168] sm:$0xff]
        %v2222 = vld [vmem:[%s2190 + $0x170] sm:$0xff]
        %v2223 = vpack.c.bf16 %v2191, %v2191
        %v2224 = vpack.c.bf16 %v2192, %v2192
        %v2225 = vpack.c.bf16 %v2193, %v2193
        %v2226 = vpack.c.bf16 %v2194, %v2194
        %v2227 = vpack.c.bf16 %v2195, %v2195
        %v2228 = vpack.c.bf16 %v2196, %v2196
        %v2229 = vpack.c.bf16 %v2197, %v2197
        %v2230 = vpack.c.bf16 %v2198, %v2198
        %v2231 = vpack.c.bf16 %v2199, %v2199
        %v2232 = vpack.c.bf16 %v2200, %v2200
        %v2233 = vpack.c.bf16 %v2201, %v2201
        %v2234 = vpack.c.bf16 %v2202, %v2202
        %v2235 = vpack.c.bf16 %v2203, %v2203
        %v2236 = vpack.c.bf16 %v2204, %v2204
        %v2237 = vpack.c.bf16 %v2205, %v2205
        %v2238 = vpack.c.bf16 %v2206, %v2206
        %v2239 = vpack.c.bf16 %v2207, %v2207
        %v2240 = vpack.c.bf16 %v2208, %v2208
        %v2241 = vpack.c.bf16 %v2209, %v2209
        %v2242 = vpack.c.bf16 %v2210, %v2210
        %v2243 = vpack.c.bf16 %v2211, %v2211
        %v2244 = vpack.c.bf16 %v2212, %v2212
        %v2245 = vpack.c.bf16 %v2213, %v2213
        %v2246 = vpack.c.bf16 %v2214, %v2214
        %v2247 = vpack.c.bf16 %v2215, %v2215
        %v2248 = vpack.c.bf16 %v2216, %v2216
        %v2249 = vpack.c.bf16 %v2217, %v2217
        %v2250 = vpack.c.bf16 %v2218, %v2218
        %v2251 = vpack.c.bf16 %v2219, %v2219
        %v2252 = vpack.c.bf16 %v2220, %v2220
        %v2253 = vpack.c.bf16 %v2221, %v2221
        %v2254 = vpack.c.bf16 %v2222, %v2222
        %v2255 = vld [vmem:[%s2190 + $0x1] sm:$0xff]
        %v2256 = vld [vmem:[%s2190 + $0x9] sm:$0xff]
        %v2257 = vld [vmem:[%s2190 + $0x19] sm:$0xff]
        %v2258 = vld [vmem:[%s2190 + $0x21] sm:$0xff]
        %v2259 = vld [vmem:[%s2190 + $0x31] sm:$0xff]
        %v2260 = vld [vmem:[%s2190 + $0x39] sm:$0xff]
        %v2261 = vld [vmem:[%s2190 + $0x49] sm:$0xff]
        %v2262 = vld [vmem:[%s2190 + $0x51] sm:$0xff]
        %v2263 = vld [vmem:[%s2190 + $0x61] sm:$0xff]
        %v2264 = vld [vmem:[%s2190 + $0x69] sm:$0xff]
        %v2265 = vld [vmem:[%s2190 + $0x79] sm:$0xff]
        %v2266 = vld [vmem:[%s2190 + $0x81] sm:$0xff]
        %v2267 = vld [vmem:[%s2190 + $0x91] sm:$0xff]
        %v2268 = vld [vmem:[%s2190 + $0x99] sm:$0xff]
        %v2269 = vld [vmem:[%s2190 + $0xa9] sm:$0xff]
        %v2270 = vld [vmem:[%s2190 + $0xb1] sm:$0xff]
        %v2271 = vld [vmem:[%s2190 + $0xc1] sm:$0xff]
        %v2272 = vld [vmem:[%s2190 + $0xc9] sm:$0xff]
        %v2273 = vld [vmem:[%s2190 + $0xd9] sm:$0xff]
        %v2274 = vld [vmem:[%s2190 + $0xe1] sm:$0xff]
        %v2275 = vld [vmem:[%s2190 + $0xf1] sm:$0xff]
        %v2276 = vld [vmem:[%s2190 + $0xf9] sm:$0xff]
        %v2277 = vld [vmem:[%s2190 + $0x109] sm:$0xff]
        %v2278 = vld [vmem:[%s2190 + $0x111] sm:$0xff]
        %v2279 = vld [vmem:[%s2190 + $0x121] sm:$0xff]
        %v2280 = vld [vmem:[%s2190 + $0x129] sm:$0xff]
        %v2281 = vld [vmem:[%s2190 + $0x139] sm:$0xff]
        %v2282 = vld [vmem:[%s2190 + $0x141] sm:$0xff]
        %v2283 = vld [vmem:[%s2190 + $0x151] sm:$0xff]
        %v2284 = vld [vmem:[%s2190 + $0x159] sm:$0xff]
        %v2285 = vld [vmem:[%s2190 + $0x169] sm:$0xff]
        %v2286 = vld [vmem:[%s2190 + $0x171] sm:$0xff]
        %v2287 = vpack.c.bf16 %v2255, %v2255
        %v2288 = vpack.c.bf16 %v2256, %v2256
        %v2289 = vpack.c.bf16 %v2257, %v2257
        %v2290 = vpack.c.bf16 %v2258, %v2258
        %v2291 = vpack.c.bf16 %v2259, %v2259
        %v2292 = vpack.c.bf16 %v2260, %v2260
        %v2293 = vpack.c.bf16 %v2261, %v2261
        %v2294 = vpack.c.bf16 %v2262, %v2262
        %v2295 = vpack.c.bf16 %v2263, %v2263
        %v2296 = vpack.c.bf16 %v2264, %v2264
        %v2297 = vpack.c.bf16 %v2265, %v2265
        %v2298 = vpack.c.bf16 %v2266, %v2266
        %v2299 = vpack.c.bf16 %v2267, %v2267
        %v2300 = vpack.c.bf16 %v2268, %v2268
        %v2301 = vpack.c.bf16 %v2269, %v2269
        %v2302 = vpack.c.bf16 %v2270, %v2270
        %v2303 = vpack.c.bf16 %v2271, %v2271
        %v2304 = vpack.c.bf16 %v2272, %v2272
        %v2305 = vpack.c.bf16 %v2273, %v2273
        %v2306 = vpack.c.bf16 %v2274, %v2274
        %v2307 = vpack.c.bf16 %v2275, %v2275
        %v2308 = vpack.c.bf16 %v2276, %v2276
        %v2309 = vpack.c.bf16 %v2277, %v2277
        %v2310 = vpack.c.bf16 %v2278, %v2278
        %v2311 = vpack.c.bf16 %v2279, %v2279
        %v2312 = vpack.c.bf16 %v2280, %v2280
        %v2313 = vpack.c.bf16 %v2281, %v2281
        %v2314 = vpack.c.bf16 %v2282, %v2282
        %v2315 = vpack.c.bf16 %v2283, %v2283
        %v2316 = vpack.c.bf16 %v2284, %v2284
        %v2317 = vpack.c.bf16 %v2285, %v2285
        %v2318 = vpack.c.bf16 %v2286, %v2286
        %v2351 = vunpack.c.l.b16 %v2223
        %v2352 = vunpack.c.l.b16 %v2224
        %v2353 = vunpack.c.l.b16 %v2225
        %v2354 = vunpack.c.l.b16 %v2226
        %v2355 = vunpack.c.l.b16 %v2227
        %v2356 = vunpack.c.l.b16 %v2228
        %v2357 = vunpack.c.l.b16 %v2229
        %v2358 = vunpack.c.l.b16 %v2230
        %v2359 = vunpack.c.l.b16 %v2231
        %v2360 = vunpack.c.l.b16 %v2232
        %v2361 = vunpack.c.l.b16 %v2233
        %v2362 = vunpack.c.l.b16 %v2234
        %v2363 = vunpack.c.l.b16 %v2235
        %v2364 = vunpack.c.l.b16 %v2236
        %v2365 = vunpack.c.l.b16 %v2237
        %v2366 = vunpack.c.l.b16 %v2238
        %v2367 = vunpack.c.l.b16 %v2239
        %v2368 = vunpack.c.l.b16 %v2240
        %v2369 = vunpack.c.l.b16 %v2241
        %v2370 = vunpack.c.l.b16 %v2242
        %v2371 = vunpack.c.l.b16 %v2243
        %v2372 = vunpack.c.l.b16 %v2244
        %v2373 = vunpack.c.l.b16 %v2245
        %v2374 = vunpack.c.l.b16 %v2246
        %v2375 = vunpack.c.l.b16 %v2247
        %v2376 = vunpack.c.l.b16 %v2248
        %v2377 = vunpack.c.l.b16 %v2249
        %v2378 = vunpack.c.l.b16 %v2250
        %v2379 = vunpack.c.l.b16 %v2251
        %v2380 = vunpack.c.l.b16 %v2252
        %v2381 = vunpack.c.l.b16 %v2253
        %v2382 = vunpack.c.l.b16 %v2254
        %v2383 = vpack.c.b16 %v2352, %v2351
        %v2384 = vpack.c.b16 %v2354, %v2353
        %v2385 = vpack.c.b16 %v2356, %v2355
        %v2386 = vpack.c.b16 %v2358, %v2357
        %v2387 = vpack.c.b16 %v2360, %v2359
        %v2388 = vpack.c.b16 %v2362, %v2361
        %v2389 = vpack.c.b16 %v2364, %v2363
        %v2390 = vpack.c.b16 %v2366, %v2365
        %v2391 = vpack.c.b16 %v2368, %v2367
        %v2392 = vpack.c.b16 %v2370, %v2369
        %v2393 = vpack.c.b16 %v2372, %v2371
        %v2394 = vpack.c.b16 %v2374, %v2373
        %v2395 = vpack.c.b16 %v2376, %v2375
        %v2396 = vpack.c.b16 %v2378, %v2377
        %v2397 = vpack.c.b16 %v2380, %v2379
        %v2398 = vpack.c.b16 %v2382, %v2381
        %v2447 = vunpack.c.l.b16 %v2287
        %v2448 = vunpack.c.l.b16 %v2288
        %v2449 = vunpack.c.l.b16 %v2289
        %v2450 = vunpack.c.l.b16 %v2290
        %v2451 = vunpack.c.l.b16 %v2291
        %v2452 = vunpack.c.l.b16 %v2292
        %v2453 = vunpack.c.l.b16 %v2293
        %v2454 = vunpack.c.l.b16 %v2294
        %v2455 = vunpack.c.l.b16 %v2295
        %v2456 = vunpack.c.l.b16 %v2296
        %v2457 = vunpack.c.l.b16 %v2297
        %v2458 = vunpack.c.l.b16 %v2298
        %v2459 = vunpack.c.l.b16 %v2299
        %v2460 = vunpack.c.l.b16 %v2300
        %v2461 = vunpack.c.l.b16 %v2301
        %v2462 = vunpack.c.l.b16 %v2302
        %v2463 = vunpack.c.l.b16 %v2303
        %v2464 = vunpack.c.l.b16 %v2304
        %v2465 = vunpack.c.l.b16 %v2305
        %v2466 = vunpack.c.l.b16 %v2306
        %v2467 = vunpack.c.l.b16 %v2307
        %v2468 = vunpack.c.l.b16 %v2308
        %v2469 = vunpack.c.l.b16 %v2309
        %v2470 = vunpack.c.l.b16 %v2310
        %v2471 = vunpack.c.l.b16 %v2311
        %v2472 = vunpack.c.l.b16 %v2312
        %v2473 = vunpack.c.l.b16 %v2313
        %v2474 = vunpack.c.l.b16 %v2314
        %v2475 = vunpack.c.l.b16 %v2315
        %v2476 = vunpack.c.l.b16 %v2316
        %v2477 = vunpack.c.l.b16 %v2317
        %v2478 = vunpack.c.l.b16 %v2318
        %v2479 = vpack.c.b16 %v2448, %v2447
        %v2480 = vpack.c.b16 %v2450, %v2449
        %v2481 = vpack.c.b16 %v2452, %v2451
        %v2482 = vpack.c.b16 %v2454, %v2453
        %v2483 = vpack.c.b16 %v2456, %v2455
        %v2484 = vpack.c.b16 %v2458, %v2457
        %v2485 = vpack.c.b16 %v2460, %v2459
        %v2486 = vpack.c.b16 %v2462, %v2461
        %v2487 = vpack.c.b16 %v2464, %v2463
        %v2488 = vpack.c.b16 %v2466, %v2465
        %v2489 = vpack.c.b16 %v2468, %v2467
        %v2490 = vpack.c.b16 %v2470, %v2469
        %v2491 = vpack.c.b16 %v2472, %v2471
        %v2492 = vpack.c.b16 %v2474, %v2473
        %v2493 = vpack.c.b16 %v2476, %v2475
        %v2494 = vpack.c.b16 %v2478, %v2477
        %s2511 = scalar_lea.vmem %s1, 384
        %v2512 = vld [vmem:[%s2511] sm:$0xf]
        %v2513 = vld [vmem:[%s2511 + $0x4] sm:$0xf]
        %v2514 = vld [vmem:[%s2511 + $0x8] sm:$0xf]
        %v2515 = vld [vmem:[%s2511 + $0xc] sm:$0xf]
        %v2516 = vld [vmem:[%s2511 + $0x10] sm:$0xf]
        %v2517 = vld [vmem:[%s2511 + $0x14] sm:$0xf]
        %v2518 = vld [vmem:[%s2511 + $0x18] sm:$0xf]
        %v2519 = vld [vmem:[%s2511 + $0x1c] sm:$0xf]
        %v2520 = vld [vmem:[%s2511 + $0x20] sm:$0xf]
        %v2521 = vld [vmem:[%s2511 + $0x24] sm:$0xf]
        %v2522 = vld [vmem:[%s2511 + $0x28] sm:$0xf]
        %v2523 = vld [vmem:[%s2511 + $0x2c] sm:$0xf]
        %v2524 = vld [vmem:[%s2511 + $0x30] sm:$0xf]
        %v2525 = vld [vmem:[%s2511 + $0x34] sm:$0xf]
        %v2526 = vld [vmem:[%s2511 + $0x38] sm:$0xf]
        %v2527 = vld [vmem:[%s2511 + $0x3c] sm:$0xf]
        %v2528 = vld [vmem:[%s2511 + $0x40] sm:$0xf]
        %v2529 = vld [vmem:[%s2511 + $0x44] sm:$0xf]
        %v2530 = vld [vmem:[%s2511 + $0x48] sm:$0xf]
        %v2531 = vld [vmem:[%s2511 + $0x4c] sm:$0xf]
        %v2532 = vld [vmem:[%s2511 + $0x50] sm:$0xf]
        %v2533 = vld [vmem:[%s2511 + $0x54] sm:$0xf]
        %v2534 = vld [vmem:[%s2511 + $0x58] sm:$0xf]
        %v2535 = vld [vmem:[%s2511 + $0x5c] sm:$0xf]
        %v2536 = vld [vmem:[%s2511 + $0x60] sm:$0xf]
        %v2537 = vld [vmem:[%s2511 + $0x64] sm:$0xf]
        %v2538 = vld [vmem:[%s2511 + $0x68] sm:$0xf]
        %v2539 = vld [vmem:[%s2511 + $0x6c] sm:$0xf]
        %v2540 = vld [vmem:[%s2511 + $0x70] sm:$0xf]
        %v2541 = vld [vmem:[%s2511 + $0x74] sm:$0xf]
        %v2542 = vld [vmem:[%s2511 + $0x78] sm:$0xf]
        %v2543 = vld [vmem:[%s2511 + $0x7c] sm:$0xf]
        %v2576 = vunpack.c.l.b16 %v2512
        %v2577 = vunpack.c.l.b16 %v2513
        %v2578 = vunpack.c.l.b16 %v2514
        %v2579 = vunpack.c.l.b16 %v2515
        %v2580 = vunpack.c.l.b16 %v2516
        %v2581 = vunpack.c.l.b16 %v2517
        %v2582 = vunpack.c.l.b16 %v2518
        %v2583 = vunpack.c.l.b16 %v2519
        %v2584 = vunpack.c.l.b16 %v2520
        %v2585 = vunpack.c.l.b16 %v2521
        %v2586 = vunpack.c.l.b16 %v2522
        %v2587 = vunpack.c.l.b16 %v2523
        %v2588 = vunpack.c.l.b16 %v2524
        %v2589 = vunpack.c.l.b16 %v2525
        %v2590 = vunpack.c.l.b16 %v2526
        %v2591 = vunpack.c.l.b16 %v2527
        %v2592 = vunpack.c.l.b16 %v2528
        %v2593 = vunpack.c.l.b16 %v2529
        %v2594 = vunpack.c.l.b16 %v2530
        %v2595 = vunpack.c.l.b16 %v2531
        %v2596 = vunpack.c.l.b16 %v2532
        %v2597 = vunpack.c.l.b16 %v2533
        %v2598 = vunpack.c.l.b16 %v2534
        %v2599 = vunpack.c.l.b16 %v2535
        %v2600 = vunpack.c.l.b16 %v2536
        %v2601 = vunpack.c.l.b16 %v2537
        %v2602 = vunpack.c.l.b16 %v2538
        %v2603 = vunpack.c.l.b16 %v2539
        %v2604 = vunpack.c.l.b16 %v2540
        %v2605 = vunpack.c.l.b16 %v2541
        %v2606 = vunpack.c.l.b16 %v2542
        %v2607 = vunpack.c.l.b16 %v2543
        %v2608 = vpack.c.b16 %v2577, %v2576
        %v2609 = vpack.c.b16 %v2579, %v2578
        %v2610 = vpack.c.b16 %v2581, %v2580
        %v2611 = vpack.c.b16 %v2583, %v2582
        %v2612 = vpack.c.b16 %v2585, %v2584
        %v2613 = vpack.c.b16 %v2587, %v2586
        %v2614 = vpack.c.b16 %v2589, %v2588
        %v2615 = vpack.c.b16 %v2591, %v2590
        %v2616 = vpack.c.b16 %v2593, %v2592
        %v2617 = vpack.c.b16 %v2595, %v2594
        %v2618 = vpack.c.b16 %v2597, %v2596
        %v2619 = vpack.c.b16 %v2599, %v2598
        %v2620 = vpack.c.b16 %v2601, %v2600
        %v2621 = vpack.c.b16 %v2603, %v2602
        %v2622 = vpack.c.b16 %v2605, %v2604
        %v2623 = vpack.c.b16 %v2607, %v2606
        %2640 = vmatpush.bf16.msra.mxu0 %v2615
        %2641 = vmatpush.bf16.msra.mxu0 %v2614
        %2642 = vmatpush.bf16.msra.mxu0 %v2613
        %2643 = vmatpush.bf16.msra.mxu0 %v2612
        %2644 = vmatpush.bf16.msra.mxu0 %v2611
        %2645 = vmatpush.bf16.msra.mxu0 %v2610
        %2646 = vmatpush.bf16.msra.mxu0 %v2609
        %2647 = vmatpush.bf16.msra.mxu0 %v2608
        %2648 = vmatmul.bf16.gmra.mxu0 %v2383
        %v2649 = vpop.f32.mrf.mxu0
        %v2650 = vadd.f32 0.0, %v2649
        %v2651 = vpop.f32.mrf.mxu0
        %v2652 = vadd.f32 0.0, %v2651
        %2653 = vmatmul.bf16.gmra.mxu0 %v2384
        %v2654 = vpop.f32.mrf.mxu0
        %v2655 = vadd.f32 0.0, %v2654
        %v2656 = vpop.f32.mrf.mxu0
        %v2657 = vadd.f32 0.0, %v2656
        %2658 = vmatmul.bf16.gmra.mxu0 %v2385
        %v2659 = vpop.f32.mrf.mxu0
        %v2660 = vadd.f32 0.0, %v2659
        %v2661 = vpop.f32.mrf.mxu0
        %v2662 = vadd.f32 0.0, %v2661
        %2663 = vmatmul.bf16.gmra.mxu0 %v2386
        %v2664 = vpop.f32.mrf.mxu0
        %v2665 = vadd.f32 0.0, %v2664
        %v2666 = vpop.f32.mrf.mxu0
        %v2667 = vadd.f32 0.0, %v2666
        %2668 = vmatmul.bf16.gmra.mxu0 %v2387
        %v2669 = vpop.f32.mrf.mxu0
        %v2670 = vadd.f32 0.0, %v2669
        %v2671 = vpop.f32.mrf.mxu0
        %v2672 = vadd.f32 0.0, %v2671
        %2673 = vmatmul.bf16.gmra.mxu0 %v2388
        %v2674 = vpop.f32.mrf.mxu0
        %v2675 = vadd.f32 0.0, %v2674
        %v2676 = vpop.f32.mrf.mxu0
        %v2677 = vadd.f32 0.0, %v2676
        %2678 = vmatmul.bf16.gmra.mxu0 %v2389
        %v2679 = vpop.f32.mrf.mxu0
        %v2680 = vadd.f32 0.0, %v2679
        %v2681 = vpop.f32.mrf.mxu0
        %v2682 = vadd.f32 0.0, %v2681
        %2683 = vmatmul.bf16.gmra.mxu0 %v2390
        %v2684 = vpop.f32.mrf.mxu0
        %v2685 = vadd.f32 0.0, %v2684
        %v2686 = vpop.f32.mrf.mxu0
        %v2687 = vadd.f32 0.0, %v2686
        %2688 = vmatmul.bf16.gmra.mxu0 %v2391
        %v2689 = vpop.f32.mrf.mxu0
        %v2690 = vadd.f32 0.0, %v2689
        %v2691 = vpop.f32.mrf.mxu0
        %v2692 = vadd.f32 0.0, %v2691
        %2693 = vmatmul.bf16.gmra.mxu0 %v2392
        %v2694 = vpop.f32.mrf.mxu0
        %v2695 = vadd.f32 0.0, %v2694
        %v2696 = vpop.f32.mrf.mxu0
        %v2697 = vadd.f32 0.0, %v2696
        %2698 = vmatmul.bf16.gmra.mxu0 %v2393
        %v2699 = vpop.f32.mrf.mxu0
        %v2700 = vadd.f32 0.0, %v2699
        %v2701 = vpop.f32.mrf.mxu0
        %v2702 = vadd.f32 0.0, %v2701
        %2703 = vmatmul.bf16.gmra.mxu0 %v2394
        %v2704 = vpop.f32.mrf.mxu0
        %v2705 = vadd.f32 0.0, %v2704
        %v2706 = vpop.f32.mrf.mxu0
        %v2707 = vadd.f32 0.0, %v2706
        %2708 = vmatmul.bf16.gmra.mxu0 %v2395
        %v2709 = vpop.f32.mrf.mxu0
        %v2710 = vadd.f32 0.0, %v2709
        %v2711 = vpop.f32.mrf.mxu0
        %v2712 = vadd.f32 0.0, %v2711
        %2713 = vmatmul.bf16.gmra.mxu0 %v2396
        %v2714 = vpop.f32.mrf.mxu0
        %v2715 = vadd.f32 0.0, %v2714
        %v2716 = vpop.f32.mrf.mxu0
        %v2717 = vadd.f32 0.0, %v2716
        %2718 = vmatmul.bf16.gmra.mxu0 %v2397
        %v2719 = vpop.f32.mrf.mxu0
        %v2720 = vadd.f32 0.0, %v2719
        %v2721 = vpop.f32.mrf.mxu0
        %v2722 = vadd.f32 0.0, %v2721
        %2723 = vmatmul.bf16.gmra.mxu0 %v2398
        %v2724 = vpop.f32.mrf.mxu0
        %v2725 = vadd.f32 0.0, %v2724
        %v2726 = vpop.f32.mrf.mxu0
        %v2727 = vadd.f32 0.0, %v2726
        %2728 = vdwg.mxu0
        %2729 = vmatpush.bf16.msra.mxu0 %v2623
        %2730 = vmatpush.bf16.msra.mxu0 %v2622
        %2731 = vmatpush.bf16.msra.mxu0 %v2621
        %2732 = vmatpush.bf16.msra.mxu0 %v2620
        %2733 = vmatpush.bf16.msra.mxu0 %v2619
        %2734 = vmatpush.bf16.msra.mxu0 %v2618
        %2735 = vmatpush.bf16.msra.mxu0 %v2617
        %2736 = vmatpush.bf16.msra.mxu0 %v2616
        %2737 = vmatmul.bf16.gmra.mxu0 %v2479
        %v2738 = vpop.f32.mrf.mxu0
        %v2739 = vadd.f32 %v2650, %v2738
        %v2740 = vpop.f32.mrf.mxu0
        %v2741 = vadd.f32 %v2652, %v2740
        %2742 = vmatmul.bf16.gmra.mxu0 %v2480
        %v2743 = vpop.f32.mrf.mxu0
        %v2744 = vadd.f32 %v2655, %v2743
        %v2745 = vpop.f32.mrf.mxu0
        %v2746 = vadd.f32 %v2657, %v2745
        %2747 = vmatmul.bf16.gmra.mxu0 %v2481
        %v2748 = vpop.f32.mrf.mxu0
        %v2749 = vadd.f32 %v2660, %v2748
        %v2750 = vpop.f32.mrf.mxu0
        %v2751 = vadd.f32 %v2662, %v2750
        %2752 = vmatmul.bf16.gmra.mxu0 %v2482
        %v2753 = vpop.f32.mrf.mxu0
        %v2754 = vadd.f32 %v2665, %v2753
        %v2755 = vpop.f32.mrf.mxu0
        %v2756 = vadd.f32 %v2667, %v2755
        %2757 = vmatmul.bf16.gmra.mxu0 %v2483
        %v2758 = vpop.f32.mrf.mxu0
        %v2759 = vadd.f32 %v2670, %v2758
        %v2760 = vpop.f32.mrf.mxu0
        %v2761 = vadd.f32 %v2672, %v2760
        %2762 = vmatmul.bf16.gmra.mxu0 %v2484
        %v2763 = vpop.f32.mrf.mxu0
        %v2764 = vadd.f32 %v2675, %v2763
        %v2765 = vpop.f32.mrf.mxu0
        %v2766 = vadd.f32 %v2677, %v2765
        %2767 = vmatmul.bf16.gmra.mxu0 %v2485
        %v2768 = vpop.f32.mrf.mxu0
        %v2769 = vadd.f32 %v2680, %v2768
        %v2770 = vpop.f32.mrf.mxu0
        %v2771 = vadd.f32 %v2682, %v2770
        %2772 = vmatmul.bf16.gmra.mxu0 %v2486
        %v2773 = vpop.f32.mrf.mxu0
        %v2774 = vadd.f32 %v2685, %v2773
        %v2775 = vpop.f32.mrf.mxu0
        %v2776 = vadd.f32 %v2687, %v2775
        %2777 = vmatmul.bf16.gmra.mxu0 %v2487
        %v2778 = vpop.f32.mrf.mxu0
        %v2779 = vadd.f32 %v2690, %v2778
        %v2780 = vpop.f32.mrf.mxu0
        %v2781 = vadd.f32 %v2692, %v2780
        %2782 = vmatmul.bf16.gmra.mxu0 %v2488
        %v2783 = vpop.f32.mrf.mxu0
        %v2784 = vadd.f32 %v2695, %v2783
        %v2785 = vpop.f32.mrf.mxu0
        %v2786 = vadd.f32 %v2697, %v2785
        %2787 = vmatmul.bf16.gmra.mxu0 %v2489
        %v2788 = vpop.f32.mrf.mxu0
        %v2789 = vadd.f32 %v2700, %v2788
        %v2790 = vpop.f32.mrf.mxu0
        %v2791 = vadd.f32 %v2702, %v2790
        %2792 = vmatmul.bf16.gmra.mxu0 %v2490
        %v2793 = vpop.f32.mrf.mxu0
        %v2794 = vadd.f32 %v2705, %v2793
        %v2795 = vpop.f32.mrf.mxu0
        %v2796 = vadd.f32 %v2707, %v2795
        %2797 = vmatmul.bf16.gmra.mxu0 %v2491
        %v2798 = vpop.f32.mrf.mxu0
        %v2799 = vadd.f32 %v2710, %v2798
        %v2800 = vpop.f32.mrf.mxu0
        %v2801 = vadd.f32 %v2712, %v2800
        %2802 = vmatmul.bf16.gmra.mxu0 %v2492
        %v2803 = vpop.f32.mrf.mxu0
        %v2804 = vadd.f32 %v2715, %v2803
        %v2805 = vpop.f32.mrf.mxu0
        %v2806 = vadd.f32 %v2717, %v2805
        %2807 = vmatmul.bf16.gmra.mxu0 %v2493
        %v2808 = vpop.f32.mrf.mxu0
        %v2809 = vadd.f32 %v2720, %v2808
        %v2810 = vpop.f32.mrf.mxu0
        %v2811 = vadd.f32 %v2722, %v2810
        %2812 = vmatmul.bf16.gmra.mxu0 %v2494
        %v2813 = vpop.f32.mrf.mxu0
        %v2814 = vadd.f32 %v2725, %v2813
        %v2815 = vpop.f32.mrf.mxu0
        %v2816 = vadd.f32 %v2727, %v2815
        %2817 = vdwg.mxu0
        %v2818 = vadd.f32 %v2158, %v2739
        %v2819 = vadd.f32 %v2159, %v2741
        %v2820 = vadd.f32 %v2160, %v2744
        %v2821 = vadd.f32 %v2161, %v2746
        %v2822 = vadd.f32 %v2162, %v2749
        %v2823 = vadd.f32 %v2163, %v2751
        %v2824 = vadd.f32 %v2164, %v2754
        %v2825 = vadd.f32 %v2165, %v2756
        %v2826 = vadd.f32 %v2166, %v2759
        %v2827 = vadd.f32 %v2167, %v2761
        %v2828 = vadd.f32 %v2168, %v2764
        %v2829 = vadd.f32 %v2169, %v2766
        %v2830 = vadd.f32 %v2170, %v2769
        %v2831 = vadd.f32 %v2171, %v2771
        %v2832 = vadd.f32 %v2172, %v2774
        %v2833 = vadd.f32 %v2173, %v2776
        %v2834 = vadd.f32 %v2174, %v2779
        %v2835 = vadd.f32 %v2175, %v2781
        %v2836 = vadd.f32 %v2176, %v2784
        %v2837 = vadd.f32 %v2177, %v2786
        %v2838 = vadd.f32 %v2178, %v2789
        %v2839 = vadd.f32 %v2179, %v2791
        %v2840 = vadd.f32 %v2180, %v2794
        %v2841 = vadd.f32 %v2181, %v2796
        %v2842 = vadd.f32 %v2182, %v2799
        %v2843 = vadd.f32 %v2183, %v2801
        %v2844 = vadd.f32 %v2184, %v2804
        %v2845 = vadd.f32 %v2185, %v2806
        %v2846 = vadd.f32 %v2186, %v2809
        %v2847 = vadd.f32 %v2187, %v2811
        %v2848 = vadd.f32 %v2188, %v2814
        %v2849 = vadd.f32 %v2189, %v2816
        %v2850 = vld [vmem:[%s2190 + $0x2] sm:$0xff]
        %v2851 = vld [vmem:[%s2190 + $0xa] sm:$0xff]
        %v2852 = vld [vmem:[%s2190 + $0x1a] sm:$0xff]
        %v2853 = vld [vmem:[%s2190 + $0x22] sm:$0xff]
        %v2854 = vld [vmem:[%s2190 + $0x32] sm:$0xff]
        %v2855 = vld [vmem:[%s2190 + $0x3a] sm:$0xff]
        %v2856 = vld [vmem:[%s2190 + $0x4a] sm:$0xff]
        %v2857 = vld [vmem:[%s2190 + $0x52] sm:$0xff]
        %v2858 = vld [vmem:[%s2190 + $0x62] sm:$0xff]
        %v2859 = vld [vmem:[%s2190 + $0x6a] sm:$0xff]
        %v2860 = vld [vmem:[%s2190 + $0x7a] sm:$0xff]
        %v2861 = vld [vmem:[%s2190 + $0x82] sm:$0xff]
        %v2862 = vld [vmem:[%s2190 + $0x92] sm:$0xff]
        %v2863 = vld [vmem:[%s2190 + $0x9a] sm:$0xff]
        %v2864 = vld [vmem:[%s2190 + $0xaa] sm:$0xff]
        %v2865 = vld [vmem:[%s2190 + $0xb2] sm:$0xff]
        %v2866 = vld [vmem:[%s2190 + $0xc2] sm:$0xff]
        %v2867 = vld [vmem:[%s2190 + $0xca] sm:$0xff]
        %v2868 = vld [vmem:[%s2190 + $0xda] sm:$0xff]
        %v2869 = vld [vmem:[%s2190 + $0xe2] sm:$0xff]
        %v2870 = vld [vmem:[%s2190 + $0xf2] sm:$0xff]
        %v2871 = vld [vmem:[%s2190 + $0xfa] sm:$0xff]
        %v2872 = vld [vmem:[%s2190 + $0x10a] sm:$0xff]
        %v2873 = vld [vmem:[%s2190 + $0x112] sm:$0xff]
        %v2874 = vld [vmem:[%s2190 + $0x122] sm:$0xff]
        %v2875 = vld [vmem:[%s2190 + $0x12a] sm:$0xff]
        %v2876 = vld [vmem:[%s2190 + $0x13a] sm:$0xff]
        %v2877 = vld [vmem:[%s2190 + $0x142] sm:$0xff]
        %v2878 = vld [vmem:[%s2190 + $0x152] sm:$0xff]
        %v2879 = vld [vmem:[%s2190 + $0x15a] sm:$0xff]
        %v2880 = vld [vmem:[%s2190 + $0x16a] sm:$0xff]
        %v2881 = vld [vmem:[%s2190 + $0x172] sm:$0xff]
        %v2882 = vpack.c.bf16 %v2850, %v2850
        %v2883 = vpack.c.bf16 %v2851, %v2851
        %v2884 = vpack.c.bf16 %v2852, %v2852
        %v2885 = vpack.c.bf16 %v2853, %v2853
        %v2886 = vpack.c.bf16 %v2854, %v2854
        %v2887 = vpack.c.bf16 %v2855, %v2855
        %v2888 = vpack.c.bf16 %v2856, %v2856
        %v2889 = vpack.c.bf16 %v2857, %v2857
        %v2890 = vpack.c.bf16 %v2858, %v2858
        %v2891 = vpack.c.bf16 %v2859, %v2859
        %v2892 = vpack.c.bf16 %v2860, %v2860
        %v2893 = vpack.c.bf16 %v2861, %v2861
        %v2894 = vpack.c.bf16 %v2862, %v2862
        %v2895 = vpack.c.bf16 %v2863, %v2863
        %v2896 = vpack.c.bf16 %v2864, %v2864
        %v2897 = vpack.c.bf16 %v2865, %v2865
        %v2898 = vpack.c.bf16 %v2866, %v2866
        %v2899 = vpack.c.bf16 %v2867, %v2867
        %v2900 = vpack.c.bf16 %v2868, %v2868
        %v2901 = vpack.c.bf16 %v2869, %v2869
        %v2902 = vpack.c.bf16 %v2870, %v2870
        %v2903 = vpack.c.bf16 %v2871, %v2871
        %v2904 = vpack.c.bf16 %v2872, %v2872
        %v2905 = vpack.c.bf16 %v2873, %v2873
        %v2906 = vpack.c.bf16 %v2874, %v2874
        %v2907 = vpack.c.bf16 %v2875, %v2875
        %v2908 = vpack.c.bf16 %v2876, %v2876
        %v2909 = vpack.c.bf16 %v2877, %v2877
        %v2910 = vpack.c.bf16 %v2878, %v2878
        %v2911 = vpack.c.bf16 %v2879, %v2879
        %v2912 = vpack.c.bf16 %v2880, %v2880
        %v2913 = vpack.c.bf16 %v2881, %v2881
        %v2946 = vunpack.c.l.b16 %v2882
        %v2947 = vunpack.c.l.b16 %v2883
        %v2948 = vunpack.c.l.b16 %v2884
        %v2949 = vunpack.c.l.b16 %v2885
        %v2950 = vunpack.c.l.b16 %v2886
        %v2951 = vunpack.c.l.b16 %v2887
        %v2952 = vunpack.c.l.b16 %v2888
        %v2953 = vunpack.c.l.b16 %v2889
        %v2954 = vunpack.c.l.b16 %v2890
        %v2955 = vunpack.c.l.b16 %v2891
        %v2956 = vunpack.c.l.b16 %v2892
        %v2957 = vunpack.c.l.b16 %v2893
        %v2958 = vunpack.c.l.b16 %v2894
        %v2959 = vunpack.c.l.b16 %v2895
        %v2960 = vunpack.c.l.b16 %v2896
        %v2961 = vunpack.c.l.b16 %v2897
        %v2962 = vunpack.c.l.b16 %v2898
        %v2963 = vunpack.c.l.b16 %v2899
        %v2964 = vunpack.c.l.b16 %v2900
        %v2965 = vunpack.c.l.b16 %v2901
        %v2966 = vunpack.c.l.b16 %v2902
        %v2967 = vunpack.c.l.b16 %v2903
        %v2968 = vunpack.c.l.b16 %v2904
        %v2969 = vunpack.c.l.b16 %v2905
        %v2970 = vunpack.c.l.b16 %v2906
        %v2971 = vunpack.c.l.b16 %v2907
        %v2972 = vunpack.c.l.b16 %v2908
        %v2973 = vunpack.c.l.b16 %v2909
        %v2974 = vunpack.c.l.b16 %v2910
        %v2975 = vunpack.c.l.b16 %v2911
        %v2976 = vunpack.c.l.b16 %v2912
        %v2977 = vunpack.c.l.b16 %v2913
        %v2978 = vpack.c.b16 %v2947, %v2946
        %v2979 = vpack.c.b16 %v2949, %v2948
        %v2980 = vpack.c.b16 %v2951, %v2950
        %v2981 = vpack.c.b16 %v2953, %v2952
        %v2982 = vpack.c.b16 %v2955, %v2954
        %v2983 = vpack.c.b16 %v2957, %v2956
        %v2984 = vpack.c.b16 %v2959, %v2958
        %v2985 = vpack.c.b16 %v2961, %v2960
        %v2986 = vpack.c.b16 %v2963, %v2962
        %v2987 = vpack.c.b16 %v2965, %v2964
        %v2988 = vpack.c.b16 %v2967, %v2966
        %v2989 = vpack.c.b16 %v2969, %v2968
        %v2990 = vpack.c.b16 %v2971, %v2970
        %v2991 = vpack.c.b16 %v2973, %v2972
        %v2992 = vpack.c.b16 %v2975, %v2974
        %v2993 = vpack.c.b16 %v2977, %v2976
        %s3010 = scalar_lea.vmem %s1, 512
        %v3011 = vld [vmem:[%s3010] sm:$0xf]
        %v3012 = vld [vmem:[%s3010 + $0x4] sm:$0xf]
        %v3013 = vld [vmem:[%s3010 + $0x8] sm:$0xf]
        %v3014 = vld [vmem:[%s3010 + $0xc] sm:$0xf]
        %v3015 = vld [vmem:[%s3010 + $0x10] sm:$0xf]
        %v3016 = vld [vmem:[%s3010 + $0x14] sm:$0xf]
        %v3017 = vld [vmem:[%s3010 + $0x18] sm:$0xf]
        %v3018 = vld [vmem:[%s3010 + $0x1c] sm:$0xf]
        %v3019 = vld [vmem:[%s3010 + $0x20] sm:$0xf]
        %v3020 = vld [vmem:[%s3010 + $0x24] sm:$0xf]
        %v3021 = vld [vmem:[%s3010 + $0x28] sm:$0xf]
        %v3022 = vld [vmem:[%s3010 + $0x2c] sm:$0xf]
        %v3023 = vld [vmem:[%s3010 + $0x30] sm:$0xf]
        %v3024 = vld [vmem:[%s3010 + $0x34] sm:$0xf]
        %v3025 = vld [vmem:[%s3010 + $0x38] sm:$0xf]
        %v3026 = vld [vmem:[%s3010 + $0x3c] sm:$0xf]
        %v3027 = vld [vmem:[%s3010 + $0x40] sm:$0xf]
        %v3028 = vld [vmem:[%s3010 + $0x44] sm:$0xf]
        %v3029 = vld [vmem:[%s3010 + $0x48] sm:$0xf]
        %v3030 = vld [vmem:[%s3010 + $0x4c] sm:$0xf]
        %v3031 = vld [vmem:[%s3010 + $0x50] sm:$0xf]
        %v3032 = vld [vmem:[%s3010 + $0x54] sm:$0xf]
        %v3033 = vld [vmem:[%s3010 + $0x58] sm:$0xf]
        %v3034 = vld [vmem:[%s3010 + $0x5c] sm:$0xf]
        %v3035 = vld [vmem:[%s3010 + $0x60] sm:$0xf]
        %v3036 = vld [vmem:[%s3010 + $0x64] sm:$0xf]
        %v3037 = vld [vmem:[%s3010 + $0x68] sm:$0xf]
        %v3038 = vld [vmem:[%s3010 + $0x6c] sm:$0xf]
        %v3039 = vld [vmem:[%s3010 + $0x70] sm:$0xf]
        %v3040 = vld [vmem:[%s3010 + $0x74] sm:$0xf]
        %v3041 = vld [vmem:[%s3010 + $0x78] sm:$0xf]
        %v3042 = vld [vmem:[%s3010 + $0x7c] sm:$0xf]
        %v3075 = vunpack.c.l.b16 %v3011
        %v3076 = vunpack.c.l.b16 %v3012
        %v3077 = vunpack.c.l.b16 %v3013
        %v3078 = vunpack.c.l.b16 %v3014
        %v3079 = vunpack.c.l.b16 %v3015
        %v3080 = vunpack.c.l.b16 %v3016
        %v3081 = vunpack.c.l.b16 %v3017
        %v3082 = vunpack.c.l.b16 %v3018
        %v3083 = vunpack.c.l.b16 %v3019
        %v3084 = vunpack.c.l.b16 %v3020
        %v3085 = vunpack.c.l.b16 %v3021
        %v3086 = vunpack.c.l.b16 %v3022
        %v3087 = vunpack.c.l.b16 %v3023
        %v3088 = vunpack.c.l.b16 %v3024
        %v3089 = vunpack.c.l.b16 %v3025
        %v3090 = vunpack.c.l.b16 %v3026
        %v3091 = vunpack.c.l.b16 %v3027
        %v3092 = vunpack.c.l.b16 %v3028
        %v3093 = vunpack.c.l.b16 %v3029
        %v3094 = vunpack.c.l.b16 %v3030
        %v3095 = vunpack.c.l.b16 %v3031
        %v3096 = vunpack.c.l.b16 %v3032
        %v3097 = vunpack.c.l.b16 %v3033
        %v3098 = vunpack.c.l.b16 %v3034
        %v3099 = vunpack.c.l.b16 %v3035
        %v3100 = vunpack.c.l.b16 %v3036
        %v3101 = vunpack.c.l.b16 %v3037
        %v3102 = vunpack.c.l.b16 %v3038
        %v3103 = vunpack.c.l.b16 %v3039
        %v3104 = vunpack.c.l.b16 %v3040
        %v3105 = vunpack.c.l.b16 %v3041
        %v3106 = vunpack.c.l.b16 %v3042
        %v3107 = vpack.c.b16 %v3076, %v3075
        %v3108 = vpack.c.b16 %v3078, %v3077
        %v3109 = vpack.c.b16 %v3080, %v3079
        %v3110 = vpack.c.b16 %v3082, %v3081
        %v3111 = vpack.c.b16 %v3084, %v3083
        %v3112 = vpack.c.b16 %v3086, %v3085
        %v3113 = vpack.c.b16 %v3088, %v3087
        %v3114 = vpack.c.b16 %v3090, %v3089
        %v3115 = vpack.c.b16 %v3092, %v3091
        %v3116 = vpack.c.b16 %v3094, %v3093
        %v3117 = vpack.c.b16 %v3096, %v3095
        %v3118 = vpack.c.b16 %v3098, %v3097
        %v3119 = vpack.c.b16 %v3100, %v3099
        %v3120 = vpack.c.b16 %v3102, %v3101
        %v3121 = vpack.c.b16 %v3104, %v3103
        %v3122 = vpack.c.b16 %v3106, %v3105
        %3139 = vmatpush.bf16.msra.mxu0 %v3114
        %3140 = vmatpush.bf16.msra.mxu0 %v3113
        %3141 = vmatpush.bf16.msra.mxu0 %v3112
        %3142 = vmatpush.bf16.msra.mxu0 %v3111
        %3143 = vmatpush.bf16.msra.mxu0 %v3110
        %3144 = vmatpush.bf16.msra.mxu0 %v3109
        %3145 = vmatpush.bf16.msra.mxu0 %v3108
        %3146 = vmatpush.bf16.msra.mxu0 %v3107
        %3147 = vmatmul.bf16.gmra.mxu0 %v2978
        %v3148 = vpop.f32.mrf.mxu0
        %v3149 = vadd.f32 0.0, %v3148
        %v3150 = vpop.f32.mrf.mxu0
        %v3151 = vadd.f32 0.0, %v3150
        %3152 = vmatmul.bf16.gmra.mxu0 %v2979
        %v3153 = vpop.f32.mrf.mxu0
        %v3154 = vadd.f32 0.0, %v3153
        %v3155 = vpop.f32.mrf.mxu0
        %v3156 = vadd.f32 0.0, %v3155
        %3157 = vmatmul.bf16.gmra.mxu0 %v2980
        %v3158 = vpop.f32.mrf.mxu0
        %v3159 = vadd.f32 0.0, %v3158
        %v3160 = vpop.f32.mrf.mxu0
        %v3161 = vadd.f32 0.0, %v3160
        %3162 = vmatmul.bf16.gmra.mxu0 %v2981
        %v3163 = vpop.f32.mrf.mxu0
        %v3164 = vadd.f32 0.0, %v3163
        %v3165 = vpop.f32.mrf.mxu0
        %v3166 = vadd.f32 0.0, %v3165
        %3167 = vmatmul.bf16.gmra.mxu0 %v2982
        %v3168 = vpop.f32.mrf.mxu0
        %v3169 = vadd.f32 0.0, %v3168
        %v3170 = vpop.f32.mrf.mxu0
        %v3171 = vadd.f32 0.0, %v3170
        %3172 = vmatmul.bf16.gmra.mxu0 %v2983
        %v3173 = vpop.f32.mrf.mxu0
        %v3174 = vadd.f32 0.0, %v3173
        %v3175 = vpop.f32.mrf.mxu0
        %v3176 = vadd.f32 0.0, %v3175
        %3177 = vmatmul.bf16.gmra.mxu0 %v2984
        %v3178 = vpop.f32.mrf.mxu0
        %v3179 = vadd.f32 0.0, %v3178
        %v3180 = vpop.f32.mrf.mxu0
        %v3181 = vadd.f32 0.0, %v3180
        %3182 = vmatmul.bf16.gmra.mxu0 %v2985
        %v3183 = vpop.f32.mrf.mxu0
        %v3184 = vadd.f32 0.0, %v3183
        %v3185 = vpop.f32.mrf.mxu0
        %v3186 = vadd.f32 0.0, %v3185
        %3187 = vmatmul.bf16.gmra.mxu0 %v2986
        %v3188 = vpop.f32.mrf.mxu0
        %v3189 = vadd.f32 0.0, %v3188
        %v3190 = vpop.f32.mrf.mxu0
        %v3191 = vadd.f32 0.0, %v3190
        %3192 = vmatmul.bf16.gmra.mxu0 %v2987
        %v3193 = vpop.f32.mrf.mxu0
        %v3194 = vadd.f32 0.0, %v3193
        %v3195 = vpop.f32.mrf.mxu0
        %v3196 = vadd.f32 0.0, %v3195
        %3197 = vmatmul.bf16.gmra.mxu0 %v2988
        %v3198 = vpop.f32.mrf.mxu0
        %v3199 = vadd.f32 0.0, %v3198
        %v3200 = vpop.f32.mrf.mxu0
        %v3201 = vadd.f32 0.0, %v3200
        %3202 = vmatmul.bf16.gmra.mxu0 %v2989
        %v3203 = vpop.f32.mrf.mxu0
        %v3204 = vadd.f32 0.0, %v3203
        %v3205 = vpop.f32.mrf.mxu0
        %v3206 = vadd.f32 0.0, %v3205
        %3207 = vmatmul.bf16.gmra.mxu0 %v2990
        %v3208 = vpop.f32.mrf.mxu0
        %v3209 = vadd.f32 0.0, %v3208
        %v3210 = vpop.f32.mrf.mxu0
        %v3211 = vadd.f32 0.0, %v3210
        %3212 = vmatmul.bf16.gmra.mxu0 %v2991
        %v3213 = vpop.f32.mrf.mxu0
        %v3214 = vadd.f32 0.0, %v3213
        %v3215 = vpop.f32.mrf.mxu0
        %v3216 = vadd.f32 0.0, %v3215
        %3217 = vmatmul.bf16.gmra.mxu0 %v2992
        %v3218 = vpop.f32.mrf.mxu0
        %v3219 = vadd.f32 0.0, %v3218
        %v3220 = vpop.f32.mrf.mxu0
        %v3221 = vadd.f32 0.0, %v3220
        %3222 = vmatmul.bf16.gmra.mxu0 %v2993
        %v3223 = vpop.f32.mrf.mxu0
        %v3224 = vadd.f32 0.0, %v3223
        %v3225 = vpop.f32.mrf.mxu0
        %v3226 = vadd.f32 0.0, %v3225
        %3227 = vdwg.mxu0
        %3228 = vmatpush.bf16.msra.mxu0 %v3122
        %3229 = vmatpush.bf16.msra.mxu0 %v3121
        %3230 = vmatpush.bf16.msra.mxu0 %v3120
        %3231 = vmatpush.bf16.msra.mxu0 %v3119
        %3232 = vmatpush.bf16.msra.mxu0 %v3118
        %3233 = vmatpush.bf16.msra.mxu0 %v3117
        %3234 = vmatpush.bf16.msra.mxu0 %v3116
        %3235 = vmatpush.bf16.msra.mxu0 %v3115
        %3236 = vmatmul.bf16.gmra.mxu0 %v2978
        %v3237 = vpop.f32.mrf.mxu0
        %v3238 = vadd.f32 %v3149, %v3237
        %v3239 = vpop.f32.mrf.mxu0
        %v3240 = vadd.f32 %v3151, %v3239
        %3241 = vmatmul.bf16.gmra.mxu0 %v2979
        %v3242 = vpop.f32.mrf.mxu0
        %v3243 = vadd.f32 %v3154, %v3242
        %v3244 = vpop.f32.mrf.mxu0
        %v3245 = vadd.f32 %v3156, %v3244
        %3246 = vmatmul.bf16.gmra.mxu0 %v2980
        %v3247 = vpop.f32.mrf.mxu0
        %v3248 = vadd.f32 %v3159, %v3247
        %v3249 = vpop.f32.mrf.mxu0
        %v3250 = vadd.f32 %v3161, %v3249
        %3251 = vmatmul.bf16.gmra.mxu0 %v2981
        %v3252 = vpop.f32.mrf.mxu0
        %v3253 = vadd.f32 %v3164, %v3252
        %v3254 = vpop.f32.mrf.mxu0
        %v3255 = vadd.f32 %v3166, %v3254
        %3256 = vmatmul.bf16.gmra.mxu0 %v2982
        %v3257 = vpop.f32.mrf.mxu0
        %v3258 = vadd.f32 %v3169, %v3257
        %v3259 = vpop.f32.mrf.mxu0
        %v3260 = vadd.f32 %v3171, %v3259
        %3261 = vmatmul.bf16.gmra.mxu0 %v2983
        %v3262 = vpop.f32.mrf.mxu0
        %v3263 = vadd.f32 %v3174, %v3262
        %v3264 = vpop.f32.mrf.mxu0
        %v3265 = vadd.f32 %v3176, %v3264
        %3266 = vmatmul.bf16.gmra.mxu0 %v2984
        %v3267 = vpop.f32.mrf.mxu0
        %v3268 = vadd.f32 %v3179, %v3267
        %v3269 = vpop.f32.mrf.mxu0
        %v3270 = vadd.f32 %v3181, %v3269
        %3271 = vmatmul.bf16.gmra.mxu0 %v2985
        %v3272 = vpop.f32.mrf.mxu0
        %v3273 = vadd.f32 %v3184, %v3272
        %v3274 = vpop.f32.mrf.mxu0
        %v3275 = vadd.f32 %v3186, %v3274
        %3276 = vmatmul.bf16.gmra.mxu0 %v2986
        %v3277 = vpop.f32.mrf.mxu0
        %v3278 = vadd.f32 %v3189, %v3277
        %v3279 = vpop.f32.mrf.mxu0
        %v3280 = vadd.f32 %v3191, %v3279
        %3281 = vmatmul.bf16.gmra.mxu0 %v2987
        %v3282 = vpop.f32.mrf.mxu0
        %v3283 = vadd.f32 %v3194, %v3282
        %v3284 = vpop.f32.mrf.mxu0
        %v3285 = vadd.f32 %v3196, %v3284
        %3286 = vmatmul.bf16.gmra.mxu0 %v2988
        %v3287 = vpop.f32.mrf.mxu0
        %v3288 = vadd.f32 %v3199, %v3287
        %v3289 = vpop.f32.mrf.mxu0
        %v3290 = vadd.f32 %v3201, %v3289
        %3291 = vmatmul.bf16.gmra.mxu0 %v2989
        %v3292 = vpop.f32.mrf.mxu0
        %v3293 = vadd.f32 %v3204, %v3292
        %v3294 = vpop.f32.mrf.mxu0
        %v3295 = vadd.f32 %v3206, %v3294
        %3296 = vmatmul.bf16.gmra.mxu0 %v2990
        %v3297 = vpop.f32.mrf.mxu0
        %v3298 = vadd.f32 %v3209, %v3297
        %v3299 = vpop.f32.mrf.mxu0
        %v3300 = vadd.f32 %v3211, %v3299
        %3301 = vmatmul.bf16.gmra.mxu0 %v2991
        %v3302 = vpop.f32.mrf.mxu0
        %v3303 = vadd.f32 %v3214, %v3302
        %v3304 = vpop.f32.mrf.mxu0
        %v3305 = vadd.f32 %v3216, %v3304
        %3306 = vmatmul.bf16.gmra.mxu0 %v2992
        %v3307 = vpop.f32.mrf.mxu0
        %v3308 = vadd.f32 %v3219, %v3307
        %v3309 = vpop.f32.mrf.mxu0
        %v3310 = vadd.f32 %v3221, %v3309
        %3311 = vmatmul.bf16.gmra.mxu0 %v2993
        %v3312 = vpop.f32.mrf.mxu0
        %v3313 = vadd.f32 %v3224, %v3312
        %v3314 = vpop.f32.mrf.mxu0
        %v3315 = vadd.f32 %v3226, %v3314
        %3316 = vdwg.mxu0
        %v3317 = vadd.f32 %v2818, %v3238
        %v3318 = vadd.f32 %v2819, %v3240
        %v3319 = vadd.f32 %v2820, %v3243
        %v3320 = vadd.f32 %v2821, %v3245
        %v3321 = vadd.f32 %v2822, %v3248
        %v3322 = vadd.f32 %v2823, %v3250
        %v3323 = vadd.f32 %v2824, %v3253
        %v3324 = vadd.f32 %v2825, %v3255
        %v3325 = vadd.f32 %v2826, %v3258
        %v3326 = vadd.f32 %v2827, %v3260
        %v3327 = vadd.f32 %v2828, %v3263
        %v3328 = vadd.f32 %v2829, %v3265
        %v3329 = vadd.f32 %v2830, %v3268
        %v3330 = vadd.f32 %v2831, %v3270
        %v3331 = vadd.f32 %v2832, %v3273
        %v3332 = vadd.f32 %v2833, %v3275
        %v3333 = vadd.f32 %v2834, %v3278
        %v3334 = vadd.f32 %v2835, %v3280
        %v3335 = vadd.f32 %v2836, %v3283
        %v3336 = vadd.f32 %v2837, %v3285
        %v3337 = vadd.f32 %v2838, %v3288
        %v3338 = vadd.f32 %v2839, %v3290
        %v3339 = vadd.f32 %v2840, %v3293
        %v3340 = vadd.f32 %v2841, %v3295
        %v3341 = vadd.f32 %v2842, %v3298
        %v3342 = vadd.f32 %v2843, %v3300
        %v3343 = vadd.f32 %v2844, %v3303
        %v3344 = vadd.f32 %v2845, %v3305
        %v3345 = vadd.f32 %v2846, %v3308
        %v3346 = vadd.f32 %v2847, %v3310
        %v3347 = vadd.f32 %v2848, %v3313
        %v3348 = vadd.f32 %v2849, %v3315
        %v3349 = vld [vmem:[%s3] sm:$0x1]
        %v3350 = vld [vmem:[%s4] sm:$0x1]
        %v3351 = vadd.f32 %v3317, %v3318
        %v3352 = vadd.f32 %v3351, %v3319
        %v3353 = vadd.f32 %v3352, %v3320
        %v3354 = vadd.f32 %v3353, %v3321
        %v3355 = vadd.f32 %v3354, %v3322
        %v3356 = vadd.f32 %v3355, %v3323
        %v3357 = vadd.f32 %v3356, %v3324
        %v3358 = vadd.f32 %v3357, %v3325
        %v3359 = vadd.f32 %v3358, %v3326
        %v3360 = vadd.f32 %v3359, %v3327
        %v3361 = vadd.f32 %v3360, %v3328
        %v3362 = vadd.f32 %v3361, %v3329
        %v3363 = vadd.f32 %v3362, %v3330
        %v3364 = vadd.f32 %v3363, %v3331
        %v3365 = vadd.f32 %v3364, %v3332
        %v3366 = vadd.f32 %v3365, %v3333
        %v3367 = vadd.f32 %v3366, %v3334
        %v3368 = vadd.f32 %v3367, %v3335
        %v3369 = vadd.f32 %v3368, %v3336
        %v3370 = vadd.f32 %v3369, %v3337
        %v3371 = vadd.f32 %v3370, %v3338
        %v3372 = vadd.f32 %v3371, %v3339
        %v3373 = vadd.f32 %v3372, %v3340
        %v3374 = vadd.f32 %v3373, %v3341
        %v3375 = vadd.f32 %v3374, %v3342
        %v3376 = vadd.f32 %v3375, %v3343
        %v3377 = vadd.f32 %v3376, %v3344
        %v3378 = vadd.f32 %v3377, %v3345
        %v3379 = vadd.f32 %v3378, %v3346
        %v3380 = vadd.f32 %v3379, %v3347
        %v3381 = vadd.f32 %v3380, %v3348
        %v3382 = vrot.slane %v3381, 4
        %v3383 = vadd.f32 %v3381, %v3382
        %v3384 = vrot.slane %v3383, 2
        %v3385 = vadd.f32 %v3383, %v3384
        %v3386 = vrot.slane %v3385, 1
        %v3387 = vadd.f32 %v3385, %v3386
        %v3388 = vmul.f32 %v3387, 0.00390625
        %v3389 = vmul.f32 %v3317, %v3317
        %v3390 = vmul.f32 %v3318, %v3318
        %v3391 = vmul.f32 %v3319, %v3319
        %v3392 = vmul.f32 %v3320, %v3320
        %v3393 = vmul.f32 %v3321, %v3321
        %v3394 = vmul.f32 %v3322, %v3322
        %v3395 = vmul.f32 %v3323, %v3323
        %v3396 = vmul.f32 %v3324, %v3324
        %v3397 = vmul.f32 %v3325, %v3325
        %v3398 = vmul.f32 %v3326, %v3326
        %v3399 = vmul.f32 %v3327, %v3327
        %v3400 = vmul.f32 %v3328, %v3328
        %v3401 = vmul.f32 %v3329, %v3329
        %v3402 = vmul.f32 %v3330, %v3330
        %v3403 = vmul.f32 %v3331, %v3331
        %v3404 = vmul.f32 %v3332, %v3332
        %v3405 = vmul.f32 %v3333, %v3333
        %v3406 = vmul.f32 %v3334, %v3334
        %v3407 = vmul.f32 %v3335, %v3335
        %v3408 = vmul.f32 %v3336, %v3336
        %v3409 = vmul.f32 %v3337, %v3337
        %v3410 = vmul.f32 %v3338, %v3338
        %v3411 = vmul.f32 %v3339, %v3339
        %v3412 = vmul.f32 %v3340, %v3340
        %v3413 = vmul.f32 %v3341, %v3341
        %v3414 = vmul.f32 %v3342, %v3342
        %v3415 = vmul.f32 %v3343, %v3343
        %v3416 = vmul.f32 %v3344, %v3344
        %v3417 = vmul.f32 %v3345, %v3345
        %v3418 = vmul.f32 %v3346, %v3346
        %v3419 = vmul.f32 %v3347, %v3347
        %v3420 = vmul.f32 %v3348, %v3348
        %v3421 = vadd.f32 %v3389, %v3390
        %v3422 = vadd.f32 %v3421, %v3391
        %v3423 = vadd.f32 %v3422, %v3392
        %v3424 = vadd.f32 %v3423, %v3393
        %v3425 = vadd.f32 %v3424, %v3394
        %v3426 = vadd.f32 %v3425, %v3395
        %v3427 = vadd.f32 %v3426, %v3396
        %v3428 = vadd.f32 %v3427, %v3397
        %v3429 = vadd.f32 %v3428, %v3398
        %v3430 = vadd.f32 %v3429, %v3399
        %v3431 = vadd.f32 %v3430, %v3400
        %v3432 = vadd.f32 %v3431, %v3401
        %v3433 = vadd.f32 %v3432, %v3402
        %v3434 = vadd.f32 %v3433, %v3403
        %v3435 = vadd.f32 %v3434, %v3404
        %v3436 = vadd.f32 %v3435, %v3405
        %v3437 = vadd.f32 %v3436, %v3406
        %v3438 = vadd.f32 %v3437, %v3407
        %v3439 = vadd.f32 %v3438, %v3408
        %v3440 = vadd.f32 %v3439, %v3409
        %v3441 = vadd.f32 %v3440, %v3410
        %v3442 = vadd.f32 %v3441, %v3411
        %v3443 = vadd.f32 %v3442, %v3412
        %v3444 = vadd.f32 %v3443, %v3413
        %v3445 = vadd.f32 %v3444, %v3414
        %v3446 = vadd.f32 %v3445, %v3415
        %v3447 = vadd.f32 %v3446, %v3416
        %v3448 = vadd.f32 %v3447, %v3417
        %v3449 = vadd.f32 %v3448, %v3418
        %v3450 = vadd.f32 %v3449, %v3419
        %v3451 = vadd.f32 %v3450, %v3420
        %v3452 = vrot.slane %v3451, 4
        %v3453 = vadd.f32 %v3451, %v3452
        %v3454 = vrot.slane %v3453, 2
        %v3455 = vadd.f32 %v3453, %v3454
        %v3456 = vrot.slane %v3455, 1
        %v3457 = vadd.f32 %v3455, %v3456
        %v3458 = vmul.f32 %v3457, 0.00390625
        %v3459 = vmul.f32 %v3388, %v3388
        %v3460 = vsub.f32 %v3458, %v3459
        %v3461 = vmax.f32 %v3460, 0.0
        %v3462 = vadd.f32 %v3461, 1e-05
        %v3463 = vrsqrt.pop %v3462
        %v3464 = vmul.f32 %v3463, %v3462
        %v3465 = vmul.f32 %v3464, %v3463
        %v3466 = vmul.f32 0.5, %v3465
        %v3467 = vsub.f32 1.5, %v3466
        %v3468 = vmul.f32 %v3463, %v3467
        %vm3469 = vweird.f32 %v3462
        %vm3470 = vweird.f32 %v3463
        %vm3471 = vmor %vm3469, %vm3470
        %v3472 = vsel %vm3471, %v3463, %v3468
        %v3473 = vsub.f32 %v3317, %v3388
        %v3474 = vsub.f32 %v3318, %v3388
        %v3475 = vsub.f32 %v3319, %v3388
        %v3476 = vsub.f32 %v3320, %v3388
        %v3477 = vsub.f32 %v3321, %v3388
        %v3478 = vsub.f32 %v3322, %v3388
        %v3479 = vsub.f32 %v3323, %v3388
        %v3480 = vsub.f32 %v3324, %v3388
        %v3481 = vsub.f32 %v3325, %v3388
        %v3482 = vsub.f32 %v3326, %v3388
        %v3483 = vsub.f32 %v3327, %v3388
        %v3484 = vsub.f32 %v3328, %v3388
        %v3485 = vsub.f32 %v3329, %v3388
        %v3486 = vsub.f32 %v3330, %v3388
        %v3487 = vsub.f32 %v3331, %v3388
        %v3488 = vsub.f32 %v3332, %v3388
        %v3489 = vsub.f32 %v3333, %v3388
        %v3490 = vsub.f32 %v3334, %v3388
        %v3491 = vsub.f32 %v3335, %v3388
        %v3492 = vsub.f32 %v3336, %v3388
        %v3493 = vsub.f32 %v3337, %v3388
        %v3494 = vsub.f32 %v3338, %v3388
        %v3495 = vsub.f32 %v3339, %v3388
        %v3496 = vsub.f32 %v3340, %v3388
        %v3497 = vsub.f32 %v3341, %v3388
        %v3498 = vsub.f32 %v3342, %v3388
        %v3499 = vsub.f32 %v3343, %v3388
        %v3500 = vsub.f32 %v3344, %v3388
        %v3501 = vsub.f32 %v3345, %v3388
        %v3502 = vsub.f32 %v3346, %v3388
        %v3503 = vsub.f32 %v3347, %v3388
        %v3504 = vsub.f32 %v3348, %v3388
        %v3505 = vmul.f32 %v3472, %v3349
        %v3506 = vperm.slane %v3505, 0
        %v3507 = vmul.f32 %v3473, %v3506
        %v3508 = vmul.f32 %v3474, %v3506
        %v3509 = vmul.f32 %v3475, %v3506
        %v3510 = vmul.f32 %v3476, %v3506
        %v3511 = vmul.f32 %v3477, %v3506
        %v3512 = vmul.f32 %v3478, %v3506
        %v3513 = vmul.f32 %v3479, %v3506
        %v3514 = vmul.f32 %v3480, %v3506
        %v3515 = vmul.f32 %v3481, %v3506
        %v3516 = vmul.f32 %v3482, %v3506
        %v3517 = vmul.f32 %v3483, %v3506
        %v3518 = vmul.f32 %v3484, %v3506
        %v3519 = vmul.f32 %v3485, %v3506
        %v3520 = vmul.f32 %v3486, %v3506
        %v3521 = vmul.f32 %v3487, %v3506
        %v3522 = vmul.f32 %v3488, %v3506
        %v3523 = vmul.f32 %v3489, %v3506
        %v3524 = vmul.f32 %v3490, %v3506
        %v3525 = vmul.f32 %v3491, %v3506
        %v3526 = vmul.f32 %v3492, %v3506
        %v3527 = vmul.f32 %v3493, %v3506
        %v3528 = vmul.f32 %v3494, %v3506
        %v3529 = vmul.f32 %v3495, %v3506
        %v3530 = vmul.f32 %v3496, %v3506
        %v3531 = vmul.f32 %v3497, %v3506
        %v3532 = vmul.f32 %v3498, %v3506
        %v3533 = vmul.f32 %v3499, %v3506
        %v3534 = vmul.f32 %v3500, %v3506
        %v3535 = vmul.f32 %v3501, %v3506
        %v3536 = vmul.f32 %v3502, %v3506
        %v3537 = vmul.f32 %v3503, %v3506
        %v3538 = vmul.f32 %v3504, %v3506
        %v3540 = vperm.slane %v3350, 0
        %v3542 = vadd.f32 %v3507, %v3540
        %v3543 = vadd.f32 %v3508, %v3540
        %v3544 = vadd.f32 %v3509, %v3540
        %v3545 = vadd.f32 %v3510, %v3540
        %v3546 = vadd.f32 %v3511, %v3540
        %v3547 = vadd.f32 %v3512, %v3540
        %v3548 = vadd.f32 %v3513, %v3540
        %v3549 = vadd.f32 %v3514, %v3540
        %v3550 = vadd.f32 %v3515, %v3540
        %v3551 = vadd.f32 %v3516, %v3540
        %v3552 = vadd.f32 %v3517, %v3540
        %v3553 = vadd.f32 %v3518, %v3540
        %v3554 = vadd.f32 %v3519, %v3540
        %v3555 = vadd.f32 %v3520, %v3540
        %v3556 = vadd.f32 %v3521, %v3540
        %v3557 = vadd.f32 %v3522, %v3540
        %v3558 = vadd.f32 %v3523, %v3540
        %v3559 = vadd.f32 %v3524, %v3540
        %v3560 = vadd.f32 %v3525, %v3540
        %v3561 = vadd.f32 %v3526, %v3540
        %v3562 = vadd.f32 %v3527, %v3540
        %v3563 = vadd.f32 %v3528, %v3540
        %v3564 = vadd.f32 %v3529, %v3540
        %v3565 = vadd.f32 %v3530, %v3540
        %v3566 = vadd.f32 %v3531, %v3540
        %v3567 = vadd.f32 %v3532, %v3540
        %v3568 = vadd.f32 %v3533, %v3540
        %v3569 = vadd.f32 %v3534, %v3540
        %v3570 = vadd.f32 %v3535, %v3540
        %v3571 = vadd.f32 %v3536, %v3540
        %v3572 = vadd.f32 %v3537, %v3540
        %v3573 = vadd.f32 %v3538, %v3540
        %v3574 = vmax.f32 %v3542, 0.0
        %v3575 = vmax.f32 %v3543, 0.0
        %v3576 = vmax.f32 %v3544, 0.0
        %v3577 = vmax.f32 %v3545, 0.0
        %v3578 = vmax.f32 %v3546, 0.0
        %v3579 = vmax.f32 %v3547, 0.0
        %v3580 = vmax.f32 %v3548, 0.0
        %v3581 = vmax.f32 %v3549, 0.0
        %v3582 = vmax.f32 %v3550, 0.0
        %v3583 = vmax.f32 %v3551, 0.0
        %v3584 = vmax.f32 %v3552, 0.0
        %v3585 = vmax.f32 %v3553, 0.0
        %v3586 = vmax.f32 %v3554, 0.0
        %v3587 = vmax.f32 %v3555, 0.0
        %v3588 = vmax.f32 %v3556, 0.0
        %v3589 = vmax.f32 %v3557, 0.0
        %v3590 = vmax.f32 %v3558, 0.0
        %v3591 = vmax.f32 %v3559, 0.0
        %v3592 = vmax.f32 %v3560, 0.0
        %v3593 = vmax.f32 %v3561, 0.0
        %v3594 = vmax.f32 %v3562, 0.0
        %v3595 = vmax.f32 %v3563, 0.0
        %v3596 = vmax.f32 %v3564, 0.0
        %v3597 = vmax.f32 %v3565, 0.0
        %v3598 = vmax.f32 %v3566, 0.0
        %v3599 = vmax.f32 %v3567, 0.0
        %v3600 = vmax.f32 %v3568, 0.0
        %v3601 = vmax.f32 %v3569, 0.0
        %v3602 = vmax.f32 %v3570, 0.0
        %v3603 = vmax.f32 %v3571, 0.0
        %v3604 = vmax.f32 %v3572, 0.0
        %v3605 = vmax.f32 %v3573, 0.0
        %v3622 = vrot.slane %v3576, 1
        %v3623 = vrot.slane %v3574, 1
        %v3624 = vrot.slane %v3578, 1
        %v3625 = vrot.slane %v3580, 1
        %v3626 = vrot.slane %v3582, 1
        %v3627 = vrot.slane %v3584, 1
        %v3628 = vrot.slane %v3586, 1
        %v3629 = vrot.slane %v3588, 1
        %v3630 = vrot.slane %v3590, 1
        %v3631 = vrot.slane %v3592, 1
        %v3632 = vrot.slane %v3594, 1
        %v3633 = vrot.slane %v3596, 1
        %v3634 = vrot.slane %v3598, 1
        %v3635 = vrot.slane %v3600, 1
        %v3636 = vrot.slane %v3602, 1
        %v3637 = vrot.slane %v3604, 1
        %vm3670 = vcmask 1040384
        %v3671 = vrot.slane %v3576, 7
        %v3672 = vrot.slane %v3577, 7
        %v3673 = vsel %vm3670, %v3671, %v3672
        %v3674 = vrot.slane %v3574, 7
        %v3675 = vrot.slane %v3575, 7
        %v3676 = vsel %vm3670, %v3674, %v3675
        %v3677 = vrot.slane %v3578, 7
        %v3678 = vrot.slane %v3579, 7
        %v3679 = vsel %vm3670, %v3677, %v3678
        %v3680 = vrot.slane %v3580, 7
        %v3681 = vrot.slane %v3581, 7
        %v3682 = vsel %vm3670, %v3680, %v3681
        %v3683 = vrot.slane %v3582, 7
        %v3684 = vrot.slane %v3583, 7
        %v3685 = vsel %vm3670, %v3683, %v3684
        %v3686 = vrot.slane %v3584, 7
        %v3687 = vrot.slane %v3585, 7
        %v3688 = vsel %vm3670, %v3686, %v3687
        %v3689 = vrot.slane %v3586, 7
        %v3690 = vrot.slane %v3587, 7
        %v3691 = vsel %vm3670, %v3689, %v3690
        %v3692 = vrot.slane %v3588, 7
        %v3693 = vrot.slane %v3589, 7
        %v3694 = vsel %vm3670, %v3692, %v3693
        %v3695 = vrot.slane %v3590, 7
        %v3696 = vrot.slane %v3591, 7
        %v3697 = vsel %vm3670, %v3695, %v3696
        %v3698 = vrot.slane %v3592, 7
        %v3699 = vrot.slane %v3593, 7
        %v3700 = vsel %vm3670, %v3698, %v3699
        %v3701 = vrot.slane %v3594, 7
        %v3702 = vrot.slane %v3595, 7
        %v3703 = vsel %vm3670, %v3701, %v3702
        %v3704 = vrot.slane %v3596, 7
        %v3705 = vrot.slane %v3597, 7
        %v3706 = vsel %vm3670, %v3704, %v3705
        %v3707 = vrot.slane %v3598, 7
        %v3708 = vrot.slane %v3599, 7
        %v3709 = vsel %vm3670, %v3707, %v3708
        %v3710 = vrot.slane %v3600, 7
        %v3711 = vrot.slane %v3601, 7
        %v3712 = vsel %vm3670, %v3710, %v3711
        %v3713 = vrot.slane %v3602, 7
        %v3714 = vrot.slane %v3603, 7
        %v3715 = vsel %vm3670, %v3713, %v3714
        %v3716 = vrot.slane %v3604, 7
        %v3717 = vrot.slane %v3605, 7
        %v3718 = vsel %vm3670, %v3716, %v3717
        %v3767 = vrot.slane %v3577, 5
        %v3768 = vrot.slane %v3575, 5
        %v3769 = vrot.slane %v3579, 5
        %v3770 = vrot.slane %v3581, 5
        %v3771 = vrot.slane %v3583, 5
        %v3772 = vrot.slane %v3585, 5
        %v3773 = vrot.slane %v3587, 5
        %v3774 = vrot.slane %v3589, 5
        %v3775 = vrot.slane %v3591, 5
        %v3776 = vrot.slane %v3593, 5
        %v3777 = vrot.slane %v3595, 5
        %v3778 = vrot.slane %v3597, 5
        %v3779 = vrot.slane %v3599, 5
        %v3780 = vrot.slane %v3601, 5
        %v3781 = vrot.slane %v3603, 5
        %v3782 = vrot.slane %v3605, 5
        %v3799 = vsel %vm3670, %v3622, %v3671
        %v3800 = vsel %vm3670, %v3623, %v3674
        %v3801 = vsel %vm3670, %v3624, %v3677
        %v3802 = vsel %vm3670, %v3625, %v3680
        %v3803 = vsel %vm3670, %v3626, %v3683
        %v3804 = vsel %vm3670, %v3627, %v3686
        %v3805 = vsel %vm3670, %v3628, %v3689
        %v3806 = vsel %vm3670, %v3629, %v3692
        %v3807 = vsel %vm3670, %v3630, %v3695
        %v3808 = vsel %vm3670, %v3631, %v3698
        %v3809 = vsel %vm3670, %v3632, %v3701
        %v3810 = vsel %vm3670, %v3633, %v3704
        %v3811 = vsel %vm3670, %v3634, %v3707
        %v3812 = vsel %vm3670, %v3635, %v3710
        %v3813 = vsel %vm3670, %v3636, %v3713
        %v3814 = vsel %vm3670, %v3637, %v3716
        %v3815 = vsel %vm3670, %v3672, %v3767
        %v3816 = vsel %vm3670, %v3675, %v3768
        %v3817 = vsel %vm3670, %v3678, %v3769
        %v3818 = vsel %vm3670, %v3681, %v3770
        %v3819 = vsel %vm3670, %v3684, %v3771
        %v3820 = vsel %vm3670, %v3687, %v3772
        %v3821 = vsel %vm3670, %v3690, %v3773
        %v3822 = vsel %vm3670, %v3693, %v3774
        %v3823 = vsel %vm3670, %v3696, %v3775
        %v3824 = vsel %vm3670, %v3699, %v3776
        %v3825 = vsel %vm3670, %v3702, %v3777
        %v3826 = vsel %vm3670, %v3705, %v3778
        %v3827 = vsel %vm3670, %v3708, %v3779
        %v3828 = vsel %vm3670, %v3711, %v3780
        %v3829 = vsel %vm3670, %v3714, %v3781
        %v3830 = vsel %vm3670, %v3717, %v3782
        %3831 = vst [vmem:[#allocation2] sm:$0xff] %v3799
        %3832 = vst [vmem:[#allocation2 + $0x8] sm:$0xff] %v3673
        %3833 = vst [vmem:[#allocation2 + $0x10] sm:$0x3] %v3815
        %3834 = vst [vmem:[#allocation2 + $0x18] sm:$0xff] %v3800
        %3835 = vst [vmem:[#allocation2 + $0x20] sm:$0xff] %v3676
        %3836 = vst [vmem:[#allocation2 + $0x28] sm:$0x3] %v3816
        %3837 = vst [vmem:[#allocation2 + $0x30] sm:$0xff] %v3799
        %3838 = vst [vmem:[#allocation2 + $0x38] sm:$0xff] %v3673
        %3839 = vst [vmem:[#allocation2 + $0x40] sm:$0x3] %v3815
        %3840 = vst [vmem:[#allocation2 + $0x48] sm:$0xff] %v3801
        %3841 = vst [vmem:[#allocation2 + $0x50] sm:$0xff] %v3679
        %3842 = vst [vmem:[#allocation2 + $0x58] sm:$0x3] %v3817
        %3843 = vst [vmem:[#allocation2 + $0x60] sm:$0xff] %v3802
        %3844 = vst [vmem:[#allocation2 + $0x68] sm:$0xff] %v3682
        %3845 = vst [vmem:[#allocation2 + $0x70] sm:$0x3] %v3818
        %3846 = vst [vmem:[#allocation2 + $0x78] sm:$0xff] %v3803
        %3847 = vst [vmem:[#allocation2 + $0x80] sm:$0xff] %v3685
        %3848 = vst [vmem:[#allocation2 + $0x88] sm:$0x3] %v3819
        %3849 = vst [vmem:[#allocation2 + $0x90] sm:$0xff] %v3804
        %3850 = vst [vmem:[#allocation2 + $0x98] sm:$0xff] %v3688
        %3851 = vst [vmem:[#allocation2 + $0xa0] sm:$0x3] %v3820
        %3852 = vst [vmem:[#allocation2 + $0xa8] sm:$0xff] %v3805
        %3853 = vst [vmem:[#allocation2 + $0xb0] sm:$0xff] %v3691
        %3854 = vst [vmem:[#allocation2 + $0xb8] sm:$0x3] %v3821
        %3855 = vst [vmem:[#allocation2 + $0xc0] sm:$0xff] %v3806
        %3856 = vst [vmem:[#allocation2 + $0xc8] sm:$0xff] %v3694
        %3857 = vst [vmem:[#allocation2 + $0xd0] sm:$0x3] %v3822
        %3858 = vst [vmem:[#allocation2 + $0xd8] sm:$0xff] %v3807
        %3859 = vst [vmem:[#allocation2 + $0xe0] sm:$0xff] %v3697
        %3860 = vst [vmem:[#allocation2 + $0xe8] sm:$0x3] %v3823
        %3861 = vst [vmem:[#allocation2 + $0xf0] sm:$0xff] %v3808
        %3862 = vst [vmem:[#allocation2 + $0xf8] sm:$0xff] %v3700
        %3863 = vst [vmem:[#allocation2 + $0x100] sm:$0x3] %v3824
        %3864 = vst [vmem:[#allocation2 + $0x108] sm:$0xff] %v3809
        %3865 = vst [vmem:[#allocation2 + $0x110] sm:$0xff] %v3703
        %3866 = vst [vmem:[#allocation2 + $0x118] sm:$0x3] %v3825
        %3867 = vst [vmem:[#allocation2 + $0x120] sm:$0xff] %v3810
        %3868 = vst [vmem:[#allocation2 + $0x128] sm:$0xff] %v3706
        %3869 = vst [vmem:[#allocation2 + $0x130] sm:$0x3] %v3826
        %3870 = vst [vmem:[#allocation2 + $0x138] sm:$0xff] %v3811
        %3871 = vst [vmem:[#allocation2 + $0x140] sm:$0xff] %v3709
        %3872 = vst [vmem:[#allocation2 + $0x148] sm:$0x3] %v3827
        %3873 = vst [vmem:[#allocation2 + $0x150] sm:$0xff] %v3812
        %3874 = vst [vmem:[#allocation2 + $0x158] sm:$0xff] %v3712
        %3875 = vst [vmem:[#allocation2 + $0x160] sm:$0x3] %v3828
        %3876 = vst [vmem:[#allocation2 + $0x168] sm:$0xff] %v3813
        %3877 = vst [vmem:[#allocation2 + $0x170] sm:$0xff] %v3715
        %3878 = vst [vmem:[#allocation2 + $0x178] sm:$0x3] %v3829
        %3879 = vst [vmem:[#allocation2 + $0x180] sm:$0xff] %v3814
        %3880 = vst [vmem:[#allocation2 + $0x188] sm:$0xff] %v3718
        %3881 = vst [vmem:[#allocation2 + $0x190] sm:$0x3] %v3830
        %3882 = vst [vmem:[#allocation2 + $0x198] sm:$0xff] %v3813
        %3883 = vst [vmem:[#allocation2 + $0x1a0] sm:$0xff] %v3715
        %3884 = vst [vmem:[#allocation2 + $0x1a8] sm:$0x3] %v3829
        %v3885 = vld [vmem:[#allocation2] sm:$0xff]
        %v3886 = vld [vmem:[#allocation2 + $0x8] sm:$0xff]
        %v3887 = vld [vmem:[#allocation2 + $0x18] sm:$0xff]
        %v3888 = vld [vmem:[#allocation2 + $0x20] sm:$0xff]
        %v3889 = vld [vmem:[#allocation2 + $0x30] sm:$0xff]
        %v3890 = vld [vmem:[#allocation2 + $0x38] sm:$0xff]
        %v3891 = vld [vmem:[#allocation2 + $0x48] sm:$0xff]
        %v3892 = vld [vmem:[#allocation2 + $0x50] sm:$0xff]
        %v3893 = vld [vmem:[#allocation2 + $0x60] sm:$0xff]
        %v3894 = vld [vmem:[#allocation2 + $0x68] sm:$0xff]
        %v3895 = vld [vmem:[#allocation2 + $0x78] sm:$0xff]
        %v3896 = vld [vmem:[#allocation2 + $0x80] sm:$0xff]
        %v3897 = vld [vmem:[#allocation2 + $0x90] sm:$0xff]
        %v3898 = vld [vmem:[#allocation2 + $0x98] sm:$0xff]
        %v3899 = vld [vmem:[#allocation2 + $0xa8] sm:$0xff]
        %v3900 = vld [vmem:[#allocation2 + $0xb0] sm:$0xff]
        %v3901 = vld [vmem:[#allocation2 + $0xc0] sm:$0xff]
        %v3902 = vld [vmem:[#allocation2 + $0xc8] sm:$0xff]
        %v3903 = vld [vmem:[#allocation2 + $0xd8] sm:$0xff]
        %v3904 = vld [vmem:[#allocation2 + $0xe0] sm:$0xff]
        %v3905 = vld [vmem:[#allocation2 + $0xf0] sm:$0xff]
        %v3906 = vld [vmem:[#allocation2 + $0xf8] sm:$0xff]
        %v3907 = vld [vmem:[#allocation2 + $0x108] sm:$0xff]
        %v3908 = vld [vmem:[#allocation2 + $0x110] sm:$0xff]
        %v3909 = vld [vmem:[#allocation2 + $0x120] sm:$0xff]
        %v3910 = vld [vmem:[#allocation2 + $0x128] sm:$0xff]
        %v3911 = vld [vmem:[#allocation2 + $0x138] sm:$0xff]
        %v3912 = vld [vmem:[#allocation2 + $0x140] sm:$0xff]
        %v3913 = vld [vmem:[#allocation2 + $0x150] sm:$0xff]
        %v3914 = vld [vmem:[#allocation2 + $0x158] sm:$0xff]
        %v3915 = vld [vmem:[#allocation2 + $0x168] sm:$0xff]
        %v3916 = vld [vmem:[#allocation2 + $0x170] sm:$0xff]
        %v3917 = vpack.c.bf16 %v3885, %v3885
        %v3918 = vpack.c.bf16 %v3886, %v3886
        %v3919 = vpack.c.bf16 %v3887, %v3887
        %v3920 = vpack.c.bf16 %v3888, %v3888
        %v3921 = vpack.c.bf16 %v3889, %v3889
        %v3922 = vpack.c.bf16 %v3890, %v3890
        %v3923 = vpack.c.bf16 %v3891, %v3891
        %v3924 = vpack.c.bf16 %v3892, %v3892
        %v3925 = vpack.c.bf16 %v3893, %v3893
        %v3926 = vpack.c.bf16 %v3894, %v3894
        %v3927 = vpack.c.bf16 %v3895, %v3895
        %v3928 = vpack.c.bf16 %v3896, %v3896
        %v3929 = vpack.c.bf16 %v3897, %v3897
        %v3930 = vpack.c.bf16 %v3898, %v3898
        %v3931 = vpack.c.bf16 %v3899, %v3899
        %v3932 = vpack.c.bf16 %v3900, %v3900
        %v3933 = vpack.c.bf16 %v3901, %v3901
        %v3934 = vpack.c.bf16 %v3902, %v3902
        %v3935 = vpack.c.bf16 %v3903, %v3903
        %v3936 = vpack.c.bf16 %v3904, %v3904
        %v3937 = vpack.c.bf16 %v3905, %v3905
        %v3938 = vpack.c.bf16 %v3906, %v3906
        %v3939 = vpack.c.bf16 %v3907, %v3907
        %v3940 = vpack.c.bf16 %v3908, %v3908
        %v3941 = vpack.c.bf16 %v3909, %v3909
        %v3942 = vpack.c.bf16 %v3910, %v3910
        %v3943 = vpack.c.bf16 %v3911, %v3911
        %v3944 = vpack.c.bf16 %v3912, %v3912
        %v3945 = vpack.c.bf16 %v3913, %v3913
        %v3946 = vpack.c.bf16 %v3914, %v3914
        %v3947 = vpack.c.bf16 %v3915, %v3915
        %v3948 = vpack.c.bf16 %v3916, %v3916
        %v3949 = vld [vmem:[#allocation2 + $0x1] sm:$0xff]
        %v3950 = vld [vmem:[#allocation2 + $0x9] sm:$0xff]
        %v3951 = vld [vmem:[#allocation2 + $0x19] sm:$0xff]
        %v3952 = vld [vmem:[#allocation2 + $0x21] sm:$0xff]
        %v3953 = vld [vmem:[#allocation2 + $0x31] sm:$0xff]
        %v3954 = vld [vmem:[#allocation2 + $0x39] sm:$0xff]
        %v3955 = vld [vmem:[#allocation2 + $0x49] sm:$0xff]
        %v3956 = vld [vmem:[#allocation2 + $0x51] sm:$0xff]
        %v3957 = vld [vmem:[#allocation2 + $0x61] sm:$0xff]
        %v3958 = vld [vmem:[#allocation2 + $0x69] sm:$0xff]
        %v3959 = vld [vmem:[#allocation2 + $0x79] sm:$0xff]
        %v3960 = vld [vmem:[#allocation2 + $0x81] sm:$0xff]
        %v3961 = vld [vmem:[#allocation2 + $0x91] sm:$0xff]
        %v3962 = vld [vmem:[#allocation2 + $0x99] sm:$0xff]
        %v3963 = vld [vmem:[#allocation2 + $0xa9] sm:$0xff]
        %v3964 = vld [vmem:[#allocation2 + $0xb1] sm:$0xff]
        %v3965 = vld [vmem:[#allocation2 + $0xc1] sm:$0xff]
        %v3966 = vld [vmem:[#allocation2 + $0xc9] sm:$0xff]
        %v3967 = vld [vmem:[#allocation2 + $0xd9] sm:$0xff]
        %v3968 = vld [vmem:[#allocation2 + $0xe1] sm:$0xff]
        %v3969 = vld [vmem:[#allocation2 + $0xf1] sm:$0xff]
        %v3970 = vld [vmem:[#allocation2 + $0xf9] sm:$0xff]
        %v3971 = vld [vmem:[#allocation2 + $0x109] sm:$0xff]
        %v3972 = vld [vmem:[#allocation2 + $0x111] sm:$0xff]
        %v3973 = vld [vmem:[#allocation2 + $0x121] sm:$0xff]
        %v3974 = vld [vmem:[#allocation2 + $0x129] sm:$0xff]
        %v3975 = vld [vmem:[#allocation2 + $0x139] sm:$0xff]
        %v3976 = vld [vmem:[#allocation2 + $0x141] sm:$0xff]
        %v3977 = vld [vmem:[#allocation2 + $0x151] sm:$0xff]
        %v3978 = vld [vmem:[#allocation2 + $0x159] sm:$0xff]
        %v3979 = vld [vmem:[#allocation2 + $0x169] sm:$0xff]
        %v3980 = vld [vmem:[#allocation2 + $0x171] sm:$0xff]
        %v3981 = vpack.c.bf16 %v3949, %v3949
        %v3982 = vpack.c.bf16 %v3950, %v3950
        %v3983 = vpack.c.bf16 %v3951, %v3951
        %v3984 = vpack.c.bf16 %v3952, %v3952
        %v3985 = vpack.c.bf16 %v3953, %v3953
        %v3986 = vpack.c.bf16 %v3954, %v3954
        %v3987 = vpack.c.bf16 %v3955, %v3955
        %v3988 = vpack.c.bf16 %v3956, %v3956
        %v3989 = vpack.c.bf16 %v3957, %v3957
        %v3990 = vpack.c.bf16 %v3958, %v3958
        %v3991 = vpack.c.bf16 %v3959, %v3959
        %v3992 = vpack.c.bf16 %v3960, %v3960
        %v3993 = vpack.c.bf16 %v3961, %v3961
        %v3994 = vpack.c.bf16 %v3962, %v3962
        %v3995 = vpack.c.bf16 %v3963, %v3963
        %v3996 = vpack.c.bf16 %v3964, %v3964
        %v3997 = vpack.c.bf16 %v3965, %v3965
        %v3998 = vpack.c.bf16 %v3966, %v3966
        %v3999 = vpack.c.bf16 %v3967, %v3967
        %v4000 = vpack.c.bf16 %v3968, %v3968
        %v4001 = vpack.c.bf16 %v3969, %v3969
        %v4002 = vpack.c.bf16 %v3970, %v3970
        %v4003 = vpack.c.bf16 %v3971, %v3971
        %v4004 = vpack.c.bf16 %v3972, %v3972
        %v4005 = vpack.c.bf16 %v3973, %v3973
        %v4006 = vpack.c.bf16 %v3974, %v3974
        %v4007 = vpack.c.bf16 %v3975, %v3975
        %v4008 = vpack.c.bf16 %v3976, %v3976
        %v4009 = vpack.c.bf16 %v3977, %v3977
        %v4010 = vpack.c.bf16 %v3978, %v3978
        %v4011 = vpack.c.bf16 %v3979, %v3979
        %v4012 = vpack.c.bf16 %v3980, %v3980
        %v4045 = vunpack.c.l.b16 %v3917
        %v4046 = vunpack.c.l.b16 %v3918
        %v4047 = vunpack.c.l.b16 %v3919
        %v4048 = vunpack.c.l.b16 %v3920
        %v4049 = vunpack.c.l.b16 %v3921
        %v4050 = vunpack.c.l.b16 %v3922
        %v4051 = vunpack.c.l.b16 %v3923
        %v4052 = vunpack.c.l.b16 %v3924
        %v4053 = vunpack.c.l.b16 %v3925
        %v4054 = vunpack.c.l.b16 %v3926
        %v4055 = vunpack.c.l.b16 %v3927
        %v4056 = vunpack.c.l.b16 %v3928
        %v4057 = vunpack.c.l.b16 %v3929
        %v4058 = vunpack.c.l.b16 %v3930
        %v4059 = vunpack.c.l.b16 %v3931
        %v4060 = vunpack.c.l.b16 %v3932
        %v4061 = vunpack.c.l.b16 %v3933
        %v4062 = vunpack.c.l.b16 %v3934
        %v4063 = vunpack.c.l.b16 %v3935
        %v4064 = vunpack.c.l.b16 %v3936
        %v4065 = vunpack.c.l.b16 %v3937
        %v4066 = vunpack.c.l.b16 %v3938
        %v4067 = vunpack.c.l.b16 %v3939
        %v4068 = vunpack.c.l.b16 %v3940
        %v4069 = vunpack.c.l.b16 %v3941
        %v4070 = vunpack.c.l.b16 %v3942
        %v4071 = vunpack.c.l.b16 %v3943
        %v4072 = vunpack.c.l.b16 %v3944
        %v4073 = vunpack.c.l.b16 %v3945
        %v4074 = vunpack.c.l.b16 %v3946
        %v4075 = vunpack.c.l.b16 %v3947
        %v4076 = vunpack.c.l.b16 %v3948
        %v4077 = vpack.c.b16 %v4046, %v4045
        %v4078 = vpack.c.b16 %v4048, %v4047
        %v4079 = vpack.c.b16 %v4050, %v4049
        %v4080 = vpack.c.b16 %v4052, %v4051
        %v4081 = vpack.c.b16 %v4054, %v4053
        %v4082 = vpack.c.b16 %v4056, %v4055
        %v4083 = vpack.c.b16 %v4058, %v4057
        %v4084 = vpack.c.b16 %v4060, %v4059
        %v4085 = vpack.c.b16 %v4062, %v4061
        %v4086 = vpack.c.b16 %v4064, %v4063
        %v4087 = vpack.c.b16 %v4066, %v4065
        %v4088 = vpack.c.b16 %v4068, %v4067
        %v4089 = vpack.c.b16 %v4070, %v4069
        %v4090 = vpack.c.b16 %v4072, %v4071
        %v4091 = vpack.c.b16 %v4074, %v4073
        %v4092 = vpack.c.b16 %v4076, %v4075
        %v4141 = vunpack.c.l.b16 %v3981
        %v4142 = vunpack.c.l.b16 %v3982
        %v4143 = vunpack.c.l.b16 %v3983
        %v4144 = vunpack.c.l.b16 %v3984
        %v4145 = vunpack.c.l.b16 %v3985
        %v4146 = vunpack.c.l.b16 %v3986
        %v4147 = vunpack.c.l.b16 %v3987
        %v4148 = vunpack.c.l.b16 %v3988
        %v4149 = vunpack.c.l.b16 %v3989
        %v4150 = vunpack.c.l.b16 %v3990
        %v4151 = vunpack.c.l.b16 %v3991
        %v4152 = vunpack.c.l.b16 %v3992
        %v4153 = vunpack.c.l.b16 %v3993
        %v4154 = vunpack.c.l.b16 %v3994
        %v4155 = vunpack.c.l.b16 %v3995
        %v4156 = vunpack.c.l.b16 %v3996
        %v4157 = vunpack.c.l.b16 %v3997
        %v4158 = vunpack.c.l.b16 %v3998
        %v4159 = vunpack.c.l.b16 %v3999
        %v4160 = vunpack.c.l.b16 %v4000
        %v4161 = vunpack.c.l.b16 %v4001
        %v4162 = vunpack.c.l.b16 %v4002
        %v4163 = vunpack.c.l.b16 %v4003
        %v4164 = vunpack.c.l.b16 %v4004
        %v4165 = vunpack.c.l.b16 %v4005
        %v4166 = vunpack.c.l.b16 %v4006
        %v4167 = vunpack.c.l.b16 %v4007
        %v4168 = vunpack.c.l.b16 %v4008
        %v4169 = vunpack.c.l.b16 %v4009
        %v4170 = vunpack.c.l.b16 %v4010
        %v4171 = vunpack.c.l.b16 %v4011
        %v4172 = vunpack.c.l.b16 %v4012
        %v4173 = vpack.c.b16 %v4142, %v4141
        %v4174 = vpack.c.b16 %v4144, %v4143
        %v4175 = vpack.c.b16 %v4146, %v4145
        %v4176 = vpack.c.b16 %v4148, %v4147
        %v4177 = vpack.c.b16 %v4150, %v4149
        %v4178 = vpack.c.b16 %v4152, %v4151
        %v4179 = vpack.c.b16 %v4154, %v4153
        %v4180 = vpack.c.b16 %v4156, %v4155
        %v4181 = vpack.c.b16 %v4158, %v4157
        %v4182 = vpack.c.b16 %v4160, %v4159
        %v4183 = vpack.c.b16 %v4162, %v4161
        %v4184 = vpack.c.b16 %v4164, %v4163
        %v4185 = vpack.c.b16 %v4166, %v4165
        %v4186 = vpack.c.b16 %v4168, %v4167
        %v4187 = vpack.c.b16 %v4170, %v4169
        %v4188 = vpack.c.b16 %v4172, %v4171
        %v4205 = vld [vmem:[%s2] sm:$0xf]
        %v4206 = vld [vmem:[%s2 + $0x4] sm:$0xf]
        %v4207 = vld [vmem:[%s2 + $0x8] sm:$0xf]
        %v4208 = vld [vmem:[%s2 + $0xc] sm:$0xf]
        %v4209 = vld [vmem:[%s2 + $0x10] sm:$0xf]
        %v4210 = vld [vmem:[%s2 + $0x14] sm:$0xf]
        %v4211 = vld [vmem:[%s2 + $0x18] sm:$0xf]
        %v4212 = vld [vmem:[%s2 + $0x1c] sm:$0xf]
        %v4213 = vld [vmem:[%s2 + $0x20] sm:$0xf]
        %v4214 = vld [vmem:[%s2 + $0x24] sm:$0xf]
        %v4215 = vld [vmem:[%s2 + $0x28] sm:$0xf]
        %v4216 = vld [vmem:[%s2 + $0x2c] sm:$0xf]
        %v4217 = vld [vmem:[%s2 + $0x30] sm:$0xf]
        %v4218 = vld [vmem:[%s2 + $0x34] sm:$0xf]
        %v4219 = vld [vmem:[%s2 + $0x38] sm:$0xf]
        %v4220 = vld [vmem:[%s2 + $0x3c] sm:$0xf]
        %v4221 = vld [vmem:[%s2 + $0x40] sm:$0xf]
        %v4222 = vld [vmem:[%s2 + $0x44] sm:$0xf]
        %v4223 = vld [vmem:[%s2 + $0x48] sm:$0xf]
        %v4224 = vld [vmem:[%s2 + $0x4c] sm:$0xf]
        %v4225 = vld [vmem:[%s2 + $0x50] sm:$0xf]
        %v4226 = vld [vmem:[%s2 + $0x54] sm:$0xf]
        %v4227 = vld [vmem:[%s2 + $0x58] sm:$0xf]
        %v4228 = vld [vmem:[%s2 + $0x5c] sm:$0xf]
        %v4229 = vld [vmem:[%s2 + $0x60] sm:$0xf]
        %v4230 = vld [vmem:[%s2 + $0x64] sm:$0xf]
        %v4231 = vld [vmem:[%s2 + $0x68] sm:$0xf]
        %v4232 = vld [vmem:[%s2 + $0x6c] sm:$0xf]
        %v4233 = vld [vmem:[%s2 + $0x70] sm:$0xf]
        %v4234 = vld [vmem:[%s2 + $0x74] sm:$0xf]
        %v4235 = vld [vmem:[%s2 + $0x78] sm:$0xf]
        %v4236 = vld [vmem:[%s2 + $0x7c] sm:$0xf]
        %v4237 = vld [vmem:[#allocation2 + $0x2] sm:$0xff]
        %v4238 = vld [vmem:[#allocation2 + $0xa] sm:$0xff]
        %v4239 = vld [vmem:[#allocation2 + $0x1a] sm:$0xff]
        %v4240 = vld [vmem:[#allocation2 + $0x22] sm:$0xff]
        %v4241 = vld [vmem:[#allocation2 + $0x32] sm:$0xff]
        %v4242 = vld [vmem:[#allocation2 + $0x3a] sm:$0xff]
        %v4243 = vld [vmem:[#allocation2 + $0x4a] sm:$0xff]
        %v4244 = vld [vmem:[#allocation2 + $0x52] sm:$0xff]
        %v4245 = vld [vmem:[#allocation2 + $0x62] sm:$0xff]
        %v4246 = vld [vmem:[#allocation2 + $0x6a] sm:$0xff]
        %v4247 = vld [vmem:[#allocation2 + $0x7a] sm:$0xff]
        %v4248 = vld [vmem:[#allocation2 + $0x82] sm:$0xff]
        %v4249 = vld [vmem:[#allocation2 + $0x92] sm:$0xff]
        %v4250 = vld [vmem:[#allocation2 + $0x9a] sm:$0xff]
        %v4251 = vld [vmem:[#allocation2 + $0xaa] sm:$0xff]
        %v4252 = vld [vmem:[#allocation2 + $0xb2] sm:$0xff]
        %v4253 = vld [vmem:[#allocation2 + $0xc2] sm:$0xff]
        %v4254 = vld [vmem:[#allocation2 + $0xca] sm:$0xff]
        %v4255 = vld [vmem:[#allocation2 + $0xda] sm:$0xff]
        %v4256 = vld [vmem:[#allocation2 + $0xe2] sm:$0xff]
        %v4257 = vld [vmem:[#allocation2 + $0xf2] sm:$0xff]
        %v4258 = vld [vmem:[#allocation2 + $0xfa] sm:$0xff]
        %v4259 = vld [vmem:[#allocation2 + $0x10a] sm:$0xff]
        %v4260 = vld [vmem:[#allocation2 + $0x112] sm:$0xff]
        %v4261 = vld [vmem:[#allocation2 + $0x122] sm:$0xff]
        %v4262 = vld [vmem:[#allocation2 + $0x12a] sm:$0xff]
        %v4263 = vld [vmem:[#allocation2 + $0x13a] sm:$0xff]
        %v4264 = vld [vmem:[#allocation2 + $0x142] sm:$0xff]
        %v4265 = vld [vmem:[#allocation2 + $0x152] sm:$0xff]
        %v4266 = vld [vmem:[#allocation2 + $0x15a] sm:$0xff]
        %v4267 = vld [vmem:[#allocation2 + $0x16a] sm:$0xff]
        %v4268 = vld [vmem:[#allocation2 + $0x172] sm:$0xff]
        %v4269 = vpack.c.bf16 %v4237, %v4237
        %v4270 = vpack.c.bf16 %v4238, %v4238
        %v4271 = vpack.c.bf16 %v4239, %v4239
        %v4272 = vpack.c.bf16 %v4240, %v4240
        %v4273 = vpack.c.bf16 %v4241, %v4241
        %v4274 = vpack.c.bf16 %v4242, %v4242
        %v4275 = vpack.c.bf16 %v4243, %v4243
        %v4276 = vpack.c.bf16 %v4244, %v4244
        %v4277 = vpack.c.bf16 %v4245, %v4245
        %v4278 = vpack.c.bf16 %v4246, %v4246
        %v4279 = vpack.c.bf16 %v4247, %v4247
        %v4280 = vpack.c.bf16 %v4248, %v4248
        %v4281 = vpack.c.bf16 %v4249, %v4249
        %v4282 = vpack.c.bf16 %v4250, %v4250
        %v4283 = vpack.c.bf16 %v4251, %v4251
        %v4284 = vpack.c.bf16 %v4252, %v4252
        %v4285 = vpack.c.bf16 %v4253, %v4253
        %v4286 = vpack.c.bf16 %v4254, %v4254
        %v4287 = vpack.c.bf16 %v4255, %v4255
        %v4288 = vpack.c.bf16 %v4256, %v4256
        %v4289 = vpack.c.bf16 %v4257, %v4257
        %v4290 = vpack.c.bf16 %v4258, %v4258
        %v4291 = vpack.c.bf16 %v4259, %v4259
        %v4292 = vpack.c.bf16 %v4260, %v4260
        %v4293 = vpack.c.bf16 %v4261, %v4261
        %v4294 = vpack.c.bf16 %v4262, %v4262
        %v4295 = vpack.c.bf16 %v4263, %v4263
        %v4296 = vpack.c.bf16 %v4264, %v4264
        %v4297 = vpack.c.bf16 %v4265, %v4265
        %v4298 = vpack.c.bf16 %v4266, %v4266
        %v4299 = vpack.c.bf16 %v4267, %v4267
        %v4300 = vpack.c.bf16 %v4268, %v4268
        %s4301 = scalar_lea.vmem [#allocation2], 24
        %v4302 = vld [vmem:[%s4301] sm:$0xff]
        %v4303 = vld [vmem:[%s4301 + $0x8] sm:$0xff]
        %v4304 = vld [vmem:[%s4301 + $0x18] sm:$0xff]
        %v4305 = vld [vmem:[%s4301 + $0x20] sm:$0xff]
        %v4306 = vld [vmem:[%s4301 + $0x30] sm:$0xff]
        %v4307 = vld [vmem:[%s4301 + $0x38] sm:$0xff]
        %v4308 = vld [vmem:[%s4301 + $0x48] sm:$0xff]
        %v4309 = vld [vmem:[%s4301 + $0x50] sm:$0xff]
        %v4310 = vld [vmem:[%s4301 + $0x60] sm:$0xff]
        %v4311 = vld [vmem:[%s4301 + $0x68] sm:$0xff]
        %v4312 = vld [vmem:[%s4301 + $0x78] sm:$0xff]
        %v4313 = vld [vmem:[%s4301 + $0x80] sm:$0xff]
        %v4314 = vld [vmem:[%s4301 + $0x90] sm:$0xff]
        %v4315 = vld [vmem:[%s4301 + $0x98] sm:$0xff]
        %v4316 = vld [vmem:[%s4301 + $0xa8] sm:$0xff]
        %v4317 = vld [vmem:[%s4301 + $0xb0] sm:$0xff]
        %v4318 = vld [vmem:[%s4301 + $0xc0] sm:$0xff]
        %v4319 = vld [vmem:[%s4301 + $0xc8] sm:$0xff]
        %v4320 = vld [vmem:[%s4301 + $0xd8] sm:$0xff]
        %v4321 = vld [vmem:[%s4301 + $0xe0] sm:$0xff]
        %v4322 = vld [vmem:[%s4301 + $0xf0] sm:$0xff]
        %v4323 = vld [vmem:[%s4301 + $0xf8] sm:$0xff]
        %v4324 = vld [vmem:[%s4301 + $0x108] sm:$0xff]
        %v4325 = vld [vmem:[%s4301 + $0x110] sm:$0xff]
        %v4326 = vld [vmem:[%s4301 + $0x120] sm:$0xff]
        %v4327 = vld [vmem:[%s4301 + $0x128] sm:$0xff]
        %v4328 = vld [vmem:[%s4301 + $0x138] sm:$0xff]
        %v4329 = vld [vmem:[%s4301 + $0x140] sm:$0xff]
        %v4330 = vld [vmem:[%s4301 + $0x150] sm:$0xff]
        %v4331 = vld [vmem:[%s4301 + $0x158] sm:$0xff]
        %v4332 = vld [vmem:[%s4301 + $0x168] sm:$0xff]
        %v4333 = vld [vmem:[%s4301 + $0x170] sm:$0xff]
        %v4334 = vpack.c.bf16 %v4302, %v4302
        %v4335 = vpack.c.bf16 %v4303, %v4303
        %v4336 = vpack.c.bf16 %v4304, %v4304
        %v4337 = vpack.c.bf16 %v4305, %v4305
        %v4338 = vpack.c.bf16 %v4306, %v4306
        %v4339 = vpack.c.bf16 %v4307, %v4307
        %v4340 = vpack.c.bf16 %v4308, %v4308
        %v4341 = vpack.c.bf16 %v4309, %v4309
        %v4342 = vpack.c.bf16 %v4310, %v4310
        %v4343 = vpack.c.bf16 %v4311, %v4311
        %v4344 = vpack.c.bf16 %v4312, %v4312
        %v4345 = vpack.c.bf16 %v4313, %v4313
        %v4346 = vpack.c.bf16 %v4314, %v4314
        %v4347 = vpack.c.bf16 %v4315, %v4315
        %v4348 = vpack.c.bf16 %v4316, %v4316
        %v4349 = vpack.c.bf16 %v4317, %v4317
        %v4350 = vpack.c.bf16 %v4318, %v4318
        %v4351 = vpack.c.bf16 %v4319, %v4319
        %v4352 = vpack.c.bf16 %v4320, %v4320
        %v4353 = vpack.c.bf16 %v4321, %v4321
        %v4354 = vpack.c.bf16 %v4322, %v4322
        %v4355 = vpack.c.bf16 %v4323, %v4323
        %v4356 = vpack.c.bf16 %v4324, %v4324
        %v4357 = vpack.c.bf16 %v4325, %v4325
        %v4358 = vpack.c.bf16 %v4326, %v4326
        %v4359 = vpack.c.bf16 %v4327, %v4327
        %v4360 = vpack.c.bf16 %v4328, %v4328
        %v4361 = vpack.c.bf16 %v4329, %v4329
        %v4362 = vpack.c.bf16 %v4330, %v4330
        %v4363 = vpack.c.bf16 %v4331, %v4331
        %v4364 = vpack.c.bf16 %v4332, %v4332
        %v4365 = vpack.c.bf16 %v4333, %v4333
        %v4398 = vunpack.c.l.b16 %v4269
        %v4399 = vunpack.c.l.b16 %v4270
        %v4400 = vunpack.c.l.b16 %v4271
        %v4401 = vunpack.c.l.b16 %v4272
        %v4402 = vunpack.c.l.b16 %v4273
        %v4403 = vunpack.c.l.b16 %v4274
        %v4404 = vunpack.c.l.b16 %v4275
        %v4405 = vunpack.c.l.b16 %v4276
        %v4406 = vunpack.c.l.b16 %v4277
        %v4407 = vunpack.c.l.b16 %v4278
        %v4408 = vunpack.c.l.b16 %v4279
        %v4409 = vunpack.c.l.b16 %v4280
        %v4410 = vunpack.c.l.b16 %v4281
        %v4411 = vunpack.c.l.b16 %v4282
        %v4412 = vunpack.c.l.b16 %v4283
        %v4413 = vunpack.c.l.b16 %v4284
        %v4414 = vunpack.c.l.b16 %v4285
        %v4415 = vunpack.c.l.b16 %v4286
        %v4416 = vunpack.c.l.b16 %v4287
        %v4417 = vunpack.c.l.b16 %v4288
        %v4418 = vunpack.c.l.b16 %v4289
        %v4419 = vunpack.c.l.b16 %v4290
        %v4420 = vunpack.c.l.b16 %v4291
        %v4421 = vunpack.c.l.b16 %v4292
        %v4422 = vunpack.c.l.b16 %v4293
        %v4423 = vunpack.c.l.b16 %v4294
        %v4424 = vunpack.c.l.b16 %v4295
        %v4425 = vunpack.c.l.b16 %v4296
        %v4426 = vunpack.c.l.b16 %v4297
        %v4427 = vunpack.c.l.b16 %v4298
        %v4428 = vunpack.c.l.b16 %v4299
        %v4429 = vunpack.c.l.b16 %v4300
        %v4430 = vpack.c.b16 %v4399, %v4398
        %v4431 = vpack.c.b16 %v4401, %v4400
        %v4432 = vpack.c.b16 %v4403, %v4402
        %v4433 = vpack.c.b16 %v4405, %v4404
        %v4434 = vpack.c.b16 %v4407, %v4406
        %v4435 = vpack.c.b16 %v4409, %v4408
        %v4436 = vpack.c.b16 %v4411, %v4410
        %v4437 = vpack.c.b16 %v4413, %v4412
        %v4438 = vpack.c.b16 %v4415, %v4414
        %v4439 = vpack.c.b16 %v4417, %v4416
        %v4440 = vpack.c.b16 %v4419, %v4418
        %v4441 = vpack.c.b16 %v4421, %v4420
        %v4442 = vpack.c.b16 %v4423, %v4422
        %v4443 = vpack.c.b16 %v4425, %v4424
        %v4444 = vpack.c.b16 %v4427, %v4426
        %v4445 = vpack.c.b16 %v4429, %v4428
        %v4494 = vunpack.c.l.b16 %v4334
        %v4495 = vunpack.c.l.b16 %v4335
        %v4496 = vunpack.c.l.b16 %v4336
        %v4497 = vunpack.c.l.b16 %v4337
        %v4498 = vunpack.c.l.b16 %v4338
        %v4499 = vunpack.c.l.b16 %v4339
        %v4500 = vunpack.c.l.b16 %v4340
        %v4501 = vunpack.c.l.b16 %v4341
        %v4502 = vunpack.c.l.b16 %v4342
        %v4503 = vunpack.c.l.b16 %v4343
        %v4504 = vunpack.c.l.b16 %v4344
        %v4505 = vunpack.c.l.b16 %v4345
        %v4506 = vunpack.c.l.b16 %v4346
        %v4507 = vunpack.c.l.b16 %v4347
        %v4508 = vunpack.c.l.b16 %v4348
        %v4509 = vunpack.c.l.b16 %v4349
        %v4510 = vunpack.c.l.b16 %v4350
        %v4511 = vunpack.c.l.b16 %v4351
        %v4512 = vunpack.c.l.b16 %v4352
        %v4513 = vunpack.c.l.b16 %v4353
        %v4514 = vunpack.c.l.b16 %v4354
        %v4515 = vunpack.c.l.b16 %v4355
        %v4516 = vunpack.c.l.b16 %v4356
        %v4517 = vunpack.c.l.b16 %v4357
        %v4518 = vunpack.c.l.b16 %v4358
        %v4519 = vunpack.c.l.b16 %v4359
        %v4520 = vunpack.c.l.b16 %v4360
        %v4521 = vunpack.c.l.b16 %v4361
        %v4522 = vunpack.c.l.b16 %v4362
        %v4523 = vunpack.c.l.b16 %v4363
        %v4524 = vunpack.c.l.b16 %v4364
        %v4525 = vunpack.c.l.b16 %v4365
        %v4526 = vpack.c.b16 %v4495, %v4494
        %v4527 = vpack.c.b16 %v4497, %v4496
        %v4528 = vpack.c.b16 %v4499, %v4498
        %v4529 = vpack.c.b16 %v4501, %v4500
        %v4530 = vpack.c.b16 %v4503, %v4502
        %v4531 = vpack.c.b16 %v4505, %v4504
        %v4532 = vpack.c.b16 %v4507, %v4506
        %v4533 = vpack.c.b16 %v4509, %v4508
        %v4534 = vpack.c.b16 %v4511, %v4510
        %v4535 = vpack.c.b16 %v4513, %v4512
        %v4536 = vpack.c.b16 %v4515, %v4514
        %v4537 = vpack.c.b16 %v4517, %v4516
        %v4538 = vpack.c.b16 %v4519, %v4518
        %v4539 = vpack.c.b16 %v4521, %v4520
        %v4540 = vpack.c.b16 %v4523, %v4522
        %v4541 = vpack.c.b16 %v4525, %v4524
        %s4558 = scalar_lea.vmem %s2, 128
        %v4559 = vld [vmem:[%s4558] sm:$0xf]
        %v4560 = vld [vmem:[%s4558 + $0x4] sm:$0xf]
        %v4561 = vld [vmem:[%s4558 + $0x8] sm:$0xf]
        %v4562 = vld [vmem:[%s4558 + $0xc] sm:$0xf]
        %v4563 = vld [vmem:[%s4558 + $0x10] sm:$0xf]
        %v4564 = vld [vmem:[%s4558 + $0x14] sm:$0xf]
        %v4565 = vld [vmem:[%s4558 + $0x18] sm:$0xf]
        %v4566 = vld [vmem:[%s4558 + $0x1c] sm:$0xf]
        %v4567 = vld [vmem:[%s4558 + $0x20] sm:$0xf]
        %v4568 = vld [vmem:[%s4558 + $0x24] sm:$0xf]
        %v4569 = vld [vmem:[%s4558 + $0x28] sm:$0xf]
        %v4570 = vld [vmem:[%s4558 + $0x2c] sm:$0xf]
        %v4571 = vld [vmem:[%s4558 + $0x30] sm:$0xf]
        %v4572 = vld [vmem:[%s4558 + $0x34] sm:$0xf]
        %v4573 = vld [vmem:[%s4558 + $0x38] sm:$0xf]
        %v4574 = vld [vmem:[%s4558 + $0x3c] sm:$0xf]
        %v4575 = vld [vmem:[%s4558 + $0x40] sm:$0xf]
        %v4576 = vld [vmem:[%s4558 + $0x44] sm:$0xf]
        %v4577 = vld [vmem:[%s4558 + $0x48] sm:$0xf]
        %v4578 = vld [vmem:[%s4558 + $0x4c] sm:$0xf]
        %v4579 = vld [vmem:[%s4558 + $0x50] sm:$0xf]
        %v4580 = vld [vmem:[%s4558 + $0x54] sm:$0xf]
        %v4581 = vld [vmem:[%s4558 + $0x58] sm:$0xf]
        %v4582 = vld [vmem:[%s4558 + $0x5c] sm:$0xf]
        %v4583 = vld [vmem:[%s4558 + $0x60] sm:$0xf]
        %v4584 = vld [vmem:[%s4558 + $0x64] sm:$0xf]
        %v4585 = vld [vmem:[%s4558 + $0x68] sm:$0xf]
        %v4586 = vld [vmem:[%s4558 + $0x6c] sm:$0xf]
        %v4587 = vld [vmem:[%s4558 + $0x70] sm:$0xf]
        %v4588 = vld [vmem:[%s4558 + $0x74] sm:$0xf]
        %v4589 = vld [vmem:[%s4558 + $0x78] sm:$0xf]
        %v4590 = vld [vmem:[%s4558 + $0x7c] sm:$0xf]
        %v4623 = vunpack.c.l.b16 %v4559
        %v4624 = vunpack.c.l.b16 %v4560
        %v4625 = vunpack.c.l.b16 %v4561
        %v4626 = vunpack.c.l.b16 %v4562
        %v4627 = vunpack.c.l.b16 %v4563
        %v4628 = vunpack.c.l.b16 %v4564
        %v4629 = vunpack.c.l.b16 %v4565
        %v4630 = vunpack.c.l.b16 %v4566
        %v4631 = vunpack.c.l.b16 %v4567
        %v4632 = vunpack.c.l.b16 %v4568
        %v4633 = vunpack.c.l.b16 %v4569
        %v4634 = vunpack.c.l.b16 %v4570
        %v4635 = vunpack.c.l.b16 %v4571
        %v4636 = vunpack.c.l.b16 %v4572
        %v4637 = vunpack.c.l.b16 %v4573
        %v4638 = vunpack.c.l.b16 %v4574
        %v4639 = vunpack.c.l.b16 %v4575
        %v4640 = vunpack.c.l.b16 %v4576
        %v4641 = vunpack.c.l.b16 %v4577
        %v4642 = vunpack.c.l.b16 %v4578
        %v4643 = vunpack.c.l.b16 %v4579
        %v4644 = vunpack.c.l.b16 %v4580
        %v4645 = vunpack.c.l.b16 %v4581
        %v4646 = vunpack.c.l.b16 %v4582
        %v4647 = vunpack.c.l.b16 %v4583
        %v4648 = vunpack.c.l.b16 %v4584
        %v4649 = vunpack.c.l.b16 %v4585
        %v4650 = vunpack.c.l.b16 %v4586
        %v4651 = vunpack.c.l.b16 %v4587
        %v4652 = vunpack.c.l.b16 %v4588
        %v4653 = vunpack.c.l.b16 %v4589
        %v4654 = vunpack.c.l.b16 %v4590
        %v4655 = vpack.c.b16 %v4624, %v4623
        %v4656 = vpack.c.b16 %v4626, %v4625
        %v4657 = vpack.c.b16 %v4628, %v4627
        %v4658 = vpack.c.b16 %v4630, %v4629
        %v4659 = vpack.c.b16 %v4632, %v4631
        %v4660 = vpack.c.b16 %v4634, %v4633
        %v4661 = vpack.c.b16 %v4636, %v4635
        %v4662 = vpack.c.b16 %v4638, %v4637
        %v4663 = vpack.c.b16 %v4640, %v4639
        %v4664 = vpack.c.b16 %v4642, %v4641
        %v4665 = vpack.c.b16 %v4644, %v4643
        %v4666 = vpack.c.b16 %v4646, %v4645
        %v4667 = vpack.c.b16 %v4648, %v4647
        %v4668 = vpack.c.b16 %v4650, %v4649
        %v4669 = vpack.c.b16 %v4652, %v4651
        %v4670 = vpack.c.b16 %v4654, %v4653
        %4687 = vmatpush.bf16.msra.mxu0 %v4662
        %4688 = vmatpush.bf16.msra.mxu0 %v4661
        %4689 = vmatpush.bf16.msra.mxu0 %v4660
        %4690 = vmatpush.bf16.msra.mxu0 %v4659
        %4691 = vmatpush.bf16.msra.mxu0 %v4658
        %4692 = vmatpush.bf16.msra.mxu0 %v4657
        %4693 = vmatpush.bf16.msra.mxu0 %v4656
        %4694 = vmatpush.bf16.msra.mxu0 %v4655
        %4695 = vmatmul.bf16.gmra.mxu0 %v4430
        %v4696 = vpop.f32.mrf.mxu0
        %v4697 = vadd.f32 0.0, %v4696
        %v4698 = vpop.f32.mrf.mxu0
        %v4699 = vadd.f32 0.0, %v4698
        %4700 = vmatmul.bf16.gmra.mxu0 %v4431
        %v4701 = vpop.f32.mrf.mxu0
        %v4702 = vadd.f32 0.0, %v4701
        %v4703 = vpop.f32.mrf.mxu0
        %v4704 = vadd.f32 0.0, %v4703
        %4705 = vmatmul.bf16.gmra.mxu0 %v4432
        %v4706 = vpop.f32.mrf.mxu0
        %v4707 = vadd.f32 0.0, %v4706
        %v4708 = vpop.f32.mrf.mxu0
        %v4709 = vadd.f32 0.0, %v4708
        %4710 = vmatmul.bf16.gmra.mxu0 %v4433
        %v4711 = vpop.f32.mrf.mxu0
        %v4712 = vadd.f32 0.0, %v4711
        %v4713 = vpop.f32.mrf.mxu0
        %v4714 = vadd.f32 0.0, %v4713
        %4715 = vmatmul.bf16.gmra.mxu0 %v4434
        %v4716 = vpop.f32.mrf.mxu0
        %v4717 = vadd.f32 0.0, %v4716
        %v4718 = vpop.f32.mrf.mxu0
        %v4719 = vadd.f32 0.0, %v4718
        %4720 = vmatmul.bf16.gmra.mxu0 %v4435
        %v4721 = vpop.f32.mrf.mxu0
        %v4722 = vadd.f32 0.0, %v4721
        %v4723 = vpop.f32.mrf.mxu0
        %v4724 = vadd.f32 0.0, %v4723
        %4725 = vmatmul.bf16.gmra.mxu0 %v4436
        %v4726 = vpop.f32.mrf.mxu0
        %v4727 = vadd.f32 0.0, %v4726
        %v4728 = vpop.f32.mrf.mxu0
        %v4729 = vadd.f32 0.0, %v4728
        %4730 = vmatmul.bf16.gmra.mxu0 %v4437
        %v4731 = vpop.f32.mrf.mxu0
        %v4732 = vadd.f32 0.0, %v4731
        %v4733 = vpop.f32.mrf.mxu0
        %v4734 = vadd.f32 0.0, %v4733
        %4735 = vmatmul.bf16.gmra.mxu0 %v4438
        %v4736 = vpop.f32.mrf.mxu0
        %v4737 = vadd.f32 0.0, %v4736
        %v4738 = vpop.f32.mrf.mxu0
        %v4739 = vadd.f32 0.0, %v4738
        %4740 = vmatmul.bf16.gmra.mxu0 %v4439
        %v4741 = vpop.f32.mrf.mxu0
        %v4742 = vadd.f32 0.0, %v4741
        %v4743 = vpop.f32.mrf.mxu0
        %v4744 = vadd.f32 0.0, %v4743
        %4745 = vmatmul.bf16.gmra.mxu0 %v4440
        %v4746 = vpop.f32.mrf.mxu0
        %v4747 = vadd.f32 0.0, %v4746
        %v4748 = vpop.f32.mrf.mxu0
        %v4749 = vadd.f32 0.0, %v4748
        %4750 = vmatmul.bf16.gmra.mxu0 %v4441
        %v4751 = vpop.f32.mrf.mxu0
        %v4752 = vadd.f32 0.0, %v4751
        %v4753 = vpop.f32.mrf.mxu0
        %v4754 = vadd.f32 0.0, %v4753
        %4755 = vmatmul.bf16.gmra.mxu0 %v4442
        %v4756 = vpop.f32.mrf.mxu0
        %v4757 = vadd.f32 0.0, %v4756
        %v4758 = vpop.f32.mrf.mxu0
        %v4759 = vadd.f32 0.0, %v4758
        %4760 = vmatmul.bf16.gmra.mxu0 %v4443
        %v4761 = vpop.f32.mrf.mxu0
        %v4762 = vadd.f32 0.0, %v4761
        %v4763 = vpop.f32.mrf.mxu0
        %v4764 = vadd.f32 0.0, %v4763
        %4765 = vmatmul.bf16.gmra.mxu0 %v4444
        %v4766 = vpop.f32.mrf.mxu0
        %v4767 = vadd.f32 0.0, %v4766
        %v4768 = vpop.f32.mrf.mxu0
        %v4769 = vadd.f32 0.0, %v4768
        %4770 = vmatmul.bf16.gmra.mxu0 %v4445
        %v4771 = vpop.f32.mrf.mxu0
        %v4772 = vadd.f32 0.0, %v4771
        %v4773 = vpop.f32.mrf.mxu0
        %v4774 = vadd.f32 0.0, %v4773
        %4775 = vdwg.mxu0
        %4776 = vmatpush.bf16.msra.mxu0 %v4670
        %4777 = vmatpush.bf16.msra.mxu0 %v4669
        %4778 = vmatpush.bf16.msra.mxu0 %v4668
        %4779 = vmatpush.bf16.msra.mxu0 %v4667
        %4780 = vmatpush.bf16.msra.mxu0 %v4666
        %4781 = vmatpush.bf16.msra.mxu0 %v4665
        %4782 = vmatpush.bf16.msra.mxu0 %v4664
        %4783 = vmatpush.bf16.msra.mxu0 %v4663
        %4784 = vmatmul.bf16.gmra.mxu0 %v4526
        %v4785 = vpop.f32.mrf.mxu0
        %v4786 = vadd.f32 %v4697, %v4785
        %v4787 = vpop.f32.mrf.mxu0
        %v4788 = vadd.f32 %v4699, %v4787
        %4789 = vmatmul.bf16.gmra.mxu0 %v4527
        %v4790 = vpop.f32.mrf.mxu0
        %v4791 = vadd.f32 %v4702, %v4790
        %v4792 = vpop.f32.mrf.mxu0
        %v4793 = vadd.f32 %v4704, %v4792
        %4794 = vmatmul.bf16.gmra.mxu0 %v4528
        %v4795 = vpop.f32.mrf.mxu0
        %v4796 = vadd.f32 %v4707, %v4795
        %v4797 = vpop.f32.mrf.mxu0
        %v4798 = vadd.f32 %v4709, %v4797
        %4799 = vmatmul.bf16.gmra.mxu0 %v4529
        %v4800 = vpop.f32.mrf.mxu0
        %v4801 = vadd.f32 %v4712, %v4800
        %v4802 = vpop.f32.mrf.mxu0
        %v4803 = vadd.f32 %v4714, %v4802
        %4804 = vmatmul.bf16.gmra.mxu0 %v4530
        %v4805 = vpop.f32.mrf.mxu0
        %v4806 = vadd.f32 %v4717, %v4805
        %v4807 = vpop.f32.mrf.mxu0
        %v4808 = vadd.f32 %v4719, %v4807
        %4809 = vmatmul.bf16.gmra.mxu0 %v4531
        %v4810 = vpop.f32.mrf.mxu0
        %v4811 = vadd.f32 %v4722, %v4810
        %v4812 = vpop.f32.mrf.mxu0
        %v4813 = vadd.f32 %v4724, %v4812
        %4814 = vmatmul.bf16.gmra.mxu0 %v4532
        %v4815 = vpop.f32.mrf.mxu0
        %v4816 = vadd.f32 %v4727, %v4815
        %v4817 = vpop.f32.mrf.mxu0
        %v4818 = vadd.f32 %v4729, %v4817
        %4819 = vmatmul.bf16.gmra.mxu0 %v4533
        %v4820 = vpop.f32.mrf.mxu0
        %v4821 = vadd.f32 %v4732, %v4820
        %v4822 = vpop.f32.mrf.mxu0
        %v4823 = vadd.f32 %v4734, %v4822
        %4824 = vmatmul.bf16.gmra.mxu0 %v4534
        %v4825 = vpop.f32.mrf.mxu0
        %v4826 = vadd.f32 %v4737, %v4825
        %v4827 = vpop.f32.mrf.mxu0
        %v4828 = vadd.f32 %v4739, %v4827
        %4829 = vmatmul.bf16.gmra.mxu0 %v4535
        %v4830 = vpop.f32.mrf.mxu0
        %v4831 = vadd.f32 %v4742, %v4830
        %v4832 = vpop.f32.mrf.mxu0
        %v4833 = vadd.f32 %v4744, %v4832
        %4834 = vmatmul.bf16.gmra.mxu0 %v4536
        %v4835 = vpop.f32.mrf.mxu0
        %v4836 = vadd.f32 %v4747, %v4835
        %v4837 = vpop.f32.mrf.mxu0
        %v4838 = vadd.f32 %v4749, %v4837
        %4839 = vmatmul.bf16.gmra.mxu0 %v4537
        %v4840 = vpop.f32.mrf.mxu0
        %v4841 = vadd.f32 %v4752, %v4840
        %v4842 = vpop.f32.mrf.mxu0
        %v4843 = vadd.f32 %v4754, %v4842
        %4844 = vmatmul.bf16.gmra.mxu0 %v4538
        %v4845 = vpop.f32.mrf.mxu0
        %v4846 = vadd.f32 %v4757, %v4845
        %v4847 = vpop.f32.mrf.mxu0
        %v4848 = vadd.f32 %v4759, %v4847
        %4849 = vmatmul.bf16.gmra.mxu0 %v4539
        %v4850 = vpop.f32.mrf.mxu0
        %v4851 = vadd.f32 %v4762, %v4850
        %v4852 = vpop.f32.mrf.mxu0
        %v4853 = vadd.f32 %v4764, %v4852
        %4854 = vmatmul.bf16.gmra.mxu0 %v4540
        %v4855 = vpop.f32.mrf.mxu0
        %v4856 = vadd.f32 %v4767, %v4855
        %v4857 = vpop.f32.mrf.mxu0
        %v4858 = vadd.f32 %v4769, %v4857
        %4859 = vmatmul.bf16.gmra.mxu0 %v4541
        %v4860 = vpop.f32.mrf.mxu0
        %v4861 = vadd.f32 %v4772, %v4860
        %v4862 = vpop.f32.mrf.mxu0
        %v4863 = vadd.f32 %v4774, %v4862
        %4864 = vdwg.mxu0
        %v4897 = vunpack.c.l.b16 %v4205
        %v4898 = vunpack.c.l.b16 %v4206
        %v4899 = vunpack.c.l.b16 %v4207
        %v4900 = vunpack.c.l.b16 %v4208
        %v4901 = vunpack.c.l.b16 %v4209
        %v4902 = vunpack.c.l.b16 %v4210
        %v4903 = vunpack.c.l.b16 %v4211
        %v4904 = vunpack.c.l.b16 %v4212
        %v4905 = vunpack.c.l.b16 %v4213
        %v4906 = vunpack.c.l.b16 %v4214
        %v4907 = vunpack.c.l.b16 %v4215
        %v4908 = vunpack.c.l.b16 %v4216
        %v4909 = vunpack.c.l.b16 %v4217
        %v4910 = vunpack.c.l.b16 %v4218
        %v4911 = vunpack.c.l.b16 %v4219
        %v4912 = vunpack.c.l.b16 %v4220
        %v4913 = vunpack.c.l.b16 %v4221
        %v4914 = vunpack.c.l.b16 %v4222
        %v4915 = vunpack.c.l.b16 %v4223
        %v4916 = vunpack.c.l.b16 %v4224
        %v4917 = vunpack.c.l.b16 %v4225
        %v4918 = vunpack.c.l.b16 %v4226
        %v4919 = vunpack.c.l.b16 %v4227
        %v4920 = vunpack.c.l.b16 %v4228
        %v4921 = vunpack.c.l.b16 %v4229
        %v4922 = vunpack.c.l.b16 %v4230
        %v4923 = vunpack.c.l.b16 %v4231
        %v4924 = vunpack.c.l.b16 %v4232
        %v4925 = vunpack.c.l.b16 %v4233
        %v4926 = vunpack.c.l.b16 %v4234
        %v4927 = vunpack.c.l.b16 %v4235
        %v4928 = vunpack.c.l.b16 %v4236
        %v4929 = vpack.c.b16 %v4898, %v4897
        %v4930 = vpack.c.b16 %v4900, %v4899
        %v4931 = vpack.c.b16 %v4902, %v4901
        %v4932 = vpack.c.b16 %v4904, %v4903
        %v4933 = vpack.c.b16 %v4906, %v4905
        %v4934 = vpack.c.b16 %v4908, %v4907
        %v4935 = vpack.c.b16 %v4910, %v4909
        %v4936 = vpack.c.b16 %v4912, %v4911
        %v4937 = vpack.c.b16 %v4914, %v4913
        %v4938 = vpack.c.b16 %v4916, %v4915
        %v4939 = vpack.c.b16 %v4918, %v4917
        %v4940 = vpack.c.b16 %v4920, %v4919
        %v4941 = vpack.c.b16 %v4922, %v4921
        %v4942 = vpack.c.b16 %v4924, %v4923
        %v4943 = vpack.c.b16 %v4926, %v4925
        %v4944 = vpack.c.b16 %v4928, %v4927
        %4961 = vmatpush.bf16.msra.mxu0 %v4936
        %4962 = vmatpush.bf16.msra.mxu0 %v4935
        %4963 = vmatpush.bf16.msra.mxu0 %v4934
        %4964 = vmatpush.bf16.msra.mxu0 %v4933
        %4965 = vmatpush.bf16.msra.mxu0 %v4932
        %4966 = vmatpush.bf16.msra.mxu0 %v4931
        %4967 = vmatpush.bf16.msra.mxu0 %v4930
        %4968 = vmatpush.bf16.msra.mxu0 %v4929
        %4969 = vmatmul.bf16.gmra.mxu0 %v4077
        %v4970 = vpop.f32.mrf.mxu0
        %v4971 = vadd.f32 %v4786, %v4970
        %v4972 = vpop.f32.mrf.mxu0
        %v4973 = vadd.f32 %v4788, %v4972
        %4974 = vmatmul.bf16.gmra.mxu0 %v4078
        %v4975 = vpop.f32.mrf.mxu0
        %v4976 = vadd.f32 %v4791, %v4975
        %v4977 = vpop.f32.mrf.mxu0
        %v4978 = vadd.f32 %v4793, %v4977
        %4979 = vmatmul.bf16.gmra.mxu0 %v4079
        %v4980 = vpop.f32.mrf.mxu0
        %v4981 = vadd.f32 %v4796, %v4980
        %v4982 = vpop.f32.mrf.mxu0
        %v4983 = vadd.f32 %v4798, %v4982
        %4984 = vmatmul.bf16.gmra.mxu0 %v4080
        %v4985 = vpop.f32.mrf.mxu0
        %v4986 = vadd.f32 %v4801, %v4985
        %v4987 = vpop.f32.mrf.mxu0
        %v4988 = vadd.f32 %v4803, %v4987
        %4989 = vmatmul.bf16.gmra.mxu0 %v4081
        %v4990 = vpop.f32.mrf.mxu0
        %v4991 = vadd.f32 %v4806, %v4990
        %v4992 = vpop.f32.mrf.mxu0
        %v4993 = vadd.f32 %v4808, %v4992
        %4994 = vmatmul.bf16.gmra.mxu0 %v4082
        %v4995 = vpop.f32.mrf.mxu0
        %v4996 = vadd.f32 %v4811, %v4995
        %v4997 = vpop.f32.mrf.mxu0
        %v4998 = vadd.f32 %v4813, %v4997
        %4999 = vmatmul.bf16.gmra.mxu0 %v4083
        %v5000 = vpop.f32.mrf.mxu0
        %v5001 = vadd.f32 %v4816, %v5000
        %v5002 = vpop.f32.mrf.mxu0
        %v5003 = vadd.f32 %v4818, %v5002
        %5004 = vmatmul.bf16.gmra.mxu0 %v4084
        %v5005 = vpop.f32.mrf.mxu0
        %v5006 = vadd.f32 %v4821, %v5005
        %v5007 = vpop.f32.mrf.mxu0
        %v5008 = vadd.f32 %v4823, %v5007
        %5009 = vmatmul.bf16.gmra.mxu0 %v4085
        %v5010 = vpop.f32.mrf.mxu0
        %v5011 = vadd.f32 %v4826, %v5010
        %v5012 = vpop.f32.mrf.mxu0
        %v5013 = vadd.f32 %v4828, %v5012
        %5014 = vmatmul.bf16.gmra.mxu0 %v4086
        %v5015 = vpop.f32.mrf.mxu0
        %v5016 = vadd.f32 %v4831, %v5015
        %v5017 = vpop.f32.mrf.mxu0
        %v5018 = vadd.f32 %v4833, %v5017
        %5019 = vmatmul.bf16.gmra.mxu0 %v4087
        %v5020 = vpop.f32.mrf.mxu0
        %v5021 = vadd.f32 %v4836, %v5020
        %v5022 = vpop.f32.mrf.mxu0
        %v5023 = vadd.f32 %v4838, %v5022
        %5024 = vmatmul.bf16.gmra.mxu0 %v4088
        %v5025 = vpop.f32.mrf.mxu0
        %v5026 = vadd.f32 %v4841, %v5025
        %v5027 = vpop.f32.mrf.mxu0
        %v5028 = vadd.f32 %v4843, %v5027
        %5029 = vmatmul.bf16.gmra.mxu0 %v4089
        %v5030 = vpop.f32.mrf.mxu0
        %v5031 = vadd.f32 %v4846, %v5030
        %v5032 = vpop.f32.mrf.mxu0
        %v5033 = vadd.f32 %v4848, %v5032
        %5034 = vmatmul.bf16.gmra.mxu0 %v4090
        %v5035 = vpop.f32.mrf.mxu0
        %v5036 = vadd.f32 %v4851, %v5035
        %v5037 = vpop.f32.mrf.mxu0
        %v5038 = vadd.f32 %v4853, %v5037
        %5039 = vmatmul.bf16.gmra.mxu0 %v4091
        %v5040 = vpop.f32.mrf.mxu0
        %v5041 = vadd.f32 %v4856, %v5040
        %v5042 = vpop.f32.mrf.mxu0
        %v5043 = vadd.f32 %v4858, %v5042
        %5044 = vmatmul.bf16.gmra.mxu0 %v4092
        %v5045 = vpop.f32.mrf.mxu0
        %v5046 = vadd.f32 %v4861, %v5045
        %v5047 = vpop.f32.mrf.mxu0
        %v5048 = vadd.f32 %v4863, %v5047
        %5049 = vdwg.mxu0
        %5050 = vmatpush.bf16.msra.mxu0 %v4944
        %5051 = vmatpush.bf16.msra.mxu0 %v4943
        %5052 = vmatpush.bf16.msra.mxu0 %v4942
        %5053 = vmatpush.bf16.msra.mxu0 %v4941
        %5054 = vmatpush.bf16.msra.mxu0 %v4940
        %5055 = vmatpush.bf16.msra.mxu0 %v4939
        %5056 = vmatpush.bf16.msra.mxu0 %v4938
        %5057 = vmatpush.bf16.msra.mxu0 %v4937
        %5058 = vmatmul.bf16.gmra.mxu0 %v4173
        %v5059 = vpop.f32.mrf.mxu0
        %v5060 = vadd.f32 %v4971, %v5059
        %v5061 = vpop.f32.mrf.mxu0
        %v5062 = vadd.f32 %v4973, %v5061
        %5063 = vmatmul.bf16.gmra.mxu0 %v4174
        %v5064 = vpop.f32.mrf.mxu0
        %v5065 = vadd.f32 %v4976, %v5064
        %v5066 = vpop.f32.mrf.mxu0
        %v5067 = vadd.f32 %v4978, %v5066
        %5068 = vmatmul.bf16.gmra.mxu0 %v4175
        %v5069 = vpop.f32.mrf.mxu0
        %v5070 = vadd.f32 %v4981, %v5069
        %v5071 = vpop.f32.mrf.mxu0
        %v5072 = vadd.f32 %v4983, %v5071
        %5073 = vmatmul.bf16.gmra.mxu0 %v4176
        %v5074 = vpop.f32.mrf.mxu0
        %v5075 = vadd.f32 %v4986, %v5074
        %v5076 = vpop.f32.mrf.mxu0
        %v5077 = vadd.f32 %v4988, %v5076
        %5078 = vmatmul.bf16.gmra.mxu0 %v4177
        %v5079 = vpop.f32.mrf.mxu0
        %v5080 = vadd.f32 %v4991, %v5079
        %v5081 = vpop.f32.mrf.mxu0
        %v5082 = vadd.f32 %v4993, %v5081
        %5083 = vmatmul.bf16.gmra.mxu0 %v4178
        %v5084 = vpop.f32.mrf.mxu0
        %v5085 = vadd.f32 %v4996, %v5084
        %v5086 = vpop.f32.mrf.mxu0
        %v5087 = vadd.f32 %v4998, %v5086
        %5088 = vmatmul.bf16.gmra.mxu0 %v4179
        %v5089 = vpop.f32.mrf.mxu0
        %v5090 = vadd.f32 %v5001, %v5089
        %v5091 = vpop.f32.mrf.mxu0
        %v5092 = vadd.f32 %v5003, %v5091
        %5093 = vmatmul.bf16.gmra.mxu0 %v4180
        %v5094 = vpop.f32.mrf.mxu0
        %v5095 = vadd.f32 %v5006, %v5094
        %v5096 = vpop.f32.mrf.mxu0
        %v5097 = vadd.f32 %v5008, %v5096
        %5098 = vmatmul.bf16.gmra.mxu0 %v4181
        %v5099 = vpop.f32.mrf.mxu0
        %v5100 = vadd.f32 %v5011, %v5099
        %v5101 = vpop.f32.mrf.mxu0
        %v5102 = vadd.f32 %v5013, %v5101
        %5103 = vmatmul.bf16.gmra.mxu0 %v4182
        %v5104 = vpop.f32.mrf.mxu0
        %v5105 = vadd.f32 %v5016, %v5104
        %v5106 = vpop.f32.mrf.mxu0
        %v5107 = vadd.f32 %v5018, %v5106
        %5108 = vmatmul.bf16.gmra.mxu0 %v4183
        %v5109 = vpop.f32.mrf.mxu0
        %v5110 = vadd.f32 %v5021, %v5109
        %v5111 = vpop.f32.mrf.mxu0
        %v5112 = vadd.f32 %v5023, %v5111
        %5113 = vmatmul.bf16.gmra.mxu0 %v4184
        %v5114 = vpop.f32.mrf.mxu0
        %v5115 = vadd.f32 %v5026, %v5114
        %v5116 = vpop.f32.mrf.mxu0
        %v5117 = vadd.f32 %v5028, %v5116
        %5118 = vmatmul.bf16.gmra.mxu0 %v4185
        %v5119 = vpop.f32.mrf.mxu0
        %v5120 = vadd.f32 %v5031, %v5119
        %v5121 = vpop.f32.mrf.mxu0
        %v5122 = vadd.f32 %v5033, %v5121
        %5123 = vmatmul.bf16.gmra.mxu0 %v4186
        %v5124 = vpop.f32.mrf.mxu0
        %v5125 = vadd.f32 %v5036, %v5124
        %v5126 = vpop.f32.mrf.mxu0
        %v5127 = vadd.f32 %v5038, %v5126
        %5128 = vmatmul.bf16.gmra.mxu0 %v4187
        %v5129 = vpop.f32.mrf.mxu0
        %v5130 = vadd.f32 %v5041, %v5129
        %v5131 = vpop.f32.mrf.mxu0
        %v5132 = vadd.f32 %v5043, %v5131
        %5133 = vmatmul.bf16.gmra.mxu0 %v4188
        %v5134 = vpop.f32.mrf.mxu0
        %v5135 = vadd.f32 %v5046, %v5134
        %v5136 = vpop.f32.mrf.mxu0
        %v5137 = vadd.f32 %v5048, %v5136
        %5138 = vdwg.mxu0
        %v5139 = vld [vmem:[%s4301 + $0x1] sm:$0xff]
        %v5140 = vld [vmem:[%s4301 + $0x9] sm:$0xff]
        %v5141 = vld [vmem:[%s4301 + $0x19] sm:$0xff]
        %v5142 = vld [vmem:[%s4301 + $0x21] sm:$0xff]
        %v5143 = vld [vmem:[%s4301 + $0x31] sm:$0xff]
        %v5144 = vld [vmem:[%s4301 + $0x39] sm:$0xff]
        %v5145 = vld [vmem:[%s4301 + $0x49] sm:$0xff]
        %v5146 = vld [vmem:[%s4301 + $0x51] sm:$0xff]
        %v5147 = vld [vmem:[%s4301 + $0x61] sm:$0xff]
        %v5148 = vld [vmem:[%s4301 + $0x69] sm:$0xff]
        %v5149 = vld [vmem:[%s4301 + $0x79] sm:$0xff]
        %v5150 = vld [vmem:[%s4301 + $0x81] sm:$0xff]
        %v5151 = vld [vmem:[%s4301 + $0x91] sm:$0xff]
        %v5152 = vld [vmem:[%s4301 + $0x99] sm:$0xff]
        %v5153 = vld [vmem:[%s4301 + $0xa9] sm:$0xff]
        %v5154 = vld [vmem:[%s4301 + $0xb1] sm:$0xff]
        %v5155 = vld [vmem:[%s4301 + $0xc1] sm:$0xff]
        %v5156 = vld [vmem:[%s4301 + $0xc9] sm:$0xff]
        %v5157 = vld [vmem:[%s4301 + $0xd9] sm:$0xff]
        %v5158 = vld [vmem:[%s4301 + $0xe1] sm:$0xff]
        %v5159 = vld [vmem:[%s4301 + $0xf1] sm:$0xff]
        %v5160 = vld [vmem:[%s4301 + $0xf9] sm:$0xff]
        %v5161 = vld [vmem:[%s4301 + $0x109] sm:$0xff]
        %v5162 = vld [vmem:[%s4301 + $0x111] sm:$0xff]
        %v5163 = vld [vmem:[%s4301 + $0x121] sm:$0xff]
        %v5164 = vld [vmem:[%s4301 + $0x129] sm:$0xff]
        %v5165 = vld [vmem:[%s4301 + $0x139] sm:$0xff]
        %v5166 = vld [vmem:[%s4301 + $0x141] sm:$0xff]
        %v5167 = vld [vmem:[%s4301 + $0x151] sm:$0xff]
        %v5168 = vld [vmem:[%s4301 + $0x159] sm:$0xff]
        %v5169 = vld [vmem:[%s4301 + $0x169] sm:$0xff]
        %v5170 = vld [vmem:[%s4301 + $0x171] sm:$0xff]
        %v5171 = vpack.c.bf16 %v5139, %v5139
        %v5172 = vpack.c.bf16 %v5140, %v5140
        %v5173 = vpack.c.bf16 %v5141, %v5141
        %v5174 = vpack.c.bf16 %v5142, %v5142
        %v5175 = vpack.c.bf16 %v5143, %v5143
        %v5176 = vpack.c.bf16 %v5144, %v5144
        %v5177 = vpack.c.bf16 %v5145, %v5145
        %v5178 = vpack.c.bf16 %v5146, %v5146
        %v5179 = vpack.c.bf16 %v5147, %v5147
        %v5180 = vpack.c.bf16 %v5148, %v5148
        %v5181 = vpack.c.bf16 %v5149, %v5149
        %v5182 = vpack.c.bf16 %v5150, %v5150
        %v5183 = vpack.c.bf16 %v5151, %v5151
        %v5184 = vpack.c.bf16 %v5152, %v5152
        %v5185 = vpack.c.bf16 %v5153, %v5153
        %v5186 = vpack.c.bf16 %v5154, %v5154
        %v5187 = vpack.c.bf16 %v5155, %v5155
        %v5188 = vpack.c.bf16 %v5156, %v5156
        %v5189 = vpack.c.bf16 %v5157, %v5157
        %v5190 = vpack.c.bf16 %v5158, %v5158
        %v5191 = vpack.c.bf16 %v5159, %v5159
        %v5192 = vpack.c.bf16 %v5160, %v5160
        %v5193 = vpack.c.bf16 %v5161, %v5161
        %v5194 = vpack.c.bf16 %v5162, %v5162
        %v5195 = vpack.c.bf16 %v5163, %v5163
        %v5196 = vpack.c.bf16 %v5164, %v5164
        %v5197 = vpack.c.bf16 %v5165, %v5165
        %v5198 = vpack.c.bf16 %v5166, %v5166
        %v5199 = vpack.c.bf16 %v5167, %v5167
        %v5200 = vpack.c.bf16 %v5168, %v5168
        %v5201 = vpack.c.bf16 %v5169, %v5169
        %v5202 = vpack.c.bf16 %v5170, %v5170
        %v5203 = vld [vmem:[%s4301 + $0x2] sm:$0xff]
        %v5204 = vld [vmem:[%s4301 + $0xa] sm:$0xff]
        %v5205 = vld [vmem:[%s4301 + $0x1a] sm:$0xff]
        %v5206 = vld [vmem:[%s4301 + $0x22] sm:$0xff]
        %v5207 = vld [vmem:[%s4301 + $0x32] sm:$0xff]
        %v5208 = vld [vmem:[%s4301 + $0x3a] sm:$0xff]
        %v5209 = vld [vmem:[%s4301 + $0x4a] sm:$0xff]
        %v5210 = vld [vmem:[%s4301 + $0x52] sm:$0xff]
        %v5211 = vld [vmem:[%s4301 + $0x62] sm:$0xff]
        %v5212 = vld [vmem:[%s4301 + $0x6a] sm:$0xff]
        %v5213 = vld [vmem:[%s4301 + $0x7a] sm:$0xff]
        %v5214 = vld [vmem:[%s4301 + $0x82] sm:$0xff]
        %v5215 = vld [vmem:[%s4301 + $0x92] sm:$0xff]
        %v5216 = vld [vmem:[%s4301 + $0x9a] sm:$0xff]
        %v5217 = vld [vmem:[%s4301 + $0xaa] sm:$0xff]
        %v5218 = vld [vmem:[%s4301 + $0xb2] sm:$0xff]
        %v5219 = vld [vmem:[%s4301 + $0xc2] sm:$0xff]
        %v5220 = vld [vmem:[%s4301 + $0xca] sm:$0xff]
        %v5221 = vld [vmem:[%s4301 + $0xda] sm:$0xff]
        %v5222 = vld [vmem:[%s4301 + $0xe2] sm:$0xff]
        %v5223 = vld [vmem:[%s4301 + $0xf2] sm:$0xff]
        %v5224 = vld [vmem:[%s4301 + $0xfa] sm:$0xff]
        %v5225 = vld [vmem:[%s4301 + $0x10a] sm:$0xff]
        %v5226 = vld [vmem:[%s4301 + $0x112] sm:$0xff]
        %v5227 = vld [vmem:[%s4301 + $0x122] sm:$0xff]
        %v5228 = vld [vmem:[%s4301 + $0x12a] sm:$0xff]
        %v5229 = vld [vmem:[%s4301 + $0x13a] sm:$0xff]
        %v5230 = vld [vmem:[%s4301 + $0x142] sm:$0xff]
        %v5231 = vld [vmem:[%s4301 + $0x152] sm:$0xff]
        %v5232 = vld [vmem:[%s4301 + $0x15a] sm:$0xff]
        %v5233 = vld [vmem:[%s4301 + $0x16a] sm:$0xff]
        %v5234 = vld [vmem:[%s4301 + $0x172] sm:$0xff]
        %v5235 = vpack.c.bf16 %v5203, %v5203
        %v5236 = vpack.c.bf16 %v5204, %v5204
        %v5237 = vpack.c.bf16 %v5205, %v5205
        %v5238 = vpack.c.bf16 %v5206, %v5206
        %v5239 = vpack.c.bf16 %v5207, %v5207
        %v5240 = vpack.c.bf16 %v5208, %v5208
        %v5241 = vpack.c.bf16 %v5209, %v5209
        %v5242 = vpack.c.bf16 %v5210, %v5210
        %v5243 = vpack.c.bf16 %v5211, %v5211
        %v5244 = vpack.c.bf16 %v5212, %v5212
        %v5245 = vpack.c.bf16 %v5213, %v5213
        %v5246 = vpack.c.bf16 %v5214, %v5214
        %v5247 = vpack.c.bf16 %v5215, %v5215
        %v5248 = vpack.c.bf16 %v5216, %v5216
        %v5249 = vpack.c.bf16 %v5217, %v5217
        %v5250 = vpack.c.bf16 %v5218, %v5218
        %v5251 = vpack.c.bf16 %v5219, %v5219
        %v5252 = vpack.c.bf16 %v5220, %v5220
        %v5253 = vpack.c.bf16 %v5221, %v5221
        %v5254 = vpack.c.bf16 %v5222, %v5222
        %v5255 = vpack.c.bf16 %v5223, %v5223
        %v5256 = vpack.c.bf16 %v5224, %v5224
        %v5257 = vpack.c.bf16 %v5225, %v5225
        %v5258 = vpack.c.bf16 %v5226, %v5226
        %v5259 = vpack.c.bf16 %v5227, %v5227
        %v5260 = vpack.c.bf16 %v5228, %v5228
        %v5261 = vpack.c.bf16 %v5229, %v5229
        %v5262 = vpack.c.bf16 %v5230, %v5230
        %v5263 = vpack.c.bf16 %v5231, %v5231
        %v5264 = vpack.c.bf16 %v5232, %v5232
        %v5265 = vpack.c.bf16 %v5233, %v5233
        %v5266 = vpack.c.bf16 %v5234, %v5234
        %v5299 = vunpack.c.l.b16 %v5171
        %v5300 = vunpack.c.l.b16 %v5172
        %v5301 = vunpack.c.l.b16 %v5173
        %v5302 = vunpack.c.l.b16 %v5174
        %v5303 = vunpack.c.l.b16 %v5175
        %v5304 = vunpack.c.l.b16 %v5176
        %v5305 = vunpack.c.l.b16 %v5177
        %v5306 = vunpack.c.l.b16 %v5178
        %v5307 = vunpack.c.l.b16 %v5179
        %v5308 = vunpack.c.l.b16 %v5180
        %v5309 = vunpack.c.l.b16 %v5181
        %v5310 = vunpack.c.l.b16 %v5182
        %v5311 = vunpack.c.l.b16 %v5183
        %v5312 = vunpack.c.l.b16 %v5184
        %v5313 = vunpack.c.l.b16 %v5185
        %v5314 = vunpack.c.l.b16 %v5186
        %v5315 = vunpack.c.l.b16 %v5187
        %v5316 = vunpack.c.l.b16 %v5188
        %v5317 = vunpack.c.l.b16 %v5189
        %v5318 = vunpack.c.l.b16 %v5190
        %v5319 = vunpack.c.l.b16 %v5191
        %v5320 = vunpack.c.l.b16 %v5192
        %v5321 = vunpack.c.l.b16 %v5193
        %v5322 = vunpack.c.l.b16 %v5194
        %v5323 = vunpack.c.l.b16 %v5195
        %v5324 = vunpack.c.l.b16 %v5196
        %v5325 = vunpack.c.l.b16 %v5197
        %v5326 = vunpack.c.l.b16 %v5198
        %v5327 = vunpack.c.l.b16 %v5199
        %v5328 = vunpack.c.l.b16 %v5200
        %v5329 = vunpack.c.l.b16 %v5201
        %v5330 = vunpack.c.l.b16 %v5202
        %v5331 = vpack.c.b16 %v5300, %v5299
        %v5332 = vpack.c.b16 %v5302, %v5301
        %v5333 = vpack.c.b16 %v5304, %v5303
        %v5334 = vpack.c.b16 %v5306, %v5305
        %v5335 = vpack.c.b16 %v5308, %v5307
        %v5336 = vpack.c.b16 %v5310, %v5309
        %v5337 = vpack.c.b16 %v5312, %v5311
        %v5338 = vpack.c.b16 %v5314, %v5313
        %v5339 = vpack.c.b16 %v5316, %v5315
        %v5340 = vpack.c.b16 %v5318, %v5317
        %v5341 = vpack.c.b16 %v5320, %v5319
        %v5342 = vpack.c.b16 %v5322, %v5321
        %v5343 = vpack.c.b16 %v5324, %v5323
        %v5344 = vpack.c.b16 %v5326, %v5325
        %v5345 = vpack.c.b16 %v5328, %v5327
        %v5346 = vpack.c.b16 %v5330, %v5329
        %v5395 = vunpack.c.l.b16 %v5235
        %v5396 = vunpack.c.l.b16 %v5236
        %v5397 = vunpack.c.l.b16 %v5237
        %v5398 = vunpack.c.l.b16 %v5238
        %v5399 = vunpack.c.l.b16 %v5239
        %v5400 = vunpack.c.l.b16 %v5240
        %v5401 = vunpack.c.l.b16 %v5241
        %v5402 = vunpack.c.l.b16 %v5242
        %v5403 = vunpack.c.l.b16 %v5243
        %v5404 = vunpack.c.l.b16 %v5244
        %v5405 = vunpack.c.l.b16 %v5245
        %v5406 = vunpack.c.l.b16 %v5246
        %v5407 = vunpack.c.l.b16 %v5247
        %v5408 = vunpack.c.l.b16 %v5248
        %v5409 = vunpack.c.l.b16 %v5249
        %v5410 = vunpack.c.l.b16 %v5250
        %v5411 = vunpack.c.l.b16 %v5251
        %v5412 = vunpack.c.l.b16 %v5252
        %v5413 = vunpack.c.l.b16 %v5253
        %v5414 = vunpack.c.l.b16 %v5254
        %v5415 = vunpack.c.l.b16 %v5255
        %v5416 = vunpack.c.l.b16 %v5256
        %v5417 = vunpack.c.l.b16 %v5257
        %v5418 = vunpack.c.l.b16 %v5258
        %v5419 = vunpack.c.l.b16 %v5259
        %v5420 = vunpack.c.l.b16 %v5260
        %v5421 = vunpack.c.l.b16 %v5261
        %v5422 = vunpack.c.l.b16 %v5262
        %v5423 = vunpack.c.l.b16 %v5263
        %v5424 = vunpack.c.l.b16 %v5264
        %v5425 = vunpack.c.l.b16 %v5265
        %v5426 = vunpack.c.l.b16 %v5266
        %v5427 = vpack.c.b16 %v5396, %v5395
        %v5428 = vpack.c.b16 %v5398, %v5397
        %v5429 = vpack.c.b16 %v5400, %v5399
        %v5430 = vpack.c.b16 %v5402, %v5401
        %v5431 = vpack.c.b16 %v5404, %v5403
        %v5432 = vpack.c.b16 %v5406, %v5405
        %v5433 = vpack.c.b16 %v5408, %v5407
        %v5434 = vpack.c.b16 %v5410, %v5409
        %v5435 = vpack.c.b16 %v5412, %v5411
        %v5436 = vpack.c.b16 %v5414, %v5413
        %v5437 = vpack.c.b16 %v5416, %v5415
        %v5438 = vpack.c.b16 %v5418, %v5417
        %v5439 = vpack.c.b16 %v5420, %v5419
        %v5440 = vpack.c.b16 %v5422, %v5421
        %v5441 = vpack.c.b16 %v5424, %v5423
        %v5442 = vpack.c.b16 %v5426, %v5425
        %s5459 = scalar_lea.vmem %s2, 256
        %v5460 = vld [vmem:[%s5459] sm:$0xf]
        %v5461 = vld [vmem:[%s5459 + $0x4] sm:$0xf]
        %v5462 = vld [vmem:[%s5459 + $0x8] sm:$0xf]
        %v5463 = vld [vmem:[%s5459 + $0xc] sm:$0xf]
        %v5464 = vld [vmem:[%s5459 + $0x10] sm:$0xf]
        %v5465 = vld [vmem:[%s5459 + $0x14] sm:$0xf]
        %v5466 = vld [vmem:[%s5459 + $0x18] sm:$0xf]
        %v5467 = vld [vmem:[%s5459 + $0x1c] sm:$0xf]
        %v5468 = vld [vmem:[%s5459 + $0x20] sm:$0xf]
        %v5469 = vld [vmem:[%s5459 + $0x24] sm:$0xf]
        %v5470 = vld [vmem:[%s5459 + $0x28] sm:$0xf]
        %v5471 = vld [vmem:[%s5459 + $0x2c] sm:$0xf]
        %v5472 = vld [vmem:[%s5459 + $0x30] sm:$0xf]
        %v5473 = vld [vmem:[%s5459 + $0x34] sm:$0xf]
        %v5474 = vld [vmem:[%s5459 + $0x38] sm:$0xf]
        %v5475 = vld [vmem:[%s5459 + $0x3c] sm:$0xf]
        %v5476 = vld [vmem:[%s5459 + $0x40] sm:$0xf]
        %v5477 = vld [vmem:[%s5459 + $0x44] sm:$0xf]
        %v5478 = vld [vmem:[%s5459 + $0x48] sm:$0xf]
        %v5479 = vld [vmem:[%s5459 + $0x4c] sm:$0xf]
        %v5480 = vld [vmem:[%s5459 + $0x50] sm:$0xf]
        %v5481 = vld [vmem:[%s5459 + $0x54] sm:$0xf]
        %v5482 = vld [vmem:[%s5459 + $0x58] sm:$0xf]
        %v5483 = vld [vmem:[%s5459 + $0x5c] sm:$0xf]
        %v5484 = vld [vmem:[%s5459 + $0x60] sm:$0xf]
        %v5485 = vld [vmem:[%s5459 + $0x64] sm:$0xf]
        %v5486 = vld [vmem:[%s5459 + $0x68] sm:$0xf]
        %v5487 = vld [vmem:[%s5459 + $0x6c] sm:$0xf]
        %v5488 = vld [vmem:[%s5459 + $0x70] sm:$0xf]
        %v5489 = vld [vmem:[%s5459 + $0x74] sm:$0xf]
        %v5490 = vld [vmem:[%s5459 + $0x78] sm:$0xf]
        %v5491 = vld [vmem:[%s5459 + $0x7c] sm:$0xf]
        %v5524 = vunpack.c.l.b16 %v5460
        %v5525 = vunpack.c.l.b16 %v5461
        %v5526 = vunpack.c.l.b16 %v5462
        %v5527 = vunpack.c.l.b16 %v5463
        %v5528 = vunpack.c.l.b16 %v5464
        %v5529 = vunpack.c.l.b16 %v5465
        %v5530 = vunpack.c.l.b16 %v5466
        %v5531 = vunpack.c.l.b16 %v5467
        %v5532 = vunpack.c.l.b16 %v5468
        %v5533 = vunpack.c.l.b16 %v5469
        %v5534 = vunpack.c.l.b16 %v5470
        %v5535 = vunpack.c.l.b16 %v5471
        %v5536 = vunpack.c.l.b16 %v5472
        %v5537 = vunpack.c.l.b16 %v5473
        %v5538 = vunpack.c.l.b16 %v5474
        %v5539 = vunpack.c.l.b16 %v5475
        %v5540 = vunpack.c.l.b16 %v5476
        %v5541 = vunpack.c.l.b16 %v5477
        %v5542 = vunpack.c.l.b16 %v5478
        %v5543 = vunpack.c.l.b16 %v5479
        %v5544 = vunpack.c.l.b16 %v5480
        %v5545 = vunpack.c.l.b16 %v5481
        %v5546 = vunpack.c.l.b16 %v5482
        %v5547 = vunpack.c.l.b16 %v5483
        %v5548 = vunpack.c.l.b16 %v5484
        %v5549 = vunpack.c.l.b16 %v5485
        %v5550 = vunpack.c.l.b16 %v5486
        %v5551 = vunpack.c.l.b16 %v5487
        %v5552 = vunpack.c.l.b16 %v5488
        %v5553 = vunpack.c.l.b16 %v5489
        %v5554 = vunpack.c.l.b16 %v5490
        %v5555 = vunpack.c.l.b16 %v5491
        %v5556 = vpack.c.b16 %v5525, %v5524
        %v5557 = vpack.c.b16 %v5527, %v5526
        %v5558 = vpack.c.b16 %v5529, %v5528
        %v5559 = vpack.c.b16 %v5531, %v5530
        %v5560 = vpack.c.b16 %v5533, %v5532
        %v5561 = vpack.c.b16 %v5535, %v5534
        %v5562 = vpack.c.b16 %v5537, %v5536
        %v5563 = vpack.c.b16 %v5539, %v5538
        %v5564 = vpack.c.b16 %v5541, %v5540
        %v5565 = vpack.c.b16 %v5543, %v5542
        %v5566 = vpack.c.b16 %v5545, %v5544
        %v5567 = vpack.c.b16 %v5547, %v5546
        %v5568 = vpack.c.b16 %v5549, %v5548
        %v5569 = vpack.c.b16 %v5551, %v5550
        %v5570 = vpack.c.b16 %v5553, %v5552
        %v5571 = vpack.c.b16 %v5555, %v5554
        %5588 = vmatpush.bf16.msra.mxu0 %v5563
        %5589 = vmatpush.bf16.msra.mxu0 %v5562
        %5590 = vmatpush.bf16.msra.mxu0 %v5561
        %5591 = vmatpush.bf16.msra.mxu0 %v5560
        %5592 = vmatpush.bf16.msra.mxu0 %v5559
        %5593 = vmatpush.bf16.msra.mxu0 %v5558
        %5594 = vmatpush.bf16.msra.mxu0 %v5557
        %5595 = vmatpush.bf16.msra.mxu0 %v5556
        %5596 = vmatmul.bf16.gmra.mxu0 %v5331
        %v5597 = vpop.f32.mrf.mxu0
        %v5598 = vadd.f32 0.0, %v5597
        %v5599 = vpop.f32.mrf.mxu0
        %v5600 = vadd.f32 0.0, %v5599
        %5601 = vmatmul.bf16.gmra.mxu0 %v5332
        %v5602 = vpop.f32.mrf.mxu0
        %v5603 = vadd.f32 0.0, %v5602
        %v5604 = vpop.f32.mrf.mxu0
        %v5605 = vadd.f32 0.0, %v5604
        %5606 = vmatmul.bf16.gmra.mxu0 %v5333
        %v5607 = vpop.f32.mrf.mxu0
        %v5608 = vadd.f32 0.0, %v5607
        %v5609 = vpop.f32.mrf.mxu0
        %v5610 = vadd.f32 0.0, %v5609
        %5611 = vmatmul.bf16.gmra.mxu0 %v5334
        %v5612 = vpop.f32.mrf.mxu0
        %v5613 = vadd.f32 0.0, %v5612
        %v5614 = vpop.f32.mrf.mxu0
        %v5615 = vadd.f32 0.0, %v5614
        %5616 = vmatmul.bf16.gmra.mxu0 %v5335
        %v5617 = vpop.f32.mrf.mxu0
        %v5618 = vadd.f32 0.0, %v5617
        %v5619 = vpop.f32.mrf.mxu0
        %v5620 = vadd.f32 0.0, %v5619
        %5621 = vmatmul.bf16.gmra.mxu0 %v5336
        %v5622 = vpop.f32.mrf.mxu0
        %v5623 = vadd.f32 0.0, %v5622
        %v5624 = vpop.f32.mrf.mxu0
        %v5625 = vadd.f32 0.0, %v5624
        %5626 = vmatmul.bf16.gmra.mxu0 %v5337
        %v5627 = vpop.f32.mrf.mxu0
        %v5628 = vadd.f32 0.0, %v5627
        %v5629 = vpop.f32.mrf.mxu0
        %v5630 = vadd.f32 0.0, %v5629
        %5631 = vmatmul.bf16.gmra.mxu0 %v5338
        %v5632 = vpop.f32.mrf.mxu0
        %v5633 = vadd.f32 0.0, %v5632
        %v5634 = vpop.f32.mrf.mxu0
        %v5635 = vadd.f32 0.0, %v5634
        %5636 = vmatmul.bf16.gmra.mxu0 %v5339
        %v5637 = vpop.f32.mrf.mxu0
        %v5638 = vadd.f32 0.0, %v5637
        %v5639 = vpop.f32.mrf.mxu0
        %v5640 = vadd.f32 0.0, %v5639
        %5641 = vmatmul.bf16.gmra.mxu0 %v5340
        %v5642 = vpop.f32.mrf.mxu0
        %v5643 = vadd.f32 0.0, %v5642
        %v5644 = vpop.f32.mrf.mxu0
        %v5645 = vadd.f32 0.0, %v5644
        %5646 = vmatmul.bf16.gmra.mxu0 %v5341
        %v5647 = vpop.f32.mrf.mxu0
        %v5648 = vadd.f32 0.0, %v5647
        %v5649 = vpop.f32.mrf.mxu0
        %v5650 = vadd.f32 0.0, %v5649
        %5651 = vmatmul.bf16.gmra.mxu0 %v5342
        %v5652 = vpop.f32.mrf.mxu0
        %v5653 = vadd.f32 0.0, %v5652
        %v5654 = vpop.f32.mrf.mxu0
        %v5655 = vadd.f32 0.0, %v5654
        %5656 = vmatmul.bf16.gmra.mxu0 %v5343
        %v5657 = vpop.f32.mrf.mxu0
        %v5658 = vadd.f32 0.0, %v5657
        %v5659 = vpop.f32.mrf.mxu0
        %v5660 = vadd.f32 0.0, %v5659
        %5661 = vmatmul.bf16.gmra.mxu0 %v5344
        %v5662 = vpop.f32.mrf.mxu0
        %v5663 = vadd.f32 0.0, %v5662
        %v5664 = vpop.f32.mrf.mxu0
        %v5665 = vadd.f32 0.0, %v5664
        %5666 = vmatmul.bf16.gmra.mxu0 %v5345
        %v5667 = vpop.f32.mrf.mxu0
        %v5668 = vadd.f32 0.0, %v5667
        %v5669 = vpop.f32.mrf.mxu0
        %v5670 = vadd.f32 0.0, %v5669
        %5671 = vmatmul.bf16.gmra.mxu0 %v5346
        %v5672 = vpop.f32.mrf.mxu0
        %v5673 = vadd.f32 0.0, %v5672
        %v5674 = vpop.f32.mrf.mxu0
        %v5675 = vadd.f32 0.0, %v5674
        %5676 = vdwg.mxu0
        %5677 = vmatpush.bf16.msra.mxu0 %v5571
        %5678 = vmatpush.bf16.msra.mxu0 %v5570
        %5679 = vmatpush.bf16.msra.mxu0 %v5569
        %5680 = vmatpush.bf16.msra.mxu0 %v5568
        %5681 = vmatpush.bf16.msra.mxu0 %v5567
        %5682 = vmatpush.bf16.msra.mxu0 %v5566
        %5683 = vmatpush.bf16.msra.mxu0 %v5565
        %5684 = vmatpush.bf16.msra.mxu0 %v5564
        %5685 = vmatmul.bf16.gmra.mxu0 %v5427
        %v5686 = vpop.f32.mrf.mxu0
        %v5687 = vadd.f32 %v5598, %v5686
        %v5688 = vpop.f32.mrf.mxu0
        %v5689 = vadd.f32 %v5600, %v5688
        %5690 = vmatmul.bf16.gmra.mxu0 %v5428
        %v5691 = vpop.f32.mrf.mxu0
        %v5692 = vadd.f32 %v5603, %v5691
        %v5693 = vpop.f32.mrf.mxu0
        %v5694 = vadd.f32 %v5605, %v5693
        %5695 = vmatmul.bf16.gmra.mxu0 %v5429
        %v5696 = vpop.f32.mrf.mxu0
        %v5697 = vadd.f32 %v5608, %v5696
        %v5698 = vpop.f32.mrf.mxu0
        %v5699 = vadd.f32 %v5610, %v5698
        %5700 = vmatmul.bf16.gmra.mxu0 %v5430
        %v5701 = vpop.f32.mrf.mxu0
        %v5702 = vadd.f32 %v5613, %v5701
        %v5703 = vpop.f32.mrf.mxu0
        %v5704 = vadd.f32 %v5615, %v5703
        %5705 = vmatmul.bf16.gmra.mxu0 %v5431
        %v5706 = vpop.f32.mrf.mxu0
        %v5707 = vadd.f32 %v5618, %v5706
        %v5708 = vpop.f32.mrf.mxu0
        %v5709 = vadd.f32 %v5620, %v5708
        %5710 = vmatmul.bf16.gmra.mxu0 %v5432
        %v5711 = vpop.f32.mrf.mxu0
        %v5712 = vadd.f32 %v5623, %v5711
        %v5713 = vpop.f32.mrf.mxu0
        %v5714 = vadd.f32 %v5625, %v5713
        %5715 = vmatmul.bf16.gmra.mxu0 %v5433
        %v5716 = vpop.f32.mrf.mxu0
        %v5717 = vadd.f32 %v5628, %v5716
        %v5718 = vpop.f32.mrf.mxu0
        %v5719 = vadd.f32 %v5630, %v5718
        %5720 = vmatmul.bf16.gmra.mxu0 %v5434
        %v5721 = vpop.f32.mrf.mxu0
        %v5722 = vadd.f32 %v5633, %v5721
        %v5723 = vpop.f32.mrf.mxu0
        %v5724 = vadd.f32 %v5635, %v5723
        %5725 = vmatmul.bf16.gmra.mxu0 %v5435
        %v5726 = vpop.f32.mrf.mxu0
        %v5727 = vadd.f32 %v5638, %v5726
        %v5728 = vpop.f32.mrf.mxu0
        %v5729 = vadd.f32 %v5640, %v5728
        %5730 = vmatmul.bf16.gmra.mxu0 %v5436
        %v5731 = vpop.f32.mrf.mxu0
        %v5732 = vadd.f32 %v5643, %v5731
        %v5733 = vpop.f32.mrf.mxu0
        %v5734 = vadd.f32 %v5645, %v5733
        %5735 = vmatmul.bf16.gmra.mxu0 %v5437
        %v5736 = vpop.f32.mrf.mxu0
        %v5737 = vadd.f32 %v5648, %v5736
        %v5738 = vpop.f32.mrf.mxu0
        %v5739 = vadd.f32 %v5650, %v5738
        %5740 = vmatmul.bf16.gmra.mxu0 %v5438
        %v5741 = vpop.f32.mrf.mxu0
        %v5742 = vadd.f32 %v5653, %v5741
        %v5743 = vpop.f32.mrf.mxu0
        %v5744 = vadd.f32 %v5655, %v5743
        %5745 = vmatmul.bf16.gmra.mxu0 %v5439
        %v5746 = vpop.f32.mrf.mxu0
        %v5747 = vadd.f32 %v5658, %v5746
        %v5748 = vpop.f32.mrf.mxu0
        %v5749 = vadd.f32 %v5660, %v5748
        %5750 = vmatmul.bf16.gmra.mxu0 %v5440
        %v5751 = vpop.f32.mrf.mxu0
        %v5752 = vadd.f32 %v5663, %v5751
        %v5753 = vpop.f32.mrf.mxu0
        %v5754 = vadd.f32 %v5665, %v5753
        %5755 = vmatmul.bf16.gmra.mxu0 %v5441
        %v5756 = vpop.f32.mrf.mxu0
        %v5757 = vadd.f32 %v5668, %v5756
        %v5758 = vpop.f32.mrf.mxu0
        %v5759 = vadd.f32 %v5670, %v5758
        %5760 = vmatmul.bf16.gmra.mxu0 %v5442
        %v5761 = vpop.f32.mrf.mxu0
        %v5762 = vadd.f32 %v5673, %v5761
        %v5763 = vpop.f32.mrf.mxu0
        %v5764 = vadd.f32 %v5675, %v5763
        %5765 = vdwg.mxu0
        %v5766 = vadd.f32 %v5060, %v5687
        %v5767 = vadd.f32 %v5062, %v5689
        %v5768 = vadd.f32 %v5065, %v5692
        %v5769 = vadd.f32 %v5067, %v5694
        %v5770 = vadd.f32 %v5070, %v5697
        %v5771 = vadd.f32 %v5072, %v5699
        %v5772 = vadd.f32 %v5075, %v5702
        %v5773 = vadd.f32 %v5077, %v5704
        %v5774 = vadd.f32 %v5080, %v5707
        %v5775 = vadd.f32 %v5082, %v5709
        %v5776 = vadd.f32 %v5085, %v5712
        %v5777 = vadd.f32 %v5087, %v5714
        %v5778 = vadd.f32 %v5090, %v5717
        %v5779 = vadd.f32 %v5092, %v5719
        %v5780 = vadd.f32 %v5095, %v5722
        %v5781 = vadd.f32 %v5097, %v5724
        %v5782 = vadd.f32 %v5100, %v5727
        %v5783 = vadd.f32 %v5102, %v5729
        %v5784 = vadd.f32 %v5105, %v5732
        %v5785 = vadd.f32 %v5107, %v5734
        %v5786 = vadd.f32 %v5110, %v5737
        %v5787 = vadd.f32 %v5112, %v5739
        %v5788 = vadd.f32 %v5115, %v5742
        %v5789 = vadd.f32 %v5117, %v5744
        %v5790 = vadd.f32 %v5120, %v5747
        %v5791 = vadd.f32 %v5122, %v5749
        %v5792 = vadd.f32 %v5125, %v5752
        %v5793 = vadd.f32 %v5127, %v5754
        %v5794 = vadd.f32 %v5130, %v5757
        %v5795 = vadd.f32 %v5132, %v5759
        %v5796 = vadd.f32 %v5135, %v5762
        %v5797 = vadd.f32 %v5137, %v5764
        %s5798 = scalar_lea.vmem [#allocation2], 48
        %v5799 = vld [vmem:[%s5798] sm:$0xff]
        %v5800 = vld [vmem:[%s5798 + $0x8] sm:$0xff]
        %v5801 = vld [vmem:[%s5798 + $0x18] sm:$0xff]
        %v5802 = vld [vmem:[%s5798 + $0x20] sm:$0xff]
        %v5803 = vld [vmem:[%s5798 + $0x30] sm:$0xff]
        %v5804 = vld [vmem:[%s5798 + $0x38] sm:$0xff]
        %v5805 = vld [vmem:[%s5798 + $0x48] sm:$0xff]
        %v5806 = vld [vmem:[%s5798 + $0x50] sm:$0xff]
        %v5807 = vld [vmem:[%s5798 + $0x60] sm:$0xff]
        %v5808 = vld [vmem:[%s5798 + $0x68] sm:$0xff]
        %v5809 = vld [vmem:[%s5798 + $0x78] sm:$0xff]
        %v5810 = vld [vmem:[%s5798 + $0x80] sm:$0xff]
        %v5811 = vld [vmem:[%s5798 + $0x90] sm:$0xff]
        %v5812 = vld [vmem:[%s5798 + $0x98] sm:$0xff]
        %v5813 = vld [vmem:[%s5798 + $0xa8] sm:$0xff]
        %v5814 = vld [vmem:[%s5798 + $0xb0] sm:$0xff]
        %v5815 = vld [vmem:[%s5798 + $0xc0] sm:$0xff]
        %v5816 = vld [vmem:[%s5798 + $0xc8] sm:$0xff]
        %v5817 = vld [vmem:[%s5798 + $0xd8] sm:$0xff]
        %v5818 = vld [vmem:[%s5798 + $0xe0] sm:$0xff]
        %v5819 = vld [vmem:[%s5798 + $0xf0] sm:$0xff]
        %v5820 = vld [vmem:[%s5798 + $0xf8] sm:$0xff]
        %v5821 = vld [vmem:[%s5798 + $0x108] sm:$0xff]
        %v5822 = vld [vmem:[%s5798 + $0x110] sm:$0xff]
        %v5823 = vld [vmem:[%s5798 + $0x120] sm:$0xff]
        %v5824 = vld [vmem:[%s5798 + $0x128] sm:$0xff]
        %v5825 = vld [vmem:[%s5798 + $0x138] sm:$0xff]
        %v5826 = vld [vmem:[%s5798 + $0x140] sm:$0xff]
        %v5827 = vld [vmem:[%s5798 + $0x150] sm:$0xff]
        %v5828 = vld [vmem:[%s5798 + $0x158] sm:$0xff]
        %v5829 = vld [vmem:[%s5798 + $0x168] sm:$0xff]
        %v5830 = vld [vmem:[%s5798 + $0x170] sm:$0xff]
        %v5831 = vpack.c.bf16 %v5799, %v5799
        %v5832 = vpack.c.bf16 %v5800, %v5800
        %v5833 = vpack.c.bf16 %v5801, %v5801
        %v5834 = vpack.c.bf16 %v5802, %v5802
        %v5835 = vpack.c.bf16 %v5803, %v5803
        %v5836 = vpack.c.bf16 %v5804, %v5804
        %v5837 = vpack.c.bf16 %v5805, %v5805
        %v5838 = vpack.c.bf16 %v5806, %v5806
        %v5839 = vpack.c.bf16 %v5807, %v5807
        %v5840 = vpack.c.bf16 %v5808, %v5808
        %v5841 = vpack.c.bf16 %v5809, %v5809
        %v5842 = vpack.c.bf16 %v5810, %v5810
        %v5843 = vpack.c.bf16 %v5811, %v5811
        %v5844 = vpack.c.bf16 %v5812, %v5812
        %v5845 = vpack.c.bf16 %v5813, %v5813
        %v5846 = vpack.c.bf16 %v5814, %v5814
        %v5847 = vpack.c.bf16 %v5815, %v5815
        %v5848 = vpack.c.bf16 %v5816, %v5816
        %v5849 = vpack.c.bf16 %v5817, %v5817
        %v5850 = vpack.c.bf16 %v5818, %v5818
        %v5851 = vpack.c.bf16 %v5819, %v5819
        %v5852 = vpack.c.bf16 %v5820, %v5820
        %v5853 = vpack.c.bf16 %v5821, %v5821
        %v5854 = vpack.c.bf16 %v5822, %v5822
        %v5855 = vpack.c.bf16 %v5823, %v5823
        %v5856 = vpack.c.bf16 %v5824, %v5824
        %v5857 = vpack.c.bf16 %v5825, %v5825
        %v5858 = vpack.c.bf16 %v5826, %v5826
        %v5859 = vpack.c.bf16 %v5827, %v5827
        %v5860 = vpack.c.bf16 %v5828, %v5828
        %v5861 = vpack.c.bf16 %v5829, %v5829
        %v5862 = vpack.c.bf16 %v5830, %v5830
        %v5863 = vld [vmem:[%s5798 + $0x1] sm:$0xff]
        %v5864 = vld [vmem:[%s5798 + $0x9] sm:$0xff]
        %v5865 = vld [vmem:[%s5798 + $0x19] sm:$0xff]
        %v5866 = vld [vmem:[%s5798 + $0x21] sm:$0xff]
        %v5867 = vld [vmem:[%s5798 + $0x31] sm:$0xff]
        %v5868 = vld [vmem:[%s5798 + $0x39] sm:$0xff]
        %v5869 = vld [vmem:[%s5798 + $0x49] sm:$0xff]
        %v5870 = vld [vmem:[%s5798 + $0x51] sm:$0xff]
        %v5871 = vld [vmem:[%s5798 + $0x61] sm:$0xff]
        %v5872 = vld [vmem:[%s5798 + $0x69] sm:$0xff]
        %v5873 = vld [vmem:[%s5798 + $0x79] sm:$0xff]
        %v5874 = vld [vmem:[%s5798 + $0x81] sm:$0xff]
        %v5875 = vld [vmem:[%s5798 + $0x91] sm:$0xff]
        %v5876 = vld [vmem:[%s5798 + $0x99] sm:$0xff]
        %v5877 = vld [vmem:[%s5798 + $0xa9] sm:$0xff]
        %v5878 = vld [vmem:[%s5798 + $0xb1] sm:$0xff]
        %v5879 = vld [vmem:[%s5798 + $0xc1] sm:$0xff]
        %v5880 = vld [vmem:[%s5798 + $0xc9] sm:$0xff]
        %v5881 = vld [vmem:[%s5798 + $0xd9] sm:$0xff]
        %v5882 = vld [vmem:[%s5798 + $0xe1] sm:$0xff]
        %v5883 = vld [vmem:[%s5798 + $0xf1] sm:$0xff]
        %v5884 = vld [vmem:[%s5798 + $0xf9] sm:$0xff]
        %v5885 = vld [vmem:[%s5798 + $0x109] sm:$0xff]
        %v5886 = vld [vmem:[%s5798 + $0x111] sm:$0xff]
        %v5887 = vld [vmem:[%s5798 + $0x121] sm:$0xff]
        %v5888 = vld [vmem:[%s5798 + $0x129] sm:$0xff]
        %v5889 = vld [vmem:[%s5798 + $0x139] sm:$0xff]
        %v5890 = vld [vmem:[%s5798 + $0x141] sm:$0xff]
        %v5891 = vld [vmem:[%s5798 + $0x151] sm:$0xff]
        %v5892 = vld [vmem:[%s5798 + $0x159] sm:$0xff]
        %v5893 = vld [vmem:[%s5798 + $0x169] sm:$0xff]
        %v5894 = vld [vmem:[%s5798 + $0x171] sm:$0xff]
        %v5895 = vpack.c.bf16 %v5863, %v5863
        %v5896 = vpack.c.bf16 %v5864, %v5864
        %v5897 = vpack.c.bf16 %v5865, %v5865
        %v5898 = vpack.c.bf16 %v5866, %v5866
        %v5899 = vpack.c.bf16 %v5867, %v5867
        %v5900 = vpack.c.bf16 %v5868, %v5868
        %v5901 = vpack.c.bf16 %v5869, %v5869
        %v5902 = vpack.c.bf16 %v5870, %v5870
        %v5903 = vpack.c.bf16 %v5871, %v5871
        %v5904 = vpack.c.bf16 %v5872, %v5872
        %v5905 = vpack.c.bf16 %v5873, %v5873
        %v5906 = vpack.c.bf16 %v5874, %v5874
        %v5907 = vpack.c.bf16 %v5875, %v5875
        %v5908 = vpack.c.bf16 %v5876, %v5876
        %v5909 = vpack.c.bf16 %v5877, %v5877
        %v5910 = vpack.c.bf16 %v5878, %v5878
        %v5911 = vpack.c.bf16 %v5879, %v5879
        %v5912 = vpack.c.bf16 %v5880, %v5880
        %v5913 = vpack.c.bf16 %v5881, %v5881
        %v5914 = vpack.c.bf16 %v5882, %v5882
        %v5915 = vpack.c.bf16 %v5883, %v5883
        %v5916 = vpack.c.bf16 %v5884, %v5884
        %v5917 = vpack.c.bf16 %v5885, %v5885
        %v5918 = vpack.c.bf16 %v5886, %v5886
        %v5919 = vpack.c.bf16 %v5887, %v5887
        %v5920 = vpack.c.bf16 %v5888, %v5888
        %v5921 = vpack.c.bf16 %v5889, %v5889
        %v5922 = vpack.c.bf16 %v5890, %v5890
        %v5923 = vpack.c.bf16 %v5891, %v5891
        %v5924 = vpack.c.bf16 %v5892, %v5892
        %v5925 = vpack.c.bf16 %v5893, %v5893
        %v5926 = vpack.c.bf16 %v5894, %v5894
        %v5959 = vunpack.c.l.b16 %v5831
        %v5960 = vunpack.c.l.b16 %v5832
        %v5961 = vunpack.c.l.b16 %v5833
        %v5962 = vunpack.c.l.b16 %v5834
        %v5963 = vunpack.c.l.b16 %v5835
        %v5964 = vunpack.c.l.b16 %v5836
        %v5965 = vunpack.c.l.b16 %v5837
        %v5966 = vunpack.c.l.b16 %v5838
        %v5967 = vunpack.c.l.b16 %v5839
        %v5968 = vunpack.c.l.b16 %v5840
        %v5969 = vunpack.c.l.b16 %v5841
        %v5970 = vunpack.c.l.b16 %v5842
        %v5971 = vunpack.c.l.b16 %v5843
        %v5972 = vunpack.c.l.b16 %v5844
        %v5973 = vunpack.c.l.b16 %v5845
        %v5974 = vunpack.c.l.b16 %v5846
        %v5975 = vunpack.c.l.b16 %v5847
        %v5976 = vunpack.c.l.b16 %v5848
        %v5977 = vunpack.c.l.b16 %v5849
        %v5978 = vunpack.c.l.b16 %v5850
        %v5979 = vunpack.c.l.b16 %v5851
        %v5980 = vunpack.c.l.b16 %v5852
        %v5981 = vunpack.c.l.b16 %v5853
        %v5982 = vunpack.c.l.b16 %v5854
        %v5983 = vunpack.c.l.b16 %v5855
        %v5984 = vunpack.c.l.b16 %v5856
        %v5985 = vunpack.c.l.b16 %v5857
        %v5986 = vunpack.c.l.b16 %v5858
        %v5987 = vunpack.c.l.b16 %v5859
        %v5988 = vunpack.c.l.b16 %v5860
        %v5989 = vunpack.c.l.b16 %v5861
        %v5990 = vunpack.c.l.b16 %v5862
        %v5991 = vpack.c.b16 %v5960, %v5959
        %v5992 = vpack.c.b16 %v5962, %v5961
        %v5993 = vpack.c.b16 %v5964, %v5963
        %v5994 = vpack.c.b16 %v5966, %v5965
        %v5995 = vpack.c.b16 %v5968, %v5967
        %v5996 = vpack.c.b16 %v5970, %v5969
        %v5997 = vpack.c.b16 %v5972, %v5971
        %v5998 = vpack.c.b16 %v5974, %v5973
        %v5999 = vpack.c.b16 %v5976, %v5975
        %v6000 = vpack.c.b16 %v5978, %v5977
        %v6001 = vpack.c.b16 %v5980, %v5979
        %v6002 = vpack.c.b16 %v5982, %v5981
        %v6003 = vpack.c.b16 %v5984, %v5983
        %v6004 = vpack.c.b16 %v5986, %v5985
        %v6005 = vpack.c.b16 %v5988, %v5987
        %v6006 = vpack.c.b16 %v5990, %v5989
        %v6055 = vunpack.c.l.b16 %v5895
        %v6056 = vunpack.c.l.b16 %v5896
        %v6057 = vunpack.c.l.b16 %v5897
        %v6058 = vunpack.c.l.b16 %v5898
        %v6059 = vunpack.c.l.b16 %v5899
        %v6060 = vunpack.c.l.b16 %v5900
        %v6061 = vunpack.c.l.b16 %v5901
        %v6062 = vunpack.c.l.b16 %v5902
        %v6063 = vunpack.c.l.b16 %v5903
        %v6064 = vunpack.c.l.b16 %v5904
        %v6065 = vunpack.c.l.b16 %v5905
        %v6066 = vunpack.c.l.b16 %v5906
        %v6067 = vunpack.c.l.b16 %v5907
        %v6068 = vunpack.c.l.b16 %v5908
        %v6069 = vunpack.c.l.b16 %v5909
        %v6070 = vunpack.c.l.b16 %v5910
        %v6071 = vunpack.c.l.b16 %v5911
        %v6072 = vunpack.c.l.b16 %v5912
        %v6073 = vunpack.c.l.b16 %v5913
        %v6074 = vunpack.c.l.b16 %v5914
        %v6075 = vunpack.c.l.b16 %v5915
        %v6076 = vunpack.c.l.b16 %v5916
        %v6077 = vunpack.c.l.b16 %v5917
        %v6078 = vunpack.c.l.b16 %v5918
        %v6079 = vunpack.c.l.b16 %v5919
        %v6080 = vunpack.c.l.b16 %v5920
        %v6081 = vunpack.c.l.b16 %v5921
        %v6082 = vunpack.c.l.b16 %v5922
        %v6083 = vunpack.c.l.b16 %v5923
        %v6084 = vunpack.c.l.b16 %v5924
        %v6085 = vunpack.c.l.b16 %v5925
        %v6086 = vunpack.c.l.b16 %v5926
        %v6087 = vpack.c.b16 %v6056, %v6055
        %v6088 = vpack.c.b16 %v6058, %v6057
        %v6089 = vpack.c.b16 %v6060, %v6059
        %v6090 = vpack.c.b16 %v6062, %v6061
        %v6091 = vpack.c.b16 %v6064, %v6063
        %v6092 = vpack.c.b16 %v6066, %v6065
        %v6093 = vpack.c.b16 %v6068, %v6067
        %v6094 = vpack.c.b16 %v6070, %v6069
        %v6095 = vpack.c.b16 %v6072, %v6071
        %v6096 = vpack.c.b16 %v6074, %v6073
        %v6097 = vpack.c.b16 %v6076, %v6075
        %v6098 = vpack.c.b16 %v6078, %v6077
        %v6099 = vpack.c.b16 %v6080, %v6079
        %v6100 = vpack.c.b16 %v6082, %v6081
        %v6101 = vpack.c.b16 %v6084, %v6083
        %v6102 = vpack.c.b16 %v6086, %v6085
        %s6119 = scalar_lea.vmem %s2, 384
        %v6120 = vld [vmem:[%s6119] sm:$0xf]
        %v6121 = vld [vmem:[%s6119 + $0x4] sm:$0xf]
        %v6122 = vld [vmem:[%s6119 + $0x8] sm:$0xf]
        %v6123 = vld [vmem:[%s6119 + $0xc] sm:$0xf]
        %v6124 = vld [vmem:[%s6119 + $0x10] sm:$0xf]
        %v6125 = vld [vmem:[%s6119 + $0x14] sm:$0xf]
        %v6126 = vld [vmem:[%s6119 + $0x18] sm:$0xf]
        %v6127 = vld [vmem:[%s6119 + $0x1c] sm:$0xf]
        %v6128 = vld [vmem:[%s6119 + $0x20] sm:$0xf]
        %v6129 = vld [vmem:[%s6119 + $0x24] sm:$0xf]
        %v6130 = vld [vmem:[%s6119 + $0x28] sm:$0xf]
        %v6131 = vld [vmem:[%s6119 + $0x2c] sm:$0xf]
        %v6132 = vld [vmem:[%s6119 + $0x30] sm:$0xf]
        %v6133 = vld [vmem:[%s6119 + $0x34] sm:$0xf]
        %v6134 = vld [vmem:[%s6119 + $0x38] sm:$0xf]
        %v6135 = vld [vmem:[%s6119 + $0x3c] sm:$0xf]
        %v6136 = vld [vmem:[%s6119 + $0x40] sm:$0xf]
        %v6137 = vld [vmem:[%s6119 + $0x44] sm:$0xf]
        %v6138 = vld [vmem:[%s6119 + $0x48] sm:$0xf]
        %v6139 = vld [vmem:[%s6119 + $0x4c] sm:$0xf]
        %v6140 = vld [vmem:[%s6119 + $0x50] sm:$0xf]
        %v6141 = vld [vmem:[%s6119 + $0x54] sm:$0xf]
        %v6142 = vld [vmem:[%s6119 + $0x58] sm:$0xf]
        %v6143 = vld [vmem:[%s6119 + $0x5c] sm:$0xf]
        %v6144 = vld [vmem:[%s6119 + $0x60] sm:$0xf]
        %v6145 = vld [vmem:[%s6119 + $0x64] sm:$0xf]
        %v6146 = vld [vmem:[%s6119 + $0x68] sm:$0xf]
        %v6147 = vld [vmem:[%s6119 + $0x6c] sm:$0xf]
        %v6148 = vld [vmem:[%s6119 + $0x70] sm:$0xf]
        %v6149 = vld [vmem:[%s6119 + $0x74] sm:$0xf]
        %v6150 = vld [vmem:[%s6119 + $0x78] sm:$0xf]
        %v6151 = vld [vmem:[%s6119 + $0x7c] sm:$0xf]
        %v6184 = vunpack.c.l.b16 %v6120
        %v6185 = vunpack.c.l.b16 %v6121
        %v6186 = vunpack.c.l.b16 %v6122
        %v6187 = vunpack.c.l.b16 %v6123
        %v6188 = vunpack.c.l.b16 %v6124
        %v6189 = vunpack.c.l.b16 %v6125
        %v6190 = vunpack.c.l.b16 %v6126
        %v6191 = vunpack.c.l.b16 %v6127
        %v6192 = vunpack.c.l.b16 %v6128
        %v6193 = vunpack.c.l.b16 %v6129
        %v6194 = vunpack.c.l.b16 %v6130
        %v6195 = vunpack.c.l.b16 %v6131
        %v6196 = vunpack.c.l.b16 %v6132
        %v6197 = vunpack.c.l.b16 %v6133
        %v6198 = vunpack.c.l.b16 %v6134
        %v6199 = vunpack.c.l.b16 %v6135
        %v6200 = vunpack.c.l.b16 %v6136
        %v6201 = vunpack.c.l.b16 %v6137
        %v6202 = vunpack.c.l.b16 %v6138
        %v6203 = vunpack.c.l.b16 %v6139
        %v6204 = vunpack.c.l.b16 %v6140
        %v6205 = vunpack.c.l.b16 %v6141
        %v6206 = vunpack.c.l.b16 %v6142
        %v6207 = vunpack.c.l.b16 %v6143
        %v6208 = vunpack.c.l.b16 %v6144
        %v6209 = vunpack.c.l.b16 %v6145
        %v6210 = vunpack.c.l.b16 %v6146
        %v6211 = vunpack.c.l.b16 %v6147
        %v6212 = vunpack.c.l.b16 %v6148
        %v6213 = vunpack.c.l.b16 %v6149
        %v6214 = vunpack.c.l.b16 %v6150
        %v6215 = vunpack.c.l.b16 %v6151
        %v6216 = vpack.c.b16 %v6185, %v6184
        %v6217 = vpack.c.b16 %v6187, %v6186
        %v6218 = vpack.c.b16 %v6189, %v6188
        %v6219 = vpack.c.b16 %v6191, %v6190
        %v6220 = vpack.c.b16 %v6193, %v6192
        %v6221 = vpack.c.b16 %v6195, %v6194
        %v6222 = vpack.c.b16 %v6197, %v6196
        %v6223 = vpack.c.b16 %v6199, %v6198
        %v6224 = vpack.c.b16 %v6201, %v6200
        %v6225 = vpack.c.b16 %v6203, %v6202
        %v6226 = vpack.c.b16 %v6205, %v6204
        %v6227 = vpack.c.b16 %v6207, %v6206
        %v6228 = vpack.c.b16 %v6209, %v6208
        %v6229 = vpack.c.b16 %v6211, %v6210
        %v6230 = vpack.c.b16 %v6213, %v6212
        %v6231 = vpack.c.b16 %v6215, %v6214
        %6248 = vmatpush.bf16.msra.mxu0 %v6223
        %6249 = vmatpush.bf16.msra.mxu0 %v6222
        %6250 = vmatpush.bf16.msra.mxu0 %v6221
        %6251 = vmatpush.bf16.msra.mxu0 %v6220
        %6252 = vmatpush.bf16.msra.mxu0 %v6219
        %6253 = vmatpush.bf16.msra.mxu0 %v6218
        %6254 = vmatpush.bf16.msra.mxu0 %v6217
        %6255 = vmatpush.bf16.msra.mxu0 %v6216
        %6256 = vmatmul.bf16.gmra.mxu0 %v5991
        %v6257 = vpop.f32.mrf.mxu0
        %v6258 = vadd.f32 0.0, %v6257
        %v6259 = vpop.f32.mrf.mxu0
        %v6260 = vadd.f32 0.0, %v6259
        %6261 = vmatmul.bf16.gmra.mxu0 %v5992
        %v6262 = vpop.f32.mrf.mxu0
        %v6263 = vadd.f32 0.0, %v6262
        %v6264 = vpop.f32.mrf.mxu0
        %v6265 = vadd.f32 0.0, %v6264
        %6266 = vmatmul.bf16.gmra.mxu0 %v5993
        %v6267 = vpop.f32.mrf.mxu0
        %v6268 = vadd.f32 0.0, %v6267
        %v6269 = vpop.f32.mrf.mxu0
        %v6270 = vadd.f32 0.0, %v6269
        %6271 = vmatmul.bf16.gmra.mxu0 %v5994
        %v6272 = vpop.f32.mrf.mxu0
        %v6273 = vadd.f32 0.0, %v6272
        %v6274 = vpop.f32.mrf.mxu0
        %v6275 = vadd.f32 0.0, %v6274
        %6276 = vmatmul.bf16.gmra.mxu0 %v5995
        %v6277 = vpop.f32.mrf.mxu0
        %v6278 = vadd.f32 0.0, %v6277
        %v6279 = vpop.f32.mrf.mxu0
        %v6280 = vadd.f32 0.0, %v6279
        %6281 = vmatmul.bf16.gmra.mxu0 %v5996
        %v6282 = vpop.f32.mrf.mxu0
        %v6283 = vadd.f32 0.0, %v6282
        %v6284 = vpop.f32.mrf.mxu0
        %v6285 = vadd.f32 0.0, %v6284
        %6286 = vmatmul.bf16.gmra.mxu0 %v5997
        %v6287 = vpop.f32.mrf.mxu0
        %v6288 = vadd.f32 0.0, %v6287
        %v6289 = vpop.f32.mrf.mxu0
        %v6290 = vadd.f32 0.0, %v6289
        %6291 = vmatmul.bf16.gmra.mxu0 %v5998
        %v6292 = vpop.f32.mrf.mxu0
        %v6293 = vadd.f32 0.0, %v6292
        %v6294 = vpop.f32.mrf.mxu0
        %v6295 = vadd.f32 0.0, %v6294
        %6296 = vmatmul.bf16.gmra.mxu0 %v5999
        %v6297 = vpop.f32.mrf.mxu0
        %v6298 = vadd.f32 0.0, %v6297
        %v6299 = vpop.f32.mrf.mxu0
        %v6300 = vadd.f32 0.0, %v6299
        %6301 = vmatmul.bf16.gmra.mxu0 %v6000
        %v6302 = vpop.f32.mrf.mxu0
        %v6303 = vadd.f32 0.0, %v6302
        %v6304 = vpop.f32.mrf.mxu0
        %v6305 = vadd.f32 0.0, %v6304
        %6306 = vmatmul.bf16.gmra.mxu0 %v6001
        %v6307 = vpop.f32.mrf.mxu0
        %v6308 = vadd.f32 0.0, %v6307
        %v6309 = vpop.f32.mrf.mxu0
        %v6310 = vadd.f32 0.0, %v6309
        %6311 = vmatmul.bf16.gmra.mxu0 %v6002
        %v6312 = vpop.f32.mrf.mxu0
        %v6313 = vadd.f32 0.0, %v6312
        %v6314 = vpop.f32.mrf.mxu0
        %v6315 = vadd.f32 0.0, %v6314
        %6316 = vmatmul.bf16.gmra.mxu0 %v6003
        %v6317 = vpop.f32.mrf.mxu0
        %v6318 = vadd.f32 0.0, %v6317
        %v6319 = vpop.f32.mrf.mxu0
        %v6320 = vadd.f32 0.0, %v6319
        %6321 = vmatmul.bf16.gmra.mxu0 %v6004
        %v6322 = vpop.f32.mrf.mxu0
        %v6323 = vadd.f32 0.0, %v6322
        %v6324 = vpop.f32.mrf.mxu0
        %v6325 = vadd.f32 0.0, %v6324
        %6326 = vmatmul.bf16.gmra.mxu0 %v6005
        %v6327 = vpop.f32.mrf.mxu0
        %v6328 = vadd.f32 0.0, %v6327
        %v6329 = vpop.f32.mrf.mxu0
        %v6330 = vadd.f32 0.0, %v6329
        %6331 = vmatmul.bf16.gmra.mxu0 %v6006
        %v6332 = vpop.f32.mrf.mxu0
        %v6333 = vadd.f32 0.0, %v6332
        %v6334 = vpop.f32.mrf.mxu0
        %v6335 = vadd.f32 0.0, %v6334
        %6336 = vdwg.mxu0
        %6337 = vmatpush.bf16.msra.mxu0 %v6231
        %6338 = vmatpush.bf16.msra.mxu0 %v6230
        %6339 = vmatpush.bf16.msra.mxu0 %v6229
        %6340 = vmatpush.bf16.msra.mxu0 %v6228
        %6341 = vmatpush.bf16.msra.mxu0 %v6227
        %6342 = vmatpush.bf16.msra.mxu0 %v6226
        %6343 = vmatpush.bf16.msra.mxu0 %v6225
        %6344 = vmatpush.bf16.msra.mxu0 %v6224
        %6345 = vmatmul.bf16.gmra.mxu0 %v6087
        %v6346 = vpop.f32.mrf.mxu0
        %v6347 = vadd.f32 %v6258, %v6346
        %v6348 = vpop.f32.mrf.mxu0
        %v6349 = vadd.f32 %v6260, %v6348
        %6350 = vmatmul.bf16.gmra.mxu0 %v6088
        %v6351 = vpop.f32.mrf.mxu0
        %v6352 = vadd.f32 %v6263, %v6351
        %v6353 = vpop.f32.mrf.mxu0
        %v6354 = vadd.f32 %v6265, %v6353
        %6355 = vmatmul.bf16.gmra.mxu0 %v6089
        %v6356 = vpop.f32.mrf.mxu0
        %v6357 = vadd.f32 %v6268, %v6356
        %v6358 = vpop.f32.mrf.mxu0
        %v6359 = vadd.f32 %v6270, %v6358
        %6360 = vmatmul.bf16.gmra.mxu0 %v6090
        %v6361 = vpop.f32.mrf.mxu0
        %v6362 = vadd.f32 %v6273, %v6361
        %v6363 = vpop.f32.mrf.mxu0
        %v6364 = vadd.f32 %v6275, %v6363
        %6365 = vmatmul.bf16.gmra.mxu0 %v6091
        %v6366 = vpop.f32.mrf.mxu0
        %v6367 = vadd.f32 %v6278, %v6366
        %v6368 = vpop.f32.mrf.mxu0
        %v6369 = vadd.f32 %v6280, %v6368
        %6370 = vmatmul.bf16.gmra.mxu0 %v6092
        %v6371 = vpop.f32.mrf.mxu0
        %v6372 = vadd.f32 %v6283, %v6371
        %v6373 = vpop.f32.mrf.mxu0
        %v6374 = vadd.f32 %v6285, %v6373
        %6375 = vmatmul.bf16.gmra.mxu0 %v6093
        %v6376 = vpop.f32.mrf.mxu0
        %v6377 = vadd.f32 %v6288, %v6376
        %v6378 = vpop.f32.mrf.mxu0
        %v6379 = vadd.f32 %v6290, %v6378
        %6380 = vmatmul.bf16.gmra.mxu0 %v6094
        %v6381 = vpop.f32.mrf.mxu0
        %v6382 = vadd.f32 %v6293, %v6381
        %v6383 = vpop.f32.mrf.mxu0
        %v6384 = vadd.f32 %v6295, %v6383
        %6385 = vmatmul.bf16.gmra.mxu0 %v6095
        %v6386 = vpop.f32.mrf.mxu0
        %v6387 = vadd.f32 %v6298, %v6386
        %v6388 = vpop.f32.mrf.mxu0
        %v6389 = vadd.f32 %v6300, %v6388
        %6390 = vmatmul.bf16.gmra.mxu0 %v6096
        %v6391 = vpop.f32.mrf.mxu0
        %v6392 = vadd.f32 %v6303, %v6391
        %v6393 = vpop.f32.mrf.mxu0
        %v6394 = vadd.f32 %v6305, %v6393
        %6395 = vmatmul.bf16.gmra.mxu0 %v6097
        %v6396 = vpop.f32.mrf.mxu0
        %v6397 = vadd.f32 %v6308, %v6396
        %v6398 = vpop.f32.mrf.mxu0
        %v6399 = vadd.f32 %v6310, %v6398
        %6400 = vmatmul.bf16.gmra.mxu0 %v6098
        %v6401 = vpop.f32.mrf.mxu0
        %v6402 = vadd.f32 %v6313, %v6401
        %v6403 = vpop.f32.mrf.mxu0
        %v6404 = vadd.f32 %v6315, %v6403
        %6405 = vmatmul.bf16.gmra.mxu0 %v6099
        %v6406 = vpop.f32.mrf.mxu0
        %v6407 = vadd.f32 %v6318, %v6406
        %v6408 = vpop.f32.mrf.mxu0
        %v6409 = vadd.f32 %v6320, %v6408
        %6410 = vmatmul.bf16.gmra.mxu0 %v6100
        %v6411 = vpop.f32.mrf.mxu0
        %v6412 = vadd.f32 %v6323, %v6411
        %v6413 = vpop.f32.mrf.mxu0
        %v6414 = vadd.f32 %v6325, %v6413
        %6415 = vmatmul.bf16.gmra.mxu0 %v6101
        %v6416 = vpop.f32.mrf.mxu0
        %v6417 = vadd.f32 %v6328, %v6416
        %v6418 = vpop.f32.mrf.mxu0
        %v6419 = vadd.f32 %v6330, %v6418
        %6420 = vmatmul.bf16.gmra.mxu0 %v6102
        %v6421 = vpop.f32.mrf.mxu0
        %v6422 = vadd.f32 %v6333, %v6421
        %v6423 = vpop.f32.mrf.mxu0
        %v6424 = vadd.f32 %v6335, %v6423
        %6425 = vdwg.mxu0
        %v6426 = vadd.f32 %v5766, %v6347
        %v6427 = vadd.f32 %v5767, %v6349
        %v6428 = vadd.f32 %v5768, %v6352
        %v6429 = vadd.f32 %v5769, %v6354
        %v6430 = vadd.f32 %v5770, %v6357
        %v6431 = vadd.f32 %v5771, %v6359
        %v6432 = vadd.f32 %v5772, %v6362
        %v6433 = vadd.f32 %v5773, %v6364
        %v6434 = vadd.f32 %v5774, %v6367
        %v6435 = vadd.f32 %v5775, %v6369
        %v6436 = vadd.f32 %v5776, %v6372
        %v6437 = vadd.f32 %v5777, %v6374
        %v6438 = vadd.f32 %v5778, %v6377
        %v6439 = vadd.f32 %v5779, %v6379
        %v6440 = vadd.f32 %v5780, %v6382
        %v6441 = vadd.f32 %v5781, %v6384
        %v6442 = vadd.f32 %v5782, %v6387
        %v6443 = vadd.f32 %v5783, %v6389
        %v6444 = vadd.f32 %v5784, %v6392
        %v6445 = vadd.f32 %v5785, %v6394
        %v6446 = vadd.f32 %v5786, %v6397
        %v6447 = vadd.f32 %v5787, %v6399
        %v6448 = vadd.f32 %v5788, %v6402
        %v6449 = vadd.f32 %v5789, %v6404
        %v6450 = vadd.f32 %v5790, %v6407
        %v6451 = vadd.f32 %v5791, %v6409
        %v6452 = vadd.f32 %v5792, %v6412
        %v6453 = vadd.f32 %v5793, %v6414
        %v6454 = vadd.f32 %v5794, %v6417
        %v6455 = vadd.f32 %v5795, %v6419
        %v6456 = vadd.f32 %v5796, %v6422
        %v6457 = vadd.f32 %v5797, %v6424
        %v6458 = vld [vmem:[%s5798 + $0x2] sm:$0xff]
        %v6459 = vld [vmem:[%s5798 + $0xa] sm:$0xff]
        %v6460 = vld [vmem:[%s5798 + $0x1a] sm:$0xff]
        %v6461 = vld [vmem:[%s5798 + $0x22] sm:$0xff]
        %v6462 = vld [vmem:[%s5798 + $0x32] sm:$0xff]
        %v6463 = vld [vmem:[%s5798 + $0x3a] sm:$0xff]
        %v6464 = vld [vmem:[%s5798 + $0x4a] sm:$0xff]
        %v6465 = vld [vmem:[%s5798 + $0x52] sm:$0xff]
        %v6466 = vld [vmem:[%s5798 + $0x62] sm:$0xff]
        %v6467 = vld [vmem:[%s5798 + $0x6a] sm:$0xff]
        %v6468 = vld [vmem:[%s5798 + $0x7a] sm:$0xff]
        %v6469 = vld [vmem:[%s5798 + $0x82] sm:$0xff]
        %v6470 = vld [vmem:[%s5798 + $0x92] sm:$0xff]
        %v6471 = vld [vmem:[%s5798 + $0x9a] sm:$0xff]
        %v6472 = vld [vmem:[%s5798 + $0xaa] sm:$0xff]
        %v6473 = vld [vmem:[%s5798 + $0xb2] sm:$0xff]
        %v6474 = vld [vmem:[%s5798 + $0xc2] sm:$0xff]
        %v6475 = vld [vmem:[%s5798 + $0xca] sm:$0xff]
        %v6476 = vld [vmem:[%s5798 + $0xda] sm:$0xff]
        %v6477 = vld [vmem:[%s5798 + $0xe2] sm:$0xff]
        %v6478 = vld [vmem:[%s5798 + $0xf2] sm:$0xff]
        %v6479 = vld [vmem:[%s5798 + $0xfa] sm:$0xff]
        %v6480 = vld [vmem:[%s5798 + $0x10a] sm:$0xff]
        %v6481 = vld [vmem:[%s5798 + $0x112] sm:$0xff]
        %v6482 = vld [vmem:[%s5798 + $0x122] sm:$0xff]
        %v6483 = vld [vmem:[%s5798 + $0x12a] sm:$0xff]
        %v6484 = vld [vmem:[%s5798 + $0x13a] sm:$0xff]
        %v6485 = vld [vmem:[%s5798 + $0x142] sm:$0xff]
        %v6486 = vld [vmem:[%s5798 + $0x152] sm:$0xff]
        %v6487 = vld [vmem:[%s5798 + $0x15a] sm:$0xff]
        %v6488 = vld [vmem:[%s5798 + $0x16a] sm:$0xff]
        %v6489 = vld [vmem:[%s5798 + $0x172] sm:$0xff]
        %v6490 = vpack.c.bf16 %v6458, %v6458
        %v6491 = vpack.c.bf16 %v6459, %v6459
        %v6492 = vpack.c.bf16 %v6460, %v6460
        %v6493 = vpack.c.bf16 %v6461, %v6461
        %v6494 = vpack.c.bf16 %v6462, %v6462
        %v6495 = vpack.c.bf16 %v6463, %v6463
        %v6496 = vpack.c.bf16 %v6464, %v6464
        %v6497 = vpack.c.bf16 %v6465, %v6465
        %v6498 = vpack.c.bf16 %v6466, %v6466
        %v6499 = vpack.c.bf16 %v6467, %v6467
        %v6500 = vpack.c.bf16 %v6468, %v6468
        %v6501 = vpack.c.bf16 %v6469, %v6469
        %v6502 = vpack.c.bf16 %v6470, %v6470
        %v6503 = vpack.c.bf16 %v6471, %v6471
        %v6504 = vpack.c.bf16 %v6472, %v6472
        %v6505 = vpack.c.bf16 %v6473, %v6473
        %v6506 = vpack.c.bf16 %v6474, %v6474
        %v6507 = vpack.c.bf16 %v6475, %v6475
        %v6508 = vpack.c.bf16 %v6476, %v6476
        %v6509 = vpack.c.bf16 %v6477, %v6477
        %v6510 = vpack.c.bf16 %v6478, %v6478
        %v6511 = vpack.c.bf16 %v6479, %v6479
        %v6512 = vpack.c.bf16 %v6480, %v6480
        %v6513 = vpack.c.bf16 %v6481, %v6481
        %v6514 = vpack.c.bf16 %v6482, %v6482
        %v6515 = vpack.c.bf16 %v6483, %v6483
        %v6516 = vpack.c.bf16 %v6484, %v6484
        %v6517 = vpack.c.bf16 %v6485, %v6485
        %v6518 = vpack.c.bf16 %v6486, %v6486
        %v6519 = vpack.c.bf16 %v6487, %v6487
        %v6520 = vpack.c.bf16 %v6488, %v6488
        %v6521 = vpack.c.bf16 %v6489, %v6489
        %v6554 = vunpack.c.l.b16 %v6490
        %v6555 = vunpack.c.l.b16 %v6491
        %v6556 = vunpack.c.l.b16 %v6492
        %v6557 = vunpack.c.l.b16 %v6493
        %v6558 = vunpack.c.l.b16 %v6494
        %v6559 = vunpack.c.l.b16 %v6495
        %v6560 = vunpack.c.l.b16 %v6496
        %v6561 = vunpack.c.l.b16 %v6497
        %v6562 = vunpack.c.l.b16 %v6498
        %v6563 = vunpack.c.l.b16 %v6499
        %v6564 = vunpack.c.l.b16 %v6500
        %v6565 = vunpack.c.l.b16 %v6501
        %v6566 = vunpack.c.l.b16 %v6502
        %v6567 = vunpack.c.l.b16 %v6503
        %v6568 = vunpack.c.l.b16 %v6504
        %v6569 = vunpack.c.l.b16 %v6505
        %v6570 = vunpack.c.l.b16 %v6506
        %v6571 = vunpack.c.l.b16 %v6507
        %v6572 = vunpack.c.l.b16 %v6508
        %v6573 = vunpack.c.l.b16 %v6509
        %v6574 = vunpack.c.l.b16 %v6510
        %v6575 = vunpack.c.l.b16 %v6511
        %v6576 = vunpack.c.l.b16 %v6512
        %v6577 = vunpack.c.l.b16 %v6513
        %v6578 = vunpack.c.l.b16 %v6514
        %v6579 = vunpack.c.l.b16 %v6515
        %v6580 = vunpack.c.l.b16 %v6516
        %v6581 = vunpack.c.l.b16 %v6517
        %v6582 = vunpack.c.l.b16 %v6518
        %v6583 = vunpack.c.l.b16 %v6519
        %v6584 = vunpack.c.l.b16 %v6520
        %v6585 = vunpack.c.l.b16 %v6521
        %v6586 = vpack.c.b16 %v6555, %v6554
        %v6587 = vpack.c.b16 %v6557, %v6556
        %v6588 = vpack.c.b16 %v6559, %v6558
        %v6589 = vpack.c.b16 %v6561, %v6560
        %v6590 = vpack.c.b16 %v6563, %v6562
        %v6591 = vpack.c.b16 %v6565, %v6564
        %v6592 = vpack.c.b16 %v6567, %v6566
        %v6593 = vpack.c.b16 %v6569, %v6568
        %v6594 = vpack.c.b16 %v6571, %v6570
        %v6595 = vpack.c.b16 %v6573, %v6572
        %v6596 = vpack.c.b16 %v6575, %v6574
        %v6597 = vpack.c.b16 %v6577, %v6576
        %v6598 = vpack.c.b16 %v6579, %v6578
        %v6599 = vpack.c.b16 %v6581, %v6580
        %v6600 = vpack.c.b16 %v6583, %v6582
        %v6601 = vpack.c.b16 %v6585, %v6584
        %s6618 = scalar_lea.vmem %s2, 512
        %v6619 = vld [vmem:[%s6618] sm:$0xf]
        %v6620 = vld [vmem:[%s6618 + $0x4] sm:$0xf]
        %v6621 = vld [vmem:[%s6618 + $0x8] sm:$0xf]
        %v6622 = vld [vmem:[%s6618 + $0xc] sm:$0xf]
        %v6623 = vld [vmem:[%s6618 + $0x10] sm:$0xf]
        %v6624 = vld [vmem:[%s6618 + $0x14] sm:$0xf]
        %v6625 = vld [vmem:[%s6618 + $0x18] sm:$0xf]
        %v6626 = vld [vmem:[%s6618 + $0x1c] sm:$0xf]
        %v6627 = vld [vmem:[%s6618 + $0x20] sm:$0xf]
        %v6628 = vld [vmem:[%s6618 + $0x24] sm:$0xf]
        %v6629 = vld [vmem:[%s6618 + $0x28] sm:$0xf]
        %v6630 = vld [vmem:[%s6618 + $0x2c] sm:$0xf]
        %v6631 = vld [vmem:[%s6618 + $0x30] sm:$0xf]
        %v6632 = vld [vmem:[%s6618 + $0x34] sm:$0xf]
        %v6633 = vld [vmem:[%s6618 + $0x38] sm:$0xf]
        %v6634 = vld [vmem:[%s6618 + $0x3c] sm:$0xf]
        %v6635 = vld [vmem:[%s6618 + $0x40] sm:$0xf]
        %v6636 = vld [vmem:[%s6618 + $0x44] sm:$0xf]
        %v6637 = vld [vmem:[%s6618 + $0x48] sm:$0xf]
        %v6638 = vld [vmem:[%s6618 + $0x4c] sm:$0xf]
        %v6639 = vld [vmem:[%s6618 + $0x50] sm:$0xf]
        %v6640 = vld [vmem:[%s6618 + $0x54] sm:$0xf]
        %v6641 = vld [vmem:[%s6618 + $0x58] sm:$0xf]
        %v6642 = vld [vmem:[%s6618 + $0x5c] sm:$0xf]
        %v6643 = vld [vmem:[%s6618 + $0x60] sm:$0xf]
        %v6644 = vld [vmem:[%s6618 + $0x64] sm:$0xf]
        %v6645 = vld [vmem:[%s6618 + $0x68] sm:$0xf]
        %v6646 = vld [vmem:[%s6618 + $0x6c] sm:$0xf]
        %v6647 = vld [vmem:[%s6618 + $0x70] sm:$0xf]
        %v6648 = vld [vmem:[%s6618 + $0x74] sm:$0xf]
        %v6649 = vld [vmem:[%s6618 + $0x78] sm:$0xf]
        %v6650 = vld [vmem:[%s6618 + $0x7c] sm:$0xf]
        %v6683 = vunpack.c.l.b16 %v6619
        %v6684 = vunpack.c.l.b16 %v6620
        %v6685 = vunpack.c.l.b16 %v6621
        %v6686 = vunpack.c.l.b16 %v6622
        %v6687 = vunpack.c.l.b16 %v6623
        %v6688 = vunpack.c.l.b16 %v6624
        %v6689 = vunpack.c.l.b16 %v6625
        %v6690 = vunpack.c.l.b16 %v6626
        %v6691 = vunpack.c.l.b16 %v6627
        %v6692 = vunpack.c.l.b16 %v6628
        %v6693 = vunpack.c.l.b16 %v6629
        %v6694 = vunpack.c.l.b16 %v6630
        %v6695 = vunpack.c.l.b16 %v6631
        %v6696 = vunpack.c.l.b16 %v6632
        %v6697 = vunpack.c.l.b16 %v6633
        %v6698 = vunpack.c.l.b16 %v6634
        %v6699 = vunpack.c.l.b16 %v6635
        %v6700 = vunpack.c.l.b16 %v6636
        %v6701 = vunpack.c.l.b16 %v6637
        %v6702 = vunpack.c.l.b16 %v6638
        %v6703 = vunpack.c.l.b16 %v6639
        %v6704 = vunpack.c.l.b16 %v6640
        %v6705 = vunpack.c.l.b16 %v6641
        %v6706 = vunpack.c.l.b16 %v6642
        %v6707 = vunpack.c.l.b16 %v6643
        %v6708 = vunpack.c.l.b16 %v6644
        %v6709 = vunpack.c.l.b16 %v6645
        %v6710 = vunpack.c.l.b16 %v6646
        %v6711 = vunpack.c.l.b16 %v6647
        %v6712 = vunpack.c.l.b16 %v6648
        %v6713 = vunpack.c.l.b16 %v6649
        %v6714 = vunpack.c.l.b16 %v6650
        %v6715 = vpack.c.b16 %v6684, %v6683
        %v6716 = vpack.c.b16 %v6686, %v6685
        %v6717 = vpack.c.b16 %v6688, %v6687
        %v6718 = vpack.c.b16 %v6690, %v6689
        %v6719 = vpack.c.b16 %v6692, %v6691
        %v6720 = vpack.c.b16 %v6694, %v6693
        %v6721 = vpack.c.b16 %v6696, %v6695
        %v6722 = vpack.c.b16 %v6698, %v6697
        %v6723 = vpack.c.b16 %v6700, %v6699
        %v6724 = vpack.c.b16 %v6702, %v6701
        %v6725 = vpack.c.b16 %v6704, %v6703
        %v6726 = vpack.c.b16 %v6706, %v6705
        %v6727 = vpack.c.b16 %v6708, %v6707
        %v6728 = vpack.c.b16 %v6710, %v6709
        %v6729 = vpack.c.b16 %v6712, %v6711
        %v6730 = vpack.c.b16 %v6714, %v6713
        %6747 = vmatpush.bf16.msra.mxu0 %v6722
        %6748 = vmatpush.bf16.msra.mxu0 %v6721
        %6749 = vmatpush.bf16.msra.mxu0 %v6720
        %6750 = vmatpush.bf16.msra.mxu0 %v6719
        %6751 = vmatpush.bf16.msra.mxu0 %v6718
        %6752 = vmatpush.bf16.msra.mxu0 %v6717
        %6753 = vmatpush.bf16.msra.mxu0 %v6716
        %6754 = vmatpush.bf16.msra.mxu0 %v6715
        %6755 = vmatmul.bf16.gmra.mxu0 %v6586
        %v6756 = vpop.f32.mrf.mxu0
        %v6757 = vadd.f32 0.0, %v6756
        %v6758 = vpop.f32.mrf.mxu0
        %v6759 = vadd.f32 0.0, %v6758
        %6760 = vmatmul.bf16.gmra.mxu0 %v6587
        %v6761 = vpop.f32.mrf.mxu0
        %v6762 = vadd.f32 0.0, %v6761
        %v6763 = vpop.f32.mrf.mxu0
        %v6764 = vadd.f32 0.0, %v6763
        %6765 = vmatmul.bf16.gmra.mxu0 %v6588
        %v6766 = vpop.f32.mrf.mxu0
        %v6767 = vadd.f32 0.0, %v6766
        %v6768 = vpop.f32.mrf.mxu0
        %v6769 = vadd.f32 0.0, %v6768
        %6770 = vmatmul.bf16.gmra.mxu0 %v6589
        %v6771 = vpop.f32.mrf.mxu0
        %v6772 = vadd.f32 0.0, %v6771
        %v6773 = vpop.f32.mrf.mxu0
        %v6774 = vadd.f32 0.0, %v6773
        %6775 = vmatmul.bf16.gmra.mxu0 %v6590
        %v6776 = vpop.f32.mrf.mxu0
        %v6777 = vadd.f32 0.0, %v6776
        %v6778 = vpop.f32.mrf.mxu0
        %v6779 = vadd.f32 0.0, %v6778
        %6780 = vmatmul.bf16.gmra.mxu0 %v6591
        %v6781 = vpop.f32.mrf.mxu0
        %v6782 = vadd.f32 0.0, %v6781
        %v6783 = vpop.f32.mrf.mxu0
        %v6784 = vadd.f32 0.0, %v6783
        %6785 = vmatmul.bf16.gmra.mxu0 %v6592
        %v6786 = vpop.f32.mrf.mxu0
        %v6787 = vadd.f32 0.0, %v6786
        %v6788 = vpop.f32.mrf.mxu0
        %v6789 = vadd.f32 0.0, %v6788
        %6790 = vmatmul.bf16.gmra.mxu0 %v6593
        %v6791 = vpop.f32.mrf.mxu0
        %v6792 = vadd.f32 0.0, %v6791
        %v6793 = vpop.f32.mrf.mxu0
        %v6794 = vadd.f32 0.0, %v6793
        %6795 = vmatmul.bf16.gmra.mxu0 %v6594
        %v6796 = vpop.f32.mrf.mxu0
        %v6797 = vadd.f32 0.0, %v6796
        %v6798 = vpop.f32.mrf.mxu0
        %v6799 = vadd.f32 0.0, %v6798
        %6800 = vmatmul.bf16.gmra.mxu0 %v6595
        %v6801 = vpop.f32.mrf.mxu0
        %v6802 = vadd.f32 0.0, %v6801
        %v6803 = vpop.f32.mrf.mxu0
        %v6804 = vadd.f32 0.0, %v6803
        %6805 = vmatmul.bf16.gmra.mxu0 %v6596
        %v6806 = vpop.f32.mrf.mxu0
        %v6807 = vadd.f32 0.0, %v6806
        %v6808 = vpop.f32.mrf.mxu0
        %v6809 = vadd.f32 0.0, %v6808
        %6810 = vmatmul.bf16.gmra.mxu0 %v6597
        %v6811 = vpop.f32.mrf.mxu0
        %v6812 = vadd.f32 0.0, %v6811
        %v6813 = vpop.f32.mrf.mxu0
        %v6814 = vadd.f32 0.0, %v6813
        %6815 = vmatmul.bf16.gmra.mxu0 %v6598
        %v6816 = vpop.f32.mrf.mxu0
        %v6817 = vadd.f32 0.0, %v6816
        %v6818 = vpop.f32.mrf.mxu0
        %v6819 = vadd.f32 0.0, %v6818
        %6820 = vmatmul.bf16.gmra.mxu0 %v6599
        %v6821 = vpop.f32.mrf.mxu0
        %v6822 = vadd.f32 0.0, %v6821
        %v6823 = vpop.f32.mrf.mxu0
        %v6824 = vadd.f32 0.0, %v6823
        %6825 = vmatmul.bf16.gmra.mxu0 %v6600
        %v6826 = vpop.f32.mrf.mxu0
        %v6827 = vadd.f32 0.0, %v6826
        %v6828 = vpop.f32.mrf.mxu0
        %v6829 = vadd.f32 0.0, %v6828
        %6830 = vmatmul.bf16.gmra.mxu0 %v6601
        %v6831 = vpop.f32.mrf.mxu0
        %v6832 = vadd.f32 0.0, %v6831
        %v6833 = vpop.f32.mrf.mxu0
        %v6834 = vadd.f32 0.0, %v6833
        %6835 = vdwg.mxu0
        %6836 = vmatpush.bf16.msra.mxu0 %v6730
        %6837 = vmatpush.bf16.msra.mxu0 %v6729
        %6838 = vmatpush.bf16.msra.mxu0 %v6728
        %6839 = vmatpush.bf16.msra.mxu0 %v6727
        %6840 = vmatpush.bf16.msra.mxu0 %v6726
        %6841 = vmatpush.bf16.msra.mxu0 %v6725
        %6842 = vmatpush.bf16.msra.mxu0 %v6724
        %6843 = vmatpush.bf16.msra.mxu0 %v6723
        %6844 = vmatmul.bf16.gmra.mxu0 %v6586
        %v6845 = vpop.f32.mrf.mxu0
        %v6846 = vadd.f32 %v6757, %v6845
        %v6847 = vpop.f32.mrf.mxu0
        %v6848 = vadd.f32 %v6759, %v6847
        %6849 = vmatmul.bf16.gmra.mxu0 %v6587
        %v6850 = vpop.f32.mrf.mxu0
        %v6851 = vadd.f32 %v6762, %v6850
        %v6852 = vpop.f32.mrf.mxu0
        %v6853 = vadd.f32 %v6764, %v6852
        %6854 = vmatmul.bf16.gmra.mxu0 %v6588
        %v6855 = vpop.f32.mrf.mxu0
        %v6856 = vadd.f32 %v6767, %v6855
        %v6857 = vpop.f32.mrf.mxu0
        %v6858 = vadd.f32 %v6769, %v6857
        %6859 = vmatmul.bf16.gmra.mxu0 %v6589
        %v6860 = vpop.f32.mrf.mxu0
        %v6861 = vadd.f32 %v6772, %v6860
        %v6862 = vpop.f32.mrf.mxu0
        %v6863 = vadd.f32 %v6774, %v6862
        %6864 = vmatmul.bf16.gmra.mxu0 %v6590
        %v6865 = vpop.f32.mrf.mxu0
        %v6866 = vadd.f32 %v6777, %v6865
        %v6867 = vpop.f32.mrf.mxu0
        %v6868 = vadd.f32 %v6779, %v6867
        %6869 = vmatmul.bf16.gmra.mxu0 %v6591
        %v6870 = vpop.f32.mrf.mxu0
        %v6871 = vadd.f32 %v6782, %v6870
        %v6872 = vpop.f32.mrf.mxu0
        %v6873 = vadd.f32 %v6784, %v6872
        %6874 = vmatmul.bf16.gmra.mxu0 %v6592
        %v6875 = vpop.f32.mrf.mxu0
        %v6876 = vadd.f32 %v6787, %v6875
        %v6877 = vpop.f32.mrf.mxu0
        %v6878 = vadd.f32 %v6789, %v6877
        %6879 = vmatmul.bf16.gmra.mxu0 %v6593
        %v6880 = vpop.f32.mrf.mxu0
        %v6881 = vadd.f32 %v6792, %v6880
        %v6882 = vpop.f32.mrf.mxu0
        %v6883 = vadd.f32 %v6794, %v6882
        %6884 = vmatmul.bf16.gmra.mxu0 %v6594
        %v6885 = vpop.f32.mrf.mxu0
        %v6886 = vadd.f32 %v6797, %v6885
        %v6887 = vpop.f32.mrf.mxu0
        %v6888 = vadd.f32 %v6799, %v6887
        %6889 = vmatmul.bf16.gmra.mxu0 %v6595
        %v6890 = vpop.f32.mrf.mxu0
        %v6891 = vadd.f32 %v6802, %v6890
        %v6892 = vpop.f32.mrf.mxu0
        %v6893 = vadd.f32 %v6804, %v6892
        %6894 = vmatmul.bf16.gmra.mxu0 %v6596
        %v6895 = vpop.f32.mrf.mxu0
        %v6896 = vadd.f32 %v6807, %v6895
        %v6897 = vpop.f32.mrf.mxu0
        %v6898 = vadd.f32 %v6809, %v6897
        %6899 = vmatmul.bf16.gmra.mxu0 %v6597
        %v6900 = vpop.f32.mrf.mxu0
        %v6901 = vadd.f32 %v6812, %v6900
        %v6902 = vpop.f32.mrf.mxu0
        %v6903 = vadd.f32 %v6814, %v6902
        %6904 = vmatmul.bf16.gmra.mxu0 %v6598
        %v6905 = vpop.f32.mrf.mxu0
        %v6906 = vadd.f32 %v6817, %v6905
        %v6907 = vpop.f32.mrf.mxu0
        %v6908 = vadd.f32 %v6819, %v6907
        %6909 = vmatmul.bf16.gmra.mxu0 %v6599
        %v6910 = vpop.f32.mrf.mxu0
        %v6911 = vadd.f32 %v6822, %v6910
        %v6912 = vpop.f32.mrf.mxu0
        %v6913 = vadd.f32 %v6824, %v6912
        %6914 = vmatmul.bf16.gmra.mxu0 %v6600
        %v6915 = vpop.f32.mrf.mxu0
        %v6916 = vadd.f32 %v6827, %v6915
        %v6917 = vpop.f32.mrf.mxu0
        %v6918 = vadd.f32 %v6829, %v6917
        %6919 = vmatmul.bf16.gmra.mxu0 %v6601
        %v6920 = vpop.f32.mrf.mxu0
        %v6921 = vadd.f32 %v6832, %v6920
        %v6922 = vpop.f32.mrf.mxu0
        %v6923 = vadd.f32 %v6834, %v6922
        %6924 = vdwg.mxu0
        %v6925 = vadd.f32 %v6426, %v6846
        %v6926 = vadd.f32 %v6427, %v6848
        %v6927 = vadd.f32 %v6428, %v6851
        %v6928 = vadd.f32 %v6429, %v6853
        %v6929 = vadd.f32 %v6430, %v6856
        %v6930 = vadd.f32 %v6431, %v6858
        %v6931 = vadd.f32 %v6432, %v6861
        %v6932 = vadd.f32 %v6433, %v6863
        %v6933 = vadd.f32 %v6434, %v6866
        %v6934 = vadd.f32 %v6435, %v6868
        %v6935 = vadd.f32 %v6436, %v6871
        %v6936 = vadd.f32 %v6437, %v6873
        %v6937 = vadd.f32 %v6438, %v6876
        %v6938 = vadd.f32 %v6439, %v6878
        %v6939 = vadd.f32 %v6440, %v6881
        %v6940 = vadd.f32 %v6441, %v6883
        %v6941 = vadd.f32 %v6442, %v6886
        %v6942 = vadd.f32 %v6443, %v6888
        %v6943 = vadd.f32 %v6444, %v6891
        %v6944 = vadd.f32 %v6445, %v6893
        %v6945 = vadd.f32 %v6446, %v6896
        %v6946 = vadd.f32 %v6447, %v6898
        %v6947 = vadd.f32 %v6448, %v6901
        %v6948 = vadd.f32 %v6449, %v6903
        %v6949 = vadd.f32 %v6450, %v6906
        %v6950 = vadd.f32 %v6451, %v6908
        %v6951 = vadd.f32 %v6452, %v6911
        %v6952 = vadd.f32 %v6453, %v6913
        %v6953 = vadd.f32 %v6454, %v6916
        %v6954 = vadd.f32 %v6455, %v6918
        %v6955 = vadd.f32 %v6456, %v6921
        %v6956 = vadd.f32 %v6457, %v6923
        %v6957 = vld [vmem:[%s5] sm:$0x1]
        %v6958 = vld [vmem:[%s6] sm:$0x1]
        %v6959 = vadd.f32 %v6925, %v6926
        %v6960 = vadd.f32 %v6959, %v6927
        %v6961 = vadd.f32 %v6960, %v6928
        %v6962 = vadd.f32 %v6961, %v6929
        %v6963 = vadd.f32 %v6962, %v6930
        %v6964 = vadd.f32 %v6963, %v6931
        %v6965 = vadd.f32 %v6964, %v6932
        %v6966 = vadd.f32 %v6965, %v6933
        %v6967 = vadd.f32 %v6966, %v6934
        %v6968 = vadd.f32 %v6967, %v6935
        %v6969 = vadd.f32 %v6968, %v6936
        %v6970 = vadd.f32 %v6969, %v6937
        %v6971 = vadd.f32 %v6970, %v6938
        %v6972 = vadd.f32 %v6971, %v6939
        %v6973 = vadd.f32 %v6972, %v6940
        %v6974 = vadd.f32 %v6973, %v6941
        %v6975 = vadd.f32 %v6974, %v6942
        %v6976 = vadd.f32 %v6975, %v6943
        %v6977 = vadd.f32 %v6976, %v6944
        %v6978 = vadd.f32 %v6977, %v6945
        %v6979 = vadd.f32 %v6978, %v6946
        %v6980 = vadd.f32 %v6979, %v6947
        %v6981 = vadd.f32 %v6980, %v6948
        %v6982 = vadd.f32 %v6981, %v6949
        %v6983 = vadd.f32 %v6982, %v6950
        %v6984 = vadd.f32 %v6983, %v6951
        %v6985 = vadd.f32 %v6984, %v6952
        %v6986 = vadd.f32 %v6985, %v6953
        %v6987 = vadd.f32 %v6986, %v6954
        %v6988 = vadd.f32 %v6987, %v6955
        %v6989 = vadd.f32 %v6988, %v6956
        %v6990 = vrot.slane %v6989, 4
        %v6991 = vadd.f32 %v6989, %v6990
        %v6992 = vrot.slane %v6991, 2
        %v6993 = vadd.f32 %v6991, %v6992
        %v6994 = vrot.slane %v6993, 1
        %v6995 = vadd.f32 %v6993, %v6994
        %v6996 = vmul.f32 %v6995, 0.00390625
        %v6997 = vmul.f32 %v6925, %v6925
        %v6998 = vmul.f32 %v6926, %v6926
        %v6999 = vmul.f32 %v6927, %v6927
        %v7000 = vmul.f32 %v6928, %v6928
        %v7001 = vmul.f32 %v6929, %v6929
        %v7002 = vmul.f32 %v6930, %v6930
        %v7003 = vmul.f32 %v6931, %v6931
        %v7004 = vmul.f32 %v6932, %v6932
        %v7005 = vmul.f32 %v6933, %v6933
        %v7006 = vmul.f32 %v6934, %v6934
        %v7007 = vmul.f32 %v6935, %v6935
        %v7008 = vmul.f32 %v6936, %v6936
        %v7009 = vmul.f32 %v6937, %v6937
        %v7010 = vmul.f32 %v6938, %v6938
        %v7011 = vmul.f32 %v6939, %v6939
        %v7012 = vmul.f32 %v6940, %v6940
        %v7013 = vmul.f32 %v6941, %v6941
        %v7014 = vmul.f32 %v6942, %v6942
        %v7015 = vmul.f32 %v6943, %v6943
        %v7016 = vmul.f32 %v6944, %v6944
        %v7017 = vmul.f32 %v6945, %v6945
        %v7018 = vmul.f32 %v6946, %v6946
        %v7019 = vmul.f32 %v6947, %v6947
        %v7020 = vmul.f32 %v6948, %v6948
        %v7021 = vmul.f32 %v6949, %v6949
        %v7022 = vmul.f32 %v6950, %v6950
        %v7023 = vmul.f32 %v6951, %v6951
        %v7024 = vmul.f32 %v6952, %v6952
        %v7025 = vmul.f32 %v6953, %v6953
        %v7026 = vmul.f32 %v6954, %v6954
        %v7027 = vmul.f32 %v6955, %v6955
        %v7028 = vmul.f32 %v6956, %v6956
        %v7029 = vadd.f32 %v6997, %v6998
        %v7030 = vadd.f32 %v7029, %v6999
        %v7031 = vadd.f32 %v7030, %v7000
        %v7032 = vadd.f32 %v7031, %v7001
        %v7033 = vadd.f32 %v7032, %v7002
        %v7034 = vadd.f32 %v7033, %v7003
        %v7035 = vadd.f32 %v7034, %v7004
        %v7036 = vadd.f32 %v7035, %v7005
        %v7037 = vadd.f32 %v7036, %v7006
        %v7038 = vadd.f32 %v7037, %v7007
        %v7039 = vadd.f32 %v7038, %v7008
        %v7040 = vadd.f32 %v7039, %v7009
        %v7041 = vadd.f32 %v7040, %v7010
        %v7042 = vadd.f32 %v7041, %v7011
        %v7043 = vadd.f32 %v7042, %v7012
        %v7044 = vadd.f32 %v7043, %v7013
        %v7045 = vadd.f32 %v7044, %v7014
        %v7046 = vadd.f32 %v7045, %v7015
        %v7047 = vadd.f32 %v7046, %v7016
        %v7048 = vadd.f32 %v7047, %v7017
        %v7049 = vadd.f32 %v7048, %v7018
        %v7050 = vadd.f32 %v7049, %v7019
        %v7051 = vadd.f32 %v7050, %v7020
        %v7052 = vadd.f32 %v7051, %v7021
        %v7053 = vadd.f32 %v7052, %v7022
        %v7054 = vadd.f32 %v7053, %v7023
        %v7055 = vadd.f32 %v7054, %v7024
        %v7056 = vadd.f32 %v7055, %v7025
        %v7057 = vadd.f32 %v7056, %v7026
        %v7058 = vadd.f32 %v7057, %v7027
        %v7059 = vadd.f32 %v7058, %v7028
        %v7060 = vrot.slane %v7059, 4
        %v7061 = vadd.f32 %v7059, %v7060
        %v7062 = vrot.slane %v7061, 2
        %v7063 = vadd.f32 %v7061, %v7062
        %v7064 = vrot.slane %v7063, 1
        %v7065 = vadd.f32 %v7063, %v7064
        %v7066 = vmul.f32 %v7065, 0.00390625
        %v7067 = vmul.f32 %v6996, %v6996
        %v7068 = vsub.f32 %v7066, %v7067
        %v7069 = vmax.f32 %v7068, 0.0
        %v7070 = vadd.f32 %v7069, 1e-05
        %v7071 = vrsqrt.pop %v7070
        %v7072 = vmul.f32 %v7071, %v7070
        %v7073 = vmul.f32 %v7072, %v7071
        %v7074 = vmul.f32 0.5, %v7073
        %v7075 = vsub.f32 1.5, %v7074
        %v7076 = vmul.f32 %v7071, %v7075
        %vm7077 = vweird.f32 %v7070
        %vm7078 = vweird.f32 %v7071
        %vm7079 = vmor %vm7077, %vm7078
        %v7080 = vsel %vm7079, %v7071, %v7076
        %v7081 = vsub.f32 %v6925, %v6996
        %v7082 = vsub.f32 %v6926, %v6996
        %v7083 = vsub.f32 %v6927, %v6996
        %v7084 = vsub.f32 %v6928, %v6996
        %v7085 = vsub.f32 %v6929, %v6996
        %v7086 = vsub.f32 %v6930, %v6996
        %v7087 = vsub.f32 %v6931, %v6996
        %v7088 = vsub.f32 %v6932, %v6996
        %v7089 = vsub.f32 %v6933, %v6996
        %v7090 = vsub.f32 %v6934, %v6996
        %v7091 = vsub.f32 %v6935, %v6996
        %v7092 = vsub.f32 %v6936, %v6996
        %v7093 = vsub.f32 %v6937, %v6996
        %v7094 = vsub.f32 %v6938, %v6996
        %v7095 = vsub.f32 %v6939, %v6996
        %v7096 = vsub.f32 %v6940, %v6996
        %v7097 = vsub.f32 %v6941, %v6996
        %v7098 = vsub.f32 %v6942, %v6996
        %v7099 = vsub.f32 %v6943, %v6996
        %v7100 = vsub.f32 %v6944, %v6996
        %v7101 = vsub.f32 %v6945, %v6996
        %v7102 = vsub.f32 %v6946, %v6996
        %v7103 = vsub.f32 %v6947, %v6996
        %v7104 = vsub.f32 %v6948, %v6996
        %v7105 = vsub.f32 %v6949, %v6996
        %v7106 = vsub.f32 %v6950, %v6996
        %v7107 = vsub.f32 %v6951, %v6996
        %v7108 = vsub.f32 %v6952, %v6996
        %v7109 = vsub.f32 %v6953, %v6996
        %v7110 = vsub.f32 %v6954, %v6996
        %v7111 = vsub.f32 %v6955, %v6996
        %v7112 = vsub.f32 %v6956, %v6996
        %v7113 = vmul.f32 %v7080, %v6957
        %v7114 = vperm.slane %v7113, 0
        %v7115 = vmul.f32 %v7081, %v7114
        %v7116 = vmul.f32 %v7082, %v7114
        %v7117 = vmul.f32 %v7083, %v7114
        %v7118 = vmul.f32 %v7084, %v7114
        %v7119 = vmul.f32 %v7085, %v7114
        %v7120 = vmul.f32 %v7086, %v7114
        %v7121 = vmul.f32 %v7087, %v7114
        %v7122 = vmul.f32 %v7088, %v7114
        %v7123 = vmul.f32 %v7089, %v7114
        %v7124 = vmul.f32 %v7090, %v7114
        %v7125 = vmul.f32 %v7091, %v7114
        %v7126 = vmul.f32 %v7092, %v7114
        %v7127 = vmul.f32 %v7093, %v7114
        %v7128 = vmul.f32 %v7094, %v7114
        %v7129 = vmul.f32 %v7095, %v7114
        %v7130 = vmul.f32 %v7096, %v7114
        %v7131 = vmul.f32 %v7097, %v7114
        %v7132 = vmul.f32 %v7098, %v7114
        %v7133 = vmul.f32 %v7099, %v7114
        %v7134 = vmul.f32 %v7100, %v7114
        %v7135 = vmul.f32 %v7101, %v7114
        %v7136 = vmul.f32 %v7102, %v7114
        %v7137 = vmul.f32 %v7103, %v7114
        %v7138 = vmul.f32 %v7104, %v7114
        %v7139 = vmul.f32 %v7105, %v7114
        %v7140 = vmul.f32 %v7106, %v7114
        %v7141 = vmul.f32 %v7107, %v7114
        %v7142 = vmul.f32 %v7108, %v7114
        %v7143 = vmul.f32 %v7109, %v7114
        %v7144 = vmul.f32 %v7110, %v7114
        %v7145 = vmul.f32 %v7111, %v7114
        %v7146 = vmul.f32 %v7112, %v7114
        %v7148 = vperm.slane %v6958, 0
        %v7150 = vadd.f32 %v7115, %v7148
        %v7151 = vadd.f32 %v7116, %v7148
        %v7152 = vadd.f32 %v7117, %v7148
        %v7153 = vadd.f32 %v7118, %v7148
        %v7154 = vadd.f32 %v7119, %v7148
        %v7155 = vadd.f32 %v7120, %v7148
        %v7156 = vadd.f32 %v7121, %v7148
        %v7157 = vadd.f32 %v7122, %v7148
        %v7158 = vadd.f32 %v7123, %v7148
        %v7159 = vadd.f32 %v7124, %v7148
        %v7160 = vadd.f32 %v7125, %v7148
        %v7161 = vadd.f32 %v7126, %v7148
        %v7162 = vadd.f32 %v7127, %v7148
        %v7163 = vadd.f32 %v7128, %v7148
        %v7164 = vadd.f32 %v7129, %v7148
        %v7165 = vadd.f32 %v7130, %v7148
        %v7166 = vadd.f32 %v7131, %v7148
        %v7167 = vadd.f32 %v7132, %v7148
        %v7168 = vadd.f32 %v7133, %v7148
        %v7169 = vadd.f32 %v7134, %v7148
        %v7170 = vadd.f32 %v7135, %v7148
        %v7171 = vadd.f32 %v7136, %v7148
        %v7172 = vadd.f32 %v7137, %v7148
        %v7173 = vadd.f32 %v7138, %v7148
        %v7174 = vadd.f32 %v7139, %v7148
        %v7175 = vadd.f32 %v7140, %v7148
        %v7176 = vadd.f32 %v7141, %v7148
        %v7177 = vadd.f32 %v7142, %v7148
        %v7178 = vadd.f32 %v7143, %v7148
        %v7179 = vadd.f32 %v7144, %v7148
        %v7180 = vadd.f32 %v7145, %v7148
        %v7181 = vadd.f32 %v7146, %v7148
        %v7182 = vld [vmem:[%s693 + $0x1] sm:$0xff]
        %v7183 = vld [vmem:[%s693 + $0x9] sm:$0xff]
        %v7184 = vld [vmem:[%s693 + $0x19] sm:$0xff]
        %v7185 = vld [vmem:[%s693 + $0x21] sm:$0xff]
        %v7186 = vld [vmem:[%s693 + $0x31] sm:$0xff]
        %v7187 = vld [vmem:[%s693 + $0x39] sm:$0xff]
        %v7188 = vld [vmem:[%s693 + $0x49] sm:$0xff]
        %v7189 = vld [vmem:[%s693 + $0x51] sm:$0xff]
        %v7190 = vld [vmem:[%s693 + $0x61] sm:$0xff]
        %v7191 = vld [vmem:[%s693 + $0x69] sm:$0xff]
        %v7192 = vld [vmem:[%s693 + $0x79] sm:$0xff]
        %v7193 = vld [vmem:[%s693 + $0x81] sm:$0xff]
        %v7194 = vld [vmem:[%s693 + $0x91] sm:$0xff]
        %v7195 = vld [vmem:[%s693 + $0x99] sm:$0xff]
        %v7196 = vld [vmem:[%s693 + $0xa9] sm:$0xff]
        %v7197 = vld [vmem:[%s693 + $0xb1] sm:$0xff]
        %v7198 = vld [vmem:[%s693 + $0xc1] sm:$0xff]
        %v7199 = vld [vmem:[%s693 + $0xc9] sm:$0xff]
        %v7200 = vld [vmem:[%s693 + $0xd9] sm:$0xff]
        %v7201 = vld [vmem:[%s693 + $0xe1] sm:$0xff]
        %v7202 = vld [vmem:[%s693 + $0xf1] sm:$0xff]
        %v7203 = vld [vmem:[%s693 + $0xf9] sm:$0xff]
        %v7204 = vld [vmem:[%s693 + $0x109] sm:$0xff]
        %v7205 = vld [vmem:[%s693 + $0x111] sm:$0xff]
        %v7206 = vld [vmem:[%s693 + $0x121] sm:$0xff]
        %v7207 = vld [vmem:[%s693 + $0x129] sm:$0xff]
        %v7208 = vld [vmem:[%s693 + $0x139] sm:$0xff]
        %v7209 = vld [vmem:[%s693 + $0x141] sm:$0xff]
        %v7210 = vld [vmem:[%s693 + $0x151] sm:$0xff]
        %v7211 = vld [vmem:[%s693 + $0x159] sm:$0xff]
        %v7212 = vld [vmem:[%s693 + $0x169] sm:$0xff]
        %v7213 = vld [vmem:[%s693 + $0x171] sm:$0xff]
        %v7214 = vadd.f32 %v7150, %v7182
        %v7215 = vadd.f32 %v7151, %v7183
        %v7216 = vadd.f32 %v7152, %v7184
        %v7217 = vadd.f32 %v7153, %v7185
        %v7218 = vadd.f32 %v7154, %v7186
        %v7219 = vadd.f32 %v7155, %v7187
        %v7220 = vadd.f32 %v7156, %v7188
        %v7221 = vadd.f32 %v7157, %v7189
        %v7222 = vadd.f32 %v7158, %v7190
        %v7223 = vadd.f32 %v7159, %v7191
        %v7224 = vadd.f32 %v7160, %v7192
        %v7225 = vadd.f32 %v7161, %v7193
        %v7226 = vadd.f32 %v7162, %v7194
        %v7227 = vadd.f32 %v7163, %v7195
        %v7228 = vadd.f32 %v7164, %v7196
        %v7229 = vadd.f32 %v7165, %v7197
        %v7230 = vadd.f32 %v7166, %v7198
        %v7231 = vadd.f32 %v7167, %v7199
        %v7232 = vadd.f32 %v7168, %v7200
        %v7233 = vadd.f32 %v7169, %v7201
        %v7234 = vadd.f32 %v7170, %v7202
        %v7235 = vadd.f32 %v7171, %v7203
        %v7236 = vadd.f32 %v7172, %v7204
        %v7237 = vadd.f32 %v7173, %v7205
        %v7238 = vadd.f32 %v7174, %v7206
        %v7239 = vadd.f32 %v7175, %v7207
        %v7240 = vadd.f32 %v7176, %v7208
        %v7241 = vadd.f32 %v7177, %v7209
        %v7242 = vadd.f32 %v7178, %v7210
        %v7243 = vadd.f32 %v7179, %v7211
        %v7244 = vadd.f32 %v7180, %v7212
        %v7245 = vadd.f32 %v7181, %v7213
        %7246 = vst [vmem:[%s271] sm:$0xff] %v7214
        %7247 = vst [vmem:[%s271 + $0x8] sm:$0xff] %v7215
        %7248 = vst [vmem:[%s271 + $0x10] sm:$0xff] %v7216
        %7249 = vst [vmem:[%s271 + $0x18] sm:$0xff] %v7217
        %7250 = vst [vmem:[%s271 + $0x20] sm:$0xff] %v7218
        %7251 = vst [vmem:[%s271 + $0x28] sm:$0xff] %v7219
        %7252 = vst [vmem:[%s271 + $0x30] sm:$0xff] %v7220
        %7253 = vst [vmem:[%s271 + $0x38] sm:$0xff] %v7221
        %7254 = vst [vmem:[%s271 + $0x40] sm:$0xff] %v7222
        %7255 = vst [vmem:[%s271 + $0x48] sm:$0xff] %v7223
        %7256 = vst [vmem:[%s271 + $0x50] sm:$0xff] %v7224
        %7257 = vst [vmem:[%s271 + $0x58] sm:$0xff] %v7225
        %7258 = vst [vmem:[%s271 + $0x60] sm:$0xff] %v7226
        %7259 = vst [vmem:[%s271 + $0x68] sm:$0xff] %v7227
        %7260 = vst [vmem:[%s271 + $0x70] sm:$0xff] %v7228
        %7261 = vst [vmem:[%s271 + $0x78] sm:$0xff] %v7229
        %7262 = vst [vmem:[%s271 + $0x80] sm:$0xff] %v7230
        %7263 = vst [vmem:[%s271 + $0x88] sm:$0xff] %v7231
        %7264 = vst [vmem:[%s271 + $0x90] sm:$0xff] %v7232
        %7265 = vst [vmem:[%s271 + $0x98] sm:$0xff] %v7233
        %7266 = vst [vmem:[%s271 + $0xa0] sm:$0xff] %v7234
        %7267 = vst [vmem:[%s271 + $0xa8] sm:$0xff] %v7235
        %7268 = vst [vmem:[%s271 + $0xb0] sm:$0xff] %v7236
        %7269 = vst [vmem:[%s271 + $0xb8] sm:$0xff] %v7237
        %7270 = vst [vmem:[%s271 + $0xc0] sm:$0xff] %v7238
        %7271 = vst [vmem:[%s271 + $0xc8] sm:$0xff] %v7239
        %7272 = vst [vmem:[%s271 + $0xd0] sm:$0xff] %v7240
        %7273 = vst [vmem:[%s271 + $0xd8] sm:$0xff] %v7241
        %7274 = vst [vmem:[%s271 + $0xe0] sm:$0xff] %v7242
        %7275 = vst [vmem:[%s271 + $0xe8] sm:$0xff] %v7243
        %7276 = vst [vmem:[%s271 + $0xf0] sm:$0xff] %v7244
        %7277 = vst [vmem:[%s271 + $0xf8] sm:$0xff] %v7245
        %s7278 = sand.u32 %s181, 1
        %s7279 = scalar_lea.sflag [#allocation4], %s7278
        %s7280 = sand.u32 %s181, 1
        %s7281 = smul.addr %s7280, 256
        %s7282 = scalar_lea.vmem [#allocation3], %s7281
        // Predicated region
        $region49: #{tpu_custom_call.1} parent=47 // pred_check
          %p7283 = pneg %p191
        $region50: #{tpu_custom_call.1} parent=47 // pred_check_branch
          %7285 = sbr.rel (%p7283) target = $region52
        $region51: #{tpu_custom_call.1} parent=47 // pred_region
          %7287 = vsyncadd %s7279, 0
          %s7288 = smul.addr %s21, 32
          %s7289 = smul.addr %s7288, 8
          %s7290 = scalar_lea.hbm %s7, %s7289
          %s7291 = sshll.u32 %s7282, 4
          %s7292 = int_to_ptr.vmem [resolvable:$true] %s7291
          %s7293 = sshll.u32 %s7290, 4
          %s7294 = int_to_ptr.hbm [resolvable:$true] %s7293
          %7299 = dma.vmem_to_hbm [thread:$0]  %s7292, 4096, %s7294, %s7279, 128, 128, 8
        $region52: #{tpu_custom_call.1} parent=47 // pred_fallthru
          _
      $region48: #{tpu_custom_call.1} parent=5 // pred_fallthru
        _
      %p7300 = scmp.le.s32.totalorder 2, %s16
      // Predicated region
      $region53: #{tpu_custom_call.1} parent=5 // pred_check
        %p7301 = pneg %p7300
      $region54: #{tpu_custom_call.1} parent=5 // pred_check_branch
        %7303 = sbr.rel (%p7301) target = $region56
      $region55: #{tpu_custom_call.1} parent=5 // pred_region
        %s7304 = ssub.s32 %s16, 2
        // Predicated region
        $region57: #{tpu_custom_call.1} parent=55 // pred_check
          %p7305 = pneg %p197
        $region58: #{tpu_custom_call.1} parent=55 // pred_check_branch
          %7307 = sbr.rel (%p7305) target = $region60
        $region59: #{tpu_custom_call.1} parent=55 // pred_region
          %s7308 = sand.u32 %s182, 1
          %s7309 = scalar_lea.sflag [#allocation4], %s7308
          %s7310 = sand.u32 %s182, 1
          %s7311 = smul.addr %s7310, 256
          %s7312 = scalar_lea.vmem [#allocation3], %s7311
          %7314 = dma.done %s7309, 4096
        $region60: #{tpu_custom_call.1} parent=55 // pred_fallthru
          _
      $region56: #{tpu_custom_call.1} parent=5 // pred_fallthru
        _
    $region6: #{tpu_custom_call.1} parent=1 // loop_footer
      %s20 = sadd.s32 1, %s16
    $region7: #{tpu_custom_call.1} parent=1 // loop_footer_branch
      %15 = sbr.rel target = $region3
    $region8: #{tpu_custom_call.1} parent=1 // loop_exit
      _
    %7315 = vsyncpa [#allocation4], 1
    %s7316 = scalar_lea.sflag [#allocation4], 1
    %7317 = vsyncpa %s7316, 1

</llo_original>
